<compile_context>
chip_gen: v7x
topology: tpu7x:2x2x1
jax: 0.10.0
libtpu: 0.0.40
codegen_flags: <defaults>
</compile_context>

<pallas_src>
import functools

import jax
import jax.numpy as jnp
from jax.experimental import pallas as pl
from jax.experimental.pallas import tpu as pltpu

NEG_SLOPE = 0.01      # nn.LeakyReLU default negative_slope
BN_EPS = 1e-5         # nn.BatchNorm2d default eps


# ----------------------------------------------------------------- in-kernel helpers (values)
def _tap(x, dy, dx, W, px):
    """(dy, dx)-shifted copy of a (Cin, H*W) flat image, zero outside the image."""
    cin, hw = x.shape
    s = dy * W + dx
    if s > 0:
        shifted = jnp.concatenate([x[:, s:], jnp.zeros((cin, s), x.dtype)], axis=1)
    elif s < 0:
        shifted = jnp.concatenate([jnp.zeros((cin, -s), x.dtype), x[:, :hw + s]], axis=1)
    else:
        shifted = x
    if dx == 0:
        return shifted                      # vertical overflow already handled by the zero fill
    valid = (px + dx >= 0) & (px + dx < W)  # horizontal taps that crossed a row edge
    return jnp.where(valid, shifted, 0.0)


def _conv3x3_bn_lrelu(xs, w_ref, scale_ref, bias_ref, H, W):
    """3x3 conv (pad=1) + folded eval-mode BatchNorm + LeakyReLU.

    xs: list of (Cin_i, H*W) chunks whose channel concatenation is the conv input
        (dense-block concat handled here without materializing it).
    w_ref: (Cout, 9 * sum(Cin_i)), tap-major / channel-minor (see _init_conv).
    Returns (Cout, H*W): channels in sublanes, spatial in lanes (lane dense).
    """
    hw = H * W
    px = jax.lax.broadcasted_iota(jnp.int32, (1, hw), 1) % W
    cols = []
    for kh in range(3):
        for kw in range(3):
            for x in xs:
                cols.append(_tap(x, kh - 1, kw - 1, W, px))
    patches = jnp.concatenate(cols, axis=0)                  # im2col: (9*Cin, H*W)
    acc = jnp.dot(w_ref[...], patches, preferred_element_type=jnp.float32)
    y = acc * scale_ref[...] + bias_ref[...]                 # folded BatchNorm
    return jnp.where(y >= 0.0, y, NEG_SLOPE * y)             # LeakyReLU


def _dense_block(x, l0, l1, H, W):
    # DenseBlock(c, g, 2): f0 = blk(c, g)(x); f1 = blk(c+g, g)(cat([x, f0], 1))
    f0 = _conv3x3_bn_lrelu([x], *l0, H, W)
    return _conv3x3_bn_lrelu([x, f0], *l1, H, W)


# ----------------------------------------------------------------- fused kernel
def _extractor_kernel(H, W, x_ref, *refs):
    o_ref = refs[-1]
    p1_ref, p2_ref = refs[-3], refs[-2]
    lr = refs[:-3]                                            # 8 conv layers x (w, scale, bias)
    c1, d10, d11, d20, d21, d30, d31, c2 = [lr[3 * i:3 * i + 3] for i in range(8)]

    x = x_ref[0]                                              # (Cin_pad, H*W) f32
    x = _conv3x3_bn_lrelu([x], *c1, H, W)                     # ConvBNLeakyRelu(in, C)
    x = _dense_block(x, d10, d11, H, W)                       # DenseBlock(C, g, 2)
    x = jnp.dot(x, p1_ref[...], preferred_element_type=jnp.float32)   # AvgPool2d(2, 2)
    H2, W2 = H // 2, W // 2
    x = _dense_block(x, d20, d21, H2, W2)                     # DenseBlock(C, g, 2)
    x = jnp.dot(x, p2_ref[...], preferred_element_type=jnp.float32)   # AvgPool2d(2, 2)
    H3, W3 = H2 // 2, W2 // 2
    x = _dense_block(x, d30, d31, H3, W3)                     # DenseBlock(C, g, 2)
    x = _conv3x3_bn_lrelu([x], *c2, H3, W3)                   # ConvBNLeakyRelu(g, M) -> (M, H3*W3)
    gap = jnp.sum(x, axis=1, keepdims=True) * (1.0 / (H3 * W3))       # AdaptiveAvgPool2d((1,1))
    o_ref[...] = gap.reshape(1, gap.shape[0], 1)


# ----------------------------------------------------------------- host-side wrapper
def _pool_matrix(H, W):
    # (H*W, (H/2)*(W/2)) matrix with four 0.25 entries per column: x @ P == AvgPool2d(2,2)
    Ho, Wo = H // 2, W // 2
    p = jnp.arange(H * W)
    q = jnp.arange(Ho * Wo)
    py, px = p // W, p % W
    qy, qx = q // Wo, q % Wo
    sel = (py[:, None] // 2 == qy[None, :]) & (px[:, None] // 2 == qx[None, :])
    return sel.astype(jnp.float32) * 0.25


def extractor_forward(params, image):
    """image: (B, in_channels, H, W) NCHW float -> (B, message_length)."""
    B, Cin, H, W = image.shape
    assert H % 4 == 0 and W % 4 == 0, "two AvgPool2d(2,2) stages need H, W % 4 == 0"
    cin_pad = params["conv1"]["w"].shape[1] // 9

    # (B, C, H, W) -> (B, C, H*W): pure metadata reshape, spatial lands on the lane axis.
    x = image.astype(jnp.float32).reshape(B, Cin, H * W)
    if cin_pad > Cin:                  # one-time pad of input channels to a sublane multiple
        x = jnp.pad(x, ((0, 0), (0, cin_pad - Cin), (0, 0)))

    p1 = _pool_matrix(H, W)
    p2 = _pool_matrix(H // 2, W // 2)

    layer_arrays = []
    for layer in (params["conv1"],
                  params["db1"]["l0"], params["db1"]["l1"],
                  params["db2"]["l0"], params["db2"]["l1"],
                  params["db3"]["l0"], params["db3"]["l1"],
                  params["conv2"]):
        layer_arrays += [layer["w"], layer["scale"], layer["bias"]]
    M = params["conv2"]["w"].shape[0]

    def const_spec(a):                 # block index constant across grid -> fetched once
        return pl.BlockSpec(a.shape, lambda b: (0, 0))

    in_specs = [pl.BlockSpec((1, cin_pad, H * W), lambda b: (b, 0, 0))]
    in_specs += [const_spec(a) for a in layer_arrays]
    in_specs += [const_spec(p1), const_spec(p2)]

    out = pl.pallas_call(
        functools.partial(_extractor_kernel, H, W),
        out_shape=jax.ShapeDtypeStruct((B, M, 1), jnp.float32),
        grid=(B,),
        in_specs=in_specs,
        out_specs=pl.BlockSpec((1, M, 1), lambda b: (b, 0, 0)),
        compiler_params=pltpu.CompilerParams(dimension_semantics=("parallel",)),
    )(x, *layer_arrays, p1, p2)
    return out[:, :, 0]                # squeeze_(3).squeeze_(2) -> (B, message_length)


# ----------------------------------------------------------------- parameters
def _init_conv(key, cin, cout, cin_pad=None):
    """Random Conv3x3 + folded eval-mode BatchNorm parameters.

    Weight layout is (Cout, 9*Cin), tap-major / channel-minor; a torch Conv2d weight
    (Cout, Cin, 3, 3) converts via w.permute(0, 2, 3, 1).reshape(Cout, 9*Cin).
    BN fold (eval): scale = gamma / sqrt(var + eps), bias = beta - mean * scale.
    """
    k_w, k_g, k_b = jax.random.split(key, 3)
    w = jax.random.normal(k_w, (cout, 3, 3, cin), jnp.float32) / jnp.sqrt(9.0 * cin)
    if cin_pad is not None and cin_pad > cin:
        w = jnp.pad(w, ((0, 0), (0, 0), (0, 0), (0, cin_pad - cin)))
    gamma = 1.0 + 0.1 * jax.random.normal(k_g, (cout,), jnp.float32)
    beta = 0.1 * jax.random.normal(k_b, (cout,), jnp.float32)
    scale = (gamma / jnp.sqrt(1.0 + BN_EPS)).reshape(cout, 1)   # running_mean=0, running_var=1
    bias = beta.reshape(cout, 1)
    return {"w": w.reshape(cout, -1), "scale": scale, "bias": bias}


def init_params(key, in_channels, conv_channels, message_length, growth_rate):
    assert conv_channels == growth_rate, "torch Sequential requires growth_rate == conv_channels"
    C, g, M = conv_channels, growth_rate, message_length
    cin_pad = ((in_channels + 7) // 8) * 8                      # sublane-align the image channels
    ks = jax.random.split(key, 8)
    return {
        "conv1": _init_conv(ks[0], in_channels, C, cin_pad),
        "db1": {"l0": _init_conv(ks[1], C, g), "l1": _init_conv(ks[2], C + g, g)},
        "db2": {"l0": _init_conv(ks[3], C, g), "l1": _init_conv(ks[4], C + g, g)},
        "db3": {"l0": _init_conv(ks[5], C, g), "l1": _init_conv(ks[6], C + g, g)},
        "conv2": _init_conv(ks[7], g, M),
    }


if __name__ == "__main__":
    # opt: in_channels=3, message_length=16, decoder.channels=8, decoder.growth_rate=8
    in_channels, conv_channels, message_length, growth_rate = 3, 8, 16, 8
    B, H, W = 2, 32, 32

    key = jax.random.PRNGKey(0)
    kp, ki = jax.random.split(key)
    params = init_params(kp, in_channels, conv_channels, message_length, growth_rate)
    image = jax.random.uniform(ki, (B, in_channels, H, W), jnp.float32)

    out = jax.jit(extractor_forward)(params, image)
    jax.block_until_ready(out)
    assert out.shape == (B, message_length), out.shape
    print("KERNEL_OK")
</pallas_src>

<mosaic_0001>
module attributes {stable_mosaic.version = 11 : i64} {
  func.func @_extractor_kernel(%arg0: i32, %arg1: memref<1x8x1024xf32, #tpu.memory_space<vmem>>, %arg2: memref<8x72xf32, #tpu.memory_space<vmem>>, %arg3: memref<8x1xf32, #tpu.memory_space<vmem>>, %arg4: memref<8x1xf32, #tpu.memory_space<vmem>>, %arg5: memref<8x72xf32, #tpu.memory_space<vmem>>, %arg6: memref<8x1xf32, #tpu.memory_space<vmem>>, %arg7: memref<8x1xf32, #tpu.memory_space<vmem>>, %arg8: memref<8x144xf32, #tpu.memory_space<vmem>>, %arg9: memref<8x1xf32, #tpu.memory_space<vmem>>, %arg10: memref<8x1xf32, #tpu.memory_space<vmem>>, %arg11: memref<8x72xf32, #tpu.memory_space<vmem>>, %arg12: memref<8x1xf32, #tpu.memory_space<vmem>>, %arg13: memref<8x1xf32, #tpu.memory_space<vmem>>, %arg14: memref<8x144xf32, #tpu.memory_space<vmem>>, %arg15: memref<8x1xf32, #tpu.memory_space<vmem>>, %arg16: memref<8x1xf32, #tpu.memory_space<vmem>>, %arg17: memref<8x72xf32, #tpu.memory_space<vmem>>, %arg18: memref<8x1xf32, #tpu.memory_space<vmem>>, %arg19: memref<8x1xf32, #tpu.memory_space<vmem>>, %arg20: memref<8x144xf32, #tpu.memory_space<vmem>>, %arg21: memref<8x1xf32, #tpu.memory_space<vmem>>, %arg22: memref<8x1xf32, #tpu.memory_space<vmem>>, %arg23: memref<16x72xf32, #tpu.memory_space<vmem>>, %arg24: memref<16x1xf32, #tpu.memory_space<vmem>>, %arg25: memref<16x1xf32, #tpu.memory_space<vmem>>, %arg26: memref<1024x256xf32, #tpu.memory_space<vmem>>, %arg27: memref<256x64xf32, #tpu.memory_space<vmem>>, %arg28: memref<1x16x1xf32, #tpu.memory_space<vmem>>) attributes {dimension_semantics = [#tpu.dimension_semantics<parallel>], iteration_bounds = array<i64: 2>, scalar_prefetch = 0 : i64, scratch_operands = 0 : i64, tpu.core_type = #tpu.core_type<tc>, window_params = [{transform_indices = @transform_0, window_bounds = array<i64: 1, 8, 1024>}, {pipeline_mode = #tpu.pipeline_mode<synchronous>, transform_indices = @transform_1, window_bounds = array<i64: 8, 72>}, {pipeline_mode = #tpu.pipeline_mode<synchronous>, transform_indices = @transform_2, window_bounds = array<i64: 8, 1>}, {pipeline_mode = #tpu.pipeline_mode<synchronous>, transform_indices = @transform_3, window_bounds = array<i64: 8, 1>}, {pipeline_mode = #tpu.pipeline_mode<synchronous>, transform_indices = @transform_4, window_bounds = array<i64: 8, 72>}, {pipeline_mode = #tpu.pipeline_mode<synchronous>, transform_indices = @transform_5, window_bounds = array<i64: 8, 1>}, {pipeline_mode = #tpu.pipeline_mode<synchronous>, transform_indices = @transform_6, window_bounds = array<i64: 8, 1>}, {pipeline_mode = #tpu.pipeline_mode<synchronous>, transform_indices = @transform_7, window_bounds = array<i64: 8, 144>}, {pipeline_mode = #tpu.pipeline_mode<synchronous>, transform_indices = @transform_8, window_bounds = array<i64: 8, 1>}, {pipeline_mode = #tpu.pipeline_mode<synchronous>, transform_indices = @transform_9, window_bounds = array<i64: 8, 1>}, {pipeline_mode = #tpu.pipeline_mode<synchronous>, transform_indices = @transform_10, window_bounds = array<i64: 8, 72>}, {pipeline_mode = #tpu.pipeline_mode<synchronous>, transform_indices = @transform_11, window_bounds = array<i64: 8, 1>}, {pipeline_mode = #tpu.pipeline_mode<synchronous>, transform_indices = @transform_12, window_bounds = array<i64: 8, 1>}, {pipeline_mode = #tpu.pipeline_mode<synchronous>, transform_indices = @transform_13, window_bounds = array<i64: 8, 144>}, {pipeline_mode = #tpu.pipeline_mode<synchronous>, transform_indices = @transform_14, window_bounds = array<i64: 8, 1>}, {pipeline_mode = #tpu.pipeline_mode<synchronous>, transform_indices = @transform_15, window_bounds = array<i64: 8, 1>}, {pipeline_mode = #tpu.pipeline_mode<synchronous>, transform_indices = @transform_16, window_bounds = array<i64: 8, 72>}, {pipeline_mode = #tpu.pipeline_mode<synchronous>, transform_indices = @transform_17, window_bounds = array<i64: 8, 1>}, {pipeline_mode = #tpu.pipeline_mode<synchronous>, transform_indices = @transform_18, window_bounds = array<i64: 8, 1>}, {pipeline_mode = #tpu.pipeline_mode<synchronous>, transform_indices = @transform_19, window_bounds = array<i64: 8, 144>}, {pipeline_mode = #tpu.pipeline_mode<synchronous>, transform_indices = @transform_20, window_bounds = array<i64: 8, 1>}, {pipeline_mode = #tpu.pipeline_mode<synchronous>, transform_indices = @transform_21, window_bounds = array<i64: 8, 1>}, {pipeline_mode = #tpu.pipeline_mode<synchronous>, transform_indices = @transform_22, window_bounds = array<i64: 16, 72>}, {pipeline_mode = #tpu.pipeline_mode<synchronous>, transform_indices = @transform_23, window_bounds = array<i64: 16, 1>}, {pipeline_mode = #tpu.pipeline_mode<synchronous>, transform_indices = @transform_24, window_bounds = array<i64: 16, 1>}, {pipeline_mode = #tpu.pipeline_mode<synchronous>, transform_indices = @transform_25, window_bounds = array<i64: 1024, 256>}, {pipeline_mode = #tpu.pipeline_mode<synchronous>, transform_indices = @transform_26, window_bounds = array<i64: 256, 64>}, {transform_indices = @transform_27, window_bounds = array<i64: 1, 16, 1>}]} {
    %c0 = arith.constant 0 : index
    %c0_0 = arith.constant 0 : index
    %c0_1 = arith.constant 0 : index
    %0 = vector.load %arg1[%c0, %c0_0, %c0_1] : memref<1x8x1024xf32, #tpu.memory_space<vmem>>, vector<1x8x1024xf32>
    %1 = vector.shape_cast %0 : vector<1x8x1024xf32> to vector<8x1024xf32>
    %2 = tpu.iota {dimensions = array<i32: 1>} : vector<1x1024xi32>
    %c32_i32 = arith.constant 32 : i32
    %c0_i32 = arith.constant 0 : i32
    %3 = arith.cmpi eq, %c32_i32, %c0_i32 : i32
    %c1_i32 = arith.constant 1 : i32
    %4 = arith.select %3, %c1_i32, %c32_i32 : i32
    %5 = vector.broadcast %4 : i32 to vector<1x1024xi32>
    %6 = arith.remsi %2, %5 : vector<1x1024xi32>
    %c0_i32_2 = arith.constant 0 : i32
    %7 = vector.broadcast %c0_i32_2 : i32 to vector<1x1024xi32>
    %8 = arith.cmpi ne, %6, %7 : vector<1x1024xi32>
    %c0_i32_3 = arith.constant 0 : i32
    %9 = vector.broadcast %c0_i32_3 : i32 to vector<1x1024xi32>
    %10 = arith.cmpi slt, %6, %9 : vector<1x1024xi32>
    %c0_i32_4 = arith.constant 0 : i32
    %11 = arith.cmpi slt, %4, %c0_i32_4 : i32
    %12 = vector.broadcast %11 : i1 to vector<1x1024xi1>
    %13 = vector.broadcast %12 : vector<1x1024xi1> to vector<1x1024xi1>
    %14 = arith.xori %10, %13 : vector<1x1024xi1>
    %15 = arith.andi %14, %8 : vector<1x1024xi1>
    %16 = vector.broadcast %4 : i32 to vector<1x1024xi32>
    %17 = arith.addi %6, %16 : vector<1x1024xi32>
    %18 = arith.select %15, %17, %6 : vector<1x1024xi1>, vector<1x1024xi32>
    %cst = arith.constant 0.000000e+00 : f32
    %19 = vector.broadcast %cst : f32 to vector<8x33xf32>
    %20 = vector.extract_strided_slice %1 {offsets = [0, 0], sizes = [8, 991], strides = [1, 1]} : vector<8x1024xf32> to vector<8x991xf32>
    %21 = tpu.concatenate %19, %20 in 1 : vector<8x33xf32>, vector<8x991xf32> -> vector<8x1024xf32>
    %c-1_i32 = arith.constant -1 : i32
    %22 = vector.broadcast %c-1_i32 : i32 to vector<1x1024xi32>
    %23 = arith.addi %18, %22 : vector<1x1024xi32>
    %c0_i32_5 = arith.constant 0 : i32
    %24 = vector.broadcast %c0_i32_5 : i32 to vector<1x1024xi32>
    %25 = arith.cmpi sge, %23, %24 : vector<1x1024xi32>
    %c-1_i32_6 = arith.constant -1 : i32
    %26 = vector.broadcast %c-1_i32_6 : i32 to vector<1x1024xi32>
    %27 = arith.addi %18, %26 : vector<1x1024xi32>
    %c32_i32_7 = arith.constant 32 : i32
    %28 = vector.broadcast %c32_i32_7 : i32 to vector<1x1024xi32>
    %29 = arith.cmpi slt, %27, %28 : vector<1x1024xi32>
    %30 = arith.andi %25, %29 : vector<1x1024xi1>
    %cst_8 = arith.constant 0.000000e+00 : f32
    %31 = vector.shape_cast %30 : vector<1x1024xi1> to vector<1x1024xi1>
    %32 = vector.broadcast %31 : vector<1x1024xi1> to vector<8x1024xi1>
    %33 = vector.broadcast %cst_8 : f32 to vector<8x1024xf32>
    %34 = arith.select %32, %21, %33 : vector<8x1024xi1>, vector<8x1024xf32>
    %cst_9 = arith.constant 0.000000e+00 : f32
    %35 = vector.broadcast %cst_9 : f32 to vector<8x32xf32>
    %36 = vector.extract_strided_slice %1 {offsets = [0, 0], sizes = [8, 992], strides = [1, 1]} : vector<8x1024xf32> to vector<8x992xf32>
    %37 = tpu.concatenate %35, %36 in 1 : vector<8x32xf32>, vector<8x992xf32> -> vector<8x1024xf32>
    %cst_10 = arith.constant 0.000000e+00 : f32
    %38 = vector.broadcast %cst_10 : f32 to vector<8x31xf32>
    %39 = vector.extract_strided_slice %1 {offsets = [0, 0], sizes = [8, 993], strides = [1, 1]} : vector<8x1024xf32> to vector<8x993xf32>
    %40 = tpu.concatenate %38, %39 in 1 : vector<8x31xf32>, vector<8x993xf32> -> vector<8x1024xf32>
    %c1_i32_11 = arith.constant 1 : i32
    %41 = vector.broadcast %c1_i32_11 : i32 to vector<1x1024xi32>
    %42 = arith.addi %18, %41 : vector<1x1024xi32>
    %c0_i32_12 = arith.constant 0 : i32
    %43 = vector.broadcast %c0_i32_12 : i32 to vector<1x1024xi32>
    %44 = arith.cmpi sge, %42, %43 : vector<1x1024xi32>
    %c1_i32_13 = arith.constant 1 : i32
    %45 = vector.broadcast %c1_i32_13 : i32 to vector<1x1024xi32>
    %46 = arith.addi %18, %45 : vector<1x1024xi32>
    %c32_i32_14 = arith.constant 32 : i32
    %47 = vector.broadcast %c32_i32_14 : i32 to vector<1x1024xi32>
    %48 = arith.cmpi slt, %46, %47 : vector<1x1024xi32>
    %49 = arith.andi %44, %48 : vector<1x1024xi1>
    %cst_15 = arith.constant 0.000000e+00 : f32
    %50 = vector.shape_cast %49 : vector<1x1024xi1> to vector<1x1024xi1>
    %51 = vector.broadcast %50 : vector<1x1024xi1> to vector<8x1024xi1>
    %52 = vector.broadcast %cst_15 : f32 to vector<8x1024xf32>
    %53 = arith.select %51, %40, %52 : vector<8x1024xi1>, vector<8x1024xf32>
    %cst_16 = arith.constant 0.000000e+00 : f32
    %54 = vector.broadcast %cst_16 : f32 to vector<8x1xf32>
    %55 = vector.extract_strided_slice %1 {offsets = [0, 0], sizes = [8, 1023], strides = [1, 1]} : vector<8x1024xf32> to vector<8x1023xf32>
    %56 = tpu.concatenate %54, %55 in 1 : vector<8x1xf32>, vector<8x1023xf32> -> vector<8x1024xf32>
    %c-1_i32_17 = arith.constant -1 : i32
    %57 = vector.broadcast %c-1_i32_17 : i32 to vector<1x1024xi32>
    %58 = arith.addi %18, %57 : vector<1x1024xi32>
    %c0_i32_18 = arith.constant 0 : i32
    %59 = vector.broadcast %c0_i32_18 : i32 to vector<1x1024xi32>
    %60 = arith.cmpi sge, %58, %59 : vector<1x1024xi32>
    %c-1_i32_19 = arith.constant -1 : i32
    %61 = vector.broadcast %c-1_i32_19 : i32 to vector<1x1024xi32>
    %62 = arith.addi %18, %61 : vector<1x1024xi32>
    %c32_i32_20 = arith.constant 32 : i32
    %63 = vector.broadcast %c32_i32_20 : i32 to vector<1x1024xi32>
    %64 = arith.cmpi slt, %62, %63 : vector<1x1024xi32>
    %65 = arith.andi %60, %64 : vector<1x1024xi1>
    %cst_21 = arith.constant 0.000000e+00 : f32
    %66 = vector.shape_cast %65 : vector<1x1024xi1> to vector<1x1024xi1>
    %67 = vector.broadcast %66 : vector<1x1024xi1> to vector<8x1024xi1>
    %68 = vector.broadcast %cst_21 : f32 to vector<8x1024xf32>
    %69 = arith.select %67, %56, %68 : vector<8x1024xi1>, vector<8x1024xf32>
    %70 = vector.extract_strided_slice %1 {offsets = [0, 1], sizes = [8, 1023], strides = [1, 1]} : vector<8x1024xf32> to vector<8x1023xf32>
    %cst_22 = arith.constant 0.000000e+00 : f32
    %71 = vector.broadcast %cst_22 : f32 to vector<8x1xf32>
    %72 = tpu.concatenate %70, %71 in 1 : vector<8x1023xf32>, vector<8x1xf32> -> vector<8x1024xf32>
    %c1_i32_23 = arith.constant 1 : i32
    %73 = vector.broadcast %c1_i32_23 : i32 to vector<1x1024xi32>
    %74 = arith.addi %18, %73 : vector<1x1024xi32>
    %c0_i32_24 = arith.constant 0 : i32
    %75 = vector.broadcast %c0_i32_24 : i32 to vector<1x1024xi32>
    %76 = arith.cmpi sge, %74, %75 : vector<1x1024xi32>
    %c1_i32_25 = arith.constant 1 : i32
    %77 = vector.broadcast %c1_i32_25 : i32 to vector<1x1024xi32>
    %78 = arith.addi %18, %77 : vector<1x1024xi32>
    %c32_i32_26 = arith.constant 32 : i32
    %79 = vector.broadcast %c32_i32_26 : i32 to vector<1x1024xi32>
    %80 = arith.cmpi slt, %78, %79 : vector<1x1024xi32>
    %81 = arith.andi %76, %80 : vector<1x1024xi1>
    %cst_27 = arith.constant 0.000000e+00 : f32
    %82 = vector.shape_cast %81 : vector<1x1024xi1> to vector<1x1024xi1>
    %83 = vector.broadcast %82 : vector<1x1024xi1> to vector<8x1024xi1>
    %84 = vector.broadcast %cst_27 : f32 to vector<8x1024xf32>
    %85 = arith.select %83, %72, %84 : vector<8x1024xi1>, vector<8x1024xf32>
    %86 = vector.extract_strided_slice %1 {offsets = [0, 31], sizes = [8, 993], strides = [1, 1]} : vector<8x1024xf32> to vector<8x993xf32>
    %cst_28 = arith.constant 0.000000e+00 : f32
    %87 = vector.broadcast %cst_28 : f32 to vector<8x31xf32>
    %88 = tpu.concatenate %86, %87 in 1 : vector<8x993xf32>, vector<8x31xf32> -> vector<8x1024xf32>
    %c-1_i32_29 = arith.constant -1 : i32
    %89 = vector.broadcast %c-1_i32_29 : i32 to vector<1x1024xi32>
    %90 = arith.addi %18, %89 : vector<1x1024xi32>
    %c0_i32_30 = arith.constant 0 : i32
    %91 = vector.broadcast %c0_i32_30 : i32 to vector<1x1024xi32>
    %92 = arith.cmpi sge, %90, %91 : vector<1x1024xi32>
    %c-1_i32_31 = arith.constant -1 : i32
    %93 = vector.broadcast %c-1_i32_31 : i32 to vector<1x1024xi32>
    %94 = arith.addi %18, %93 : vector<1x1024xi32>
    %c32_i32_32 = arith.constant 32 : i32
    %95 = vector.broadcast %c32_i32_32 : i32 to vector<1x1024xi32>
    %96 = arith.cmpi slt, %94, %95 : vector<1x1024xi32>
    %97 = arith.andi %92, %96 : vector<1x1024xi1>
    %cst_33 = arith.constant 0.000000e+00 : f32
    %98 = vector.shape_cast %97 : vector<1x1024xi1> to vector<1x1024xi1>
    %99 = vector.broadcast %98 : vector<1x1024xi1> to vector<8x1024xi1>
    %100 = vector.broadcast %cst_33 : f32 to vector<8x1024xf32>
    %101 = arith.select %99, %88, %100 : vector<8x1024xi1>, vector<8x1024xf32>
    %102 = vector.extract_strided_slice %1 {offsets = [0, 32], sizes = [8, 992], strides = [1, 1]} : vector<8x1024xf32> to vector<8x992xf32>
    %cst_34 = arith.constant 0.000000e+00 : f32
    %103 = vector.broadcast %cst_34 : f32 to vector<8x32xf32>
    %104 = tpu.concatenate %102, %103 in 1 : vector<8x992xf32>, vector<8x32xf32> -> vector<8x1024xf32>
    %105 = vector.extract_strided_slice %1 {offsets = [0, 33], sizes = [8, 991], strides = [1, 1]} : vector<8x1024xf32> to vector<8x991xf32>
    %cst_35 = arith.constant 0.000000e+00 : f32
    %106 = vector.broadcast %cst_35 : f32 to vector<8x33xf32>
    %107 = tpu.concatenate %105, %106 in 1 : vector<8x991xf32>, vector<8x33xf32> -> vector<8x1024xf32>
    %c1_i32_36 = arith.constant 1 : i32
    %108 = vector.broadcast %c1_i32_36 : i32 to vector<1x1024xi32>
    %109 = arith.addi %18, %108 : vector<1x1024xi32>
    %c0_i32_37 = arith.constant 0 : i32
    %110 = vector.broadcast %c0_i32_37 : i32 to vector<1x1024xi32>
    %111 = arith.cmpi sge, %109, %110 : vector<1x1024xi32>
    %c1_i32_38 = arith.constant 1 : i32
    %112 = vector.broadcast %c1_i32_38 : i32 to vector<1x1024xi32>
    %113 = arith.addi %18, %112 : vector<1x1024xi32>
    %c32_i32_39 = arith.constant 32 : i32
    %114 = vector.broadcast %c32_i32_39 : i32 to vector<1x1024xi32>
    %115 = arith.cmpi slt, %113, %114 : vector<1x1024xi32>
    %116 = arith.andi %111, %115 : vector<1x1024xi1>
    %cst_40 = arith.constant 0.000000e+00 : f32
    %117 = vector.shape_cast %116 : vector<1x1024xi1> to vector<1x1024xi1>
    %118 = vector.broadcast %117 : vector<1x1024xi1> to vector<8x1024xi1>
    %119 = vector.broadcast %cst_40 : f32 to vector<8x1024xf32>
    %120 = arith.select %118, %107, %119 : vector<8x1024xi1>, vector<8x1024xf32>
    %121 = tpu.concatenate %34, %37, %53, %69, %1, %85, %101, %104, %120 in 0 : vector<8x1024xf32>, vector<8x1024xf32>, vector<8x1024xf32>, vector<8x1024xf32>, vector<8x1024xf32>, vector<8x1024xf32>, vector<8x1024xf32>, vector<8x1024xf32>, vector<8x1024xf32> -> vector<72x1024xf32>
    %c0_41 = arith.constant 0 : index
    %c0_42 = arith.constant 0 : index
    %122 = vector.load %arg2[%c0_41, %c0_42] : memref<8x72xf32, #tpu.memory_space<vmem>>, vector<8x72xf32>
    %cst_43 = arith.constant dense<0.000000e+00> : vector<8x1024xf32>
    %123 = tpu.matmul %122, %121, %cst_43 {dimension_numbers = #tpu.dot_dimension_numbers<[1], [0], [0], [1], [0, 0, 1, 1], [], []>} : vector<8x72xf32>, vector<72x1024xf32>, vector<8x1024xf32> -> vector<8x1024xf32>
    %c0_44 = arith.constant 0 : index
    %c0_45 = arith.constant 0 : index
    %124 = vector.load %arg3[%c0_44, %c0_45] : memref<8x1xf32, #tpu.memory_space<vmem>>, vector<8x1xf32>
    %125 = vector.broadcast %124 : vector<8x1xf32> to vector<8x1024xf32>
    %126 = arith.mulf %123, %125 : vector<8x1024xf32>
    %c0_46 = arith.constant 0 : index
    %c0_47 = arith.constant 0 : index
    %127 = vector.load %arg4[%c0_46, %c0_47] : memref<8x1xf32, #tpu.memory_space<vmem>>, vector<8x1xf32>
    %128 = vector.broadcast %127 : vector<8x1xf32> to vector<8x1024xf32>
    %129 = arith.addf %126, %128 : vector<8x1024xf32>
    %cst_48 = arith.constant 0.000000e+00 : f32
    %130 = vector.broadcast %cst_48 : f32 to vector<8x1024xf32>
    %131 = arith.cmpf oge, %129, %130 : vector<8x1024xf32>
    %cst_49 = arith.constant 0.00999999977 : f32
    %132 = vector.broadcast %cst_49 : f32 to vector<8x1024xf32>
    %133 = arith.mulf %132, %129 : vector<8x1024xf32>
    %134 = arith.select %131, %129, %133 : vector<8x1024xi1>, vector<8x1024xf32>
    %135 = tpu.iota {dimensions = array<i32: 1>} : vector<1x1024xi32>
    %c32_i32_50 = arith.constant 32 : i32
    %c0_i32_51 = arith.constant 0 : i32
    %136 = arith.cmpi eq, %c32_i32_50, %c0_i32_51 : i32
    %c1_i32_52 = arith.constant 1 : i32
    %137 = arith.select %136, %c1_i32_52, %c32_i32_50 : i32
    %138 = vector.broadcast %137 : i32 to vector<1x1024xi32>
    %139 = arith.remsi %135, %138 : vector<1x1024xi32>
    %c0_i32_53 = arith.constant 0 : i32
    %140 = vector.broadcast %c0_i32_53 : i32 to vector<1x1024xi32>
    %141 = arith.cmpi ne, %139, %140 : vector<1x1024xi32>
    %c0_i32_54 = arith.constant 0 : i32
    %142 = vector.broadcast %c0_i32_54 : i32 to vector<1x1024xi32>
    %143 = arith.cmpi slt, %139, %142 : vector<1x1024xi32>
    %c0_i32_55 = arith.constant 0 : i32
    %144 = arith.cmpi slt, %137, %c0_i32_55 : i32
    %145 = vector.broadcast %144 : i1 to vector<1x1024xi1>
    %146 = vector.broadcast %145 : vector<1x1024xi1> to vector<1x1024xi1>
    %147 = arith.xori %143, %146 : vector<1x1024xi1>
    %148 = arith.andi %147, %141 : vector<1x1024xi1>
    %149 = vector.broadcast %137 : i32 to vector<1x1024xi32>
    %150 = arith.addi %139, %149 : vector<1x1024xi32>
    %151 = arith.select %148, %150, %139 : vector<1x1024xi1>, vector<1x1024xi32>
    %cst_56 = arith.constant 0.000000e+00 : f32
    %152 = vector.broadcast %cst_56 : f32 to vector<8x33xf32>
    %153 = vector.extract_strided_slice %134 {offsets = [0, 0], sizes = [8, 991], strides = [1, 1]} : vector<8x1024xf32> to vector<8x991xf32>
    %154 = tpu.concatenate %152, %153 in 1 : vector<8x33xf32>, vector<8x991xf32> -> vector<8x1024xf32>
    %c-1_i32_57 = arith.constant -1 : i32
    %155 = vector.broadcast %c-1_i32_57 : i32 to vector<1x1024xi32>
    %156 = arith.addi %151, %155 : vector<1x1024xi32>
    %c0_i32_58 = arith.constant 0 : i32
    %157 = vector.broadcast %c0_i32_58 : i32 to vector<1x1024xi32>
    %158 = arith.cmpi sge, %156, %157 : vector<1x1024xi32>
    %c-1_i32_59 = arith.constant -1 : i32
    %159 = vector.broadcast %c-1_i32_59 : i32 to vector<1x1024xi32>
    %160 = arith.addi %151, %159 : vector<1x1024xi32>
    %c32_i32_60 = arith.constant 32 : i32
    %161 = vector.broadcast %c32_i32_60 : i32 to vector<1x1024xi32>
    %162 = arith.cmpi slt, %160, %161 : vector<1x1024xi32>
    %163 = arith.andi %158, %162 : vector<1x1024xi1>
    %cst_61 = arith.constant 0.000000e+00 : f32
    %164 = vector.shape_cast %163 : vector<1x1024xi1> to vector<1x1024xi1>
    %165 = vector.broadcast %164 : vector<1x1024xi1> to vector<8x1024xi1>
    %166 = vector.broadcast %cst_61 : f32 to vector<8x1024xf32>
    %167 = arith.select %165, %154, %166 : vector<8x1024xi1>, vector<8x1024xf32>
    %cst_62 = arith.constant 0.000000e+00 : f32
    %168 = vector.broadcast %cst_62 : f32 to vector<8x32xf32>
    %169 = vector.extract_strided_slice %134 {offsets = [0, 0], sizes = [8, 992], strides = [1, 1]} : vector<8x1024xf32> to vector<8x992xf32>
    %170 = tpu.concatenate %168, %169 in 1 : vector<8x32xf32>, vector<8x992xf32> -> vector<8x1024xf32>
    %cst_63 = arith.constant 0.000000e+00 : f32
    %171 = vector.broadcast %cst_63 : f32 to vector<8x31xf32>
    %172 = vector.extract_strided_slice %134 {offsets = [0, 0], sizes = [8, 993], strides = [1, 1]} : vector<8x1024xf32> to vector<8x993xf32>
    %173 = tpu.concatenate %171, %172 in 1 : vector<8x31xf32>, vector<8x993xf32> -> vector<8x1024xf32>
    %c1_i32_64 = arith.constant 1 : i32
    %174 = vector.broadcast %c1_i32_64 : i32 to vector<1x1024xi32>
    %175 = arith.addi %151, %174 : vector<1x1024xi32>
    %c0_i32_65 = arith.constant 0 : i32
    %176 = vector.broadcast %c0_i32_65 : i32 to vector<1x1024xi32>
    %177 = arith.cmpi sge, %175, %176 : vector<1x1024xi32>
    %c1_i32_66 = arith.constant 1 : i32
    %178 = vector.broadcast %c1_i32_66 : i32 to vector<1x1024xi32>
    %179 = arith.addi %151, %178 : vector<1x1024xi32>
    %c32_i32_67 = arith.constant 32 : i32
    %180 = vector.broadcast %c32_i32_67 : i32 to vector<1x1024xi32>
    %181 = arith.cmpi slt, %179, %180 : vector<1x1024xi32>
    %182 = arith.andi %177, %181 : vector<1x1024xi1>
    %cst_68 = arith.constant 0.000000e+00 : f32
    %183 = vector.shape_cast %182 : vector<1x1024xi1> to vector<1x1024xi1>
    %184 = vector.broadcast %183 : vector<1x1024xi1> to vector<8x1024xi1>
    %185 = vector.broadcast %cst_68 : f32 to vector<8x1024xf32>
    %186 = arith.select %184, %173, %185 : vector<8x1024xi1>, vector<8x1024xf32>
    %cst_69 = arith.constant 0.000000e+00 : f32
    %187 = vector.broadcast %cst_69 : f32 to vector<8x1xf32>
    %188 = vector.extract_strided_slice %134 {offsets = [0, 0], sizes = [8, 1023], strides = [1, 1]} : vector<8x1024xf32> to vector<8x1023xf32>
    %189 = tpu.concatenate %187, %188 in 1 : vector<8x1xf32>, vector<8x1023xf32> -> vector<8x1024xf32>
    %c-1_i32_70 = arith.constant -1 : i32
    %190 = vector.broadcast %c-1_i32_70 : i32 to vector<1x1024xi32>
    %191 = arith.addi %151, %190 : vector<1x1024xi32>
    %c0_i32_71 = arith.constant 0 : i32
    %192 = vector.broadcast %c0_i32_71 : i32 to vector<1x1024xi32>
    %193 = arith.cmpi sge, %191, %192 : vector<1x1024xi32>
    %c-1_i32_72 = arith.constant -1 : i32
    %194 = vector.broadcast %c-1_i32_72 : i32 to vector<1x1024xi32>
    %195 = arith.addi %151, %194 : vector<1x1024xi32>
    %c32_i32_73 = arith.constant 32 : i32
    %196 = vector.broadcast %c32_i32_73 : i32 to vector<1x1024xi32>
    %197 = arith.cmpi slt, %195, %196 : vector<1x1024xi32>
    %198 = arith.andi %193, %197 : vector<1x1024xi1>
    %cst_74 = arith.constant 0.000000e+00 : f32
    %199 = vector.shape_cast %198 : vector<1x1024xi1> to vector<1x1024xi1>
    %200 = vector.broadcast %199 : vector<1x1024xi1> to vector<8x1024xi1>
    %201 = vector.broadcast %cst_74 : f32 to vector<8x1024xf32>
    %202 = arith.select %200, %189, %201 : vector<8x1024xi1>, vector<8x1024xf32>
    %203 = vector.extract_strided_slice %134 {offsets = [0, 1], sizes = [8, 1023], strides = [1, 1]} : vector<8x1024xf32> to vector<8x1023xf32>
    %cst_75 = arith.constant 0.000000e+00 : f32
    %204 = vector.broadcast %cst_75 : f32 to vector<8x1xf32>
    %205 = tpu.concatenate %203, %204 in 1 : vector<8x1023xf32>, vector<8x1xf32> -> vector<8x1024xf32>
    %c1_i32_76 = arith.constant 1 : i32
    %206 = vector.broadcast %c1_i32_76 : i32 to vector<1x1024xi32>
    %207 = arith.addi %151, %206 : vector<1x1024xi32>
    %c0_i32_77 = arith.constant 0 : i32
    %208 = vector.broadcast %c0_i32_77 : i32 to vector<1x1024xi32>
    %209 = arith.cmpi sge, %207, %208 : vector<1x1024xi32>
    %c1_i32_78 = arith.constant 1 : i32
    %210 = vector.broadcast %c1_i32_78 : i32 to vector<1x1024xi32>
    %211 = arith.addi %151, %210 : vector<1x1024xi32>
    %c32_i32_79 = arith.constant 32 : i32
    %212 = vector.broadcast %c32_i32_79 : i32 to vector<1x1024xi32>
    %213 = arith.cmpi slt, %211, %212 : vector<1x1024xi32>
    %214 = arith.andi %209, %213 : vector<1x1024xi1>
    %cst_80 = arith.constant 0.000000e+00 : f32
    %215 = vector.shape_cast %214 : vector<1x1024xi1> to vector<1x1024xi1>
    %216 = vector.broadcast %215 : vector<1x1024xi1> to vector<8x1024xi1>
    %217 = vector.broadcast %cst_80 : f32 to vector<8x1024xf32>
    %218 = arith.select %216, %205, %217 : vector<8x1024xi1>, vector<8x1024xf32>
    %219 = vector.extract_strided_slice %134 {offsets = [0, 31], sizes = [8, 993], strides = [1, 1]} : vector<8x1024xf32> to vector<8x993xf32>
    %cst_81 = arith.constant 0.000000e+00 : f32
    %220 = vector.broadcast %cst_81 : f32 to vector<8x31xf32>
    %221 = tpu.concatenate %219, %220 in 1 : vector<8x993xf32>, vector<8x31xf32> -> vector<8x1024xf32>
    %c-1_i32_82 = arith.constant -1 : i32
    %222 = vector.broadcast %c-1_i32_82 : i32 to vector<1x1024xi32>
    %223 = arith.addi %151, %222 : vector<1x1024xi32>
    %c0_i32_83 = arith.constant 0 : i32
    %224 = vector.broadcast %c0_i32_83 : i32 to vector<1x1024xi32>
    %225 = arith.cmpi sge, %223, %224 : vector<1x1024xi32>
    %c-1_i32_84 = arith.constant -1 : i32
    %226 = vector.broadcast %c-1_i32_84 : i32 to vector<1x1024xi32>
    %227 = arith.addi %151, %226 : vector<1x1024xi32>
    %c32_i32_85 = arith.constant 32 : i32
    %228 = vector.broadcast %c32_i32_85 : i32 to vector<1x1024xi32>
    %229 = arith.cmpi slt, %227, %228 : vector<1x1024xi32>
    %230 = arith.andi %225, %229 : vector<1x1024xi1>
    %cst_86 = arith.constant 0.000000e+00 : f32
    %231 = vector.shape_cast %230 : vector<1x1024xi1> to vector<1x1024xi1>
    %232 = vector.broadcast %231 : vector<1x1024xi1> to vector<8x1024xi1>
    %233 = vector.broadcast %cst_86 : f32 to vector<8x1024xf32>
    %234 = arith.select %232, %221, %233 : vector<8x1024xi1>, vector<8x1024xf32>
    %235 = vector.extract_strided_slice %134 {offsets = [0, 32], sizes = [8, 992], strides = [1, 1]} : vector<8x1024xf32> to vector<8x992xf32>
    %cst_87 = arith.constant 0.000000e+00 : f32
    %236 = vector.broadcast %cst_87 : f32 to vector<8x32xf32>
    %237 = tpu.concatenate %235, %236 in 1 : vector<8x992xf32>, vector<8x32xf32> -> vector<8x1024xf32>
    %238 = vector.extract_strided_slice %134 {offsets = [0, 33], sizes = [8, 991], strides = [1, 1]} : vector<8x1024xf32> to vector<8x991xf32>
    %cst_88 = arith.constant 0.000000e+00 : f32
    %239 = vector.broadcast %cst_88 : f32 to vector<8x33xf32>
    %240 = tpu.concatenate %238, %239 in 1 : vector<8x991xf32>, vector<8x33xf32> -> vector<8x1024xf32>
    %c1_i32_89 = arith.constant 1 : i32
    %241 = vector.broadcast %c1_i32_89 : i32 to vector<1x1024xi32>
    %242 = arith.addi %151, %241 : vector<1x1024xi32>
    %c0_i32_90 = arith.constant 0 : i32
    %243 = vector.broadcast %c0_i32_90 : i32 to vector<1x1024xi32>
    %244 = arith.cmpi sge, %242, %243 : vector<1x1024xi32>
    %c1_i32_91 = arith.constant 1 : i32
    %245 = vector.broadcast %c1_i32_91 : i32 to vector<1x1024xi32>
    %246 = arith.addi %151, %245 : vector<1x1024xi32>
    %c32_i32_92 = arith.constant 32 : i32
    %247 = vector.broadcast %c32_i32_92 : i32 to vector<1x1024xi32>
    %248 = arith.cmpi slt, %246, %247 : vector<1x1024xi32>
    %249 = arith.andi %244, %248 : vector<1x1024xi1>
    %cst_93 = arith.constant 0.000000e+00 : f32
    %250 = vector.shape_cast %249 : vector<1x1024xi1> to vector<1x1024xi1>
    %251 = vector.broadcast %250 : vector<1x1024xi1> to vector<8x1024xi1>
    %252 = vector.broadcast %cst_93 : f32 to vector<8x1024xf32>
    %253 = arith.select %251, %240, %252 : vector<8x1024xi1>, vector<8x1024xf32>
    %254 = tpu.concatenate %167, %170, %186, %202, %134, %218, %234, %237, %253 in 0 : vector<8x1024xf32>, vector<8x1024xf32>, vector<8x1024xf32>, vector<8x1024xf32>, vector<8x1024xf32>, vector<8x1024xf32>, vector<8x1024xf32>, vector<8x1024xf32>, vector<8x1024xf32> -> vector<72x1024xf32>
    %c0_94 = arith.constant 0 : index
    %c0_95 = arith.constant 0 : index
    %255 = vector.load %arg5[%c0_94, %c0_95] : memref<8x72xf32, #tpu.memory_space<vmem>>, vector<8x72xf32>
    %cst_96 = arith.constant dense<0.000000e+00> : vector<8x1024xf32>
    %256 = tpu.matmul %255, %254, %cst_96 {dimension_numbers = #tpu.dot_dimension_numbers<[1], [0], [0], [1], [0, 0, 1, 1], [], []>} : vector<8x72xf32>, vector<72x1024xf32>, vector<8x1024xf32> -> vector<8x1024xf32>
    %c0_97 = arith.constant 0 : index
    %c0_98 = arith.constant 0 : index
    %257 = vector.load %arg6[%c0_97, %c0_98] : memref<8x1xf32, #tpu.memory_space<vmem>>, vector<8x1xf32>
    %258 = vector.broadcast %257 : vector<8x1xf32> to vector<8x1024xf32>
    %259 = arith.mulf %256, %258 : vector<8x1024xf32>
    %c0_99 = arith.constant 0 : index
    %c0_100 = arith.constant 0 : index
    %260 = vector.load %arg7[%c0_99, %c0_100] : memref<8x1xf32, #tpu.memory_space<vmem>>, vector<8x1xf32>
    %261 = vector.broadcast %260 : vector<8x1xf32> to vector<8x1024xf32>
    %262 = arith.addf %259, %261 : vector<8x1024xf32>
    %cst_101 = arith.constant 0.000000e+00 : f32
    %263 = vector.broadcast %cst_101 : f32 to vector<8x1024xf32>
    %264 = arith.cmpf oge, %262, %263 : vector<8x1024xf32>
    %cst_102 = arith.constant 0.00999999977 : f32
    %265 = vector.broadcast %cst_102 : f32 to vector<8x1024xf32>
    %266 = arith.mulf %265, %262 : vector<8x1024xf32>
    %267 = arith.select %264, %262, %266 : vector<8x1024xi1>, vector<8x1024xf32>
    %268 = tpu.iota {dimensions = array<i32: 1>} : vector<1x1024xi32>
    %c32_i32_103 = arith.constant 32 : i32
    %c0_i32_104 = arith.constant 0 : i32
    %269 = arith.cmpi eq, %c32_i32_103, %c0_i32_104 : i32
    %c1_i32_105 = arith.constant 1 : i32
    %270 = arith.select %269, %c1_i32_105, %c32_i32_103 : i32
    %271 = vector.broadcast %270 : i32 to vector<1x1024xi32>
    %272 = arith.remsi %268, %271 : vector<1x1024xi32>
    %c0_i32_106 = arith.constant 0 : i32
    %273 = vector.broadcast %c0_i32_106 : i32 to vector<1x1024xi32>
    %274 = arith.cmpi ne, %272, %273 : vector<1x1024xi32>
    %c0_i32_107 = arith.constant 0 : i32
    %275 = vector.broadcast %c0_i32_107 : i32 to vector<1x1024xi32>
    %276 = arith.cmpi slt, %272, %275 : vector<1x1024xi32>
    %c0_i32_108 = arith.constant 0 : i32
    %277 = arith.cmpi slt, %270, %c0_i32_108 : i32
    %278 = vector.broadcast %277 : i1 to vector<1x1024xi1>
    %279 = vector.broadcast %278 : vector<1x1024xi1> to vector<1x1024xi1>
    %280 = arith.xori %276, %279 : vector<1x1024xi1>
    %281 = arith.andi %280, %274 : vector<1x1024xi1>
    %282 = vector.broadcast %270 : i32 to vector<1x1024xi32>
    %283 = arith.addi %272, %282 : vector<1x1024xi32>
    %284 = arith.select %281, %283, %272 : vector<1x1024xi1>, vector<1x1024xi32>
    %cst_109 = arith.constant 0.000000e+00 : f32
    %285 = vector.broadcast %cst_109 : f32 to vector<8x33xf32>
    %286 = vector.extract_strided_slice %134 {offsets = [0, 0], sizes = [8, 991], strides = [1, 1]} : vector<8x1024xf32> to vector<8x991xf32>
    %287 = tpu.concatenate %285, %286 in 1 : vector<8x33xf32>, vector<8x991xf32> -> vector<8x1024xf32>
    %c-1_i32_110 = arith.constant -1 : i32
    %288 = vector.broadcast %c-1_i32_110 : i32 to vector<1x1024xi32>
    %289 = arith.addi %284, %288 : vector<1x1024xi32>
    %c0_i32_111 = arith.constant 0 : i32
    %290 = vector.broadcast %c0_i32_111 : i32 to vector<1x1024xi32>
    %291 = arith.cmpi sge, %289, %290 : vector<1x1024xi32>
    %c-1_i32_112 = arith.constant -1 : i32
    %292 = vector.broadcast %c-1_i32_112 : i32 to vector<1x1024xi32>
    %293 = arith.addi %284, %292 : vector<1x1024xi32>
    %c32_i32_113 = arith.constant 32 : i32
    %294 = vector.broadcast %c32_i32_113 : i32 to vector<1x1024xi32>
    %295 = arith.cmpi slt, %293, %294 : vector<1x1024xi32>
    %296 = arith.andi %291, %295 : vector<1x1024xi1>
    %cst_114 = arith.constant 0.000000e+00 : f32
    %297 = vector.shape_cast %296 : vector<1x1024xi1> to vector<1x1024xi1>
    %298 = vector.broadcast %297 : vector<1x1024xi1> to vector<8x1024xi1>
    %299 = vector.broadcast %cst_114 : f32 to vector<8x1024xf32>
    %300 = arith.select %298, %287, %299 : vector<8x1024xi1>, vector<8x1024xf32>
    %cst_115 = arith.constant 0.000000e+00 : f32
    %301 = vector.broadcast %cst_115 : f32 to vector<8x33xf32>
    %302 = vector.extract_strided_slice %267 {offsets = [0, 0], sizes = [8, 991], strides = [1, 1]} : vector<8x1024xf32> to vector<8x991xf32>
    %303 = tpu.concatenate %301, %302 in 1 : vector<8x33xf32>, vector<8x991xf32> -> vector<8x1024xf32>
    %c-1_i32_116 = arith.constant -1 : i32
    %304 = vector.broadcast %c-1_i32_116 : i32 to vector<1x1024xi32>
    %305 = arith.addi %284, %304 : vector<1x1024xi32>
    %c0_i32_117 = arith.constant 0 : i32
    %306 = vector.broadcast %c0_i32_117 : i32 to vector<1x1024xi32>
    %307 = arith.cmpi sge, %305, %306 : vector<1x1024xi32>
    %c-1_i32_118 = arith.constant -1 : i32
    %308 = vector.broadcast %c-1_i32_118 : i32 to vector<1x1024xi32>
    %309 = arith.addi %284, %308 : vector<1x1024xi32>
    %c32_i32_119 = arith.constant 32 : i32
    %310 = vector.broadcast %c32_i32_119 : i32 to vector<1x1024xi32>
    %311 = arith.cmpi slt, %309, %310 : vector<1x1024xi32>
    %312 = arith.andi %307, %311 : vector<1x1024xi1>
    %cst_120 = arith.constant 0.000000e+00 : f32
    %313 = vector.shape_cast %312 : vector<1x1024xi1> to vector<1x1024xi1>
    %314 = vector.broadcast %313 : vector<1x1024xi1> to vector<8x1024xi1>
    %315 = vector.broadcast %cst_120 : f32 to vector<8x1024xf32>
    %316 = arith.select %314, %303, %315 : vector<8x1024xi1>, vector<8x1024xf32>
    %cst_121 = arith.constant 0.000000e+00 : f32
    %317 = vector.broadcast %cst_121 : f32 to vector<8x32xf32>
    %318 = vector.extract_strided_slice %134 {offsets = [0, 0], sizes = [8, 992], strides = [1, 1]} : vector<8x1024xf32> to vector<8x992xf32>
    %319 = tpu.concatenate %317, %318 in 1 : vector<8x32xf32>, vector<8x992xf32> -> vector<8x1024xf32>
    %cst_122 = arith.constant 0.000000e+00 : f32
    %320 = vector.broadcast %cst_122 : f32 to vector<8x32xf32>
    %321 = vector.extract_strided_slice %267 {offsets = [0, 0], sizes = [8, 992], strides = [1, 1]} : vector<8x1024xf32> to vector<8x992xf32>
    %322 = tpu.concatenate %320, %321 in 1 : vector<8x32xf32>, vector<8x992xf32> -> vector<8x1024xf32>
    %cst_123 = arith.constant 0.000000e+00 : f32
    %323 = vector.broadcast %cst_123 : f32 to vector<8x31xf32>
    %324 = vector.extract_strided_slice %134 {offsets = [0, 0], sizes = [8, 993], strides = [1, 1]} : vector<8x1024xf32> to vector<8x993xf32>
    %325 = tpu.concatenate %323, %324 in 1 : vector<8x31xf32>, vector<8x993xf32> -> vector<8x1024xf32>
    %c1_i32_124 = arith.constant 1 : i32
    %326 = vector.broadcast %c1_i32_124 : i32 to vector<1x1024xi32>
    %327 = arith.addi %284, %326 : vector<1x1024xi32>
    %c0_i32_125 = arith.constant 0 : i32
    %328 = vector.broadcast %c0_i32_125 : i32 to vector<1x1024xi32>
    %329 = arith.cmpi sge, %327, %328 : vector<1x1024xi32>
    %c1_i32_126 = arith.constant 1 : i32
    %330 = vector.broadcast %c1_i32_126 : i32 to vector<1x1024xi32>
    %331 = arith.addi %284, %330 : vector<1x1024xi32>
    %c32_i32_127 = arith.constant 32 : i32
    %332 = vector.broadcast %c32_i32_127 : i32 to vector<1x1024xi32>
    %333 = arith.cmpi slt, %331, %332 : vector<1x1024xi32>
    %334 = arith.andi %329, %333 : vector<1x1024xi1>
    %cst_128 = arith.constant 0.000000e+00 : f32
    %335 = vector.shape_cast %334 : vector<1x1024xi1> to vector<1x1024xi1>
    %336 = vector.broadcast %335 : vector<1x1024xi1> to vector<8x1024xi1>
    %337 = vector.broadcast %cst_128 : f32 to vector<8x1024xf32>
    %338 = arith.select %336, %325, %337 : vector<8x1024xi1>, vector<8x1024xf32>
    %cst_129 = arith.constant 0.000000e+00 : f32
    %339 = vector.broadcast %cst_129 : f32 to vector<8x31xf32>
    %340 = vector.extract_strided_slice %267 {offsets = [0, 0], sizes = [8, 993], strides = [1, 1]} : vector<8x1024xf32> to vector<8x993xf32>
    %341 = tpu.concatenate %339, %340 in 1 : vector<8x31xf32>, vector<8x993xf32> -> vector<8x1024xf32>
    %c1_i32_130 = arith.constant 1 : i32
    %342 = vector.broadcast %c1_i32_130 : i32 to vector<1x1024xi32>
    %343 = arith.addi %284, %342 : vector<1x1024xi32>
    %c0_i32_131 = arith.constant 0 : i32
    %344 = vector.broadcast %c0_i32_131 : i32 to vector<1x1024xi32>
    %345 = arith.cmpi sge, %343, %344 : vector<1x1024xi32>
    %c1_i32_132 = arith.constant 1 : i32
    %346 = vector.broadcast %c1_i32_132 : i32 to vector<1x1024xi32>
    %347 = arith.addi %284, %346 : vector<1x1024xi32>
    %c32_i32_133 = arith.constant 32 : i32
    %348 = vector.broadcast %c32_i32_133 : i32 to vector<1x1024xi32>
    %349 = arith.cmpi slt, %347, %348 : vector<1x1024xi32>
    %350 = arith.andi %345, %349 : vector<1x1024xi1>
    %cst_134 = arith.constant 0.000000e+00 : f32
    %351 = vector.shape_cast %350 : vector<1x1024xi1> to vector<1x1024xi1>
    %352 = vector.broadcast %351 : vector<1x1024xi1> to vector<8x1024xi1>
    %353 = vector.broadcast %cst_134 : f32 to vector<8x1024xf32>
    %354 = arith.select %352, %341, %353 : vector<8x1024xi1>, vector<8x1024xf32>
    %cst_135 = arith.constant 0.000000e+00 : f32
    %355 = vector.broadcast %cst_135 : f32 to vector<8x1xf32>
    %356 = vector.extract_strided_slice %134 {offsets = [0, 0], sizes = [8, 1023], strides = [1, 1]} : vector<8x1024xf32> to vector<8x1023xf32>
    %357 = tpu.concatenate %355, %356 in 1 : vector<8x1xf32>, vector<8x1023xf32> -> vector<8x1024xf32>
    %c-1_i32_136 = arith.constant -1 : i32
    %358 = vector.broadcast %c-1_i32_136 : i32 to vector<1x1024xi32>
    %359 = arith.addi %284, %358 : vector<1x1024xi32>
    %c0_i32_137 = arith.constant 0 : i32
    %360 = vector.broadcast %c0_i32_137 : i32 to vector<1x1024xi32>
    %361 = arith.cmpi sge, %359, %360 : vector<1x1024xi32>
    %c-1_i32_138 = arith.constant -1 : i32
    %362 = vector.broadcast %c-1_i32_138 : i32 to vector<1x1024xi32>
    %363 = arith.addi %284, %362 : vector<1x1024xi32>
    %c32_i32_139 = arith.constant 32 : i32
    %364 = vector.broadcast %c32_i32_139 : i32 to vector<1x1024xi32>
    %365 = arith.cmpi slt, %363, %364 : vector<1x1024xi32>
    %366 = arith.andi %361, %365 : vector<1x1024xi1>
    %cst_140 = arith.constant 0.000000e+00 : f32
    %367 = vector.shape_cast %366 : vector<1x1024xi1> to vector<1x1024xi1>
    %368 = vector.broadcast %367 : vector<1x1024xi1> to vector<8x1024xi1>
    %369 = vector.broadcast %cst_140 : f32 to vector<8x1024xf32>
    %370 = arith.select %368, %357, %369 : vector<8x1024xi1>, vector<8x1024xf32>
    %cst_141 = arith.constant 0.000000e+00 : f32
    %371 = vector.broadcast %cst_141 : f32 to vector<8x1xf32>
    %372 = vector.extract_strided_slice %267 {offsets = [0, 0], sizes = [8, 1023], strides = [1, 1]} : vector<8x1024xf32> to vector<8x1023xf32>
    %373 = tpu.concatenate %371, %372 in 1 : vector<8x1xf32>, vector<8x1023xf32> -> vector<8x1024xf32>
    %c-1_i32_142 = arith.constant -1 : i32
    %374 = vector.broadcast %c-1_i32_142 : i32 to vector<1x1024xi32>
    %375 = arith.addi %284, %374 : vector<1x1024xi32>
    %c0_i32_143 = arith.constant 0 : i32
    %376 = vector.broadcast %c0_i32_143 : i32 to vector<1x1024xi32>
    %377 = arith.cmpi sge, %375, %376 : vector<1x1024xi32>
    %c-1_i32_144 = arith.constant -1 : i32
    %378 = vector.broadcast %c-1_i32_144 : i32 to vector<1x1024xi32>
    %379 = arith.addi %284, %378 : vector<1x1024xi32>
    %c32_i32_145 = arith.constant 32 : i32
    %380 = vector.broadcast %c32_i32_145 : i32 to vector<1x1024xi32>
    %381 = arith.cmpi slt, %379, %380 : vector<1x1024xi32>
    %382 = arith.andi %377, %381 : vector<1x1024xi1>
    %cst_146 = arith.constant 0.000000e+00 : f32
    %383 = vector.shape_cast %382 : vector<1x1024xi1> to vector<1x1024xi1>
    %384 = vector.broadcast %383 : vector<1x1024xi1> to vector<8x1024xi1>
    %385 = vector.broadcast %cst_146 : f32 to vector<8x1024xf32>
    %386 = arith.select %384, %373, %385 : vector<8x1024xi1>, vector<8x1024xf32>
    %387 = vector.extract_strided_slice %134 {offsets = [0, 1], sizes = [8, 1023], strides = [1, 1]} : vector<8x1024xf32> to vector<8x1023xf32>
    %cst_147 = arith.constant 0.000000e+00 : f32
    %388 = vector.broadcast %cst_147 : f32 to vector<8x1xf32>
    %389 = tpu.concatenate %387, %388 in 1 : vector<8x1023xf32>, vector<8x1xf32> -> vector<8x1024xf32>
    %c1_i32_148 = arith.constant 1 : i32
    %390 = vector.broadcast %c1_i32_148 : i32 to vector<1x1024xi32>
    %391 = arith.addi %284, %390 : vector<1x1024xi32>
    %c0_i32_149 = arith.constant 0 : i32
    %392 = vector.broadcast %c0_i32_149 : i32 to vector<1x1024xi32>
    %393 = arith.cmpi sge, %391, %392 : vector<1x1024xi32>
    %c1_i32_150 = arith.constant 1 : i32
    %394 = vector.broadcast %c1_i32_150 : i32 to vector<1x1024xi32>
    %395 = arith.addi %284, %394 : vector<1x1024xi32>
    %c32_i32_151 = arith.constant 32 : i32
    %396 = vector.broadcast %c32_i32_151 : i32 to vector<1x1024xi32>
    %397 = arith.cmpi slt, %395, %396 : vector<1x1024xi32>
    %398 = arith.andi %393, %397 : vector<1x1024xi1>
    %cst_152 = arith.constant 0.000000e+00 : f32
    %399 = vector.shape_cast %398 : vector<1x1024xi1> to vector<1x1024xi1>
    %400 = vector.broadcast %399 : vector<1x1024xi1> to vector<8x1024xi1>
    %401 = vector.broadcast %cst_152 : f32 to vector<8x1024xf32>
    %402 = arith.select %400, %389, %401 : vector<8x1024xi1>, vector<8x1024xf32>
    %403 = vector.extract_strided_slice %267 {offsets = [0, 1], sizes = [8, 1023], strides = [1, 1]} : vector<8x1024xf32> to vector<8x1023xf32>
    %cst_153 = arith.constant 0.000000e+00 : f32
    %404 = vector.broadcast %cst_153 : f32 to vector<8x1xf32>
    %405 = tpu.concatenate %403, %404 in 1 : vector<8x1023xf32>, vector<8x1xf32> -> vector<8x1024xf32>
    %c1_i32_154 = arith.constant 1 : i32
    %406 = vector.broadcast %c1_i32_154 : i32 to vector<1x1024xi32>
    %407 = arith.addi %284, %406 : vector<1x1024xi32>
    %c0_i32_155 = arith.constant 0 : i32
    %408 = vector.broadcast %c0_i32_155 : i32 to vector<1x1024xi32>
    %409 = arith.cmpi sge, %407, %408 : vector<1x1024xi32>
    %c1_i32_156 = arith.constant 1 : i32
    %410 = vector.broadcast %c1_i32_156 : i32 to vector<1x1024xi32>
    %411 = arith.addi %284, %410 : vector<1x1024xi32>
    %c32_i32_157 = arith.constant 32 : i32
    %412 = vector.broadcast %c32_i32_157 : i32 to vector<1x1024xi32>
    %413 = arith.cmpi slt, %411, %412 : vector<1x1024xi32>
    %414 = arith.andi %409, %413 : vector<1x1024xi1>
    %cst_158 = arith.constant 0.000000e+00 : f32
    %415 = vector.shape_cast %414 : vector<1x1024xi1> to vector<1x1024xi1>
    %416 = vector.broadcast %415 : vector<1x1024xi1> to vector<8x1024xi1>
    %417 = vector.broadcast %cst_158 : f32 to vector<8x1024xf32>
    %418 = arith.select %416, %405, %417 : vector<8x1024xi1>, vector<8x1024xf32>
    %419 = vector.extract_strided_slice %134 {offsets = [0, 31], sizes = [8, 993], strides = [1, 1]} : vector<8x1024xf32> to vector<8x993xf32>
    %cst_159 = arith.constant 0.000000e+00 : f32
    %420 = vector.broadcast %cst_159 : f32 to vector<8x31xf32>
    %421 = tpu.concatenate %419, %420 in 1 : vector<8x993xf32>, vector<8x31xf32> -> vector<8x1024xf32>
    %c-1_i32_160 = arith.constant -1 : i32
    %422 = vector.broadcast %c-1_i32_160 : i32 to vector<1x1024xi32>
    %423 = arith.addi %284, %422 : vector<1x1024xi32>
    %c0_i32_161 = arith.constant 0 : i32
    %424 = vector.broadcast %c0_i32_161 : i32 to vector<1x1024xi32>
    %425 = arith.cmpi sge, %423, %424 : vector<1x1024xi32>
    %c-1_i32_162 = arith.constant -1 : i32
    %426 = vector.broadcast %c-1_i32_162 : i32 to vector<1x1024xi32>
    %427 = arith.addi %284, %426 : vector<1x1024xi32>
    %c32_i32_163 = arith.constant 32 : i32
    %428 = vector.broadcast %c32_i32_163 : i32 to vector<1x1024xi32>
    %429 = arith.cmpi slt, %427, %428 : vector<1x1024xi32>
    %430 = arith.andi %425, %429 : vector<1x1024xi1>
    %cst_164 = arith.constant 0.000000e+00 : f32
    %431 = vector.shape_cast %430 : vector<1x1024xi1> to vector<1x1024xi1>
    %432 = vector.broadcast %431 : vector<1x1024xi1> to vector<8x1024xi1>
    %433 = vector.broadcast %cst_164 : f32 to vector<8x1024xf32>
    %434 = arith.select %432, %421, %433 : vector<8x1024xi1>, vector<8x1024xf32>
    %435 = vector.extract_strided_slice %267 {offsets = [0, 31], sizes = [8, 993], strides = [1, 1]} : vector<8x1024xf32> to vector<8x993xf32>
    %cst_165 = arith.constant 0.000000e+00 : f32
    %436 = vector.broadcast %cst_165 : f32 to vector<8x31xf32>
    %437 = tpu.concatenate %435, %436 in 1 : vector<8x993xf32>, vector<8x31xf32> -> vector<8x1024xf32>
    %c-1_i32_166 = arith.constant -1 : i32
    %438 = vector.broadcast %c-1_i32_166 : i32 to vector<1x1024xi32>
    %439 = arith.addi %284, %438 : vector<1x1024xi32>
    %c0_i32_167 = arith.constant 0 : i32
    %440 = vector.broadcast %c0_i32_167 : i32 to vector<1x1024xi32>
    %441 = arith.cmpi sge, %439, %440 : vector<1x1024xi32>
    %c-1_i32_168 = arith.constant -1 : i32
    %442 = vector.broadcast %c-1_i32_168 : i32 to vector<1x1024xi32>
    %443 = arith.addi %284, %442 : vector<1x1024xi32>
    %c32_i32_169 = arith.constant 32 : i32
    %444 = vector.broadcast %c32_i32_169 : i32 to vector<1x1024xi32>
    %445 = arith.cmpi slt, %443, %444 : vector<1x1024xi32>
    %446 = arith.andi %441, %445 : vector<1x1024xi1>
    %cst_170 = arith.constant 0.000000e+00 : f32
    %447 = vector.shape_cast %446 : vector<1x1024xi1> to vector<1x1024xi1>
    %448 = vector.broadcast %447 : vector<1x1024xi1> to vector<8x1024xi1>
    %449 = vector.broadcast %cst_170 : f32 to vector<8x1024xf32>
    %450 = arith.select %448, %437, %449 : vector<8x1024xi1>, vector<8x1024xf32>
    %451 = vector.extract_strided_slice %134 {offsets = [0, 32], sizes = [8, 992], strides = [1, 1]} : vector<8x1024xf32> to vector<8x992xf32>
    %cst_171 = arith.constant 0.000000e+00 : f32
    %452 = vector.broadcast %cst_171 : f32 to vector<8x32xf32>
    %453 = tpu.concatenate %451, %452 in 1 : vector<8x992xf32>, vector<8x32xf32> -> vector<8x1024xf32>
    %454 = vector.extract_strided_slice %267 {offsets = [0, 32], sizes = [8, 992], strides = [1, 1]} : vector<8x1024xf32> to vector<8x992xf32>
    %cst_172 = arith.constant 0.000000e+00 : f32
    %455 = vector.broadcast %cst_172 : f32 to vector<8x32xf32>
    %456 = tpu.concatenate %454, %455 in 1 : vector<8x992xf32>, vector<8x32xf32> -> vector<8x1024xf32>
    %457 = vector.extract_strided_slice %134 {offsets = [0, 33], sizes = [8, 991], strides = [1, 1]} : vector<8x1024xf32> to vector<8x991xf32>
    %cst_173 = arith.constant 0.000000e+00 : f32
    %458 = vector.broadcast %cst_173 : f32 to vector<8x33xf32>
    %459 = tpu.concatenate %457, %458 in 1 : vector<8x991xf32>, vector<8x33xf32> -> vector<8x1024xf32>
    %c1_i32_174 = arith.constant 1 : i32
    %460 = vector.broadcast %c1_i32_174 : i32 to vector<1x1024xi32>
    %461 = arith.addi %284, %460 : vector<1x1024xi32>
    %c0_i32_175 = arith.constant 0 : i32
    %462 = vector.broadcast %c0_i32_175 : i32 to vector<1x1024xi32>
    %463 = arith.cmpi sge, %461, %462 : vector<1x1024xi32>
    %c1_i32_176 = arith.constant 1 : i32
    %464 = vector.broadcast %c1_i32_176 : i32 to vector<1x1024xi32>
    %465 = arith.addi %284, %464 : vector<1x1024xi32>
    %c32_i32_177 = arith.constant 32 : i32
    %466 = vector.broadcast %c32_i32_177 : i32 to vector<1x1024xi32>
    %467 = arith.cmpi slt, %465, %466 : vector<1x1024xi32>
    %468 = arith.andi %463, %467 : vector<1x1024xi1>
    %cst_178 = arith.constant 0.000000e+00 : f32
    %469 = vector.shape_cast %468 : vector<1x1024xi1> to vector<1x1024xi1>
    %470 = vector.broadcast %469 : vector<1x1024xi1> to vector<8x1024xi1>
    %471 = vector.broadcast %cst_178 : f32 to vector<8x1024xf32>
    %472 = arith.select %470, %459, %471 : vector<8x1024xi1>, vector<8x1024xf32>
    %473 = vector.extract_strided_slice %267 {offsets = [0, 33], sizes = [8, 991], strides = [1, 1]} : vector<8x1024xf32> to vector<8x991xf32>
    %cst_179 = arith.constant 0.000000e+00 : f32
    %474 = vector.broadcast %cst_179 : f32 to vector<8x33xf32>
    %475 = tpu.concatenate %473, %474 in 1 : vector<8x991xf32>, vector<8x33xf32> -> vector<8x1024xf32>
    %c1_i32_180 = arith.constant 1 : i32
    %476 = vector.broadcast %c1_i32_180 : i32 to vector<1x1024xi32>
    %477 = arith.addi %284, %476 : vector<1x1024xi32>
    %c0_i32_181 = arith.constant 0 : i32
    %478 = vector.broadcast %c0_i32_181 : i32 to vector<1x1024xi32>
    %479 = arith.cmpi sge, %477, %478 : vector<1x1024xi32>
    %c1_i32_182 = arith.constant 1 : i32
    %480 = vector.broadcast %c1_i32_182 : i32 to vector<1x1024xi32>
    %481 = arith.addi %284, %480 : vector<1x1024xi32>
    %c32_i32_183 = arith.constant 32 : i32
    %482 = vector.broadcast %c32_i32_183 : i32 to vector<1x1024xi32>
    %483 = arith.cmpi slt, %481, %482 : vector<1x1024xi32>
    %484 = arith.andi %479, %483 : vector<1x1024xi1>
    %cst_184 = arith.constant 0.000000e+00 : f32
    %485 = vector.shape_cast %484 : vector<1x1024xi1> to vector<1x1024xi1>
    %486 = vector.broadcast %485 : vector<1x1024xi1> to vector<8x1024xi1>
    %487 = vector.broadcast %cst_184 : f32 to vector<8x1024xf32>
    %488 = arith.select %486, %475, %487 : vector<8x1024xi1>, vector<8x1024xf32>
    %489 = tpu.concatenate %300, %316, %319, %322, %338, %354, %370, %386, %134, %267, %402, %418, %434, %450, %453, %456 in 0 : vector<8x1024xf32>, vector<8x1024xf32>, vector<8x1024xf32>, vector<8x1024xf32>, vector<8x1024xf32>, vector<8x1024xf32>, vector<8x1024xf32>, vector<8x1024xf32>, vector<8x1024xf32>, vector<8x1024xf32>, vector<8x1024xf32>, vector<8x1024xf32>, vector<8x1024xf32>, vector<8x1024xf32>, vector<8x1024xf32>, vector<8x1024xf32> -> vector<128x1024xf32>
    %490 = tpu.concatenate %472, %488 in 0 : vector<8x1024xf32>, vector<8x1024xf32> -> vector<16x1024xf32>
    %491 = tpu.concatenate %489, %490 in 0 : vector<128x1024xf32>, vector<16x1024xf32> -> vector<144x1024xf32>
    %c0_185 = arith.constant 0 : index
    %c0_186 = arith.constant 0 : index
    %492 = vector.load %arg8[%c0_185, %c0_186] : memref<8x144xf32, #tpu.memory_space<vmem>>, vector<8x144xf32>
    %cst_187 = arith.constant dense<0.000000e+00> : vector<8x1024xf32>
    %493 = tpu.matmul %492, %491, %cst_187 {dimension_numbers = #tpu.dot_dimension_numbers<[1], [0], [0], [1], [0, 0, 1, 1], [], []>} : vector<8x144xf32>, vector<144x1024xf32>, vector<8x1024xf32> -> vector<8x1024xf32>
    %c0_188 = arith.constant 0 : index
    %c0_189 = arith.constant 0 : index
    %494 = vector.load %arg9[%c0_188, %c0_189] : memref<8x1xf32, #tpu.memory_space<vmem>>, vector<8x1xf32>
    %495 = vector.broadcast %494 : vector<8x1xf32> to vector<8x1024xf32>
    %496 = arith.mulf %493, %495 : vector<8x1024xf32>
    %c0_190 = arith.constant 0 : index
    %c0_191 = arith.constant 0 : index
    %497 = vector.load %arg10[%c0_190, %c0_191] : memref<8x1xf32, #tpu.memory_space<vmem>>, vector<8x1xf32>
    %498 = vector.broadcast %497 : vector<8x1xf32> to vector<8x1024xf32>
    %499 = arith.addf %496, %498 : vector<8x1024xf32>
    %cst_192 = arith.constant 0.000000e+00 : f32
    %500 = vector.broadcast %cst_192 : f32 to vector<8x1024xf32>
    %501 = arith.cmpf oge, %499, %500 : vector<8x1024xf32>
    %cst_193 = arith.constant 0.00999999977 : f32
    %502 = vector.broadcast %cst_193 : f32 to vector<8x1024xf32>
    %503 = arith.mulf %502, %499 : vector<8x1024xf32>
    %504 = arith.select %501, %499, %503 : vector<8x1024xi1>, vector<8x1024xf32>
    %c0_194 = arith.constant 0 : index
    %c0_195 = arith.constant 0 : index
    %505 = vector.load %arg26[%c0_194, %c0_195] : memref<1024x256xf32, #tpu.memory_space<vmem>>, vector<1024x256xf32>
    %cst_196 = arith.constant dense<0.000000e+00> : vector<8x256xf32>
    %506 = tpu.matmul %504, %505, %cst_196 {dimension_numbers = #tpu.dot_dimension_numbers<[1], [0], [0], [1], [0, 0, 1, 1], [], []>} : vector<8x1024xf32>, vector<1024x256xf32>, vector<8x256xf32> -> vector<8x256xf32>
    %507 = tpu.iota {dimensions = array<i32: 1>} : vector<1x256xi32>
    %c16_i32 = arith.constant 16 : i32
    %c0_i32_197 = arith.constant 0 : i32
    %508 = arith.cmpi eq, %c16_i32, %c0_i32_197 : i32
    %c1_i32_198 = arith.constant 1 : i32
    %509 = arith.select %508, %c1_i32_198, %c16_i32 : i32
    %510 = vector.broadcast %509 : i32 to vector<1x256xi32>
    %511 = arith.remsi %507, %510 : vector<1x256xi32>
    %c0_i32_199 = arith.constant 0 : i32
    %512 = vector.broadcast %c0_i32_199 : i32 to vector<1x256xi32>
    %513 = arith.cmpi ne, %511, %512 : vector<1x256xi32>
    %c0_i32_200 = arith.constant 0 : i32
    %514 = vector.broadcast %c0_i32_200 : i32 to vector<1x256xi32>
    %515 = arith.cmpi slt, %511, %514 : vector<1x256xi32>
    %c0_i32_201 = arith.constant 0 : i32
    %516 = arith.cmpi slt, %509, %c0_i32_201 : i32
    %517 = vector.broadcast %516 : i1 to vector<1x256xi1>
    %518 = vector.broadcast %517 : vector<1x256xi1> to vector<1x256xi1>
    %519 = arith.xori %515, %518 : vector<1x256xi1>
    %520 = arith.andi %519, %513 : vector<1x256xi1>
    %521 = vector.broadcast %509 : i32 to vector<1x256xi32>
    %522 = arith.addi %511, %521 : vector<1x256xi32>
    %523 = arith.select %520, %522, %511 : vector<1x256xi1>, vector<1x256xi32>
    %cst_202 = arith.constant 0.000000e+00 : f32
    %524 = vector.broadcast %cst_202 : f32 to vector<8x17xf32>
    %525 = vector.extract_strided_slice %506 {offsets = [0, 0], sizes = [8, 239], strides = [1, 1]} : vector<8x256xf32> to vector<8x239xf32>
    %526 = tpu.concatenate %524, %525 in 1 : vector<8x17xf32>, vector<8x239xf32> -> vector<8x256xf32>
    %c-1_i32_203 = arith.constant -1 : i32
    %527 = vector.broadcast %c-1_i32_203 : i32 to vector<1x256xi32>
    %528 = arith.addi %523, %527 : vector<1x256xi32>
    %c0_i32_204 = arith.constant 0 : i32
    %529 = vector.broadcast %c0_i32_204 : i32 to vector<1x256xi32>
    %530 = arith.cmpi sge, %528, %529 : vector<1x256xi32>
    %c-1_i32_205 = arith.constant -1 : i32
    %531 = vector.broadcast %c-1_i32_205 : i32 to vector<1x256xi32>
    %532 = arith.addi %523, %531 : vector<1x256xi32>
    %c16_i32_206 = arith.constant 16 : i32
    %533 = vector.broadcast %c16_i32_206 : i32 to vector<1x256xi32>
    %534 = arith.cmpi slt, %532, %533 : vector<1x256xi32>
    %535 = arith.andi %530, %534 : vector<1x256xi1>
    %cst_207 = arith.constant 0.000000e+00 : f32
    %536 = vector.shape_cast %535 : vector<1x256xi1> to vector<1x256xi1>
    %537 = vector.broadcast %536 : vector<1x256xi1> to vector<8x256xi1>
    %538 = vector.broadcast %cst_207 : f32 to vector<8x256xf32>
    %539 = arith.select %537, %526, %538 : vector<8x256xi1>, vector<8x256xf32>
    %cst_208 = arith.constant 0.000000e+00 : f32
    %540 = vector.broadcast %cst_208 : f32 to vector<8x16xf32>
    %541 = vector.extract_strided_slice %506 {offsets = [0, 0], sizes = [8, 240], strides = [1, 1]} : vector<8x256xf32> to vector<8x240xf32>
    %542 = tpu.concatenate %540, %541 in 1 : vector<8x16xf32>, vector<8x240xf32> -> vector<8x256xf32>
    %cst_209 = arith.constant 0.000000e+00 : f32
    %543 = vector.broadcast %cst_209 : f32 to vector<8x15xf32>
    %544 = vector.extract_strided_slice %506 {offsets = [0, 0], sizes = [8, 241], strides = [1, 1]} : vector<8x256xf32> to vector<8x241xf32>
    %545 = tpu.concatenate %543, %544 in 1 : vector<8x15xf32>, vector<8x241xf32> -> vector<8x256xf32>
    %c1_i32_210 = arith.constant 1 : i32
    %546 = vector.broadcast %c1_i32_210 : i32 to vector<1x256xi32>
    %547 = arith.addi %523, %546 : vector<1x256xi32>
    %c0_i32_211 = arith.constant 0 : i32
    %548 = vector.broadcast %c0_i32_211 : i32 to vector<1x256xi32>
    %549 = arith.cmpi sge, %547, %548 : vector<1x256xi32>
    %c1_i32_212 = arith.constant 1 : i32
    %550 = vector.broadcast %c1_i32_212 : i32 to vector<1x256xi32>
    %551 = arith.addi %523, %550 : vector<1x256xi32>
    %c16_i32_213 = arith.constant 16 : i32
    %552 = vector.broadcast %c16_i32_213 : i32 to vector<1x256xi32>
    %553 = arith.cmpi slt, %551, %552 : vector<1x256xi32>
    %554 = arith.andi %549, %553 : vector<1x256xi1>
    %cst_214 = arith.constant 0.000000e+00 : f32
    %555 = vector.shape_cast %554 : vector<1x256xi1> to vector<1x256xi1>
    %556 = vector.broadcast %555 : vector<1x256xi1> to vector<8x256xi1>
    %557 = vector.broadcast %cst_214 : f32 to vector<8x256xf32>
    %558 = arith.select %556, %545, %557 : vector<8x256xi1>, vector<8x256xf32>
    %cst_215 = arith.constant 0.000000e+00 : f32
    %559 = vector.broadcast %cst_215 : f32 to vector<8x1xf32>
    %560 = vector.extract_strided_slice %506 {offsets = [0, 0], sizes = [8, 255], strides = [1, 1]} : vector<8x256xf32> to vector<8x255xf32>
    %561 = tpu.concatenate %559, %560 in 1 : vector<8x1xf32>, vector<8x255xf32> -> vector<8x256xf32>
    %c-1_i32_216 = arith.constant -1 : i32
    %562 = vector.broadcast %c-1_i32_216 : i32 to vector<1x256xi32>
    %563 = arith.addi %523, %562 : vector<1x256xi32>
    %c0_i32_217 = arith.constant 0 : i32
    %564 = vector.broadcast %c0_i32_217 : i32 to vector<1x256xi32>
    %565 = arith.cmpi sge, %563, %564 : vector<1x256xi32>
    %c-1_i32_218 = arith.constant -1 : i32
    %566 = vector.broadcast %c-1_i32_218 : i32 to vector<1x256xi32>
    %567 = arith.addi %523, %566 : vector<1x256xi32>
    %c16_i32_219 = arith.constant 16 : i32
    %568 = vector.broadcast %c16_i32_219 : i32 to vector<1x256xi32>
    %569 = arith.cmpi slt, %567, %568 : vector<1x256xi32>
    %570 = arith.andi %565, %569 : vector<1x256xi1>
    %cst_220 = arith.constant 0.000000e+00 : f32
    %571 = vector.shape_cast %570 : vector<1x256xi1> to vector<1x256xi1>
    %572 = vector.broadcast %571 : vector<1x256xi1> to vector<8x256xi1>
    %573 = vector.broadcast %cst_220 : f32 to vector<8x256xf32>
    %574 = arith.select %572, %561, %573 : vector<8x256xi1>, vector<8x256xf32>
    %575 = vector.extract_strided_slice %506 {offsets = [0, 1], sizes = [8, 255], strides = [1, 1]} : vector<8x256xf32> to vector<8x255xf32>
    %cst_221 = arith.constant 0.000000e+00 : f32
    %576 = vector.broadcast %cst_221 : f32 to vector<8x1xf32>
    %577 = tpu.concatenate %575, %576 in 1 : vector<8x255xf32>, vector<8x1xf32> -> vector<8x256xf32>
    %c1_i32_222 = arith.constant 1 : i32
    %578 = vector.broadcast %c1_i32_222 : i32 to vector<1x256xi32>
    %579 = arith.addi %523, %578 : vector<1x256xi32>
    %c0_i32_223 = arith.constant 0 : i32
    %580 = vector.broadcast %c0_i32_223 : i32 to vector<1x256xi32>
    %581 = arith.cmpi sge, %579, %580 : vector<1x256xi32>
    %c1_i32_224 = arith.constant 1 : i32
    %582 = vector.broadcast %c1_i32_224 : i32 to vector<1x256xi32>
    %583 = arith.addi %523, %582 : vector<1x256xi32>
    %c16_i32_225 = arith.constant 16 : i32
    %584 = vector.broadcast %c16_i32_225 : i32 to vector<1x256xi32>
    %585 = arith.cmpi slt, %583, %584 : vector<1x256xi32>
    %586 = arith.andi %581, %585 : vector<1x256xi1>
    %cst_226 = arith.constant 0.000000e+00 : f32
    %587 = vector.shape_cast %586 : vector<1x256xi1> to vector<1x256xi1>
    %588 = vector.broadcast %587 : vector<1x256xi1> to vector<8x256xi1>
    %589 = vector.broadcast %cst_226 : f32 to vector<8x256xf32>
    %590 = arith.select %588, %577, %589 : vector<8x256xi1>, vector<8x256xf32>
    %591 = vector.extract_strided_slice %506 {offsets = [0, 15], sizes = [8, 241], strides = [1, 1]} : vector<8x256xf32> to vector<8x241xf32>
    %cst_227 = arith.constant 0.000000e+00 : f32
    %592 = vector.broadcast %cst_227 : f32 to vector<8x15xf32>
    %593 = tpu.concatenate %591, %592 in 1 : vector<8x241xf32>, vector<8x15xf32> -> vector<8x256xf32>
    %c-1_i32_228 = arith.constant -1 : i32
    %594 = vector.broadcast %c-1_i32_228 : i32 to vector<1x256xi32>
    %595 = arith.addi %523, %594 : vector<1x256xi32>
    %c0_i32_229 = arith.constant 0 : i32
    %596 = vector.broadcast %c0_i32_229 : i32 to vector<1x256xi32>
    %597 = arith.cmpi sge, %595, %596 : vector<1x256xi32>
    %c-1_i32_230 = arith.constant -1 : i32
    %598 = vector.broadcast %c-1_i32_230 : i32 to vector<1x256xi32>
    %599 = arith.addi %523, %598 : vector<1x256xi32>
    %c16_i32_231 = arith.constant 16 : i32
    %600 = vector.broadcast %c16_i32_231 : i32 to vector<1x256xi32>
    %601 = arith.cmpi slt, %599, %600 : vector<1x256xi32>
    %602 = arith.andi %597, %601 : vector<1x256xi1>
    %cst_232 = arith.constant 0.000000e+00 : f32
    %603 = vector.shape_cast %602 : vector<1x256xi1> to vector<1x256xi1>
    %604 = vector.broadcast %603 : vector<1x256xi1> to vector<8x256xi1>
    %605 = vector.broadcast %cst_232 : f32 to vector<8x256xf32>
    %606 = arith.select %604, %593, %605 : vector<8x256xi1>, vector<8x256xf32>
    %607 = vector.extract_strided_slice %506 {offsets = [0, 16], sizes = [8, 240], strides = [1, 1]} : vector<8x256xf32> to vector<8x240xf32>
    %cst_233 = arith.constant 0.000000e+00 : f32
    %608 = vector.broadcast %cst_233 : f32 to vector<8x16xf32>
    %609 = tpu.concatenate %607, %608 in 1 : vector<8x240xf32>, vector<8x16xf32> -> vector<8x256xf32>
    %610 = vector.extract_strided_slice %506 {offsets = [0, 17], sizes = [8, 239], strides = [1, 1]} : vector<8x256xf32> to vector<8x239xf32>
    %cst_234 = arith.constant 0.000000e+00 : f32
    %611 = vector.broadcast %cst_234 : f32 to vector<8x17xf32>
    %612 = tpu.concatenate %610, %611 in 1 : vector<8x239xf32>, vector<8x17xf32> -> vector<8x256xf32>
    %c1_i32_235 = arith.constant 1 : i32
    %613 = vector.broadcast %c1_i32_235 : i32 to vector<1x256xi32>
    %614 = arith.addi %523, %613 : vector<1x256xi32>
    %c0_i32_236 = arith.constant 0 : i32
    %615 = vector.broadcast %c0_i32_236 : i32 to vector<1x256xi32>
    %616 = arith.cmpi sge, %614, %615 : vector<1x256xi32>
    %c1_i32_237 = arith.constant 1 : i32
    %617 = vector.broadcast %c1_i32_237 : i32 to vector<1x256xi32>
    %618 = arith.addi %523, %617 : vector<1x256xi32>
    %c16_i32_238 = arith.constant 16 : i32
    %619 = vector.broadcast %c16_i32_238 : i32 to vector<1x256xi32>
    %620 = arith.cmpi slt, %618, %619 : vector<1x256xi32>
    %621 = arith.andi %616, %620 : vector<1x256xi1>
    %cst_239 = arith.constant 0.000000e+00 : f32
    %622 = vector.shape_cast %621 : vector<1x256xi1> to vector<1x256xi1>
    %623 = vector.broadcast %622 : vector<1x256xi1> to vector<8x256xi1>
    %624 = vector.broadcast %cst_239 : f32 to vector<8x256xf32>
    %625 = arith.select %623, %612, %624 : vector<8x256xi1>, vector<8x256xf32>
    %626 = tpu.concatenate %539, %542, %558, %574, %506, %590, %606, %609, %625 in 0 : vector<8x256xf32>, vector<8x256xf32>, vector<8x256xf32>, vector<8x256xf32>, vector<8x256xf32>, vector<8x256xf32>, vector<8x256xf32>, vector<8x256xf32>, vector<8x256xf32> -> vector<72x256xf32>
    %c0_240 = arith.constant 0 : index
    %c0_241 = arith.constant 0 : index
    %627 = vector.load %arg11[%c0_240, %c0_241] : memref<8x72xf32, #tpu.memory_space<vmem>>, vector<8x72xf32>
    %cst_242 = arith.constant dense<0.000000e+00> : vector<8x256xf32>
    %628 = tpu.matmul %627, %626, %cst_242 {dimension_numbers = #tpu.dot_dimension_numbers<[1], [0], [0], [1], [0, 0, 1, 1], [], []>} : vector<8x72xf32>, vector<72x256xf32>, vector<8x256xf32> -> vector<8x256xf32>
    %c0_243 = arith.constant 0 : index
    %c0_244 = arith.constant 0 : index
    %629 = vector.load %arg12[%c0_243, %c0_244] : memref<8x1xf32, #tpu.memory_space<vmem>>, vector<8x1xf32>
    %630 = vector.broadcast %629 : vector<8x1xf32> to vector<8x256xf32>
    %631 = arith.mulf %628, %630 : vector<8x256xf32>
    %c0_245 = arith.constant 0 : index
    %c0_246 = arith.constant 0 : index
    %632 = vector.load %arg13[%c0_245, %c0_246] : memref<8x1xf32, #tpu.memory_space<vmem>>, vector<8x1xf32>
    %633 = vector.broadcast %632 : vector<8x1xf32> to vector<8x256xf32>
    %634 = arith.addf %631, %633 : vector<8x256xf32>
    %cst_247 = arith.constant 0.000000e+00 : f32
    %635 = vector.broadcast %cst_247 : f32 to vector<8x256xf32>
    %636 = arith.cmpf oge, %634, %635 : vector<8x256xf32>
    %cst_248 = arith.constant 0.00999999977 : f32
    %637 = vector.broadcast %cst_248 : f32 to vector<8x256xf32>
    %638 = arith.mulf %637, %634 : vector<8x256xf32>
    %639 = arith.select %636, %634, %638 : vector<8x256xi1>, vector<8x256xf32>
    %640 = tpu.iota {dimensions = array<i32: 1>} : vector<1x256xi32>
    %c16_i32_249 = arith.constant 16 : i32
    %c0_i32_250 = arith.constant 0 : i32
    %641 = arith.cmpi eq, %c16_i32_249, %c0_i32_250 : i32
    %c1_i32_251 = arith.constant 1 : i32
    %642 = arith.select %641, %c1_i32_251, %c16_i32_249 : i32
    %643 = vector.broadcast %642 : i32 to vector<1x256xi32>
    %644 = arith.remsi %640, %643 : vector<1x256xi32>
    %c0_i32_252 = arith.constant 0 : i32
    %645 = vector.broadcast %c0_i32_252 : i32 to vector<1x256xi32>
    %646 = arith.cmpi ne, %644, %645 : vector<1x256xi32>
    %c0_i32_253 = arith.constant 0 : i32
    %647 = vector.broadcast %c0_i32_253 : i32 to vector<1x256xi32>
    %648 = arith.cmpi slt, %644, %647 : vector<1x256xi32>
    %c0_i32_254 = arith.constant 0 : i32
    %649 = arith.cmpi slt, %642, %c0_i32_254 : i32
    %650 = vector.broadcast %649 : i1 to vector<1x256xi1>
    %651 = vector.broadcast %650 : vector<1x256xi1> to vector<1x256xi1>
    %652 = arith.xori %648, %651 : vector<1x256xi1>
    %653 = arith.andi %652, %646 : vector<1x256xi1>
    %654 = vector.broadcast %642 : i32 to vector<1x256xi32>
    %655 = arith.addi %644, %654 : vector<1x256xi32>
    %656 = arith.select %653, %655, %644 : vector<1x256xi1>, vector<1x256xi32>
    %cst_255 = arith.constant 0.000000e+00 : f32
    %657 = vector.broadcast %cst_255 : f32 to vector<8x17xf32>
    %658 = vector.extract_strided_slice %506 {offsets = [0, 0], sizes = [8, 239], strides = [1, 1]} : vector<8x256xf32> to vector<8x239xf32>
    %659 = tpu.concatenate %657, %658 in 1 : vector<8x17xf32>, vector<8x239xf32> -> vector<8x256xf32>
    %c-1_i32_256 = arith.constant -1 : i32
    %660 = vector.broadcast %c-1_i32_256 : i32 to vector<1x256xi32>
    %661 = arith.addi %656, %660 : vector<1x256xi32>
    %c0_i32_257 = arith.constant 0 : i32
    %662 = vector.broadcast %c0_i32_257 : i32 to vector<1x256xi32>
    %663 = arith.cmpi sge, %661, %662 : vector<1x256xi32>
    %c-1_i32_258 = arith.constant -1 : i32
    %664 = vector.broadcast %c-1_i32_258 : i32 to vector<1x256xi32>
    %665 = arith.addi %656, %664 : vector<1x256xi32>
    %c16_i32_259 = arith.constant 16 : i32
    %666 = vector.broadcast %c16_i32_259 : i32 to vector<1x256xi32>
    %667 = arith.cmpi slt, %665, %666 : vector<1x256xi32>
    %668 = arith.andi %663, %667 : vector<1x256xi1>
    %cst_260 = arith.constant 0.000000e+00 : f32
    %669 = vector.shape_cast %668 : vector<1x256xi1> to vector<1x256xi1>
    %670 = vector.broadcast %669 : vector<1x256xi1> to vector<8x256xi1>
    %671 = vector.broadcast %cst_260 : f32 to vector<8x256xf32>
    %672 = arith.select %670, %659, %671 : vector<8x256xi1>, vector<8x256xf32>
    %cst_261 = arith.constant 0.000000e+00 : f32
    %673 = vector.broadcast %cst_261 : f32 to vector<8x17xf32>
    %674 = vector.extract_strided_slice %639 {offsets = [0, 0], sizes = [8, 239], strides = [1, 1]} : vector<8x256xf32> to vector<8x239xf32>
    %675 = tpu.concatenate %673, %674 in 1 : vector<8x17xf32>, vector<8x239xf32> -> vector<8x256xf32>
    %c-1_i32_262 = arith.constant -1 : i32
    %676 = vector.broadcast %c-1_i32_262 : i32 to vector<1x256xi32>
    %677 = arith.addi %656, %676 : vector<1x256xi32>
    %c0_i32_263 = arith.constant 0 : i32
    %678 = vector.broadcast %c0_i32_263 : i32 to vector<1x256xi32>
    %679 = arith.cmpi sge, %677, %678 : vector<1x256xi32>
    %c-1_i32_264 = arith.constant -1 : i32
    %680 = vector.broadcast %c-1_i32_264 : i32 to vector<1x256xi32>
    %681 = arith.addi %656, %680 : vector<1x256xi32>
    %c16_i32_265 = arith.constant 16 : i32
    %682 = vector.broadcast %c16_i32_265 : i32 to vector<1x256xi32>
    %683 = arith.cmpi slt, %681, %682 : vector<1x256xi32>
    %684 = arith.andi %679, %683 : vector<1x256xi1>
    %cst_266 = arith.constant 0.000000e+00 : f32
    %685 = vector.shape_cast %684 : vector<1x256xi1> to vector<1x256xi1>
    %686 = vector.broadcast %685 : vector<1x256xi1> to vector<8x256xi1>
    %687 = vector.broadcast %cst_266 : f32 to vector<8x256xf32>
    %688 = arith.select %686, %675, %687 : vector<8x256xi1>, vector<8x256xf32>
    %cst_267 = arith.constant 0.000000e+00 : f32
    %689 = vector.broadcast %cst_267 : f32 to vector<8x16xf32>
    %690 = vector.extract_strided_slice %506 {offsets = [0, 0], sizes = [8, 240], strides = [1, 1]} : vector<8x256xf32> to vector<8x240xf32>
    %691 = tpu.concatenate %689, %690 in 1 : vector<8x16xf32>, vector<8x240xf32> -> vector<8x256xf32>
    %cst_268 = arith.constant 0.000000e+00 : f32
    %692 = vector.broadcast %cst_268 : f32 to vector<8x16xf32>
    %693 = vector.extract_strided_slice %639 {offsets = [0, 0], sizes = [8, 240], strides = [1, 1]} : vector<8x256xf32> to vector<8x240xf32>
    %694 = tpu.concatenate %692, %693 in 1 : vector<8x16xf32>, vector<8x240xf32> -> vector<8x256xf32>
    %cst_269 = arith.constant 0.000000e+00 : f32
    %695 = vector.broadcast %cst_269 : f32 to vector<8x15xf32>
    %696 = vector.extract_strided_slice %506 {offsets = [0, 0], sizes = [8, 241], strides = [1, 1]} : vector<8x256xf32> to vector<8x241xf32>
    %697 = tpu.concatenate %695, %696 in 1 : vector<8x15xf32>, vector<8x241xf32> -> vector<8x256xf32>
    %c1_i32_270 = arith.constant 1 : i32
    %698 = vector.broadcast %c1_i32_270 : i32 to vector<1x256xi32>
    %699 = arith.addi %656, %698 : vector<1x256xi32>
    %c0_i32_271 = arith.constant 0 : i32
    %700 = vector.broadcast %c0_i32_271 : i32 to vector<1x256xi32>
    %701 = arith.cmpi sge, %699, %700 : vector<1x256xi32>
    %c1_i32_272 = arith.constant 1 : i32
    %702 = vector.broadcast %c1_i32_272 : i32 to vector<1x256xi32>
    %703 = arith.addi %656, %702 : vector<1x256xi32>
    %c16_i32_273 = arith.constant 16 : i32
    %704 = vector.broadcast %c16_i32_273 : i32 to vector<1x256xi32>
    %705 = arith.cmpi slt, %703, %704 : vector<1x256xi32>
    %706 = arith.andi %701, %705 : vector<1x256xi1>
    %cst_274 = arith.constant 0.000000e+00 : f32
    %707 = vector.shape_cast %706 : vector<1x256xi1> to vector<1x256xi1>
    %708 = vector.broadcast %707 : vector<1x256xi1> to vector<8x256xi1>
    %709 = vector.broadcast %cst_274 : f32 to vector<8x256xf32>
    %710 = arith.select %708, %697, %709 : vector<8x256xi1>, vector<8x256xf32>
    %cst_275 = arith.constant 0.000000e+00 : f32
    %711 = vector.broadcast %cst_275 : f32 to vector<8x15xf32>
    %712 = vector.extract_strided_slice %639 {offsets = [0, 0], sizes = [8, 241], strides = [1, 1]} : vector<8x256xf32> to vector<8x241xf32>
    %713 = tpu.concatenate %711, %712 in 1 : vector<8x15xf32>, vector<8x241xf32> -> vector<8x256xf32>
    %c1_i32_276 = arith.constant 1 : i32
    %714 = vector.broadcast %c1_i32_276 : i32 to vector<1x256xi32>
    %715 = arith.addi %656, %714 : vector<1x256xi32>
    %c0_i32_277 = arith.constant 0 : i32
    %716 = vector.broadcast %c0_i32_277 : i32 to vector<1x256xi32>
    %717 = arith.cmpi sge, %715, %716 : vector<1x256xi32>
    %c1_i32_278 = arith.constant 1 : i32
    %718 = vector.broadcast %c1_i32_278 : i32 to vector<1x256xi32>
    %719 = arith.addi %656, %718 : vector<1x256xi32>
    %c16_i32_279 = arith.constant 16 : i32
    %720 = vector.broadcast %c16_i32_279 : i32 to vector<1x256xi32>
    %721 = arith.cmpi slt, %719, %720 : vector<1x256xi32>
    %722 = arith.andi %717, %721 : vector<1x256xi1>
    %cst_280 = arith.constant 0.000000e+00 : f32
    %723 = vector.shape_cast %722 : vector<1x256xi1> to vector<1x256xi1>
    %724 = vector.broadcast %723 : vector<1x256xi1> to vector<8x256xi1>
    %725 = vector.broadcast %cst_280 : f32 to vector<8x256xf32>
    %726 = arith.select %724, %713, %725 : vector<8x256xi1>, vector<8x256xf32>
    %cst_281 = arith.constant 0.000000e+00 : f32
    %727 = vector.broadcast %cst_281 : f32 to vector<8x1xf32>
    %728 = vector.extract_strided_slice %506 {offsets = [0, 0], sizes = [8, 255], strides = [1, 1]} : vector<8x256xf32> to vector<8x255xf32>
    %729 = tpu.concatenate %727, %728 in 1 : vector<8x1xf32>, vector<8x255xf32> -> vector<8x256xf32>
    %c-1_i32_282 = arith.constant -1 : i32
    %730 = vector.broadcast %c-1_i32_282 : i32 to vector<1x256xi32>
    %731 = arith.addi %656, %730 : vector<1x256xi32>
    %c0_i32_283 = arith.constant 0 : i32
    %732 = vector.broadcast %c0_i32_283 : i32 to vector<1x256xi32>
    %733 = arith.cmpi sge, %731, %732 : vector<1x256xi32>
    %c-1_i32_284 = arith.constant -1 : i32
    %734 = vector.broadcast %c-1_i32_284 : i32 to vector<1x256xi32>
    %735 = arith.addi %656, %734 : vector<1x256xi32>
    %c16_i32_285 = arith.constant 16 : i32
    %736 = vector.broadcast %c16_i32_285 : i32 to vector<1x256xi32>
    %737 = arith.cmpi slt, %735, %736 : vector<1x256xi32>
    %738 = arith.andi %733, %737 : vector<1x256xi1>
    %cst_286 = arith.constant 0.000000e+00 : f32
    %739 = vector.shape_cast %738 : vector<1x256xi1> to vector<1x256xi1>
    %740 = vector.broadcast %739 : vector<1x256xi1> to vector<8x256xi1>
    %741 = vector.broadcast %cst_286 : f32 to vector<8x256xf32>
    %742 = arith.select %740, %729, %741 : vector<8x256xi1>, vector<8x256xf32>
    %cst_287 = arith.constant 0.000000e+00 : f32
    %743 = vector.broadcast %cst_287 : f32 to vector<8x1xf32>
    %744 = vector.extract_strided_slice %639 {offsets = [0, 0], sizes = [8, 255], strides = [1, 1]} : vector<8x256xf32> to vector<8x255xf32>
    %745 = tpu.concatenate %743, %744 in 1 : vector<8x1xf32>, vector<8x255xf32> -> vector<8x256xf32>
    %c-1_i32_288 = arith.constant -1 : i32
    %746 = vector.broadcast %c-1_i32_288 : i32 to vector<1x256xi32>
    %747 = arith.addi %656, %746 : vector<1x256xi32>
    %c0_i32_289 = arith.constant 0 : i32
    %748 = vector.broadcast %c0_i32_289 : i32 to vector<1x256xi32>
    %749 = arith.cmpi sge, %747, %748 : vector<1x256xi32>
    %c-1_i32_290 = arith.constant -1 : i32
    %750 = vector.broadcast %c-1_i32_290 : i32 to vector<1x256xi32>
    %751 = arith.addi %656, %750 : vector<1x256xi32>
    %c16_i32_291 = arith.constant 16 : i32
    %752 = vector.broadcast %c16_i32_291 : i32 to vector<1x256xi32>
    %753 = arith.cmpi slt, %751, %752 : vector<1x256xi32>
    %754 = arith.andi %749, %753 : vector<1x256xi1>
    %cst_292 = arith.constant 0.000000e+00 : f32
    %755 = vector.shape_cast %754 : vector<1x256xi1> to vector<1x256xi1>
    %756 = vector.broadcast %755 : vector<1x256xi1> to vector<8x256xi1>
    %757 = vector.broadcast %cst_292 : f32 to vector<8x256xf32>
    %758 = arith.select %756, %745, %757 : vector<8x256xi1>, vector<8x256xf32>
    %759 = vector.extract_strided_slice %506 {offsets = [0, 1], sizes = [8, 255], strides = [1, 1]} : vector<8x256xf32> to vector<8x255xf32>
    %cst_293 = arith.constant 0.000000e+00 : f32
    %760 = vector.broadcast %cst_293 : f32 to vector<8x1xf32>
    %761 = tpu.concatenate %759, %760 in 1 : vector<8x255xf32>, vector<8x1xf32> -> vector<8x256xf32>
    %c1_i32_294 = arith.constant 1 : i32
    %762 = vector.broadcast %c1_i32_294 : i32 to vector<1x256xi32>
    %763 = arith.addi %656, %762 : vector<1x256xi32>
    %c0_i32_295 = arith.constant 0 : i32
    %764 = vector.broadcast %c0_i32_295 : i32 to vector<1x256xi32>
    %765 = arith.cmpi sge, %763, %764 : vector<1x256xi32>
    %c1_i32_296 = arith.constant 1 : i32
    %766 = vector.broadcast %c1_i32_296 : i32 to vector<1x256xi32>
    %767 = arith.addi %656, %766 : vector<1x256xi32>
    %c16_i32_297 = arith.constant 16 : i32
    %768 = vector.broadcast %c16_i32_297 : i32 to vector<1x256xi32>
    %769 = arith.cmpi slt, %767, %768 : vector<1x256xi32>
    %770 = arith.andi %765, %769 : vector<1x256xi1>
    %cst_298 = arith.constant 0.000000e+00 : f32
    %771 = vector.shape_cast %770 : vector<1x256xi1> to vector<1x256xi1>
    %772 = vector.broadcast %771 : vector<1x256xi1> to vector<8x256xi1>
    %773 = vector.broadcast %cst_298 : f32 to vector<8x256xf32>
    %774 = arith.select %772, %761, %773 : vector<8x256xi1>, vector<8x256xf32>
    %775 = vector.extract_strided_slice %639 {offsets = [0, 1], sizes = [8, 255], strides = [1, 1]} : vector<8x256xf32> to vector<8x255xf32>
    %cst_299 = arith.constant 0.000000e+00 : f32
    %776 = vector.broadcast %cst_299 : f32 to vector<8x1xf32>
    %777 = tpu.concatenate %775, %776 in 1 : vector<8x255xf32>, vector<8x1xf32> -> vector<8x256xf32>
    %c1_i32_300 = arith.constant 1 : i32
    %778 = vector.broadcast %c1_i32_300 : i32 to vector<1x256xi32>
    %779 = arith.addi %656, %778 : vector<1x256xi32>
    %c0_i32_301 = arith.constant 0 : i32
    %780 = vector.broadcast %c0_i32_301 : i32 to vector<1x256xi32>
    %781 = arith.cmpi sge, %779, %780 : vector<1x256xi32>
    %c1_i32_302 = arith.constant 1 : i32
    %782 = vector.broadcast %c1_i32_302 : i32 to vector<1x256xi32>
    %783 = arith.addi %656, %782 : vector<1x256xi32>
    %c16_i32_303 = arith.constant 16 : i32
    %784 = vector.broadcast %c16_i32_303 : i32 to vector<1x256xi32>
    %785 = arith.cmpi slt, %783, %784 : vector<1x256xi32>
    %786 = arith.andi %781, %785 : vector<1x256xi1>
    %cst_304 = arith.constant 0.000000e+00 : f32
    %787 = vector.shape_cast %786 : vector<1x256xi1> to vector<1x256xi1>
    %788 = vector.broadcast %787 : vector<1x256xi1> to vector<8x256xi1>
    %789 = vector.broadcast %cst_304 : f32 to vector<8x256xf32>
    %790 = arith.select %788, %777, %789 : vector<8x256xi1>, vector<8x256xf32>
    %791 = vector.extract_strided_slice %506 {offsets = [0, 15], sizes = [8, 241], strides = [1, 1]} : vector<8x256xf32> to vector<8x241xf32>
    %cst_305 = arith.constant 0.000000e+00 : f32
    %792 = vector.broadcast %cst_305 : f32 to vector<8x15xf32>
    %793 = tpu.concatenate %791, %792 in 1 : vector<8x241xf32>, vector<8x15xf32> -> vector<8x256xf32>
    %c-1_i32_306 = arith.constant -1 : i32
    %794 = vector.broadcast %c-1_i32_306 : i32 to vector<1x256xi32>
    %795 = arith.addi %656, %794 : vector<1x256xi32>
    %c0_i32_307 = arith.constant 0 : i32
    %796 = vector.broadcast %c0_i32_307 : i32 to vector<1x256xi32>
    %797 = arith.cmpi sge, %795, %796 : vector<1x256xi32>
    %c-1_i32_308 = arith.constant -1 : i32
    %798 = vector.broadcast %c-1_i32_308 : i32 to vector<1x256xi32>
    %799 = arith.addi %656, %798 : vector<1x256xi32>
    %c16_i32_309 = arith.constant 16 : i32
    %800 = vector.broadcast %c16_i32_309 : i32 to vector<1x256xi32>
    %801 = arith.cmpi slt, %799, %800 : vector<1x256xi32>
    %802 = arith.andi %797, %801 : vector<1x256xi1>
    %cst_310 = arith.constant 0.000000e+00 : f32
    %803 = vector.shape_cast %802 : vector<1x256xi1> to vector<1x256xi1>
    %804 = vector.broadcast %803 : vector<1x256xi1> to vector<8x256xi1>
    %805 = vector.broadcast %cst_310 : f32 to vector<8x256xf32>
    %806 = arith.select %804, %793, %805 : vector<8x256xi1>, vector<8x256xf32>
    %807 = vector.extract_strided_slice %639 {offsets = [0, 15], sizes = [8, 241], strides = [1, 1]} : vector<8x256xf32> to vector<8x241xf32>
    %cst_311 = arith.constant 0.000000e+00 : f32
    %808 = vector.broadcast %cst_311 : f32 to vector<8x15xf32>
    %809 = tpu.concatenate %807, %808 in 1 : vector<8x241xf32>, vector<8x15xf32> -> vector<8x256xf32>
    %c-1_i32_312 = arith.constant -1 : i32
    %810 = vector.broadcast %c-1_i32_312 : i32 to vector<1x256xi32>
    %811 = arith.addi %656, %810 : vector<1x256xi32>
    %c0_i32_313 = arith.constant 0 : i32
    %812 = vector.broadcast %c0_i32_313 : i32 to vector<1x256xi32>
    %813 = arith.cmpi sge, %811, %812 : vector<1x256xi32>
    %c-1_i32_314 = arith.constant -1 : i32
    %814 = vector.broadcast %c-1_i32_314 : i32 to vector<1x256xi32>
    %815 = arith.addi %656, %814 : vector<1x256xi32>
    %c16_i32_315 = arith.constant 16 : i32
    %816 = vector.broadcast %c16_i32_315 : i32 to vector<1x256xi32>
    %817 = arith.cmpi slt, %815, %816 : vector<1x256xi32>
    %818 = arith.andi %813, %817 : vector<1x256xi1>
    %cst_316 = arith.constant 0.000000e+00 : f32
    %819 = vector.shape_cast %818 : vector<1x256xi1> to vector<1x256xi1>
    %820 = vector.broadcast %819 : vector<1x256xi1> to vector<8x256xi1>
    %821 = vector.broadcast %cst_316 : f32 to vector<8x256xf32>
    %822 = arith.select %820, %809, %821 : vector<8x256xi1>, vector<8x256xf32>
    %823 = vector.extract_strided_slice %506 {offsets = [0, 16], sizes = [8, 240], strides = [1, 1]} : vector<8x256xf32> to vector<8x240xf32>
    %cst_317 = arith.constant 0.000000e+00 : f32
    %824 = vector.broadcast %cst_317 : f32 to vector<8x16xf32>
    %825 = tpu.concatenate %823, %824 in 1 : vector<8x240xf32>, vector<8x16xf32> -> vector<8x256xf32>
    %826 = vector.extract_strided_slice %639 {offsets = [0, 16], sizes = [8, 240], strides = [1, 1]} : vector<8x256xf32> to vector<8x240xf32>
    %cst_318 = arith.constant 0.000000e+00 : f32
    %827 = vector.broadcast %cst_318 : f32 to vector<8x16xf32>
    %828 = tpu.concatenate %826, %827 in 1 : vector<8x240xf32>, vector<8x16xf32> -> vector<8x256xf32>
    %829 = vector.extract_strided_slice %506 {offsets = [0, 17], sizes = [8, 239], strides = [1, 1]} : vector<8x256xf32> to vector<8x239xf32>
    %cst_319 = arith.constant 0.000000e+00 : f32
    %830 = vector.broadcast %cst_319 : f32 to vector<8x17xf32>
    %831 = tpu.concatenate %829, %830 in 1 : vector<8x239xf32>, vector<8x17xf32> -> vector<8x256xf32>
    %c1_i32_320 = arith.constant 1 : i32
    %832 = vector.broadcast %c1_i32_320 : i32 to vector<1x256xi32>
    %833 = arith.addi %656, %832 : vector<1x256xi32>
    %c0_i32_321 = arith.constant 0 : i32
    %834 = vector.broadcast %c0_i32_321 : i32 to vector<1x256xi32>
    %835 = arith.cmpi sge, %833, %834 : vector<1x256xi32>
    %c1_i32_322 = arith.constant 1 : i32
    %836 = vector.broadcast %c1_i32_322 : i32 to vector<1x256xi32>
    %837 = arith.addi %656, %836 : vector<1x256xi32>
    %c16_i32_323 = arith.constant 16 : i32
    %838 = vector.broadcast %c16_i32_323 : i32 to vector<1x256xi32>
    %839 = arith.cmpi slt, %837, %838 : vector<1x256xi32>
    %840 = arith.andi %835, %839 : vector<1x256xi1>
    %cst_324 = arith.constant 0.000000e+00 : f32
    %841 = vector.shape_cast %840 : vector<1x256xi1> to vector<1x256xi1>
    %842 = vector.broadcast %841 : vector<1x256xi1> to vector<8x256xi1>
    %843 = vector.broadcast %cst_324 : f32 to vector<8x256xf32>
    %844 = arith.select %842, %831, %843 : vector<8x256xi1>, vector<8x256xf32>
    %845 = vector.extract_strided_slice %639 {offsets = [0, 17], sizes = [8, 239], strides = [1, 1]} : vector<8x256xf32> to vector<8x239xf32>
    %cst_325 = arith.constant 0.000000e+00 : f32
    %846 = vector.broadcast %cst_325 : f32 to vector<8x17xf32>
    %847 = tpu.concatenate %845, %846 in 1 : vector<8x239xf32>, vector<8x17xf32> -> vector<8x256xf32>
    %c1_i32_326 = arith.constant 1 : i32
    %848 = vector.broadcast %c1_i32_326 : i32 to vector<1x256xi32>
    %849 = arith.addi %656, %848 : vector<1x256xi32>
    %c0_i32_327 = arith.constant 0 : i32
    %850 = vector.broadcast %c0_i32_327 : i32 to vector<1x256xi32>
    %851 = arith.cmpi sge, %849, %850 : vector<1x256xi32>
    %c1_i32_328 = arith.constant 1 : i32
    %852 = vector.broadcast %c1_i32_328 : i32 to vector<1x256xi32>
    %853 = arith.addi %656, %852 : vector<1x256xi32>
    %c16_i32_329 = arith.constant 16 : i32
    %854 = vector.broadcast %c16_i32_329 : i32 to vector<1x256xi32>
    %855 = arith.cmpi slt, %853, %854 : vector<1x256xi32>
    %856 = arith.andi %851, %855 : vector<1x256xi1>
    %cst_330 = arith.constant 0.000000e+00 : f32
    %857 = vector.shape_cast %856 : vector<1x256xi1> to vector<1x256xi1>
    %858 = vector.broadcast %857 : vector<1x256xi1> to vector<8x256xi1>
    %859 = vector.broadcast %cst_330 : f32 to vector<8x256xf32>
    %860 = arith.select %858, %847, %859 : vector<8x256xi1>, vector<8x256xf32>
    %861 = tpu.concatenate %672, %688, %691, %694, %710, %726, %742, %758, %506, %639, %774, %790, %806, %822, %825, %828 in 0 : vector<8x256xf32>, vector<8x256xf32>, vector<8x256xf32>, vector<8x256xf32>, vector<8x256xf32>, vector<8x256xf32>, vector<8x256xf32>, vector<8x256xf32>, vector<8x256xf32>, vector<8x256xf32>, vector<8x256xf32>, vector<8x256xf32>, vector<8x256xf32>, vector<8x256xf32>, vector<8x256xf32>, vector<8x256xf32> -> vector<128x256xf32>
    %862 = tpu.concatenate %844, %860 in 0 : vector<8x256xf32>, vector<8x256xf32> -> vector<16x256xf32>
    %863 = tpu.concatenate %861, %862 in 0 : vector<128x256xf32>, vector<16x256xf32> -> vector<144x256xf32>
    %c0_331 = arith.constant 0 : index
    %c0_332 = arith.constant 0 : index
    %864 = vector.load %arg14[%c0_331, %c0_332] : memref<8x144xf32, #tpu.memory_space<vmem>>, vector<8x144xf32>
    %cst_333 = arith.constant dense<0.000000e+00> : vector<8x256xf32>
    %865 = tpu.matmul %864, %863, %cst_333 {dimension_numbers = #tpu.dot_dimension_numbers<[1], [0], [0], [1], [0, 0, 1, 1], [], []>} : vector<8x144xf32>, vector<144x256xf32>, vector<8x256xf32> -> vector<8x256xf32>
    %c0_334 = arith.constant 0 : index
    %c0_335 = arith.constant 0 : index
    %866 = vector.load %arg15[%c0_334, %c0_335] : memref<8x1xf32, #tpu.memory_space<vmem>>, vector<8x1xf32>
    %867 = vector.broadcast %866 : vector<8x1xf32> to vector<8x256xf32>
    %868 = arith.mulf %865, %867 : vector<8x256xf32>
    %c0_336 = arith.constant 0 : index
    %c0_337 = arith.constant 0 : index
    %869 = vector.load %arg16[%c0_336, %c0_337] : memref<8x1xf32, #tpu.memory_space<vmem>>, vector<8x1xf32>
    %870 = vector.broadcast %869 : vector<8x1xf32> to vector<8x256xf32>
    %871 = arith.addf %868, %870 : vector<8x256xf32>
    %cst_338 = arith.constant 0.000000e+00 : f32
    %872 = vector.broadcast %cst_338 : f32 to vector<8x256xf32>
    %873 = arith.cmpf oge, %871, %872 : vector<8x256xf32>
    %cst_339 = arith.constant 0.00999999977 : f32
    %874 = vector.broadcast %cst_339 : f32 to vector<8x256xf32>
    %875 = arith.mulf %874, %871 : vector<8x256xf32>
    %876 = arith.select %873, %871, %875 : vector<8x256xi1>, vector<8x256xf32>
    %c0_340 = arith.constant 0 : index
    %c0_341 = arith.constant 0 : index
    %877 = vector.load %arg27[%c0_340, %c0_341] : memref<256x64xf32, #tpu.memory_space<vmem>>, vector<256x64xf32>
    %cst_342 = arith.constant dense<0.000000e+00> : vector<8x64xf32>
    %878 = tpu.matmul %876, %877, %cst_342 {dimension_numbers = #tpu.dot_dimension_numbers<[1], [0], [0], [1], [0, 0, 1, 1], [], []>} : vector<8x256xf32>, vector<256x64xf32>, vector<8x64xf32> -> vector<8x64xf32>
    %879 = tpu.iota {dimensions = array<i32: 1>} : vector<1x64xi32>
    %c8_i32 = arith.constant 8 : i32
    %c0_i32_343 = arith.constant 0 : i32
    %880 = arith.cmpi eq, %c8_i32, %c0_i32_343 : i32
    %c1_i32_344 = arith.constant 1 : i32
    %881 = arith.select %880, %c1_i32_344, %c8_i32 : i32
    %882 = vector.broadcast %881 : i32 to vector<1x64xi32>
    %883 = arith.remsi %879, %882 : vector<1x64xi32>
    %c0_i32_345 = arith.constant 0 : i32
    %884 = vector.broadcast %c0_i32_345 : i32 to vector<1x64xi32>
    %885 = arith.cmpi ne, %883, %884 : vector<1x64xi32>
    %c0_i32_346 = arith.constant 0 : i32
    %886 = vector.broadcast %c0_i32_346 : i32 to vector<1x64xi32>
    %887 = arith.cmpi slt, %883, %886 : vector<1x64xi32>
    %c0_i32_347 = arith.constant 0 : i32
    %888 = arith.cmpi slt, %881, %c0_i32_347 : i32
    %889 = vector.broadcast %888 : i1 to vector<1x64xi1>
    %890 = vector.broadcast %889 : vector<1x64xi1> to vector<1x64xi1>
    %891 = arith.xori %887, %890 : vector<1x64xi1>
    %892 = arith.andi %891, %885 : vector<1x64xi1>
    %893 = vector.broadcast %881 : i32 to vector<1x64xi32>
    %894 = arith.addi %883, %893 : vector<1x64xi32>
    %895 = arith.select %892, %894, %883 : vector<1x64xi1>, vector<1x64xi32>
    %cst_348 = arith.constant 0.000000e+00 : f32
    %896 = vector.broadcast %cst_348 : f32 to vector<8x9xf32>
    %897 = vector.extract_strided_slice %878 {offsets = [0, 0], sizes = [8, 55], strides = [1, 1]} : vector<8x64xf32> to vector<8x55xf32>
    %898 = tpu.concatenate %896, %897 in 1 : vector<8x9xf32>, vector<8x55xf32> -> vector<8x64xf32>
    %c-1_i32_349 = arith.constant -1 : i32
    %899 = vector.broadcast %c-1_i32_349 : i32 to vector<1x64xi32>
    %900 = arith.addi %895, %899 : vector<1x64xi32>
    %c0_i32_350 = arith.constant 0 : i32
    %901 = vector.broadcast %c0_i32_350 : i32 to vector<1x64xi32>
    %902 = arith.cmpi sge, %900, %901 : vector<1x64xi32>
    %c-1_i32_351 = arith.constant -1 : i32
    %903 = vector.broadcast %c-1_i32_351 : i32 to vector<1x64xi32>
    %904 = arith.addi %895, %903 : vector<1x64xi32>
    %c8_i32_352 = arith.constant 8 : i32
    %905 = vector.broadcast %c8_i32_352 : i32 to vector<1x64xi32>
    %906 = arith.cmpi slt, %904, %905 : vector<1x64xi32>
    %907 = arith.andi %902, %906 : vector<1x64xi1>
    %cst_353 = arith.constant 0.000000e+00 : f32
    %908 = vector.shape_cast %907 : vector<1x64xi1> to vector<1x64xi1>
    %909 = vector.broadcast %908 : vector<1x64xi1> to vector<8x64xi1>
    %910 = vector.broadcast %cst_353 : f32 to vector<8x64xf32>
    %911 = arith.select %909, %898, %910 : vector<8x64xi1>, vector<8x64xf32>
    %cst_354 = arith.constant 0.000000e+00 : f32
    %912 = vector.broadcast %cst_354 : f32 to vector<8x8xf32>
    %913 = vector.extract_strided_slice %878 {offsets = [0, 0], sizes = [8, 56], strides = [1, 1]} : vector<8x64xf32> to vector<8x56xf32>
    %914 = tpu.concatenate %912, %913 in 1 : vector<8x8xf32>, vector<8x56xf32> -> vector<8x64xf32>
    %cst_355 = arith.constant 0.000000e+00 : f32
    %915 = vector.broadcast %cst_355 : f32 to vector<8x7xf32>
    %916 = vector.extract_strided_slice %878 {offsets = [0, 0], sizes = [8, 57], strides = [1, 1]} : vector<8x64xf32> to vector<8x57xf32>
    %917 = tpu.concatenate %915, %916 in 1 : vector<8x7xf32>, vector<8x57xf32> -> vector<8x64xf32>
    %c1_i32_356 = arith.constant 1 : i32
    %918 = vector.broadcast %c1_i32_356 : i32 to vector<1x64xi32>
    %919 = arith.addi %895, %918 : vector<1x64xi32>
    %c0_i32_357 = arith.constant 0 : i32
    %920 = vector.broadcast %c0_i32_357 : i32 to vector<1x64xi32>
    %921 = arith.cmpi sge, %919, %920 : vector<1x64xi32>
    %c1_i32_358 = arith.constant 1 : i32
    %922 = vector.broadcast %c1_i32_358 : i32 to vector<1x64xi32>
    %923 = arith.addi %895, %922 : vector<1x64xi32>
    %c8_i32_359 = arith.constant 8 : i32
    %924 = vector.broadcast %c8_i32_359 : i32 to vector<1x64xi32>
    %925 = arith.cmpi slt, %923, %924 : vector<1x64xi32>
    %926 = arith.andi %921, %925 : vector<1x64xi1>
    %cst_360 = arith.constant 0.000000e+00 : f32
    %927 = vector.shape_cast %926 : vector<1x64xi1> to vector<1x64xi1>
    %928 = vector.broadcast %927 : vector<1x64xi1> to vector<8x64xi1>
    %929 = vector.broadcast %cst_360 : f32 to vector<8x64xf32>
    %930 = arith.select %928, %917, %929 : vector<8x64xi1>, vector<8x64xf32>
    %cst_361 = arith.constant 0.000000e+00 : f32
    %931 = vector.broadcast %cst_361 : f32 to vector<8x1xf32>
    %932 = vector.extract_strided_slice %878 {offsets = [0, 0], sizes = [8, 63], strides = [1, 1]} : vector<8x64xf32> to vector<8x63xf32>
    %933 = tpu.concatenate %931, %932 in 1 : vector<8x1xf32>, vector<8x63xf32> -> vector<8x64xf32>
    %c-1_i32_362 = arith.constant -1 : i32
    %934 = vector.broadcast %c-1_i32_362 : i32 to vector<1x64xi32>
    %935 = arith.addi %895, %934 : vector<1x64xi32>
    %c0_i32_363 = arith.constant 0 : i32
    %936 = vector.broadcast %c0_i32_363 : i32 to vector<1x64xi32>
    %937 = arith.cmpi sge, %935, %936 : vector<1x64xi32>
    %c-1_i32_364 = arith.constant -1 : i32
    %938 = vector.broadcast %c-1_i32_364 : i32 to vector<1x64xi32>
    %939 = arith.addi %895, %938 : vector<1x64xi32>
    %c8_i32_365 = arith.constant 8 : i32
    %940 = vector.broadcast %c8_i32_365 : i32 to vector<1x64xi32>
    %941 = arith.cmpi slt, %939, %940 : vector<1x64xi32>
    %942 = arith.andi %937, %941 : vector<1x64xi1>
    %cst_366 = arith.constant 0.000000e+00 : f32
    %943 = vector.shape_cast %942 : vector<1x64xi1> to vector<1x64xi1>
    %944 = vector.broadcast %943 : vector<1x64xi1> to vector<8x64xi1>
    %945 = vector.broadcast %cst_366 : f32 to vector<8x64xf32>
    %946 = arith.select %944, %933, %945 : vector<8x64xi1>, vector<8x64xf32>
    %947 = vector.extract_strided_slice %878 {offsets = [0, 1], sizes = [8, 63], strides = [1, 1]} : vector<8x64xf32> to vector<8x63xf32>
    %cst_367 = arith.constant 0.000000e+00 : f32
    %948 = vector.broadcast %cst_367 : f32 to vector<8x1xf32>
    %949 = tpu.concatenate %947, %948 in 1 : vector<8x63xf32>, vector<8x1xf32> -> vector<8x64xf32>
    %c1_i32_368 = arith.constant 1 : i32
    %950 = vector.broadcast %c1_i32_368 : i32 to vector<1x64xi32>
    %951 = arith.addi %895, %950 : vector<1x64xi32>
    %c0_i32_369 = arith.constant 0 : i32
    %952 = vector.broadcast %c0_i32_369 : i32 to vector<1x64xi32>
    %953 = arith.cmpi sge, %951, %952 : vector<1x64xi32>
    %c1_i32_370 = arith.constant 1 : i32
    %954 = vector.broadcast %c1_i32_370 : i32 to vector<1x64xi32>
    %955 = arith.addi %895, %954 : vector<1x64xi32>
    %c8_i32_371 = arith.constant 8 : i32
    %956 = vector.broadcast %c8_i32_371 : i32 to vector<1x64xi32>
    %957 = arith.cmpi slt, %955, %956 : vector<1x64xi32>
    %958 = arith.andi %953, %957 : vector<1x64xi1>
    %cst_372 = arith.constant 0.000000e+00 : f32
    %959 = vector.shape_cast %958 : vector<1x64xi1> to vector<1x64xi1>
    %960 = vector.broadcast %959 : vector<1x64xi1> to vector<8x64xi1>
    %961 = vector.broadcast %cst_372 : f32 to vector<8x64xf32>
    %962 = arith.select %960, %949, %961 : vector<8x64xi1>, vector<8x64xf32>
    %963 = vector.extract_strided_slice %878 {offsets = [0, 7], sizes = [8, 57], strides = [1, 1]} : vector<8x64xf32> to vector<8x57xf32>
    %cst_373 = arith.constant 0.000000e+00 : f32
    %964 = vector.broadcast %cst_373 : f32 to vector<8x7xf32>
    %965 = tpu.concatenate %963, %964 in 1 : vector<8x57xf32>, vector<8x7xf32> -> vector<8x64xf32>
    %c-1_i32_374 = arith.constant -1 : i32
    %966 = vector.broadcast %c-1_i32_374 : i32 to vector<1x64xi32>
    %967 = arith.addi %895, %966 : vector<1x64xi32>
    %c0_i32_375 = arith.constant 0 : i32
    %968 = vector.broadcast %c0_i32_375 : i32 to vector<1x64xi32>
    %969 = arith.cmpi sge, %967, %968 : vector<1x64xi32>
    %c-1_i32_376 = arith.constant -1 : i32
    %970 = vector.broadcast %c-1_i32_376 : i32 to vector<1x64xi32>
    %971 = arith.addi %895, %970 : vector<1x64xi32>
    %c8_i32_377 = arith.constant 8 : i32
    %972 = vector.broadcast %c8_i32_377 : i32 to vector<1x64xi32>
    %973 = arith.cmpi slt, %971, %972 : vector<1x64xi32>
    %974 = arith.andi %969, %973 : vector<1x64xi1>
    %cst_378 = arith.constant 0.000000e+00 : f32
    %975 = vector.shape_cast %974 : vector<1x64xi1> to vector<1x64xi1>
    %976 = vector.broadcast %975 : vector<1x64xi1> to vector<8x64xi1>
    %977 = vector.broadcast %cst_378 : f32 to vector<8x64xf32>
    %978 = arith.select %976, %965, %977 : vector<8x64xi1>, vector<8x64xf32>
    %979 = vector.extract_strided_slice %878 {offsets = [0, 8], sizes = [8, 56], strides = [1, 1]} : vector<8x64xf32> to vector<8x56xf32>
    %cst_379 = arith.constant 0.000000e+00 : f32
    %980 = vector.broadcast %cst_379 : f32 to vector<8x8xf32>
    %981 = tpu.concatenate %979, %980 in 1 : vector<8x56xf32>, vector<8x8xf32> -> vector<8x64xf32>
    %982 = vector.extract_strided_slice %878 {offsets = [0, 9], sizes = [8, 55], strides = [1, 1]} : vector<8x64xf32> to vector<8x55xf32>
    %cst_380 = arith.constant 0.000000e+00 : f32
    %983 = vector.broadcast %cst_380 : f32 to vector<8x9xf32>
    %984 = tpu.concatenate %982, %983 in 1 : vector<8x55xf32>, vector<8x9xf32> -> vector<8x64xf32>
    %c1_i32_381 = arith.constant 1 : i32
    %985 = vector.broadcast %c1_i32_381 : i32 to vector<1x64xi32>
    %986 = arith.addi %895, %985 : vector<1x64xi32>
    %c0_i32_382 = arith.constant 0 : i32
    %987 = vector.broadcast %c0_i32_382 : i32 to vector<1x64xi32>
    %988 = arith.cmpi sge, %986, %987 : vector<1x64xi32>
    %c1_i32_383 = arith.constant 1 : i32
    %989 = vector.broadcast %c1_i32_383 : i32 to vector<1x64xi32>
    %990 = arith.addi %895, %989 : vector<1x64xi32>
    %c8_i32_384 = arith.constant 8 : i32
    %991 = vector.broadcast %c8_i32_384 : i32 to vector<1x64xi32>
    %992 = arith.cmpi slt, %990, %991 : vector<1x64xi32>
    %993 = arith.andi %988, %992 : vector<1x64xi1>
    %cst_385 = arith.constant 0.000000e+00 : f32
    %994 = vector.shape_cast %993 : vector<1x64xi1> to vector<1x64xi1>
    %995 = vector.broadcast %994 : vector<1x64xi1> to vector<8x64xi1>
    %996 = vector.broadcast %cst_385 : f32 to vector<8x64xf32>
    %997 = arith.select %995, %984, %996 : vector<8x64xi1>, vector<8x64xf32>
    %998 = tpu.concatenate %911, %914, %930, %946, %878, %962, %978, %981, %997 in 0 : vector<8x64xf32>, vector<8x64xf32>, vector<8x64xf32>, vector<8x64xf32>, vector<8x64xf32>, vector<8x64xf32>, vector<8x64xf32>, vector<8x64xf32>, vector<8x64xf32> -> vector<72x64xf32>
    %c0_386 = arith.constant 0 : index
    %c0_387 = arith.constant 0 : index
    %999 = vector.load %arg17[%c0_386, %c0_387] : memref<8x72xf32, #tpu.memory_space<vmem>>, vector<8x72xf32>
    %cst_388 = arith.constant dense<0.000000e+00> : vector<8x64xf32>
    %1000 = tpu.matmul %999, %998, %cst_388 {dimension_numbers = #tpu.dot_dimension_numbers<[1], [0], [0], [1], [0, 0, 1, 1], [], []>} : vector<8x72xf32>, vector<72x64xf32>, vector<8x64xf32> -> vector<8x64xf32>
    %c0_389 = arith.constant 0 : index
    %c0_390 = arith.constant 0 : index
    %1001 = vector.load %arg18[%c0_389, %c0_390] : memref<8x1xf32, #tpu.memory_space<vmem>>, vector<8x1xf32>
    %1002 = vector.broadcast %1001 : vector<8x1xf32> to vector<8x64xf32>
    %1003 = arith.mulf %1000, %1002 : vector<8x64xf32>
    %c0_391 = arith.constant 0 : index
    %c0_392 = arith.constant 0 : index
    %1004 = vector.load %arg19[%c0_391, %c0_392] : memref<8x1xf32, #tpu.memory_space<vmem>>, vector<8x1xf32>
    %1005 = vector.broadcast %1004 : vector<8x1xf32> to vector<8x64xf32>
    %1006 = arith.addf %1003, %1005 : vector<8x64xf32>
    %cst_393 = arith.constant 0.000000e+00 : f32
    %1007 = vector.broadcast %cst_393 : f32 to vector<8x64xf32>
    %1008 = arith.cmpf oge, %1006, %1007 : vector<8x64xf32>
    %cst_394 = arith.constant 0.00999999977 : f32
    %1009 = vector.broadcast %cst_394 : f32 to vector<8x64xf32>
    %1010 = arith.mulf %1009, %1006 : vector<8x64xf32>
    %1011 = arith.select %1008, %1006, %1010 : vector<8x64xi1>, vector<8x64xf32>
    %1012 = tpu.iota {dimensions = array<i32: 1>} : vector<1x64xi32>
    %c8_i32_395 = arith.constant 8 : i32
    %c0_i32_396 = arith.constant 0 : i32
    %1013 = arith.cmpi eq, %c8_i32_395, %c0_i32_396 : i32
    %c1_i32_397 = arith.constant 1 : i32
    %1014 = arith.select %1013, %c1_i32_397, %c8_i32_395 : i32
    %1015 = vector.broadcast %1014 : i32 to vector<1x64xi32>
    %1016 = arith.remsi %1012, %1015 : vector<1x64xi32>
    %c0_i32_398 = arith.constant 0 : i32
    %1017 = vector.broadcast %c0_i32_398 : i32 to vector<1x64xi32>
    %1018 = arith.cmpi ne, %1016, %1017 : vector<1x64xi32>
    %c0_i32_399 = arith.constant 0 : i32
    %1019 = vector.broadcast %c0_i32_399 : i32 to vector<1x64xi32>
    %1020 = arith.cmpi slt, %1016, %1019 : vector<1x64xi32>
    %c0_i32_400 = arith.constant 0 : i32
    %1021 = arith.cmpi slt, %1014, %c0_i32_400 : i32
    %1022 = vector.broadcast %1021 : i1 to vector<1x64xi1>
    %1023 = vector.broadcast %1022 : vector<1x64xi1> to vector<1x64xi1>
    %1024 = arith.xori %1020, %1023 : vector<1x64xi1>
    %1025 = arith.andi %1024, %1018 : vector<1x64xi1>
    %1026 = vector.broadcast %1014 : i32 to vector<1x64xi32>
    %1027 = arith.addi %1016, %1026 : vector<1x64xi32>
    %1028 = arith.select %1025, %1027, %1016 : vector<1x64xi1>, vector<1x64xi32>
    %cst_401 = arith.constant 0.000000e+00 : f32
    %1029 = vector.broadcast %cst_401 : f32 to vector<8x9xf32>
    %1030 = vector.extract_strided_slice %878 {offsets = [0, 0], sizes = [8, 55], strides = [1, 1]} : vector<8x64xf32> to vector<8x55xf32>
    %1031 = tpu.concatenate %1029, %1030 in 1 : vector<8x9xf32>, vector<8x55xf32> -> vector<8x64xf32>
    %c-1_i32_402 = arith.constant -1 : i32
    %1032 = vector.broadcast %c-1_i32_402 : i32 to vector<1x64xi32>
    %1033 = arith.addi %1028, %1032 : vector<1x64xi32>
    %c0_i32_403 = arith.constant 0 : i32
    %1034 = vector.broadcast %c0_i32_403 : i32 to vector<1x64xi32>
    %1035 = arith.cmpi sge, %1033, %1034 : vector<1x64xi32>
    %c-1_i32_404 = arith.constant -1 : i32
    %1036 = vector.broadcast %c-1_i32_404 : i32 to vector<1x64xi32>
    %1037 = arith.addi %1028, %1036 : vector<1x64xi32>
    %c8_i32_405 = arith.constant 8 : i32
    %1038 = vector.broadcast %c8_i32_405 : i32 to vector<1x64xi32>
    %1039 = arith.cmpi slt, %1037, %1038 : vector<1x64xi32>
    %1040 = arith.andi %1035, %1039 : vector<1x64xi1>
    %cst_406 = arith.constant 0.000000e+00 : f32
    %1041 = vector.shape_cast %1040 : vector<1x64xi1> to vector<1x64xi1>
    %1042 = vector.broadcast %1041 : vector<1x64xi1> to vector<8x64xi1>
    %1043 = vector.broadcast %cst_406 : f32 to vector<8x64xf32>
    %1044 = arith.select %1042, %1031, %1043 : vector<8x64xi1>, vector<8x64xf32>
    %cst_407 = arith.constant 0.000000e+00 : f32
    %1045 = vector.broadcast %cst_407 : f32 to vector<8x9xf32>
    %1046 = vector.extract_strided_slice %1011 {offsets = [0, 0], sizes = [8, 55], strides = [1, 1]} : vector<8x64xf32> to vector<8x55xf32>
    %1047 = tpu.concatenate %1045, %1046 in 1 : vector<8x9xf32>, vector<8x55xf32> -> vector<8x64xf32>
    %c-1_i32_408 = arith.constant -1 : i32
    %1048 = vector.broadcast %c-1_i32_408 : i32 to vector<1x64xi32>
    %1049 = arith.addi %1028, %1048 : vector<1x64xi32>
    %c0_i32_409 = arith.constant 0 : i32
    %1050 = vector.broadcast %c0_i32_409 : i32 to vector<1x64xi32>
    %1051 = arith.cmpi sge, %1049, %1050 : vector<1x64xi32>
    %c-1_i32_410 = arith.constant -1 : i32
    %1052 = vector.broadcast %c-1_i32_410 : i32 to vector<1x64xi32>
    %1053 = arith.addi %1028, %1052 : vector<1x64xi32>
    %c8_i32_411 = arith.constant 8 : i32
    %1054 = vector.broadcast %c8_i32_411 : i32 to vector<1x64xi32>
    %1055 = arith.cmpi slt, %1053, %1054 : vector<1x64xi32>
    %1056 = arith.andi %1051, %1055 : vector<1x64xi1>
    %cst_412 = arith.constant 0.000000e+00 : f32
    %1057 = vector.shape_cast %1056 : vector<1x64xi1> to vector<1x64xi1>
    %1058 = vector.broadcast %1057 : vector<1x64xi1> to vector<8x64xi1>
    %1059 = vector.broadcast %cst_412 : f32 to vector<8x64xf32>
    %1060 = arith.select %1058, %1047, %1059 : vector<8x64xi1>, vector<8x64xf32>
    %cst_413 = arith.constant 0.000000e+00 : f32
    %1061 = vector.broadcast %cst_413 : f32 to vector<8x8xf32>
    %1062 = vector.extract_strided_slice %878 {offsets = [0, 0], sizes = [8, 56], strides = [1, 1]} : vector<8x64xf32> to vector<8x56xf32>
    %1063 = tpu.concatenate %1061, %1062 in 1 : vector<8x8xf32>, vector<8x56xf32> -> vector<8x64xf32>
    %cst_414 = arith.constant 0.000000e+00 : f32
    %1064 = vector.broadcast %cst_414 : f32 to vector<8x8xf32>
    %1065 = vector.extract_strided_slice %1011 {offsets = [0, 0], sizes = [8, 56], strides = [1, 1]} : vector<8x64xf32> to vector<8x56xf32>
    %1066 = tpu.concatenate %1064, %1065 in 1 : vector<8x8xf32>, vector<8x56xf32> -> vector<8x64xf32>
    %cst_415 = arith.constant 0.000000e+00 : f32
    %1067 = vector.broadcast %cst_415 : f32 to vector<8x7xf32>
    %1068 = vector.extract_strided_slice %878 {offsets = [0, 0], sizes = [8, 57], strides = [1, 1]} : vector<8x64xf32> to vector<8x57xf32>
    %1069 = tpu.concatenate %1067, %1068 in 1 : vector<8x7xf32>, vector<8x57xf32> -> vector<8x64xf32>
    %c1_i32_416 = arith.constant 1 : i32
    %1070 = vector.broadcast %c1_i32_416 : i32 to vector<1x64xi32>
    %1071 = arith.addi %1028, %1070 : vector<1x64xi32>
    %c0_i32_417 = arith.constant 0 : i32
    %1072 = vector.broadcast %c0_i32_417 : i32 to vector<1x64xi32>
    %1073 = arith.cmpi sge, %1071, %1072 : vector<1x64xi32>
    %c1_i32_418 = arith.constant 1 : i32
    %1074 = vector.broadcast %c1_i32_418 : i32 to vector<1x64xi32>
    %1075 = arith.addi %1028, %1074 : vector<1x64xi32>
    %c8_i32_419 = arith.constant 8 : i32
    %1076 = vector.broadcast %c8_i32_419 : i32 to vector<1x64xi32>
    %1077 = arith.cmpi slt, %1075, %1076 : vector<1x64xi32>
    %1078 = arith.andi %1073, %1077 : vector<1x64xi1>
    %cst_420 = arith.constant 0.000000e+00 : f32
    %1079 = vector.shape_cast %1078 : vector<1x64xi1> to vector<1x64xi1>
    %1080 = vector.broadcast %1079 : vector<1x64xi1> to vector<8x64xi1>
    %1081 = vector.broadcast %cst_420 : f32 to vector<8x64xf32>
    %1082 = arith.select %1080, %1069, %1081 : vector<8x64xi1>, vector<8x64xf32>
    %cst_421 = arith.constant 0.000000e+00 : f32
    %1083 = vector.broadcast %cst_421 : f32 to vector<8x7xf32>
    %1084 = vector.extract_strided_slice %1011 {offsets = [0, 0], sizes = [8, 57], strides = [1, 1]} : vector<8x64xf32> to vector<8x57xf32>
    %1085 = tpu.concatenate %1083, %1084 in 1 : vector<8x7xf32>, vector<8x57xf32> -> vector<8x64xf32>
    %c1_i32_422 = arith.constant 1 : i32
    %1086 = vector.broadcast %c1_i32_422 : i32 to vector<1x64xi32>
    %1087 = arith.addi %1028, %1086 : vector<1x64xi32>
    %c0_i32_423 = arith.constant 0 : i32
    %1088 = vector.broadcast %c0_i32_423 : i32 to vector<1x64xi32>
    %1089 = arith.cmpi sge, %1087, %1088 : vector<1x64xi32>
    %c1_i32_424 = arith.constant 1 : i32
    %1090 = vector.broadcast %c1_i32_424 : i32 to vector<1x64xi32>
    %1091 = arith.addi %1028, %1090 : vector<1x64xi32>
    %c8_i32_425 = arith.constant 8 : i32
    %1092 = vector.broadcast %c8_i32_425 : i32 to vector<1x64xi32>
    %1093 = arith.cmpi slt, %1091, %1092 : vector<1x64xi32>
    %1094 = arith.andi %1089, %1093 : vector<1x64xi1>
    %cst_426 = arith.constant 0.000000e+00 : f32
    %1095 = vector.shape_cast %1094 : vector<1x64xi1> to vector<1x64xi1>
    %1096 = vector.broadcast %1095 : vector<1x64xi1> to vector<8x64xi1>
    %1097 = vector.broadcast %cst_426 : f32 to vector<8x64xf32>
    %1098 = arith.select %1096, %1085, %1097 : vector<8x64xi1>, vector<8x64xf32>
    %cst_427 = arith.constant 0.000000e+00 : f32
    %1099 = vector.broadcast %cst_427 : f32 to vector<8x1xf32>
    %1100 = vector.extract_strided_slice %878 {offsets = [0, 0], sizes = [8, 63], strides = [1, 1]} : vector<8x64xf32> to vector<8x63xf32>
    %1101 = tpu.concatenate %1099, %1100 in 1 : vector<8x1xf32>, vector<8x63xf32> -> vector<8x64xf32>
    %c-1_i32_428 = arith.constant -1 : i32
    %1102 = vector.broadcast %c-1_i32_428 : i32 to vector<1x64xi32>
    %1103 = arith.addi %1028, %1102 : vector<1x64xi32>
    %c0_i32_429 = arith.constant 0 : i32
    %1104 = vector.broadcast %c0_i32_429 : i32 to vector<1x64xi32>
    %1105 = arith.cmpi sge, %1103, %1104 : vector<1x64xi32>
    %c-1_i32_430 = arith.constant -1 : i32
    %1106 = vector.broadcast %c-1_i32_430 : i32 to vector<1x64xi32>
    %1107 = arith.addi %1028, %1106 : vector<1x64xi32>
    %c8_i32_431 = arith.constant 8 : i32
    %1108 = vector.broadcast %c8_i32_431 : i32 to vector<1x64xi32>
    %1109 = arith.cmpi slt, %1107, %1108 : vector<1x64xi32>
    %1110 = arith.andi %1105, %1109 : vector<1x64xi1>
    %cst_432 = arith.constant 0.000000e+00 : f32
    %1111 = vector.shape_cast %1110 : vector<1x64xi1> to vector<1x64xi1>
    %1112 = vector.broadcast %1111 : vector<1x64xi1> to vector<8x64xi1>
    %1113 = vector.broadcast %cst_432 : f32 to vector<8x64xf32>
    %1114 = arith.select %1112, %1101, %1113 : vector<8x64xi1>, vector<8x64xf32>
    %cst_433 = arith.constant 0.000000e+00 : f32
    %1115 = vector.broadcast %cst_433 : f32 to vector<8x1xf32>
    %1116 = vector.extract_strided_slice %1011 {offsets = [0, 0], sizes = [8, 63], strides = [1, 1]} : vector<8x64xf32> to vector<8x63xf32>
    %1117 = tpu.concatenate %1115, %1116 in 1 : vector<8x1xf32>, vector<8x63xf32> -> vector<8x64xf32>
    %c-1_i32_434 = arith.constant -1 : i32
    %1118 = vector.broadcast %c-1_i32_434 : i32 to vector<1x64xi32>
    %1119 = arith.addi %1028, %1118 : vector<1x64xi32>
    %c0_i32_435 = arith.constant 0 : i32
    %1120 = vector.broadcast %c0_i32_435 : i32 to vector<1x64xi32>
    %1121 = arith.cmpi sge, %1119, %1120 : vector<1x64xi32>
    %c-1_i32_436 = arith.constant -1 : i32
    %1122 = vector.broadcast %c-1_i32_436 : i32 to vector<1x64xi32>
    %1123 = arith.addi %1028, %1122 : vector<1x64xi32>
    %c8_i32_437 = arith.constant 8 : i32
    %1124 = vector.broadcast %c8_i32_437 : i32 to vector<1x64xi32>
    %1125 = arith.cmpi slt, %1123, %1124 : vector<1x64xi32>
    %1126 = arith.andi %1121, %1125 : vector<1x64xi1>
    %cst_438 = arith.constant 0.000000e+00 : f32
    %1127 = vector.shape_cast %1126 : vector<1x64xi1> to vector<1x64xi1>
    %1128 = vector.broadcast %1127 : vector<1x64xi1> to vector<8x64xi1>
    %1129 = vector.broadcast %cst_438 : f32 to vector<8x64xf32>
    %1130 = arith.select %1128, %1117, %1129 : vector<8x64xi1>, vector<8x64xf32>
    %1131 = vector.extract_strided_slice %878 {offsets = [0, 1], sizes = [8, 63], strides = [1, 1]} : vector<8x64xf32> to vector<8x63xf32>
    %cst_439 = arith.constant 0.000000e+00 : f32
    %1132 = vector.broadcast %cst_439 : f32 to vector<8x1xf32>
    %1133 = tpu.concatenate %1131, %1132 in 1 : vector<8x63xf32>, vector<8x1xf32> -> vector<8x64xf32>
    %c1_i32_440 = arith.constant 1 : i32
    %1134 = vector.broadcast %c1_i32_440 : i32 to vector<1x64xi32>
    %1135 = arith.addi %1028, %1134 : vector<1x64xi32>
    %c0_i32_441 = arith.constant 0 : i32
    %1136 = vector.broadcast %c0_i32_441 : i32 to vector<1x64xi32>
    %1137 = arith.cmpi sge, %1135, %1136 : vector<1x64xi32>
    %c1_i32_442 = arith.constant 1 : i32
    %1138 = vector.broadcast %c1_i32_442 : i32 to vector<1x64xi32>
    %1139 = arith.addi %1028, %1138 : vector<1x64xi32>
    %c8_i32_443 = arith.constant 8 : i32
    %1140 = vector.broadcast %c8_i32_443 : i32 to vector<1x64xi32>
    %1141 = arith.cmpi slt, %1139, %1140 : vector<1x64xi32>
    %1142 = arith.andi %1137, %1141 : vector<1x64xi1>
    %cst_444 = arith.constant 0.000000e+00 : f32
    %1143 = vector.shape_cast %1142 : vector<1x64xi1> to vector<1x64xi1>
    %1144 = vector.broadcast %1143 : vector<1x64xi1> to vector<8x64xi1>
    %1145 = vector.broadcast %cst_444 : f32 to vector<8x64xf32>
    %1146 = arith.select %1144, %1133, %1145 : vector<8x64xi1>, vector<8x64xf32>
    %1147 = vector.extract_strided_slice %1011 {offsets = [0, 1], sizes = [8, 63], strides = [1, 1]} : vector<8x64xf32> to vector<8x63xf32>
    %cst_445 = arith.constant 0.000000e+00 : f32
    %1148 = vector.broadcast %cst_445 : f32 to vector<8x1xf32>
    %1149 = tpu.concatenate %1147, %1148 in 1 : vector<8x63xf32>, vector<8x1xf32> -> vector<8x64xf32>
    %c1_i32_446 = arith.constant 1 : i32
    %1150 = vector.broadcast %c1_i32_446 : i32 to vector<1x64xi32>
    %1151 = arith.addi %1028, %1150 : vector<1x64xi32>
    %c0_i32_447 = arith.constant 0 : i32
    %1152 = vector.broadcast %c0_i32_447 : i32 to vector<1x64xi32>
    %1153 = arith.cmpi sge, %1151, %1152 : vector<1x64xi32>
    %c1_i32_448 = arith.constant 1 : i32
    %1154 = vector.broadcast %c1_i32_448 : i32 to vector<1x64xi32>
    %1155 = arith.addi %1028, %1154 : vector<1x64xi32>
    %c8_i32_449 = arith.constant 8 : i32
    %1156 = vector.broadcast %c8_i32_449 : i32 to vector<1x64xi32>
    %1157 = arith.cmpi slt, %1155, %1156 : vector<1x64xi32>
    %1158 = arith.andi %1153, %1157 : vector<1x64xi1>
    %cst_450 = arith.constant 0.000000e+00 : f32
    %1159 = vector.shape_cast %1158 : vector<1x64xi1> to vector<1x64xi1>
    %1160 = vector.broadcast %1159 : vector<1x64xi1> to vector<8x64xi1>
    %1161 = vector.broadcast %cst_450 : f32 to vector<8x64xf32>
    %1162 = arith.select %1160, %1149, %1161 : vector<8x64xi1>, vector<8x64xf32>
    %1163 = vector.extract_strided_slice %878 {offsets = [0, 7], sizes = [8, 57], strides = [1, 1]} : vector<8x64xf32> to vector<8x57xf32>
    %cst_451 = arith.constant 0.000000e+00 : f32
    %1164 = vector.broadcast %cst_451 : f32 to vector<8x7xf32>
    %1165 = tpu.concatenate %1163, %1164 in 1 : vector<8x57xf32>, vector<8x7xf32> -> vector<8x64xf32>
    %c-1_i32_452 = arith.constant -1 : i32
    %1166 = vector.broadcast %c-1_i32_452 : i32 to vector<1x64xi32>
    %1167 = arith.addi %1028, %1166 : vector<1x64xi32>
    %c0_i32_453 = arith.constant 0 : i32
    %1168 = vector.broadcast %c0_i32_453 : i32 to vector<1x64xi32>
    %1169 = arith.cmpi sge, %1167, %1168 : vector<1x64xi32>
    %c-1_i32_454 = arith.constant -1 : i32
    %1170 = vector.broadcast %c-1_i32_454 : i32 to vector<1x64xi32>
    %1171 = arith.addi %1028, %1170 : vector<1x64xi32>
    %c8_i32_455 = arith.constant 8 : i32
    %1172 = vector.broadcast %c8_i32_455 : i32 to vector<1x64xi32>
    %1173 = arith.cmpi slt, %1171, %1172 : vector<1x64xi32>
    %1174 = arith.andi %1169, %1173 : vector<1x64xi1>
    %cst_456 = arith.constant 0.000000e+00 : f32
    %1175 = vector.shape_cast %1174 : vector<1x64xi1> to vector<1x64xi1>
    %1176 = vector.broadcast %1175 : vector<1x64xi1> to vector<8x64xi1>
    %1177 = vector.broadcast %cst_456 : f32 to vector<8x64xf32>
    %1178 = arith.select %1176, %1165, %1177 : vector<8x64xi1>, vector<8x64xf32>
    %1179 = vector.extract_strided_slice %1011 {offsets = [0, 7], sizes = [8, 57], strides = [1, 1]} : vector<8x64xf32> to vector<8x57xf32>
    %cst_457 = arith.constant 0.000000e+00 : f32
    %1180 = vector.broadcast %cst_457 : f32 to vector<8x7xf32>
    %1181 = tpu.concatenate %1179, %1180 in 1 : vector<8x57xf32>, vector<8x7xf32> -> vector<8x64xf32>
    %c-1_i32_458 = arith.constant -1 : i32
    %1182 = vector.broadcast %c-1_i32_458 : i32 to vector<1x64xi32>
    %1183 = arith.addi %1028, %1182 : vector<1x64xi32>
    %c0_i32_459 = arith.constant 0 : i32
    %1184 = vector.broadcast %c0_i32_459 : i32 to vector<1x64xi32>
    %1185 = arith.cmpi sge, %1183, %1184 : vector<1x64xi32>
    %c-1_i32_460 = arith.constant -1 : i32
    %1186 = vector.broadcast %c-1_i32_460 : i32 to vector<1x64xi32>
    %1187 = arith.addi %1028, %1186 : vector<1x64xi32>
    %c8_i32_461 = arith.constant 8 : i32
    %1188 = vector.broadcast %c8_i32_461 : i32 to vector<1x64xi32>
    %1189 = arith.cmpi slt, %1187, %1188 : vector<1x64xi32>
    %1190 = arith.andi %1185, %1189 : vector<1x64xi1>
    %cst_462 = arith.constant 0.000000e+00 : f32
    %1191 = vector.shape_cast %1190 : vector<1x64xi1> to vector<1x64xi1>
    %1192 = vector.broadcast %1191 : vector<1x64xi1> to vector<8x64xi1>
    %1193 = vector.broadcast %cst_462 : f32 to vector<8x64xf32>
    %1194 = arith.select %1192, %1181, %1193 : vector<8x64xi1>, vector<8x64xf32>
    %1195 = vector.extract_strided_slice %878 {offsets = [0, 8], sizes = [8, 56], strides = [1, 1]} : vector<8x64xf32> to vector<8x56xf32>
    %cst_463 = arith.constant 0.000000e+00 : f32
    %1196 = vector.broadcast %cst_463 : f32 to vector<8x8xf32>
    %1197 = tpu.concatenate %1195, %1196 in 1 : vector<8x56xf32>, vector<8x8xf32> -> vector<8x64xf32>
    %1198 = vector.extract_strided_slice %1011 {offsets = [0, 8], sizes = [8, 56], strides = [1, 1]} : vector<8x64xf32> to vector<8x56xf32>
    %cst_464 = arith.constant 0.000000e+00 : f32
    %1199 = vector.broadcast %cst_464 : f32 to vector<8x8xf32>
    %1200 = tpu.concatenate %1198, %1199 in 1 : vector<8x56xf32>, vector<8x8xf32> -> vector<8x64xf32>
    %1201 = vector.extract_strided_slice %878 {offsets = [0, 9], sizes = [8, 55], strides = [1, 1]} : vector<8x64xf32> to vector<8x55xf32>
    %cst_465 = arith.constant 0.000000e+00 : f32
    %1202 = vector.broadcast %cst_465 : f32 to vector<8x9xf32>
    %1203 = tpu.concatenate %1201, %1202 in 1 : vector<8x55xf32>, vector<8x9xf32> -> vector<8x64xf32>
    %c1_i32_466 = arith.constant 1 : i32
    %1204 = vector.broadcast %c1_i32_466 : i32 to vector<1x64xi32>
    %1205 = arith.addi %1028, %1204 : vector<1x64xi32>
    %c0_i32_467 = arith.constant 0 : i32
    %1206 = vector.broadcast %c0_i32_467 : i32 to vector<1x64xi32>
    %1207 = arith.cmpi sge, %1205, %1206 : vector<1x64xi32>
    %c1_i32_468 = arith.constant 1 : i32
    %1208 = vector.broadcast %c1_i32_468 : i32 to vector<1x64xi32>
    %1209 = arith.addi %1028, %1208 : vector<1x64xi32>
    %c8_i32_469 = arith.constant 8 : i32
    %1210 = vector.broadcast %c8_i32_469 : i32 to vector<1x64xi32>
    %1211 = arith.cmpi slt, %1209, %1210 : vector<1x64xi32>
    %1212 = arith.andi %1207, %1211 : vector<1x64xi1>
    %cst_470 = arith.constant 0.000000e+00 : f32
    %1213 = vector.shape_cast %1212 : vector<1x64xi1> to vector<1x64xi1>
    %1214 = vector.broadcast %1213 : vector<1x64xi1> to vector<8x64xi1>
    %1215 = vector.broadcast %cst_470 : f32 to vector<8x64xf32>
    %1216 = arith.select %1214, %1203, %1215 : vector<8x64xi1>, vector<8x64xf32>
    %1217 = vector.extract_strided_slice %1011 {offsets = [0, 9], sizes = [8, 55], strides = [1, 1]} : vector<8x64xf32> to vector<8x55xf32>
    %cst_471 = arith.constant 0.000000e+00 : f32
    %1218 = vector.broadcast %cst_471 : f32 to vector<8x9xf32>
    %1219 = tpu.concatenate %1217, %1218 in 1 : vector<8x55xf32>, vector<8x9xf32> -> vector<8x64xf32>
    %c1_i32_472 = arith.constant 1 : i32
    %1220 = vector.broadcast %c1_i32_472 : i32 to vector<1x64xi32>
    %1221 = arith.addi %1028, %1220 : vector<1x64xi32>
    %c0_i32_473 = arith.constant 0 : i32
    %1222 = vector.broadcast %c0_i32_473 : i32 to vector<1x64xi32>
    %1223 = arith.cmpi sge, %1221, %1222 : vector<1x64xi32>
    %c1_i32_474 = arith.constant 1 : i32
    %1224 = vector.broadcast %c1_i32_474 : i32 to vector<1x64xi32>
    %1225 = arith.addi %1028, %1224 : vector<1x64xi32>
    %c8_i32_475 = arith.constant 8 : i32
    %1226 = vector.broadcast %c8_i32_475 : i32 to vector<1x64xi32>
    %1227 = arith.cmpi slt, %1225, %1226 : vector<1x64xi32>
    %1228 = arith.andi %1223, %1227 : vector<1x64xi1>
    %cst_476 = arith.constant 0.000000e+00 : f32
    %1229 = vector.shape_cast %1228 : vector<1x64xi1> to vector<1x64xi1>
    %1230 = vector.broadcast %1229 : vector<1x64xi1> to vector<8x64xi1>
    %1231 = vector.broadcast %cst_476 : f32 to vector<8x64xf32>
    %1232 = arith.select %1230, %1219, %1231 : vector<8x64xi1>, vector<8x64xf32>
    %1233 = tpu.concatenate %1044, %1060, %1063, %1066, %1082, %1098, %1114, %1130, %878, %1011, %1146, %1162, %1178, %1194, %1197, %1200 in 0 : vector<8x64xf32>, vector<8x64xf32>, vector<8x64xf32>, vector<8x64xf32>, vector<8x64xf32>, vector<8x64xf32>, vector<8x64xf32>, vector<8x64xf32>, vector<8x64xf32>, vector<8x64xf32>, vector<8x64xf32>, vector<8x64xf32>, vector<8x64xf32>, vector<8x64xf32>, vector<8x64xf32>, vector<8x64xf32> -> vector<128x64xf32>
    %1234 = tpu.concatenate %1216, %1232 in 0 : vector<8x64xf32>, vector<8x64xf32> -> vector<16x64xf32>
    %1235 = tpu.concatenate %1233, %1234 in 0 : vector<128x64xf32>, vector<16x64xf32> -> vector<144x64xf32>
    %c0_477 = arith.constant 0 : index
    %c0_478 = arith.constant 0 : index
    %1236 = vector.load %arg20[%c0_477, %c0_478] : memref<8x144xf32, #tpu.memory_space<vmem>>, vector<8x144xf32>
    %cst_479 = arith.constant dense<0.000000e+00> : vector<8x64xf32>
    %1237 = tpu.matmul %1236, %1235, %cst_479 {dimension_numbers = #tpu.dot_dimension_numbers<[1], [0], [0], [1], [0, 0, 1, 1], [], []>} : vector<8x144xf32>, vector<144x64xf32>, vector<8x64xf32> -> vector<8x64xf32>
    %c0_480 = arith.constant 0 : index
    %c0_481 = arith.constant 0 : index
    %1238 = vector.load %arg21[%c0_480, %c0_481] : memref<8x1xf32, #tpu.memory_space<vmem>>, vector<8x1xf32>
    %1239 = vector.broadcast %1238 : vector<8x1xf32> to vector<8x64xf32>
    %1240 = arith.mulf %1237, %1239 : vector<8x64xf32>
    %c0_482 = arith.constant 0 : index
    %c0_483 = arith.constant 0 : index
    %1241 = vector.load %arg22[%c0_482, %c0_483] : memref<8x1xf32, #tpu.memory_space<vmem>>, vector<8x1xf32>
    %1242 = vector.broadcast %1241 : vector<8x1xf32> to vector<8x64xf32>
    %1243 = arith.addf %1240, %1242 : vector<8x64xf32>
    %cst_484 = arith.constant 0.000000e+00 : f32
    %1244 = vector.broadcast %cst_484 : f32 to vector<8x64xf32>
    %1245 = arith.cmpf oge, %1243, %1244 : vector<8x64xf32>
    %cst_485 = arith.constant 0.00999999977 : f32
    %1246 = vector.broadcast %cst_485 : f32 to vector<8x64xf32>
    %1247 = arith.mulf %1246, %1243 : vector<8x64xf32>
    %1248 = arith.select %1245, %1243, %1247 : vector<8x64xi1>, vector<8x64xf32>
    %1249 = tpu.iota {dimensions = array<i32: 1>} : vector<1x64xi32>
    %c8_i32_486 = arith.constant 8 : i32
    %c0_i32_487 = arith.constant 0 : i32
    %1250 = arith.cmpi eq, %c8_i32_486, %c0_i32_487 : i32
    %c1_i32_488 = arith.constant 1 : i32
    %1251 = arith.select %1250, %c1_i32_488, %c8_i32_486 : i32
    %1252 = vector.broadcast %1251 : i32 to vector<1x64xi32>
    %1253 = arith.remsi %1249, %1252 : vector<1x64xi32>
    %c0_i32_489 = arith.constant 0 : i32
    %1254 = vector.broadcast %c0_i32_489 : i32 to vector<1x64xi32>
    %1255 = arith.cmpi ne, %1253, %1254 : vector<1x64xi32>
    %c0_i32_490 = arith.constant 0 : i32
    %1256 = vector.broadcast %c0_i32_490 : i32 to vector<1x64xi32>
    %1257 = arith.cmpi slt, %1253, %1256 : vector<1x64xi32>
    %c0_i32_491 = arith.constant 0 : i32
    %1258 = arith.cmpi slt, %1251, %c0_i32_491 : i32
    %1259 = vector.broadcast %1258 : i1 to vector<1x64xi1>
    %1260 = vector.broadcast %1259 : vector<1x64xi1> to vector<1x64xi1>
    %1261 = arith.xori %1257, %1260 : vector<1x64xi1>
    %1262 = arith.andi %1261, %1255 : vector<1x64xi1>
    %1263 = vector.broadcast %1251 : i32 to vector<1x64xi32>
    %1264 = arith.addi %1253, %1263 : vector<1x64xi32>
    %1265 = arith.select %1262, %1264, %1253 : vector<1x64xi1>, vector<1x64xi32>
    %cst_492 = arith.constant 0.000000e+00 : f32
    %1266 = vector.broadcast %cst_492 : f32 to vector<8x9xf32>
    %1267 = vector.extract_strided_slice %1248 {offsets = [0, 0], sizes = [8, 55], strides = [1, 1]} : vector<8x64xf32> to vector<8x55xf32>
    %1268 = tpu.concatenate %1266, %1267 in 1 : vector<8x9xf32>, vector<8x55xf32> -> vector<8x64xf32>
    %c-1_i32_493 = arith.constant -1 : i32
    %1269 = vector.broadcast %c-1_i32_493 : i32 to vector<1x64xi32>
    %1270 = arith.addi %1265, %1269 : vector<1x64xi32>
    %c0_i32_494 = arith.constant 0 : i32
    %1271 = vector.broadcast %c0_i32_494 : i32 to vector<1x64xi32>
    %1272 = arith.cmpi sge, %1270, %1271 : vector<1x64xi32>
    %c-1_i32_495 = arith.constant -1 : i32
    %1273 = vector.broadcast %c-1_i32_495 : i32 to vector<1x64xi32>
    %1274 = arith.addi %1265, %1273 : vector<1x64xi32>
    %c8_i32_496 = arith.constant 8 : i32
    %1275 = vector.broadcast %c8_i32_496 : i32 to vector<1x64xi32>
    %1276 = arith.cmpi slt, %1274, %1275 : vector<1x64xi32>
    %1277 = arith.andi %1272, %1276 : vector<1x64xi1>
    %cst_497 = arith.constant 0.000000e+00 : f32
    %1278 = vector.shape_cast %1277 : vector<1x64xi1> to vector<1x64xi1>
    %1279 = vector.broadcast %1278 : vector<1x64xi1> to vector<8x64xi1>
    %1280 = vector.broadcast %cst_497 : f32 to vector<8x64xf32>
    %1281 = arith.select %1279, %1268, %1280 : vector<8x64xi1>, vector<8x64xf32>
    %cst_498 = arith.constant 0.000000e+00 : f32
    %1282 = vector.broadcast %cst_498 : f32 to vector<8x8xf32>
    %1283 = vector.extract_strided_slice %1248 {offsets = [0, 0], sizes = [8, 56], strides = [1, 1]} : vector<8x64xf32> to vector<8x56xf32>
    %1284 = tpu.concatenate %1282, %1283 in 1 : vector<8x8xf32>, vector<8x56xf32> -> vector<8x64xf32>
    %cst_499 = arith.constant 0.000000e+00 : f32
    %1285 = vector.broadcast %cst_499 : f32 to vector<8x7xf32>
    %1286 = vector.extract_strided_slice %1248 {offsets = [0, 0], sizes = [8, 57], strides = [1, 1]} : vector<8x64xf32> to vector<8x57xf32>
    %1287 = tpu.concatenate %1285, %1286 in 1 : vector<8x7xf32>, vector<8x57xf32> -> vector<8x64xf32>
    %c1_i32_500 = arith.constant 1 : i32
    %1288 = vector.broadcast %c1_i32_500 : i32 to vector<1x64xi32>
    %1289 = arith.addi %1265, %1288 : vector<1x64xi32>
    %c0_i32_501 = arith.constant 0 : i32
    %1290 = vector.broadcast %c0_i32_501 : i32 to vector<1x64xi32>
    %1291 = arith.cmpi sge, %1289, %1290 : vector<1x64xi32>
    %c1_i32_502 = arith.constant 1 : i32
    %1292 = vector.broadcast %c1_i32_502 : i32 to vector<1x64xi32>
    %1293 = arith.addi %1265, %1292 : vector<1x64xi32>
    %c8_i32_503 = arith.constant 8 : i32
    %1294 = vector.broadcast %c8_i32_503 : i32 to vector<1x64xi32>
    %1295 = arith.cmpi slt, %1293, %1294 : vector<1x64xi32>
    %1296 = arith.andi %1291, %1295 : vector<1x64xi1>
    %cst_504 = arith.constant 0.000000e+00 : f32
    %1297 = vector.shape_cast %1296 : vector<1x64xi1> to vector<1x64xi1>
    %1298 = vector.broadcast %1297 : vector<1x64xi1> to vector<8x64xi1>
    %1299 = vector.broadcast %cst_504 : f32 to vector<8x64xf32>
    %1300 = arith.select %1298, %1287, %1299 : vector<8x64xi1>, vector<8x64xf32>
    %cst_505 = arith.constant 0.000000e+00 : f32
    %1301 = vector.broadcast %cst_505 : f32 to vector<8x1xf32>
    %1302 = vector.extract_strided_slice %1248 {offsets = [0, 0], sizes = [8, 63], strides = [1, 1]} : vector<8x64xf32> to vector<8x63xf32>
    %1303 = tpu.concatenate %1301, %1302 in 1 : vector<8x1xf32>, vector<8x63xf32> -> vector<8x64xf32>
    %c-1_i32_506 = arith.constant -1 : i32
    %1304 = vector.broadcast %c-1_i32_506 : i32 to vector<1x64xi32>
    %1305 = arith.addi %1265, %1304 : vector<1x64xi32>
    %c0_i32_507 = arith.constant 0 : i32
    %1306 = vector.broadcast %c0_i32_507 : i32 to vector<1x64xi32>
    %1307 = arith.cmpi sge, %1305, %1306 : vector<1x64xi32>
    %c-1_i32_508 = arith.constant -1 : i32
    %1308 = vector.broadcast %c-1_i32_508 : i32 to vector<1x64xi32>
    %1309 = arith.addi %1265, %1308 : vector<1x64xi32>
    %c8_i32_509 = arith.constant 8 : i32
    %1310 = vector.broadcast %c8_i32_509 : i32 to vector<1x64xi32>
    %1311 = arith.cmpi slt, %1309, %1310 : vector<1x64xi32>
    %1312 = arith.andi %1307, %1311 : vector<1x64xi1>
    %cst_510 = arith.constant 0.000000e+00 : f32
    %1313 = vector.shape_cast %1312 : vector<1x64xi1> to vector<1x64xi1>
    %1314 = vector.broadcast %1313 : vector<1x64xi1> to vector<8x64xi1>
    %1315 = vector.broadcast %cst_510 : f32 to vector<8x64xf32>
    %1316 = arith.select %1314, %1303, %1315 : vector<8x64xi1>, vector<8x64xf32>
    %1317 = vector.extract_strided_slice %1248 {offsets = [0, 1], sizes = [8, 63], strides = [1, 1]} : vector<8x64xf32> to vector<8x63xf32>
    %cst_511 = arith.constant 0.000000e+00 : f32
    %1318 = vector.broadcast %cst_511 : f32 to vector<8x1xf32>
    %1319 = tpu.concatenate %1317, %1318 in 1 : vector<8x63xf32>, vector<8x1xf32> -> vector<8x64xf32>
    %c1_i32_512 = arith.constant 1 : i32
    %1320 = vector.broadcast %c1_i32_512 : i32 to vector<1x64xi32>
    %1321 = arith.addi %1265, %1320 : vector<1x64xi32>
    %c0_i32_513 = arith.constant 0 : i32
    %1322 = vector.broadcast %c0_i32_513 : i32 to vector<1x64xi32>
    %1323 = arith.cmpi sge, %1321, %1322 : vector<1x64xi32>
    %c1_i32_514 = arith.constant 1 : i32
    %1324 = vector.broadcast %c1_i32_514 : i32 to vector<1x64xi32>
    %1325 = arith.addi %1265, %1324 : vector<1x64xi32>
    %c8_i32_515 = arith.constant 8 : i32
    %1326 = vector.broadcast %c8_i32_515 : i32 to vector<1x64xi32>
    %1327 = arith.cmpi slt, %1325, %1326 : vector<1x64xi32>
    %1328 = arith.andi %1323, %1327 : vector<1x64xi1>
    %cst_516 = arith.constant 0.000000e+00 : f32
    %1329 = vector.shape_cast %1328 : vector<1x64xi1> to vector<1x64xi1>
    %1330 = vector.broadcast %1329 : vector<1x64xi1> to vector<8x64xi1>
    %1331 = vector.broadcast %cst_516 : f32 to vector<8x64xf32>
    %1332 = arith.select %1330, %1319, %1331 : vector<8x64xi1>, vector<8x64xf32>
    %1333 = vector.extract_strided_slice %1248 {offsets = [0, 7], sizes = [8, 57], strides = [1, 1]} : vector<8x64xf32> to vector<8x57xf32>
    %cst_517 = arith.constant 0.000000e+00 : f32
    %1334 = vector.broadcast %cst_517 : f32 to vector<8x7xf32>
    %1335 = tpu.concatenate %1333, %1334 in 1 : vector<8x57xf32>, vector<8x7xf32> -> vector<8x64xf32>
    %c-1_i32_518 = arith.constant -1 : i32
    %1336 = vector.broadcast %c-1_i32_518 : i32 to vector<1x64xi32>
    %1337 = arith.addi %1265, %1336 : vector<1x64xi32>
    %c0_i32_519 = arith.constant 0 : i32
    %1338 = vector.broadcast %c0_i32_519 : i32 to vector<1x64xi32>
    %1339 = arith.cmpi sge, %1337, %1338 : vector<1x64xi32>
    %c-1_i32_520 = arith.constant -1 : i32
    %1340 = vector.broadcast %c-1_i32_520 : i32 to vector<1x64xi32>
    %1341 = arith.addi %1265, %1340 : vector<1x64xi32>
    %c8_i32_521 = arith.constant 8 : i32
    %1342 = vector.broadcast %c8_i32_521 : i32 to vector<1x64xi32>
    %1343 = arith.cmpi slt, %1341, %1342 : vector<1x64xi32>
    %1344 = arith.andi %1339, %1343 : vector<1x64xi1>
    %cst_522 = arith.constant 0.000000e+00 : f32
    %1345 = vector.shape_cast %1344 : vector<1x64xi1> to vector<1x64xi1>
    %1346 = vector.broadcast %1345 : vector<1x64xi1> to vector<8x64xi1>
    %1347 = vector.broadcast %cst_522 : f32 to vector<8x64xf32>
    %1348 = arith.select %1346, %1335, %1347 : vector<8x64xi1>, vector<8x64xf32>
    %1349 = vector.extract_strided_slice %1248 {offsets = [0, 8], sizes = [8, 56], strides = [1, 1]} : vector<8x64xf32> to vector<8x56xf32>
    %cst_523 = arith.constant 0.000000e+00 : f32
    %1350 = vector.broadcast %cst_523 : f32 to vector<8x8xf32>
    %1351 = tpu.concatenate %1349, %1350 in 1 : vector<8x56xf32>, vector<8x8xf32> -> vector<8x64xf32>
    %1352 = vector.extract_strided_slice %1248 {offsets = [0, 9], sizes = [8, 55], strides = [1, 1]} : vector<8x64xf32> to vector<8x55xf32>
    %cst_524 = arith.constant 0.000000e+00 : f32
    %1353 = vector.broadcast %cst_524 : f32 to vector<8x9xf32>
    %1354 = tpu.concatenate %1352, %1353 in 1 : vector<8x55xf32>, vector<8x9xf32> -> vector<8x64xf32>
    %c1_i32_525 = arith.constant 1 : i32
    %1355 = vector.broadcast %c1_i32_525 : i32 to vector<1x64xi32>
    %1356 = arith.addi %1265, %1355 : vector<1x64xi32>
    %c0_i32_526 = arith.constant 0 : i32
    %1357 = vector.broadcast %c0_i32_526 : i32 to vector<1x64xi32>
    %1358 = arith.cmpi sge, %1356, %1357 : vector<1x64xi32>
    %c1_i32_527 = arith.constant 1 : i32
    %1359 = vector.broadcast %c1_i32_527 : i32 to vector<1x64xi32>
    %1360 = arith.addi %1265, %1359 : vector<1x64xi32>
    %c8_i32_528 = arith.constant 8 : i32
    %1361 = vector.broadcast %c8_i32_528 : i32 to vector<1x64xi32>
    %1362 = arith.cmpi slt, %1360, %1361 : vector<1x64xi32>
    %1363 = arith.andi %1358, %1362 : vector<1x64xi1>
    %cst_529 = arith.constant 0.000000e+00 : f32
    %1364 = vector.shape_cast %1363 : vector<1x64xi1> to vector<1x64xi1>
    %1365 = vector.broadcast %1364 : vector<1x64xi1> to vector<8x64xi1>
    %1366 = vector.broadcast %cst_529 : f32 to vector<8x64xf32>
    %1367 = arith.select %1365, %1354, %1366 : vector<8x64xi1>, vector<8x64xf32>
    %1368 = tpu.concatenate %1281, %1284, %1300, %1316, %1248, %1332, %1348, %1351, %1367 in 0 : vector<8x64xf32>, vector<8x64xf32>, vector<8x64xf32>, vector<8x64xf32>, vector<8x64xf32>, vector<8x64xf32>, vector<8x64xf32>, vector<8x64xf32>, vector<8x64xf32> -> vector<72x64xf32>
    %c0_530 = arith.constant 0 : index
    %c0_531 = arith.constant 0 : index
    %1369 = vector.load %arg23[%c0_530, %c0_531] : memref<16x72xf32, #tpu.memory_space<vmem>>, vector<16x72xf32>
    %cst_532 = arith.constant dense<0.000000e+00> : vector<16x64xf32>
    %1370 = tpu.matmul %1369, %1368, %cst_532 {dimension_numbers = #tpu.dot_dimension_numbers<[1], [0], [0], [1], [0, 0, 1, 1], [], []>} : vector<16x72xf32>, vector<72x64xf32>, vector<16x64xf32> -> vector<16x64xf32>
    %c0_533 = arith.constant 0 : index
    %c0_534 = arith.constant 0 : index
    %1371 = vector.load %arg24[%c0_533, %c0_534] : memref<16x1xf32, #tpu.memory_space<vmem>>, vector<16x1xf32>
    %1372 = vector.broadcast %1371 : vector<16x1xf32> to vector<16x64xf32>
    %1373 = arith.mulf %1370, %1372 : vector<16x64xf32>
    %c0_535 = arith.constant 0 : index
    %c0_536 = arith.constant 0 : index
    %1374 = vector.load %arg25[%c0_535, %c0_536] : memref<16x1xf32, #tpu.memory_space<vmem>>, vector<16x1xf32>
    %1375 = vector.broadcast %1374 : vector<16x1xf32> to vector<16x64xf32>
    %1376 = arith.addf %1373, %1375 : vector<16x64xf32>
    %cst_537 = arith.constant 0.000000e+00 : f32
    %1377 = vector.broadcast %cst_537 : f32 to vector<16x64xf32>
    %1378 = arith.cmpf oge, %1376, %1377 : vector<16x64xf32>
    %cst_538 = arith.constant 0.00999999977 : f32
    %1379 = vector.broadcast %cst_538 : f32 to vector<16x64xf32>
    %1380 = arith.mulf %1379, %1376 : vector<16x64xf32>
    %1381 = arith.select %1378, %1376, %1380 : vector<16x64xi1>, vector<16x64xf32>
    %cst_539 = arith.constant dense<0.000000e+00> : vector<16xf32>
    %1382 = vector.multi_reduction <add>, %1381, %cst_539 [1] : vector<16x64xf32> to vector<16xf32>
    %1383 = vector.shape_cast %1382 : vector<16xf32> to vector<16x1xf32>
    %cst_540 = arith.constant 1.562500e-02 : f32
    %1384 = vector.broadcast %cst_540 : f32 to vector<16x1xf32>
    %1385 = arith.mulf %1383, %1384 : vector<16x1xf32>
    %1386 = vector.shape_cast %1385 : vector<16x1xf32> to vector<1x16x1xf32>
    %c0_541 = arith.constant 0 : index
    %c0_542 = arith.constant 0 : index
    %c0_543 = arith.constant 0 : index
    %1387 = vector.load %arg28[%c0_541, %c0_542, %c0_543] : memref<1x16x1xf32, #tpu.memory_space<vmem>>, vector<1x16x1xf32>
    tpu.vector_store %arg28[%c0_541, %c0_542, %c0_543], %1386 {strides = array<i32>} : memref<1x16x1xf32, #tpu.memory_space<vmem>>, vector<1x16x1xf32>,
    return
  }
  func.func @transform_0(%arg0: i32) -> (i32, i32, i32) {
    %c0_i32 = arith.constant 0 : i32
    %c0_i32_0 = arith.constant 0 : i32
    %c0_i32_1 = arith.constant 0 : i32
    return %arg0, %c0_i32, %c0_i32_0 : i32, i32, i32
  }
  func.func @transform_1(%arg0: i32) -> (i32, i32) {
    %c0_i32 = arith.constant 0 : i32
    %c0_i32_0 = arith.constant 0 : i32
    %c0_i32_1 = arith.constant 0 : i32
    return %c0_i32, %c0_i32_0 : i32, i32
  }
  func.func @transform_2(%arg0: i32) -> (i32, i32) {
    %c0_i32 = arith.constant 0 : i32
    %c0_i32_0 = arith.constant 0 : i32
    %c0_i32_1 = arith.constant 0 : i32
    return %c0_i32, %c0_i32_0 : i32, i32
  }
  func.func @transform_3(%arg0: i32) -> (i32, i32) {
    %c0_i32 = arith.constant 0 : i32
    %c0_i32_0 = arith.constant 0 : i32
    %c0_i32_1 = arith.constant 0 : i32
    return %c0_i32, %c0_i32_0 : i32, i32
  }
  func.func @transform_4(%arg0: i32) -> (i32, i32) {
    %c0_i32 = arith.constant 0 : i32
    %c0_i32_0 = arith.constant 0 : i32
    %c0_i32_1 = arith.constant 0 : i32
    return %c0_i32, %c0_i32_0 : i32, i32
  }
  func.func @transform_5(%arg0: i32) -> (i32, i32) {
    %c0_i32 = arith.constant 0 : i32
    %c0_i32_0 = arith.constant 0 : i32
    %c0_i32_1 = arith.constant 0 : i32
    return %c0_i32, %c0_i32_0 : i32, i32
  }
  func.func @transform_6(%arg0: i32) -> (i32, i32) {
    %c0_i32 = arith.constant 0 : i32
    %c0_i32_0 = arith.constant 0 : i32
    %c0_i32_1 = arith.constant 0 : i32
    return %c0_i32, %c0_i32_0 : i32, i32
  }
  func.func @transform_7(%arg0: i32) -> (i32, i32) {
    %c0_i32 = arith.constant 0 : i32
    %c0_i32_0 = arith.constant 0 : i32
    %c0_i32_1 = arith.constant 0 : i32
    return %c0_i32, %c0_i32_0 : i32, i32
  }
  func.func @transform_8(%arg0: i32) -> (i32, i32) {
    %c0_i32 = arith.constant 0 : i32
    %c0_i32_0 = arith.constant 0 : i32
    %c0_i32_1 = arith.constant 0 : i32
    return %c0_i32, %c0_i32_0 : i32, i32
  }
  func.func @transform_9(%arg0: i32) -> (i32, i32) {
    %c0_i32 = arith.constant 0 : i32
    %c0_i32_0 = arith.constant 0 : i32
    %c0_i32_1 = arith.constant 0 : i32
    return %c0_i32, %c0_i32_0 : i32, i32
  }
  func.func @transform_10(%arg0: i32) -> (i32, i32) {
    %c0_i32 = arith.constant 0 : i32
    %c0_i32_0 = arith.constant 0 : i32
    %c0_i32_1 = arith.constant 0 : i32
    return %c0_i32, %c0_i32_0 : i32, i32
  }
  func.func @transform_11(%arg0: i32) -> (i32, i32) {
    %c0_i32 = arith.constant 0 : i32
    %c0_i32_0 = arith.constant 0 : i32
    %c0_i32_1 = arith.constant 0 : i32
    return %c0_i32, %c0_i32_0 : i32, i32
  }
  func.func @transform_12(%arg0: i32) -> (i32, i32) {
    %c0_i32 = arith.constant 0 : i32
    %c0_i32_0 = arith.constant 0 : i32
    %c0_i32_1 = arith.constant 0 : i32
    return %c0_i32, %c0_i32_0 : i32, i32
  }
  func.func @transform_13(%arg0: i32) -> (i32, i32) {
    %c0_i32 = arith.constant 0 : i32
    %c0_i32_0 = arith.constant 0 : i32
    %c0_i32_1 = arith.constant 0 : i32
    return %c0_i32, %c0_i32_0 : i32, i32
  }
  func.func @transform_14(%arg0: i32) -> (i32, i32) {
    %c0_i32 = arith.constant 0 : i32
    %c0_i32_0 = arith.constant 0 : i32
    %c0_i32_1 = arith.constant 0 : i32
    return %c0_i32, %c0_i32_0 : i32, i32
  }
  func.func @transform_15(%arg0: i32) -> (i32, i32) {
    %c0_i32 = arith.constant 0 : i32
    %c0_i32_0 = arith.constant 0 : i32
    %c0_i32_1 = arith.constant 0 : i32
    return %c0_i32, %c0_i32_0 : i32, i32
  }
  func.func @transform_16(%arg0: i32) -> (i32, i32) {
    %c0_i32 = arith.constant 0 : i32
    %c0_i32_0 = arith.constant 0 : i32
    %c0_i32_1 = arith.constant 0 : i32
    return %c0_i32, %c0_i32_0 : i32, i32
  }
  func.func @transform_17(%arg0: i32) -> (i32, i32) {
    %c0_i32 = arith.constant 0 : i32
    %c0_i32_0 = arith.constant 0 : i32
    %c0_i32_1 = arith.constant 0 : i32
    return %c0_i32, %c0_i32_0 : i32, i32
  }
  func.func @transform_18(%arg0: i32) -> (i32, i32) {
    %c0_i32 = arith.constant 0 : i32
    %c0_i32_0 = arith.constant 0 : i32
    %c0_i32_1 = arith.constant 0 : i32
    return %c0_i32, %c0_i32_0 : i32, i32
  }
  func.func @transform_19(%arg0: i32) -> (i32, i32) {
    %c0_i32 = arith.constant 0 : i32
    %c0_i32_0 = arith.constant 0 : i32
    %c0_i32_1 = arith.constant 0 : i32
    return %c0_i32, %c0_i32_0 : i32, i32
  }
  func.func @transform_20(%arg0: i32) -> (i32, i32) {
    %c0_i32 = arith.constant 0 : i32
    %c0_i32_0 = arith.constant 0 : i32
    %c0_i32_1 = arith.constant 0 : i32
    return %c0_i32, %c0_i32_0 : i32, i32
  }
  func.func @transform_21(%arg0: i32) -> (i32, i32) {
    %c0_i32 = arith.constant 0 : i32
    %c0_i32_0 = arith.constant 0 : i32
    %c0_i32_1 = arith.constant 0 : i32
    return %c0_i32, %c0_i32_0 : i32, i32
  }
  func.func @transform_22(%arg0: i32) -> (i32, i32) {
    %c0_i32 = arith.constant 0 : i32
    %c0_i32_0 = arith.constant 0 : i32
    %c0_i32_1 = arith.constant 0 : i32
    return %c0_i32, %c0_i32_0 : i32, i32
  }
  func.func @transform_23(%arg0: i32) -> (i32, i32) {
    %c0_i32 = arith.constant 0 : i32
    %c0_i32_0 = arith.constant 0 : i32
    %c0_i32_1 = arith.constant 0 : i32
    return %c0_i32, %c0_i32_0 : i32, i32
  }
  func.func @transform_24(%arg0: i32) -> (i32, i32) {
    %c0_i32 = arith.constant 0 : i32
    %c0_i32_0 = arith.constant 0 : i32
    %c0_i32_1 = arith.constant 0 : i32
    return %c0_i32, %c0_i32_0 : i32, i32
  }
  func.func @transform_25(%arg0: i32) -> (i32, i32) {
    %c0_i32 = arith.constant 0 : i32
    %c0_i32_0 = arith.constant 0 : i32
    %c0_i32_1 = arith.constant 0 : i32
    return %c0_i32, %c0_i32_0 : i32, i32
  }
  func.func @transform_26(%arg0: i32) -> (i32, i32) {
    %c0_i32 = arith.constant 0 : i32
    %c0_i32_0 = arith.constant 0 : i32
    %c0_i32_1 = arith.constant 0 : i32
    return %c0_i32, %c0_i32_0 : i32, i32
  }
  func.func @transform_27(%arg0: i32) -> (i32, i32, i32) {
    %c0_i32 = arith.constant 0 : i32
    %c0_i32_0 = arith.constant 0 : i32
    %c0_i32_1 = arith.constant 0 : i32
    return %arg0, %c0_i32, %c0_i32_0 : i32, i32, i32
  }
}

</mosaic_0001>

<llo_original>
// kernel: extractor_forward.1
$region0: #{extractor_forward.1}
  #allocation0 [shape = 'u32[]', space=smem, size = 0x4, offset = 0x4, fixed_abs, tag = 'smem constant byte address 0x4 - core index']
  #allocation1 [shape = 'u32[144,128]{1,0:T(1,128)}', space=vmem, size = 0x12000, scoped, tag = 'internal scratch']
  %s0 = inlined_call_operand.vmem [shape: f32[2,8,1024], index: 0, kind: input, shape index: {}]
  %s1 = inlined_call_operand.vmem [shape: f32[8,72], index: 1, kind: input, shape index: {}]
  %s2 = inlined_call_operand.vmem [shape: f32[8,1], index: 2, kind: input, shape index: {}]
  %s3 = inlined_call_operand.vmem [shape: f32[8,1], index: 3, kind: input, shape index: {}]
  %s4 = inlined_call_operand.vmem [shape: f32[8,72], index: 4, kind: input, shape index: {}]
  %s5 = inlined_call_operand.vmem [shape: f32[8,1], index: 5, kind: input, shape index: {}]
  %s6 = inlined_call_operand.vmem [shape: f32[8,1], index: 6, kind: input, shape index: {}]
  %s7 = inlined_call_operand.vmem [shape: f32[8,144], index: 7, kind: input, shape index: {}]
  %s8 = inlined_call_operand.vmem [shape: f32[8,1], index: 8, kind: input, shape index: {}]
  %s9 = inlined_call_operand.vmem [shape: f32[8,1], index: 9, kind: input, shape index: {}]
  %s10 = inlined_call_operand.vmem [shape: f32[8,72], index: 10, kind: input, shape index: {}]
  %s11 = inlined_call_operand.vmem [shape: f32[8,1], index: 11, kind: input, shape index: {}]
  %s12 = inlined_call_operand.vmem [shape: f32[8,1], index: 12, kind: input, shape index: {}]
  %s13 = inlined_call_operand.vmem [shape: f32[8,144], index: 13, kind: input, shape index: {}]
  %s14 = inlined_call_operand.vmem [shape: f32[8,1], index: 14, kind: input, shape index: {}]
  %s15 = inlined_call_operand.vmem [shape: f32[8,1], index: 15, kind: input, shape index: {}]
  %s16 = inlined_call_operand.vmem [shape: f32[8,72], index: 16, kind: input, shape index: {}]
  %s17 = inlined_call_operand.vmem [shape: f32[8,1], index: 17, kind: input, shape index: {}]
  %s18 = inlined_call_operand.vmem [shape: f32[8,1], index: 18, kind: input, shape index: {}]
  %s19 = inlined_call_operand.vmem [shape: f32[8,144], index: 19, kind: input, shape index: {}]
  %s20 = inlined_call_operand.vmem [shape: f32[8,1], index: 20, kind: input, shape index: {}]
  %s21 = inlined_call_operand.vmem [shape: f32[8,1], index: 21, kind: input, shape index: {}]
  %s22 = inlined_call_operand.vmem [shape: f32[16,72], index: 22, kind: input, shape index: {}]
  %s23 = inlined_call_operand.vmem [shape: f32[16,1], index: 23, kind: input, shape index: {}]
  %s24 = inlined_call_operand.vmem [shape: f32[16,1], index: 24, kind: input, shape index: {}]
  %s25 = inlined_call_operand.vmem [shape: f32[1024,256], index: 25, kind: input, shape index: {}]
  %s26 = inlined_call_operand.vmem [shape: f32[256,64], index: 26, kind: input, shape index: {}]
  %s27 = inlined_call_operand.vmem [shape: f32[2,16,1], index: 27, kind: output, shape index: {}]
  %s28 = sld [smem:[#allocation0]]
  $region141: #{extractor_forward.1} parent=0
    _
  %s30 = ssub.s32 1, %s28
  %s31 = scalar_select 0, %s30, %s28
  loop: start=0, step=1, limit=4
  $region2: #{extractor_forward.1} parent=0 // loop_pre_header
    _
  $region3: #{extractor_forward.1} parent=0 // loop_header
    %s33 = sphi 0, %s37
    %p34 = scmp.ge.s32.totalorder %s33, 4
    %s43 = sphi 0, %s45
    %s46 = sphi 0, %s43
    %s47 = sphi 0, %s46
    %s63 = sphi 0, %s47
    %s67 = sphi 0, %s67
    %s69 = sphi 0, %s67
    %s70 = sphi 0, %s69
    %s84 = sphi 0, %s70
    %s88 = sphi 0, %s88
    %s90 = sphi 0, %s88
    %s91 = sphi 0, %s90
    %s105 = sphi 0, %s91
    %s109 = sphi 0, %s109
    %s111 = sphi 0, %s109
    %s112 = sphi 0, %s111
    %s126 = sphi 0, %s112
    %s130 = sphi 0, %s130
    %s132 = sphi 0, %s130
    %s133 = sphi 0, %s132
    %s147 = sphi 0, %s133
    %s151 = sphi 0, %s151
    %s153 = sphi 0, %s151
    %s154 = sphi 0, %s153
    %s168 = sphi 0, %s154
    %s172 = sphi 0, %s172
    %s174 = sphi 0, %s172
    %s175 = sphi 0, %s174
    %s189 = sphi 0, %s175
    %s193 = sphi 0, %s193
    %s195 = sphi 0, %s193
    %s196 = sphi 0, %s195
    %s210 = sphi 0, %s196
    %s214 = sphi 0, %s214
    %s216 = sphi 0, %s214
    %s217 = sphi 0, %s216
    %s231 = sphi 0, %s217
    %s235 = sphi 0, %s235
    %s237 = sphi 0, %s235
    %s238 = sphi 0, %s237
    %s252 = sphi 0, %s238
    %s256 = sphi 0, %s256
    %s258 = sphi 0, %s256
    %s259 = sphi 0, %s258
    %s273 = sphi 0, %s259
    %s277 = sphi 0, %s277
    %s279 = sphi 0, %s277
    %s280 = sphi 0, %s279
    %s294 = sphi 0, %s280
    %s298 = sphi 0, %s298
    %s300 = sphi 0, %s298
    %s301 = sphi 0, %s300
    %s315 = sphi 0, %s301
    %s319 = sphi 0, %s319
    %s321 = sphi 0, %s319
    %s322 = sphi 0, %s321
    %s336 = sphi 0, %s322
    %s340 = sphi 0, %s340
    %s342 = sphi 0, %s340
    %s343 = sphi 0, %s342
    %s357 = sphi 0, %s343
    %s361 = sphi 0, %s361
    %s363 = sphi 0, %s361
    %s364 = sphi 0, %s363
    %s378 = sphi 0, %s364
    %s382 = sphi 0, %s382
    %s384 = sphi 0, %s382
    %s385 = sphi 0, %s384
    %s399 = sphi 0, %s385
    %s403 = sphi 0, %s403
    %s405 = sphi 0, %s403
    %s406 = sphi 0, %s405
    %s420 = sphi 0, %s406
    %s424 = sphi 0, %s424
    %s426 = sphi 0, %s424
    %s427 = sphi 0, %s426
    %s441 = sphi 0, %s427
    %s445 = sphi 0, %s445
    %s447 = sphi 0, %s445
    %s448 = sphi 0, %s447
    %s462 = sphi 0, %s448
    %s466 = sphi 0, %s466
    %s468 = sphi 0, %s466
    %s469 = sphi 0, %s468
    %s483 = sphi 0, %s469
    %s487 = sphi 0, %s487
    %s489 = sphi 0, %s487
    %s490 = sphi 0, %s489
    %s504 = sphi 0, %s490
    %s508 = sphi 0, %s508
    %s510 = sphi 0, %s508
    %s511 = sphi 0, %s510
    %s525 = sphi 0, %s511
    %s529 = sphi 0, %s529
    %s531 = sphi 0, %s529
    %s532 = sphi 0, %s531
    %s546 = sphi 0, %s532
    %s550 = sphi 0, %s550
    %s552 = sphi 0, %s550
    %s553 = sphi 0, %s552
    %s567 = sphi 0, %s553
    %s571 = sphi 0, %s571
    %s573 = sphi 0, %s571
    %s574 = sphi 0, %s573
    %s588 = sphi 0, %s574
    %s592 = sphi 0, %s592
    %s594 = sphi 0, %s592
    %s595 = sphi 0, %s594
    %s609 = sphi 0, %s595
    %s615 = sphi 0, %s617
    %s618 = sphi 0, %s615
    %s619 = sphi 0, %s618
    %s635 = sphi 0, %s619
  $region4: #{extractor_forward.1} parent=0 // loop_header_branch
    %36 = sbr.rel (%p34) target = $region8
  $region5: #{extractor_forward.1} parent=0 // loop_body
    %s38 = ssub.s32 %s33, 1
    %s39 = ssub.s32 %s33, 2
    %s40 = sadd.s32 %s33, 1
    %s41 = ssub.s32 %s33, %s40
    %p42 = scmp.eq.s32.totalorder %s41, 0
    %s44 = sadd.s32 %s43, 1
    %s45 = scalar_select %p42, %s43, %s44
    %p48 = pneg %p42
    %p49 = scmp.eq.s32.totalorder %s33, 1
    %p50 = por %p48, %p49
    %p51 = scmp.ne.s32.totalorder %s43, %s46
    %p52 = scmp.eq.s32.totalorder %s33, 0
    %p53 = por %p51, %p52
    %p54 = scmp.ne.s32.totalorder %s43, %s46
    %p55 = scmp.eq.s32.totalorder %s38, 1
    %p56 = por %p54, %p55
    %p57 = scmp.ne.s32.totalorder %s46, %s47
    %p58 = scmp.eq.s32.totalorder %s38, 0
    %p59 = por %p57, %p58
    %p60 = scmp.ne.s32.totalorder %s46, %s47
    %p61 = scmp.eq.s32.totalorder %s39, 1
    %p62 = por %p60, %p61
    %p64 = scmp.ne.s32.totalorder %s47, %s63
    %p65 = scmp.eq.s32.totalorder %s39, 0
    %p66 = por %p64, %p65
    %s68 = sadd.s32 %s67, 1
    %p71 = scmp.eq.s32.totalorder %s33, 1
    %p72 = scmp.ne.s32.totalorder %s67, %s69
    %p73 = scmp.eq.s32.totalorder %s33, 0
    %p74 = por %p72, %p73
    %p75 = scmp.ne.s32.totalorder %s67, %s69
    %p76 = scmp.eq.s32.totalorder %s38, 1
    %p77 = por %p75, %p76
    %p78 = scmp.ne.s32.totalorder %s69, %s70
    %p79 = scmp.eq.s32.totalorder %s38, 0
    %p80 = por %p78, %p79
    %p81 = scmp.ne.s32.totalorder %s69, %s70
    %p82 = scmp.eq.s32.totalorder %s39, 1
    %p83 = por %p81, %p82
    %p85 = scmp.ne.s32.totalorder %s70, %s84
    %p86 = scmp.eq.s32.totalorder %s39, 0
    %p87 = por %p85, %p86
    %s89 = sadd.s32 %s88, 1
    %p92 = scmp.eq.s32.totalorder %s33, 1
    %p93 = scmp.ne.s32.totalorder %s88, %s90
    %p94 = scmp.eq.s32.totalorder %s33, 0
    %p95 = por %p93, %p94
    %p96 = scmp.ne.s32.totalorder %s88, %s90
    %p97 = scmp.eq.s32.totalorder %s38, 1
    %p98 = por %p96, %p97
    %p99 = scmp.ne.s32.totalorder %s90, %s91
    %p100 = scmp.eq.s32.totalorder %s38, 0
    %p101 = por %p99, %p100
    %p102 = scmp.ne.s32.totalorder %s90, %s91
    %p103 = scmp.eq.s32.totalorder %s39, 1
    %p104 = por %p102, %p103
    %p106 = scmp.ne.s32.totalorder %s91, %s105
    %p107 = scmp.eq.s32.totalorder %s39, 0
    %p108 = por %p106, %p107
    %s110 = sadd.s32 %s109, 1
    %p113 = scmp.eq.s32.totalorder %s33, 1
    %p114 = scmp.ne.s32.totalorder %s109, %s111
    %p115 = scmp.eq.s32.totalorder %s33, 0
    %p116 = por %p114, %p115
    %p117 = scmp.ne.s32.totalorder %s109, %s111
    %p118 = scmp.eq.s32.totalorder %s38, 1
    %p119 = por %p117, %p118
    %p120 = scmp.ne.s32.totalorder %s111, %s112
    %p121 = scmp.eq.s32.totalorder %s38, 0
    %p122 = por %p120, %p121
    %p123 = scmp.ne.s32.totalorder %s111, %s112
    %p124 = scmp.eq.s32.totalorder %s39, 1
    %p125 = por %p123, %p124
    %p127 = scmp.ne.s32.totalorder %s112, %s126
    %p128 = scmp.eq.s32.totalorder %s39, 0
    %p129 = por %p127, %p128
    %s131 = sadd.s32 %s130, 1
    %p134 = scmp.eq.s32.totalorder %s33, 1
    %p135 = scmp.ne.s32.totalorder %s130, %s132
    %p136 = scmp.eq.s32.totalorder %s33, 0
    %p137 = por %p135, %p136
    %p138 = scmp.ne.s32.totalorder %s130, %s132
    %p139 = scmp.eq.s32.totalorder %s38, 1
    %p140 = por %p138, %p139
    %p141 = scmp.ne.s32.totalorder %s132, %s133
    %p142 = scmp.eq.s32.totalorder %s38, 0
    %p143 = por %p141, %p142
    %p144 = scmp.ne.s32.totalorder %s132, %s133
    %p145 = scmp.eq.s32.totalorder %s39, 1
    %p146 = por %p144, %p145
    %p148 = scmp.ne.s32.totalorder %s133, %s147
    %p149 = scmp.eq.s32.totalorder %s39, 0
    %p150 = por %p148, %p149
    %s152 = sadd.s32 %s151, 1
    %p155 = scmp.eq.s32.totalorder %s33, 1
    %p156 = scmp.ne.s32.totalorder %s151, %s153
    %p157 = scmp.eq.s32.totalorder %s33, 0
    %p158 = por %p156, %p157
    %p159 = scmp.ne.s32.totalorder %s151, %s153
    %p160 = scmp.eq.s32.totalorder %s38, 1
    %p161 = por %p159, %p160
    %p162 = scmp.ne.s32.totalorder %s153, %s154
    %p163 = scmp.eq.s32.totalorder %s38, 0
    %p164 = por %p162, %p163
    %p165 = scmp.ne.s32.totalorder %s153, %s154
    %p166 = scmp.eq.s32.totalorder %s39, 1
    %p167 = por %p165, %p166
    %p169 = scmp.ne.s32.totalorder %s154, %s168
    %p170 = scmp.eq.s32.totalorder %s39, 0
    %p171 = por %p169, %p170
    %s173 = sadd.s32 %s172, 1
    %p176 = scmp.eq.s32.totalorder %s33, 1
    %p177 = scmp.ne.s32.totalorder %s172, %s174
    %p178 = scmp.eq.s32.totalorder %s33, 0
    %p179 = por %p177, %p178
    %p180 = scmp.ne.s32.totalorder %s172, %s174
    %p181 = scmp.eq.s32.totalorder %s38, 1
    %p182 = por %p180, %p181
    %p183 = scmp.ne.s32.totalorder %s174, %s175
    %p184 = scmp.eq.s32.totalorder %s38, 0
    %p185 = por %p183, %p184
    %p186 = scmp.ne.s32.totalorder %s174, %s175
    %p187 = scmp.eq.s32.totalorder %s39, 1
    %p188 = por %p186, %p187
    %p190 = scmp.ne.s32.totalorder %s175, %s189
    %p191 = scmp.eq.s32.totalorder %s39, 0
    %p192 = por %p190, %p191
    %s194 = sadd.s32 %s193, 1
    %p197 = scmp.eq.s32.totalorder %s33, 1
    %p198 = scmp.ne.s32.totalorder %s193, %s195
    %p199 = scmp.eq.s32.totalorder %s33, 0
    %p200 = por %p198, %p199
    %p201 = scmp.ne.s32.totalorder %s193, %s195
    %p202 = scmp.eq.s32.totalorder %s38, 1
    %p203 = por %p201, %p202
    %p204 = scmp.ne.s32.totalorder %s195, %s196
    %p205 = scmp.eq.s32.totalorder %s38, 0
    %p206 = por %p204, %p205
    %p207 = scmp.ne.s32.totalorder %s195, %s196
    %p208 = scmp.eq.s32.totalorder %s39, 1
    %p209 = por %p207, %p208
    %p211 = scmp.ne.s32.totalorder %s196, %s210
    %p212 = scmp.eq.s32.totalorder %s39, 0
    %p213 = por %p211, %p212
    %s215 = sadd.s32 %s214, 1
    %p218 = scmp.eq.s32.totalorder %s33, 1
    %p219 = scmp.ne.s32.totalorder %s214, %s216
    %p220 = scmp.eq.s32.totalorder %s33, 0
    %p221 = por %p219, %p220
    %p222 = scmp.ne.s32.totalorder %s214, %s216
    %p223 = scmp.eq.s32.totalorder %s38, 1
    %p224 = por %p222, %p223
    %p225 = scmp.ne.s32.totalorder %s216, %s217
    %p226 = scmp.eq.s32.totalorder %s38, 0
    %p227 = por %p225, %p226
    %p228 = scmp.ne.s32.totalorder %s216, %s217
    %p229 = scmp.eq.s32.totalorder %s39, 1
    %p230 = por %p228, %p229
    %p232 = scmp.ne.s32.totalorder %s217, %s231
    %p233 = scmp.eq.s32.totalorder %s39, 0
    %p234 = por %p232, %p233
    %s236 = sadd.s32 %s235, 1
    %p239 = scmp.eq.s32.totalorder %s33, 1
    %p240 = scmp.ne.s32.totalorder %s235, %s237
    %p241 = scmp.eq.s32.totalorder %s33, 0
    %p242 = por %p240, %p241
    %p243 = scmp.ne.s32.totalorder %s235, %s237
    %p244 = scmp.eq.s32.totalorder %s38, 1
    %p245 = por %p243, %p244
    %p246 = scmp.ne.s32.totalorder %s237, %s238
    %p247 = scmp.eq.s32.totalorder %s38, 0
    %p248 = por %p246, %p247
    %p249 = scmp.ne.s32.totalorder %s237, %s238
    %p250 = scmp.eq.s32.totalorder %s39, 1
    %p251 = por %p249, %p250
    %p253 = scmp.ne.s32.totalorder %s238, %s252
    %p254 = scmp.eq.s32.totalorder %s39, 0
    %p255 = por %p253, %p254
    %s257 = sadd.s32 %s256, 1
    %p260 = scmp.eq.s32.totalorder %s33, 1
    %p261 = scmp.ne.s32.totalorder %s256, %s258
    %p262 = scmp.eq.s32.totalorder %s33, 0
    %p263 = por %p261, %p262
    %p264 = scmp.ne.s32.totalorder %s256, %s258
    %p265 = scmp.eq.s32.totalorder %s38, 1
    %p266 = por %p264, %p265
    %p267 = scmp.ne.s32.totalorder %s258, %s259
    %p268 = scmp.eq.s32.totalorder %s38, 0
    %p269 = por %p267, %p268
    %p270 = scmp.ne.s32.totalorder %s258, %s259
    %p271 = scmp.eq.s32.totalorder %s39, 1
    %p272 = por %p270, %p271
    %p274 = scmp.ne.s32.totalorder %s259, %s273
    %p275 = scmp.eq.s32.totalorder %s39, 0
    %p276 = por %p274, %p275
    %s278 = sadd.s32 %s277, 1
    %p281 = scmp.eq.s32.totalorder %s33, 1
    %p282 = scmp.ne.s32.totalorder %s277, %s279
    %p283 = scmp.eq.s32.totalorder %s33, 0
    %p284 = por %p282, %p283
    %p285 = scmp.ne.s32.totalorder %s277, %s279
    %p286 = scmp.eq.s32.totalorder %s38, 1
    %p287 = por %p285, %p286
    %p288 = scmp.ne.s32.totalorder %s279, %s280
    %p289 = scmp.eq.s32.totalorder %s38, 0
    %p290 = por %p288, %p289
    %p291 = scmp.ne.s32.totalorder %s279, %s280
    %p292 = scmp.eq.s32.totalorder %s39, 1
    %p293 = por %p291, %p292
    %p295 = scmp.ne.s32.totalorder %s280, %s294
    %p296 = scmp.eq.s32.totalorder %s39, 0
    %p297 = por %p295, %p296
    %s299 = sadd.s32 %s298, 1
    %p302 = scmp.eq.s32.totalorder %s33, 1
    %p303 = scmp.ne.s32.totalorder %s298, %s300
    %p304 = scmp.eq.s32.totalorder %s33, 0
    %p305 = por %p303, %p304
    %p306 = scmp.ne.s32.totalorder %s298, %s300
    %p307 = scmp.eq.s32.totalorder %s38, 1
    %p308 = por %p306, %p307
    %p309 = scmp.ne.s32.totalorder %s300, %s301
    %p310 = scmp.eq.s32.totalorder %s38, 0
    %p311 = por %p309, %p310
    %p312 = scmp.ne.s32.totalorder %s300, %s301
    %p313 = scmp.eq.s32.totalorder %s39, 1
    %p314 = por %p312, %p313
    %p316 = scmp.ne.s32.totalorder %s301, %s315
    %p317 = scmp.eq.s32.totalorder %s39, 0
    %p318 = por %p316, %p317
    %s320 = sadd.s32 %s319, 1
    %p323 = scmp.eq.s32.totalorder %s33, 1
    %p324 = scmp.ne.s32.totalorder %s319, %s321
    %p325 = scmp.eq.s32.totalorder %s33, 0
    %p326 = por %p324, %p325
    %p327 = scmp.ne.s32.totalorder %s319, %s321
    %p328 = scmp.eq.s32.totalorder %s38, 1
    %p329 = por %p327, %p328
    %p330 = scmp.ne.s32.totalorder %s321, %s322
    %p331 = scmp.eq.s32.totalorder %s38, 0
    %p332 = por %p330, %p331
    %p333 = scmp.ne.s32.totalorder %s321, %s322
    %p334 = scmp.eq.s32.totalorder %s39, 1
    %p335 = por %p333, %p334
    %p337 = scmp.ne.s32.totalorder %s322, %s336
    %p338 = scmp.eq.s32.totalorder %s39, 0
    %p339 = por %p337, %p338
    %s341 = sadd.s32 %s340, 1
    %p344 = scmp.eq.s32.totalorder %s33, 1
    %p345 = scmp.ne.s32.totalorder %s340, %s342
    %p346 = scmp.eq.s32.totalorder %s33, 0
    %p347 = por %p345, %p346
    %p348 = scmp.ne.s32.totalorder %s340, %s342
    %p349 = scmp.eq.s32.totalorder %s38, 1
    %p350 = por %p348, %p349
    %p351 = scmp.ne.s32.totalorder %s342, %s343
    %p352 = scmp.eq.s32.totalorder %s38, 0
    %p353 = por %p351, %p352
    %p354 = scmp.ne.s32.totalorder %s342, %s343
    %p355 = scmp.eq.s32.totalorder %s39, 1
    %p356 = por %p354, %p355
    %p358 = scmp.ne.s32.totalorder %s343, %s357
    %p359 = scmp.eq.s32.totalorder %s39, 0
    %p360 = por %p358, %p359
    %s362 = sadd.s32 %s361, 1
    %p365 = scmp.eq.s32.totalorder %s33, 1
    %p366 = scmp.ne.s32.totalorder %s361, %s363
    %p367 = scmp.eq.s32.totalorder %s33, 0
    %p368 = por %p366, %p367
    %p369 = scmp.ne.s32.totalorder %s361, %s363
    %p370 = scmp.eq.s32.totalorder %s38, 1
    %p371 = por %p369, %p370
    %p372 = scmp.ne.s32.totalorder %s363, %s364
    %p373 = scmp.eq.s32.totalorder %s38, 0
    %p374 = por %p372, %p373
    %p375 = scmp.ne.s32.totalorder %s363, %s364
    %p376 = scmp.eq.s32.totalorder %s39, 1
    %p377 = por %p375, %p376
    %p379 = scmp.ne.s32.totalorder %s364, %s378
    %p380 = scmp.eq.s32.totalorder %s39, 0
    %p381 = por %p379, %p380
    %s383 = sadd.s32 %s382, 1
    %p386 = scmp.eq.s32.totalorder %s33, 1
    %p387 = scmp.ne.s32.totalorder %s382, %s384
    %p388 = scmp.eq.s32.totalorder %s33, 0
    %p389 = por %p387, %p388
    %p390 = scmp.ne.s32.totalorder %s382, %s384
    %p391 = scmp.eq.s32.totalorder %s38, 1
    %p392 = por %p390, %p391
    %p393 = scmp.ne.s32.totalorder %s384, %s385
    %p394 = scmp.eq.s32.totalorder %s38, 0
    %p395 = por %p393, %p394
    %p396 = scmp.ne.s32.totalorder %s384, %s385
    %p397 = scmp.eq.s32.totalorder %s39, 1
    %p398 = por %p396, %p397
    %p400 = scmp.ne.s32.totalorder %s385, %s399
    %p401 = scmp.eq.s32.totalorder %s39, 0
    %p402 = por %p400, %p401
    %s404 = sadd.s32 %s403, 1
    %p407 = scmp.eq.s32.totalorder %s33, 1
    %p408 = scmp.ne.s32.totalorder %s403, %s405
    %p409 = scmp.eq.s32.totalorder %s33, 0
    %p410 = por %p408, %p409
    %p411 = scmp.ne.s32.totalorder %s403, %s405
    %p412 = scmp.eq.s32.totalorder %s38, 1
    %p413 = por %p411, %p412
    %p414 = scmp.ne.s32.totalorder %s405, %s406
    %p415 = scmp.eq.s32.totalorder %s38, 0
    %p416 = por %p414, %p415
    %p417 = scmp.ne.s32.totalorder %s405, %s406
    %p418 = scmp.eq.s32.totalorder %s39, 1
    %p419 = por %p417, %p418
    %p421 = scmp.ne.s32.totalorder %s406, %s420
    %p422 = scmp.eq.s32.totalorder %s39, 0
    %p423 = por %p421, %p422
    %s425 = sadd.s32 %s424, 1
    %p428 = scmp.eq.s32.totalorder %s33, 1
    %p429 = scmp.ne.s32.totalorder %s424, %s426
    %p430 = scmp.eq.s32.totalorder %s33, 0
    %p431 = por %p429, %p430
    %p432 = scmp.ne.s32.totalorder %s424, %s426
    %p433 = scmp.eq.s32.totalorder %s38, 1
    %p434 = por %p432, %p433
    %p435 = scmp.ne.s32.totalorder %s426, %s427
    %p436 = scmp.eq.s32.totalorder %s38, 0
    %p437 = por %p435, %p436
    %p438 = scmp.ne.s32.totalorder %s426, %s427
    %p439 = scmp.eq.s32.totalorder %s39, 1
    %p440 = por %p438, %p439
    %p442 = scmp.ne.s32.totalorder %s427, %s441
    %p443 = scmp.eq.s32.totalorder %s39, 0
    %p444 = por %p442, %p443
    %s446 = sadd.s32 %s445, 1
    %p449 = scmp.eq.s32.totalorder %s33, 1
    %p450 = scmp.ne.s32.totalorder %s445, %s447
    %p451 = scmp.eq.s32.totalorder %s33, 0
    %p452 = por %p450, %p451
    %p453 = scmp.ne.s32.totalorder %s445, %s447
    %p454 = scmp.eq.s32.totalorder %s38, 1
    %p455 = por %p453, %p454
    %p456 = scmp.ne.s32.totalorder %s447, %s448
    %p457 = scmp.eq.s32.totalorder %s38, 0
    %p458 = por %p456, %p457
    %p459 = scmp.ne.s32.totalorder %s447, %s448
    %p460 = scmp.eq.s32.totalorder %s39, 1
    %p461 = por %p459, %p460
    %p463 = scmp.ne.s32.totalorder %s448, %s462
    %p464 = scmp.eq.s32.totalorder %s39, 0
    %p465 = por %p463, %p464
    %s467 = sadd.s32 %s466, 1
    %p470 = scmp.eq.s32.totalorder %s33, 1
    %p471 = scmp.ne.s32.totalorder %s466, %s468
    %p472 = scmp.eq.s32.totalorder %s33, 0
    %p473 = por %p471, %p472
    %p474 = scmp.ne.s32.totalorder %s466, %s468
    %p475 = scmp.eq.s32.totalorder %s38, 1
    %p476 = por %p474, %p475
    %p477 = scmp.ne.s32.totalorder %s468, %s469
    %p478 = scmp.eq.s32.totalorder %s38, 0
    %p479 = por %p477, %p478
    %p480 = scmp.ne.s32.totalorder %s468, %s469
    %p481 = scmp.eq.s32.totalorder %s39, 1
    %p482 = por %p480, %p481
    %p484 = scmp.ne.s32.totalorder %s469, %s483
    %p485 = scmp.eq.s32.totalorder %s39, 0
    %p486 = por %p484, %p485
    %s488 = sadd.s32 %s487, 1
    %p491 = scmp.eq.s32.totalorder %s33, 1
    %p492 = scmp.ne.s32.totalorder %s487, %s489
    %p493 = scmp.eq.s32.totalorder %s33, 0
    %p494 = por %p492, %p493
    %p495 = scmp.ne.s32.totalorder %s487, %s489
    %p496 = scmp.eq.s32.totalorder %s38, 1
    %p497 = por %p495, %p496
    %p498 = scmp.ne.s32.totalorder %s489, %s490
    %p499 = scmp.eq.s32.totalorder %s38, 0
    %p500 = por %p498, %p499
    %p501 = scmp.ne.s32.totalorder %s489, %s490
    %p502 = scmp.eq.s32.totalorder %s39, 1
    %p503 = por %p501, %p502
    %p505 = scmp.ne.s32.totalorder %s490, %s504
    %p506 = scmp.eq.s32.totalorder %s39, 0
    %p507 = por %p505, %p506
    %s509 = sadd.s32 %s508, 1
    %p512 = scmp.eq.s32.totalorder %s33, 1
    %p513 = scmp.ne.s32.totalorder %s508, %s510
    %p514 = scmp.eq.s32.totalorder %s33, 0
    %p515 = por %p513, %p514
    %p516 = scmp.ne.s32.totalorder %s508, %s510
    %p517 = scmp.eq.s32.totalorder %s38, 1
    %p518 = por %p516, %p517
    %p519 = scmp.ne.s32.totalorder %s510, %s511
    %p520 = scmp.eq.s32.totalorder %s38, 0
    %p521 = por %p519, %p520
    %p522 = scmp.ne.s32.totalorder %s510, %s511
    %p523 = scmp.eq.s32.totalorder %s39, 1
    %p524 = por %p522, %p523
    %p526 = scmp.ne.s32.totalorder %s511, %s525
    %p527 = scmp.eq.s32.totalorder %s39, 0
    %p528 = por %p526, %p527
    %s530 = sadd.s32 %s529, 1
    %p533 = scmp.eq.s32.totalorder %s33, 1
    %p534 = scmp.ne.s32.totalorder %s529, %s531
    %p535 = scmp.eq.s32.totalorder %s33, 0
    %p536 = por %p534, %p535
    %p537 = scmp.ne.s32.totalorder %s529, %s531
    %p538 = scmp.eq.s32.totalorder %s38, 1
    %p539 = por %p537, %p538
    %p540 = scmp.ne.s32.totalorder %s531, %s532
    %p541 = scmp.eq.s32.totalorder %s38, 0
    %p542 = por %p540, %p541
    %p543 = scmp.ne.s32.totalorder %s531, %s532
    %p544 = scmp.eq.s32.totalorder %s39, 1
    %p545 = por %p543, %p544
    %p547 = scmp.ne.s32.totalorder %s532, %s546
    %p548 = scmp.eq.s32.totalorder %s39, 0
    %p549 = por %p547, %p548
    %s551 = sadd.s32 %s550, 1
    %p554 = scmp.eq.s32.totalorder %s33, 1
    %p555 = scmp.ne.s32.totalorder %s550, %s552
    %p556 = scmp.eq.s32.totalorder %s33, 0
    %p557 = por %p555, %p556
    %p558 = scmp.ne.s32.totalorder %s550, %s552
    %p559 = scmp.eq.s32.totalorder %s38, 1
    %p560 = por %p558, %p559
    %p561 = scmp.ne.s32.totalorder %s552, %s553
    %p562 = scmp.eq.s32.totalorder %s38, 0
    %p563 = por %p561, %p562
    %p564 = scmp.ne.s32.totalorder %s552, %s553
    %p565 = scmp.eq.s32.totalorder %s39, 1
    %p566 = por %p564, %p565
    %p568 = scmp.ne.s32.totalorder %s553, %s567
    %p569 = scmp.eq.s32.totalorder %s39, 0
    %p570 = por %p568, %p569
    %s572 = sadd.s32 %s571, 1
    %p575 = scmp.eq.s32.totalorder %s33, 1
    %p576 = scmp.ne.s32.totalorder %s571, %s573
    %p577 = scmp.eq.s32.totalorder %s33, 0
    %p578 = por %p576, %p577
    %p579 = scmp.ne.s32.totalorder %s571, %s573
    %p580 = scmp.eq.s32.totalorder %s38, 1
    %p581 = por %p579, %p580
    %p582 = scmp.ne.s32.totalorder %s573, %s574
    %p583 = scmp.eq.s32.totalorder %s38, 0
    %p584 = por %p582, %p583
    %p585 = scmp.ne.s32.totalorder %s573, %s574
    %p586 = scmp.eq.s32.totalorder %s39, 1
    %p587 = por %p585, %p586
    %p589 = scmp.ne.s32.totalorder %s574, %s588
    %p590 = scmp.eq.s32.totalorder %s39, 0
    %p591 = por %p589, %p590
    %s593 = sadd.s32 %s592, 1
    %p596 = scmp.eq.s32.totalorder %s33, 1
    %p597 = scmp.ne.s32.totalorder %s592, %s594
    %p598 = scmp.eq.s32.totalorder %s33, 0
    %p599 = por %p597, %p598
    %p600 = scmp.ne.s32.totalorder %s592, %s594
    %p601 = scmp.eq.s32.totalorder %s38, 1
    %p602 = por %p600, %p601
    %p603 = scmp.ne.s32.totalorder %s594, %s595
    %p604 = scmp.eq.s32.totalorder %s38, 0
    %p605 = por %p603, %p604
    %p606 = scmp.ne.s32.totalorder %s594, %s595
    %p607 = scmp.eq.s32.totalorder %s39, 1
    %p608 = por %p606, %p607
    %p610 = scmp.ne.s32.totalorder %s595, %s609
    %p611 = scmp.eq.s32.totalorder %s39, 0
    %p612 = por %p610, %p611
    %s613 = ssub.s32 %s33, %s40
    %p614 = scmp.eq.s32.totalorder %s613, 0
    %s616 = sadd.s32 %s615, 1
    %s617 = scalar_select %p614, %s615, %s616
    %p620 = pneg %p614
    %p621 = scmp.eq.s32.totalorder %s33, 1
    %p622 = por %p620, %p621
    %p623 = scmp.ne.s32.totalorder %s615, %s618
    %p624 = scmp.eq.s32.totalorder %s33, 0
    %p625 = por %p623, %p624
    %p626 = scmp.ne.s32.totalorder %s615, %s618
    %p627 = scmp.eq.s32.totalorder %s38, 1
    %p628 = por %p626, %p627
    %p629 = scmp.ne.s32.totalorder %s618, %s619
    %p630 = scmp.eq.s32.totalorder %s38, 0
    %p631 = por %p629, %p630
    %p632 = scmp.ne.s32.totalorder %s618, %s619
    %p633 = scmp.eq.s32.totalorder %s39, 1
    %p634 = por %p632, %p633
    %p636 = scmp.ne.s32.totalorder %s619, %s635
    %p637 = scmp.eq.s32.totalorder %s39, 0
    %p638 = por %p636, %p637
    %p639 = scmp.le.s32.totalorder 1, %s33
    %p640 = scmp.lt.s32.totalorder %s33, 3
    %p641 = pnand %p639, %p640
    %p642 = pneg %p641
    // Predicated region
    $region9: #{extractor_forward.1} parent=5 // pred_check
      _
    $region10: #{extractor_forward.1} parent=5 // pred_check_branch
      %644 = sbr.rel (%p641) target = $region12
    $region11: #{extractor_forward.1} parent=5 // pred_region
      %s645 = ssub.s32 %s33, 1
      // Predicated region
      $region13: #{extractor_forward.1} parent=11 // pred_check
        %p646 = pneg %p80
      $region14: #{extractor_forward.1} parent=11 // pred_check_branch
        %648 = sbr.rel (%p646) target = $region16
      $region15: #{extractor_forward.1} parent=11 // pred_region
        _
      $region16: #{extractor_forward.1} parent=11 // pred_fallthru
        _
      // Predicated region
      $region17: #{extractor_forward.1} parent=11 // pred_check
        %p649 = pneg %p101
      $region18: #{extractor_forward.1} parent=11 // pred_check_branch
        %651 = sbr.rel (%p649) target = $region20
      $region19: #{extractor_forward.1} parent=11 // pred_region
        _
      $region20: #{extractor_forward.1} parent=11 // pred_fallthru
        _
      // Predicated region
      $region21: #{extractor_forward.1} parent=11 // pred_check
        %p652 = pneg %p122
      $region22: #{extractor_forward.1} parent=11 // pred_check_branch
        %654 = sbr.rel (%p652) target = $region24
      $region23: #{extractor_forward.1} parent=11 // pred_region
        _
      $region24: #{extractor_forward.1} parent=11 // pred_fallthru
        _
      // Predicated region
      $region25: #{extractor_forward.1} parent=11 // pred_check
        %p655 = pneg %p143
      $region26: #{extractor_forward.1} parent=11 // pred_check_branch
        %657 = sbr.rel (%p655) target = $region28
      $region27: #{extractor_forward.1} parent=11 // pred_region
        _
      $region28: #{extractor_forward.1} parent=11 // pred_fallthru
        _
      // Predicated region
      $region29: #{extractor_forward.1} parent=11 // pred_check
        %p658 = pneg %p164
      $region30: #{extractor_forward.1} parent=11 // pred_check_branch
        %660 = sbr.rel (%p658) target = $region32
      $region31: #{extractor_forward.1} parent=11 // pred_region
        _
      $region32: #{extractor_forward.1} parent=11 // pred_fallthru
        _
      // Predicated region
      $region33: #{extractor_forward.1} parent=11 // pred_check
        %p661 = pneg %p185
      $region34: #{extractor_forward.1} parent=11 // pred_check_branch
        %663 = sbr.rel (%p661) target = $region36
      $region35: #{extractor_forward.1} parent=11 // pred_region
        _
      $region36: #{extractor_forward.1} parent=11 // pred_fallthru
        _
      // Predicated region
      $region37: #{extractor_forward.1} parent=11 // pred_check
        %p664 = pneg %p206
      $region38: #{extractor_forward.1} parent=11 // pred_check_branch
        %666 = sbr.rel (%p664) target = $region40
      $region39: #{extractor_forward.1} parent=11 // pred_region
        _
      $region40: #{extractor_forward.1} parent=11 // pred_fallthru
        _
      // Predicated region
      $region41: #{extractor_forward.1} parent=11 // pred_check
        %p667 = pneg %p227
      $region42: #{extractor_forward.1} parent=11 // pred_check_branch
        %669 = sbr.rel (%p667) target = $region44
      $region43: #{extractor_forward.1} parent=11 // pred_region
        _
      $region44: #{extractor_forward.1} parent=11 // pred_fallthru
        _
      // Predicated region
      $region45: #{extractor_forward.1} parent=11 // pred_check
        %p670 = pneg %p248
      $region46: #{extractor_forward.1} parent=11 // pred_check_branch
        %672 = sbr.rel (%p670) target = $region48
      $region47: #{extractor_forward.1} parent=11 // pred_region
        _
      $region48: #{extractor_forward.1} parent=11 // pred_fallthru
        _
      // Predicated region
      $region49: #{extractor_forward.1} parent=11 // pred_check
        %p673 = pneg %p269
      $region50: #{extractor_forward.1} parent=11 // pred_check_branch
        %675 = sbr.rel (%p673) target = $region52
      $region51: #{extractor_forward.1} parent=11 // pred_region
        _
      $region52: #{extractor_forward.1} parent=11 // pred_fallthru
        _
      // Predicated region
      $region53: #{extractor_forward.1} parent=11 // pred_check
        %p676 = pneg %p290
      $region54: #{extractor_forward.1} parent=11 // pred_check_branch
        %678 = sbr.rel (%p676) target = $region56
      $region55: #{extractor_forward.1} parent=11 // pred_region
        _
      $region56: #{extractor_forward.1} parent=11 // pred_fallthru
        _
      // Predicated region
      $region57: #{extractor_forward.1} parent=11 // pred_check
        %p679 = pneg %p311
      $region58: #{extractor_forward.1} parent=11 // pred_check_branch
        %681 = sbr.rel (%p679) target = $region60
      $region59: #{extractor_forward.1} parent=11 // pred_region
        _
      $region60: #{extractor_forward.1} parent=11 // pred_fallthru
        _
      // Predicated region
      $region61: #{extractor_forward.1} parent=11 // pred_check
        %p682 = pneg %p332
      $region62: #{extractor_forward.1} parent=11 // pred_check_branch
        %684 = sbr.rel (%p682) target = $region64
      $region63: #{extractor_forward.1} parent=11 // pred_region
        _
      $region64: #{extractor_forward.1} parent=11 // pred_fallthru
        _
      // Predicated region
      $region65: #{extractor_forward.1} parent=11 // pred_check
        %p685 = pneg %p353
      $region66: #{extractor_forward.1} parent=11 // pred_check_branch
        %687 = sbr.rel (%p685) target = $region68
      $region67: #{extractor_forward.1} parent=11 // pred_region
        _
      $region68: #{extractor_forward.1} parent=11 // pred_fallthru
        _
      // Predicated region
      $region69: #{extractor_forward.1} parent=11 // pred_check
        %p688 = pneg %p374
      $region70: #{extractor_forward.1} parent=11 // pred_check_branch
        %690 = sbr.rel (%p688) target = $region72
      $region71: #{extractor_forward.1} parent=11 // pred_region
        _
      $region72: #{extractor_forward.1} parent=11 // pred_fallthru
        _
      // Predicated region
      $region73: #{extractor_forward.1} parent=11 // pred_check
        %p691 = pneg %p395
      $region74: #{extractor_forward.1} parent=11 // pred_check_branch
        %693 = sbr.rel (%p691) target = $region76
      $region75: #{extractor_forward.1} parent=11 // pred_region
        _
      $region76: #{extractor_forward.1} parent=11 // pred_fallthru
        _
      // Predicated region
      $region77: #{extractor_forward.1} parent=11 // pred_check
        %p694 = pneg %p416
      $region78: #{extractor_forward.1} parent=11 // pred_check_branch
        %696 = sbr.rel (%p694) target = $region80
      $region79: #{extractor_forward.1} parent=11 // pred_region
        _
      $region80: #{extractor_forward.1} parent=11 // pred_fallthru
        _
      // Predicated region
      $region81: #{extractor_forward.1} parent=11 // pred_check
        %p697 = pneg %p437
      $region82: #{extractor_forward.1} parent=11 // pred_check_branch
        %699 = sbr.rel (%p697) target = $region84
      $region83: #{extractor_forward.1} parent=11 // pred_region
        _
      $region84: #{extractor_forward.1} parent=11 // pred_fallthru
        _
      // Predicated region
      $region85: #{extractor_forward.1} parent=11 // pred_check
        %p700 = pneg %p458
      $region86: #{extractor_forward.1} parent=11 // pred_check_branch
        %702 = sbr.rel (%p700) target = $region88
      $region87: #{extractor_forward.1} parent=11 // pred_region
        _
      $region88: #{extractor_forward.1} parent=11 // pred_fallthru
        _
      // Predicated region
      $region89: #{extractor_forward.1} parent=11 // pred_check
        %p703 = pneg %p479
      $region90: #{extractor_forward.1} parent=11 // pred_check_branch
        %705 = sbr.rel (%p703) target = $region92
      $region91: #{extractor_forward.1} parent=11 // pred_region
        _
      $region92: #{extractor_forward.1} parent=11 // pred_fallthru
        _
      // Predicated region
      $region93: #{extractor_forward.1} parent=11 // pred_check
        %p706 = pneg %p500
      $region94: #{extractor_forward.1} parent=11 // pred_check_branch
        %708 = sbr.rel (%p706) target = $region96
      $region95: #{extractor_forward.1} parent=11 // pred_region
        _
      $region96: #{extractor_forward.1} parent=11 // pred_fallthru
        _
      // Predicated region
      $region97: #{extractor_forward.1} parent=11 // pred_check
        %p709 = pneg %p521
      $region98: #{extractor_forward.1} parent=11 // pred_check_branch
        %711 = sbr.rel (%p709) target = $region100
      $region99: #{extractor_forward.1} parent=11 // pred_region
        _
      $region100: #{extractor_forward.1} parent=11 // pred_fallthru
        _
      // Predicated region
      $region101: #{extractor_forward.1} parent=11 // pred_check
        %p712 = pneg %p542
      $region102: #{extractor_forward.1} parent=11 // pred_check_branch
        %714 = sbr.rel (%p712) target = $region104
      $region103: #{extractor_forward.1} parent=11 // pred_region
        _
      $region104: #{extractor_forward.1} parent=11 // pred_fallthru
        _
      // Predicated region
      $region105: #{extractor_forward.1} parent=11 // pred_check
        %p715 = pneg %p563
      $region106: #{extractor_forward.1} parent=11 // pred_check_branch
        %717 = sbr.rel (%p715) target = $region108
      $region107: #{extractor_forward.1} parent=11 // pred_region
        _
      $region108: #{extractor_forward.1} parent=11 // pred_fallthru
        _
      // Predicated region
      $region109: #{extractor_forward.1} parent=11 // pred_check
        %p718 = pneg %p584
      $region110: #{extractor_forward.1} parent=11 // pred_check_branch
        %720 = sbr.rel (%p718) target = $region112
      $region111: #{extractor_forward.1} parent=11 // pred_region
        _
      $region112: #{extractor_forward.1} parent=11 // pred_fallthru
        _
      // Predicated region
      $region113: #{extractor_forward.1} parent=11 // pred_check
        %p721 = pneg %p605
      $region114: #{extractor_forward.1} parent=11 // pred_check_branch
        %723 = sbr.rel (%p721) target = $region116
      $region115: #{extractor_forward.1} parent=11 // pred_region
        _
      $region116: #{extractor_forward.1} parent=11 // pred_fallthru
        _
    $region12: #{extractor_forward.1} parent=5 // pred_fallthru
      _
    %p724 = scmp.lt.s32.totalorder %s33, 2
    // Predicated region
    $region117: #{extractor_forward.1} parent=5 // pred_check
      %p725 = pneg %p724
    $region118: #{extractor_forward.1} parent=5 // pred_check_branch
      %727 = sbr.rel (%p725) target = $region120
    $region119: #{extractor_forward.1} parent=5 // pred_region
      // Predicated region
      $region121: #{extractor_forward.1} parent=119 // pred_check
        %p728 = pneg %p53
      $region122: #{extractor_forward.1} parent=119 // pred_check_branch
        %730 = sbr.rel (%p728) target = $region124
      $region123: #{extractor_forward.1} parent=119 // pred_region
        %p731 = scmp.lt.s32.totalorder %s33, 1
        %s732 = scalar_select %p731, %s33, 1
        %s733 = smul.addr %s732, 8
        %s734 = smul.addr %s733, 8
        %s735 = scalar_lea.vmem %s0, %s734
      $region124: #{extractor_forward.1} parent=119 // pred_fallthru
        _
    $region120: #{extractor_forward.1} parent=5 // pred_fallthru
      _
    %p736 = scmp.le.s32.totalorder 1, %s33
    %p737 = scmp.lt.s32.totalorder %s33, 3
    %p738 = pnand %p736, %p737
    %p739 = pneg %p738
    // Predicated region
    $region125: #{extractor_forward.1} parent=5 // pred_check
      _
    $region126: #{extractor_forward.1} parent=5 // pred_check_branch
      %741 = sbr.rel (%p738) target = $region128
    $region127: #{extractor_forward.1} parent=5 // pred_region
      %s742 = ssub.s32 %s33, 1
      %p743 = scmp.lt.s32.totalorder %s38, 1
      %s744 = scalar_select %p743, %s38, 1
      %s745 = smul.addr %s744, 8
      %s746 = smul.addr %s745, 8
      %s747 = scalar_lea.vmem %s0, %s746
      %p748 = pneg %p59
      %p749 = pneg %p56
      %p750 = pneg %p80
      %p751 = pneg %p77
      %p752 = pneg %p101
      %p753 = pneg %p98
      %p754 = pneg %p122
      %p755 = pneg %p119
      %p756 = pneg %p143
      %p757 = pneg %p140
      %p758 = pneg %p164
      %p759 = pneg %p161
      %p760 = pneg %p185
      %p761 = pneg %p182
      %p762 = pneg %p206
      %p763 = pneg %p203
      %p764 = pneg %p227
      %p765 = pneg %p224
      %p766 = pneg %p248
      %p767 = pneg %p245
      %p768 = pneg %p269
      %p769 = pneg %p266
      %p770 = pneg %p290
      %p771 = pneg %p287
      %p772 = pneg %p311
      %p773 = pneg %p308
      %p774 = pneg %p332
      %p775 = pneg %p329
      %p776 = pneg %p353
      %p777 = pneg %p350
      %p778 = pneg %p374
      %p779 = pneg %p371
      %p780 = pneg %p395
      %p781 = pneg %p392
      %p782 = pneg %p416
      %p783 = pneg %p413
      %p784 = pneg %p437
      %p785 = pneg %p434
      %p786 = pneg %p458
      %p787 = pneg %p455
      %p788 = pneg %p479
      %p789 = pneg %p476
      %p790 = pneg %p500
      %p791 = pneg %p497
      %p792 = pneg %p521
      %p793 = pneg %p518
      %p794 = pneg %p542
      %p795 = pneg %p539
      %p796 = pneg %p563
      %p797 = pneg %p560
      %p798 = pneg %p584
      %p799 = pneg %p581
      %p800 = pneg %p605
      %p801 = pneg %p602
      %p802 = pneg %p631
      %p803 = pneg %p628
      %p804 = scmp.lt.s32.totalorder %s38, 1
      %s805 = scalar_select %p804, %s38, 1
      %s806 = smul.addr %s805, 2
      %s807 = smul.addr %s806, 8
      %s808 = scalar_lea.vmem %s27, %s807
      %p809 = scmp.lt.s32.totalorder %s38, 1
      %s810 = scalar_select %p809, %s38, 1
      %s811 = smul.addr %s810, 8
      %s812 = smul.addr %s811, 8
      %s813 = scalar_lea.vmem %s0, %s812
      %p814 = scmp.lt.s32.totalorder %s38, 1
      %s815 = scalar_select %p814, %s38, 1
      %s816 = smul.addr %s815, 2
      %s817 = smul.addr %s816, 8
      %s818 = scalar_lea.vmem %s27, %s817
      %v819 = vld [vmem:[%s813] sm:$0xff]
      %v820 = vld [vmem:[%s813 + $0x8] sm:$0xff]
      %v821 = vld [vmem:[%s813 + $0x10] sm:$0xff]
      %v822 = vld [vmem:[%s813 + $0x18] sm:$0xff]
      %v823 = vld [vmem:[%s813 + $0x20] sm:$0xff]
      %v824 = vld [vmem:[%s813 + $0x28] sm:$0xff]
      %v825 = vld [vmem:[%s813 + $0x30] sm:$0xff]
      %v826 = vld [vmem:[%s813 + $0x38] sm:$0xff]
      %v827 = vlaneseq
      %v828 = vand.u32 %v827, 127
      %v829 = vadd.s32 %v828, 128
      %v830 = vadd.s32 %v828, 256
      %v831 = vadd.s32 %v828, 384
      %v832 = vadd.s32 %v828, 512
      %v833 = vadd.s32 %v828, 640
      %v834 = vadd.s32 %v828, 768
      %v835 = vadd.s32 %v828, 896
      %vm836 = vcmp.lt.s32.totalorder %v828, 0
      %v837 = vsub.s32 0, %v828
      %v838 = vsel %vm836, %v837, %v828
      %v839 = vshrl.u32 %v838, 5
      %v840 = vand.u32 %v838, 31
      %v841 = vsub.s32 0, %v840
      %v842 = vsel %vm836, %v841, %v840
      %vm843 = vcmp.lt.s32.totalorder %v829, 0
      %v844 = vsub.s32 0, %v829
      %v845 = vsel %vm843, %v844, %v829
      %v846 = vshrl.u32 %v845, 5
      %v847 = vand.u32 %v845, 31
      %v848 = vsub.s32 0, %v847
      %v849 = vsel %vm843, %v848, %v847
      %vm850 = vcmp.lt.s32.totalorder %v830, 0
      %v851 = vsub.s32 0, %v830
      %v852 = vsel %vm850, %v851, %v830
      %v853 = vshrl.u32 %v852, 5
      %v854 = vand.u32 %v852, 31
      %v855 = vsub.s32 0, %v854
      %v856 = vsel %vm850, %v855, %v854
      %vm857 = vcmp.lt.s32.totalorder %v831, 0
      %v858 = vsub.s32 0, %v831
      %v859 = vsel %vm857, %v858, %v831
      %v860 = vshrl.u32 %v859, 5
      %v861 = vand.u32 %v859, 31
      %v862 = vsub.s32 0, %v861
      %v863 = vsel %vm857, %v862, %v861
      %vm864 = vcmp.lt.s32.totalorder %v832, 0
      %v865 = vsub.s32 0, %v832
      %v866 = vsel %vm864, %v865, %v832
      %v867 = vshrl.u32 %v866, 5
      %v868 = vand.u32 %v866, 31
      %v869 = vsub.s32 0, %v868
      %v870 = vsel %vm864, %v869, %v868
      %vm871 = vcmp.lt.s32.totalorder %v833, 0
      %v872 = vsub.s32 0, %v833
      %v873 = vsel %vm871, %v872, %v833
      %v874 = vshrl.u32 %v873, 5
      %v875 = vand.u32 %v873, 31
      %v876 = vsub.s32 0, %v875
      %v877 = vsel %vm871, %v876, %v875
      %vm878 = vcmp.lt.s32.totalorder %v834, 0
      %v879 = vsub.s32 0, %v834
      %v880 = vsel %vm878, %v879, %v834
      %v881 = vshrl.u32 %v880, 5
      %v882 = vand.u32 %v880, 31
      %v883 = vsub.s32 0, %v882
      %v884 = vsel %vm878, %v883, %v882
      %vm885 = vcmp.lt.s32.totalorder %v835, 0
      %v886 = vsub.s32 0, %v835
      %v887 = vsel %vm885, %v886, %v835
      %v888 = vshrl.u32 %v887, 5
      %v889 = vand.u32 %v887, 31
      %v890 = vsub.s32 0, %v889
      %v891 = vsel %vm885, %v890, %v889
      %vm892 = vcmp.ne.s32.totalorder %v842, 0
      %vm893 = vcmp.ne.s32.totalorder %v849, 0
      %vm894 = vcmp.ne.s32.totalorder %v856, 0
      %vm895 = vcmp.ne.s32.totalorder %v863, 0
      %vm896 = vcmp.ne.s32.totalorder %v870, 0
      %vm897 = vcmp.ne.s32.totalorder %v877, 0
      %vm898 = vcmp.ne.s32.totalorder %v884, 0
      %vm899 = vcmp.ne.s32.totalorder %v891, 0
      %vm900 = vcmp.lt.s32.totalorder %v842, 0
      %vm901 = vcmp.lt.s32.totalorder %v849, 0
      %vm902 = vcmp.lt.s32.totalorder %v856, 0
      %vm903 = vcmp.lt.s32.totalorder %v863, 0
      %vm904 = vcmp.lt.s32.totalorder %v870, 0
      %vm905 = vcmp.lt.s32.totalorder %v877, 0
      %vm906 = vcmp.lt.s32.totalorder %v884, 0
      %vm907 = vcmp.lt.s32.totalorder %v891, 0
      %vm908 = vmand %vm900, %vm892
      %vm909 = vmand %vm901, %vm893
      %vm910 = vmand %vm902, %vm894
      %vm911 = vmand %vm903, %vm895
      %vm912 = vmand %vm904, %vm896
      %vm913 = vmand %vm905, %vm897
      %vm914 = vmand %vm906, %vm898
      %vm915 = vmand %vm907, %vm899
      %v916 = vadd.s32 %v842, 32
      %v917 = vadd.s32 %v849, 32
      %v918 = vadd.s32 %v856, 32
      %v919 = vadd.s32 %v863, 32
      %v920 = vadd.s32 %v870, 32
      %v921 = vadd.s32 %v877, 32
      %v922 = vadd.s32 %v884, 32
      %v923 = vadd.s32 %v891, 32
      %v924 = vsel %vm908, %v916, %v842
      %v925 = vsel %vm909, %v917, %v849
      %v926 = vsel %vm910, %v918, %v856
      %v927 = vsel %vm911, %v919, %v863
      %v928 = vsel %vm912, %v920, %v870
      %v929 = vsel %vm913, %v921, %v877
      %v930 = vsel %vm914, %v922, %v884
      %v931 = vsel %vm915, %v923, %v891
      %940 = vrot.lane.b32.xlu0 %v819, 33
      %v941 = vpop.permute.xlu0 %940
      %942 = vrot.lane.b32.xlu0 %v820, 33
      %v943 = vpop.permute.xlu0 %942
      %944 = vrot.lane.b32.xlu0 %v821, 33
      %v945 = vpop.permute.xlu0 %944
      %946 = vrot.lane.b32.xlu0 %v822, 33
      %v947 = vpop.permute.xlu0 %946
      %948 = vrot.lane.b32.xlu0 %v823, 33
      %v949 = vpop.permute.xlu0 %948
      %950 = vrot.lane.b32.xlu0 %v824, 33
      %v951 = vpop.permute.xlu0 %950
      %952 = vrot.lane.b32.xlu0 %v825, 33
      %v953 = vpop.permute.xlu0 %952
      %954 = vrot.lane.b32.xlu0 %v826, 33
      %v955 = vpop.permute.xlu0 %954
      %vm956 = vcmask 269312
      %v957 = vsel %vm956, %v941, %v943
      %v958 = vsel %vm956, %v943, %v945
      %v959 = vsel %vm956, %v945, %v947
      %v960 = vsel %vm956, %v947, %v949
      %v961 = vsel %vm956, %v949, %v951
      %v962 = vsel %vm956, %v951, %v953
      %v963 = vsel %vm956, %v953, %v955
      %v972 = vsel %vm956, 0.0, %v941
      %v973 = vadd.s32 %v924, 4294967295
      %v974 = vadd.s32 %v925, 4294967295
      %v975 = vadd.s32 %v926, 4294967295
      %v976 = vadd.s32 %v927, 4294967295
      %v977 = vadd.s32 %v928, 4294967295
      %v978 = vadd.s32 %v929, 4294967295
      %v979 = vadd.s32 %v930, 4294967295
      %v980 = vadd.s32 %v931, 4294967295
      %vm981 = vcmp.ge.s32.totalorder %v973, 0
      %vm982 = vcmp.ge.s32.totalorder %v974, 0
      %vm983 = vcmp.ge.s32.totalorder %v975, 0
      %vm984 = vcmp.ge.s32.totalorder %v976, 0
      %vm985 = vcmp.ge.s32.totalorder %v977, 0
      %vm986 = vcmp.ge.s32.totalorder %v978, 0
      %vm987 = vcmp.ge.s32.totalorder %v979, 0
      %vm988 = vcmp.ge.s32.totalorder %v980, 0
      %vm989 = vcmp.lt.s32.totalorder %v973, 32
      %vm990 = vcmp.lt.s32.totalorder %v974, 32
      %vm991 = vcmp.lt.s32.totalorder %v975, 32
      %vm992 = vcmp.lt.s32.totalorder %v976, 32
      %vm993 = vcmp.lt.s32.totalorder %v977, 32
      %vm994 = vcmp.lt.s32.totalorder %v978, 32
      %vm995 = vcmp.lt.s32.totalorder %v979, 32
      %vm996 = vcmp.lt.s32.totalorder %v980, 32
      %vm997 = vmand %vm981, %vm989
      %vm998 = vmand %vm982, %vm990
      %vm999 = vmand %vm983, %vm991
      %vm1000 = vmand %vm984, %vm992
      %vm1001 = vmand %vm985, %vm993
      %vm1002 = vmand %vm986, %vm994
      %vm1003 = vmand %vm987, %vm995
      %vm1004 = vmand %vm988, %vm996
      %v1005 = vsel %vm997, 1, 0
      %v1006 = vsel %vm998, 1, 0
      %v1007 = vsel %vm999, 1, 0
      %v1008 = vsel %vm1000, 1, 0
      %v1009 = vsel %vm1001, 1, 0
      %v1010 = vsel %vm1002, 1, 0
      %v1011 = vsel %vm1003, 1, 0
      %v1012 = vsel %vm1004, 1, 0
      %vm1013 = vcmp.eq.s32.totalorder %v1005, 1
      %vm1014 = vcmp.eq.s32.totalorder %v1006, 1
      %vm1015 = vcmp.eq.s32.totalorder %v1007, 1
      %vm1016 = vcmp.eq.s32.totalorder %v1008, 1
      %vm1017 = vcmp.eq.s32.totalorder %v1009, 1
      %vm1018 = vcmp.eq.s32.totalorder %v1010, 1
      %vm1019 = vcmp.eq.s32.totalorder %v1011, 1
      %vm1020 = vcmp.eq.s32.totalorder %v1012, 1
      %v1021 = vsel %vm1013, %v972, 0.0
      %v1022 = vsel %vm1014, %v957, 0.0
      %v1023 = vsel %vm1015, %v958, 0.0
      %v1024 = vsel %vm1016, %v959, 0.0
      %v1025 = vsel %vm1017, %v960, 0.0
      %v1026 = vsel %vm1018, %v961, 0.0
      %v1027 = vsel %vm1019, %v962, 0.0
      %v1028 = vsel %vm1020, %v963, 0.0
      %1029 = vrot.lane.b32.xlu0 %v819, 32
      %v1030 = vpop.permute.xlu0 %1029
      %1031 = vrot.lane.b32.xlu0 %v820, 32
      %v1032 = vpop.permute.xlu0 %1031
      %1033 = vrot.lane.b32.xlu0 %v821, 32
      %v1034 = vpop.permute.xlu0 %1033
      %1035 = vrot.lane.b32.xlu0 %v822, 32
      %v1036 = vpop.permute.xlu0 %1035
      %1037 = vrot.lane.b32.xlu0 %v823, 32
      %v1038 = vpop.permute.xlu0 %1037
      %1039 = vrot.lane.b32.xlu0 %v824, 32
      %v1040 = vpop.permute.xlu0 %1039
      %1041 = vrot.lane.b32.xlu0 %v825, 32
      %v1042 = vpop.permute.xlu0 %1041
      %1043 = vrot.lane.b32.xlu0 %v826, 32
      %v1044 = vpop.permute.xlu0 %1043
      %vm1045 = vcmask 261120
      %v1046 = vsel %vm1045, %v1030, %v1032
      %v1047 = vsel %vm1045, %v1032, %v1034
      %v1048 = vsel %vm1045, %v1034, %v1036
      %v1049 = vsel %vm1045, %v1036, %v1038
      %v1050 = vsel %vm1045, %v1038, %v1040
      %v1051 = vsel %vm1045, %v1040, %v1042
      %v1052 = vsel %vm1045, %v1042, %v1044
      %v1061 = vsel %vm1045, 0.0, %v1030
      %1062 = vrot.lane.b32.xlu0 %v819, 31
      %v1063 = vpop.permute.xlu0 %1062
      %1064 = vrot.lane.b32.xlu0 %v820, 31
      %v1065 = vpop.permute.xlu0 %1064
      %1066 = vrot.lane.b32.xlu0 %v821, 31
      %v1067 = vpop.permute.xlu0 %1066
      %1068 = vrot.lane.b32.xlu0 %v822, 31
      %v1069 = vpop.permute.xlu0 %1068
      %1070 = vrot.lane.b32.xlu0 %v823, 31
      %v1071 = vpop.permute.xlu0 %1070
      %1072 = vrot.lane.b32.xlu0 %v824, 31
      %v1073 = vpop.permute.xlu0 %1072
      %1074 = vrot.lane.b32.xlu0 %v825, 31
      %v1075 = vpop.permute.xlu0 %1074
      %1076 = vrot.lane.b32.xlu0 %v826, 31
      %v1077 = vpop.permute.xlu0 %1076
      %vm1078 = vcmask 252928
      %v1079 = vsel %vm1078, %v1063, %v1065
      %v1080 = vsel %vm1078, %v1065, %v1067
      %v1081 = vsel %vm1078, %v1067, %v1069
      %v1082 = vsel %vm1078, %v1069, %v1071
      %v1083 = vsel %vm1078, %v1071, %v1073
      %v1084 = vsel %vm1078, %v1073, %v1075
      %v1085 = vsel %vm1078, %v1075, %v1077
      %v1094 = vsel %vm1078, 0.0, %v1063
      %v1095 = vadd.s32 %v924, 1
      %v1096 = vadd.s32 %v925, 1
      %v1097 = vadd.s32 %v926, 1
      %v1098 = vadd.s32 %v927, 1
      %v1099 = vadd.s32 %v928, 1
      %v1100 = vadd.s32 %v929, 1
      %v1101 = vadd.s32 %v930, 1
      %v1102 = vadd.s32 %v931, 1
      %vm1103 = vcmp.ge.s32.totalorder %v1095, 0
      %vm1104 = vcmp.ge.s32.totalorder %v1096, 0
      %vm1105 = vcmp.ge.s32.totalorder %v1097, 0
      %vm1106 = vcmp.ge.s32.totalorder %v1098, 0
      %vm1107 = vcmp.ge.s32.totalorder %v1099, 0
      %vm1108 = vcmp.ge.s32.totalorder %v1100, 0
      %vm1109 = vcmp.ge.s32.totalorder %v1101, 0
      %vm1110 = vcmp.ge.s32.totalorder %v1102, 0
      %vm1111 = vcmp.lt.s32.totalorder %v1095, 32
      %vm1112 = vcmp.lt.s32.totalorder %v1096, 32
      %vm1113 = vcmp.lt.s32.totalorder %v1097, 32
      %vm1114 = vcmp.lt.s32.totalorder %v1098, 32
      %vm1115 = vcmp.lt.s32.totalorder %v1099, 32
      %vm1116 = vcmp.lt.s32.totalorder %v1100, 32
      %vm1117 = vcmp.lt.s32.totalorder %v1101, 32
      %vm1118 = vcmp.lt.s32.totalorder %v1102, 32
      %vm1119 = vmand %vm1103, %vm1111
      %vm1120 = vmand %vm1104, %vm1112
      %vm1121 = vmand %vm1105, %vm1113
      %vm1122 = vmand %vm1106, %vm1114
      %vm1123 = vmand %vm1107, %vm1115
      %vm1124 = vmand %vm1108, %vm1116
      %vm1125 = vmand %vm1109, %vm1117
      %vm1126 = vmand %vm1110, %vm1118
      %v1127 = vsel %vm1119, 1, 0
      %v1128 = vsel %vm1120, 1, 0
      %v1129 = vsel %vm1121, 1, 0
      %v1130 = vsel %vm1122, 1, 0
      %v1131 = vsel %vm1123, 1, 0
      %v1132 = vsel %vm1124, 1, 0
      %v1133 = vsel %vm1125, 1, 0
      %v1134 = vsel %vm1126, 1, 0
      %vm1135 = vcmp.eq.s32.totalorder %v1127, 1
      %vm1136 = vcmp.eq.s32.totalorder %v1128, 1
      %vm1137 = vcmp.eq.s32.totalorder %v1129, 1
      %vm1138 = vcmp.eq.s32.totalorder %v1130, 1
      %vm1139 = vcmp.eq.s32.totalorder %v1131, 1
      %vm1140 = vcmp.eq.s32.totalorder %v1132, 1
      %vm1141 = vcmp.eq.s32.totalorder %v1133, 1
      %vm1142 = vcmp.eq.s32.totalorder %v1134, 1
      %v1143 = vsel %vm1135, %v1094, 0.0
      %v1144 = vsel %vm1136, %v1079, 0.0
      %v1145 = vsel %vm1137, %v1080, 0.0
      %v1146 = vsel %vm1138, %v1081, 0.0
      %v1147 = vsel %vm1139, %v1082, 0.0
      %v1148 = vsel %vm1140, %v1083, 0.0
      %v1149 = vsel %vm1141, %v1084, 0.0
      %v1150 = vsel %vm1142, %v1085, 0.0
      %1151 = vrot.lane.b32.xlu0 %v819, 1
      %v1152 = vpop.permute.xlu0 %1151
      %1153 = vrot.lane.b32.xlu0 %v820, 1
      %v1154 = vpop.permute.xlu0 %1153
      %1155 = vrot.lane.b32.xlu0 %v821, 1
      %v1156 = vpop.permute.xlu0 %1155
      %1157 = vrot.lane.b32.xlu0 %v822, 1
      %v1158 = vpop.permute.xlu0 %1157
      %1159 = vrot.lane.b32.xlu0 %v823, 1
      %v1160 = vpop.permute.xlu0 %1159
      %1161 = vrot.lane.b32.xlu0 %v824, 1
      %v1162 = vpop.permute.xlu0 %1161
      %1163 = vrot.lane.b32.xlu0 %v825, 1
      %v1164 = vpop.permute.xlu0 %1163
      %1165 = vrot.lane.b32.xlu0 %v826, 1
      %v1166 = vpop.permute.xlu0 %1165
      %vm1167 = vcmask 7168
      %v1168 = vsel %vm1167, %v1152, %v1154
      %v1169 = vsel %vm1167, %v1154, %v1156
      %v1170 = vsel %vm1167, %v1156, %v1158
      %v1171 = vsel %vm1167, %v1158, %v1160
      %v1172 = vsel %vm1167, %v1160, %v1162
      %v1173 = vsel %vm1167, %v1162, %v1164
      %v1174 = vsel %vm1167, %v1164, %v1166
      %v1183 = vsel %vm1167, 0.0, %v1152
      %v1184 = vsel %vm1013, %v1183, 0.0
      %v1185 = vsel %vm1014, %v1168, 0.0
      %v1186 = vsel %vm1015, %v1169, 0.0
      %v1187 = vsel %vm1016, %v1170, 0.0
      %v1188 = vsel %vm1017, %v1171, 0.0
      %v1189 = vsel %vm1018, %v1172, 0.0
      %v1190 = vsel %vm1019, %v1173, 0.0
      %v1191 = vsel %vm1020, %v1174, 0.0
      %1192 = vrot.lane.b32.xlu0 %v819, 127
      %v1193 = vpop.permute.xlu0 %1192
      %1194 = vrot.lane.b32.xlu0 %v820, 127
      %v1195 = vpop.permute.xlu0 %1194
      %1196 = vrot.lane.b32.xlu0 %v821, 127
      %v1197 = vpop.permute.xlu0 %1196
      %1198 = vrot.lane.b32.xlu0 %v822, 127
      %v1199 = vpop.permute.xlu0 %1198
      %1200 = vrot.lane.b32.xlu0 %v823, 127
      %v1201 = vpop.permute.xlu0 %1200
      %1202 = vrot.lane.b32.xlu0 %v824, 127
      %v1203 = vpop.permute.xlu0 %1202
      %1204 = vrot.lane.b32.xlu0 %v825, 127
      %v1205 = vpop.permute.xlu0 %1204
      %1206 = vrot.lane.b32.xlu0 %v826, 127
      %v1207 = vpop.permute.xlu0 %1206
      %vm1208 = vcmask 1039360
      %v1209 = vsel %vm1208, %v1193, %v1195
      %v1210 = vsel %vm1208, %v1195, %v1197
      %v1211 = vsel %vm1208, %v1197, %v1199
      %v1212 = vsel %vm1208, %v1199, %v1201
      %v1213 = vsel %vm1208, %v1201, %v1203
      %v1214 = vsel %vm1208, %v1203, %v1205
      %v1215 = vsel %vm1208, %v1205, %v1207
      %v1224 = vsel %vm1208, %v1207, 0.0
      %v1225 = vsel %vm1135, %v1209, 0.0
      %v1226 = vsel %vm1136, %v1210, 0.0
      %v1227 = vsel %vm1137, %v1211, 0.0
      %v1228 = vsel %vm1138, %v1212, 0.0
      %v1229 = vsel %vm1139, %v1213, 0.0
      %v1230 = vsel %vm1140, %v1214, 0.0
      %v1231 = vsel %vm1141, %v1215, 0.0
      %v1232 = vsel %vm1142, %v1224, 0.0
      %1233 = vrot.lane.b32.xlu0 %v819, 97
      %v1234 = vpop.permute.xlu0 %1233
      %1235 = vrot.lane.b32.xlu0 %v820, 97
      %v1236 = vpop.permute.xlu0 %1235
      %1237 = vrot.lane.b32.xlu0 %v821, 97
      %v1238 = vpop.permute.xlu0 %1237
      %1239 = vrot.lane.b32.xlu0 %v822, 97
      %v1240 = vpop.permute.xlu0 %1239
      %1241 = vrot.lane.b32.xlu0 %v823, 97
      %v1242 = vpop.permute.xlu0 %1241
      %1243 = vrot.lane.b32.xlu0 %v824, 97
      %v1244 = vpop.permute.xlu0 %1243
      %1245 = vrot.lane.b32.xlu0 %v825, 97
      %v1246 = vpop.permute.xlu0 %1245
      %1247 = vrot.lane.b32.xlu0 %v826, 97
      %v1248 = vpop.permute.xlu0 %1247
      %vm1249 = vcmask 793600
      %v1250 = vsel %vm1249, %v1234, %v1236
      %v1251 = vsel %vm1249, %v1236, %v1238
      %v1252 = vsel %vm1249, %v1238, %v1240
      %v1253 = vsel %vm1249, %v1240, %v1242
      %v1254 = vsel %vm1249, %v1242, %v1244
      %v1255 = vsel %vm1249, %v1244, %v1246
      %v1256 = vsel %vm1249, %v1246, %v1248
      %v1265 = vsel %vm1249, %v1248, 0.0
      %v1266 = vsel %vm1013, %v1250, 0.0
      %v1267 = vsel %vm1014, %v1251, 0.0
      %v1268 = vsel %vm1015, %v1252, 0.0
      %v1269 = vsel %vm1016, %v1253, 0.0
      %v1270 = vsel %vm1017, %v1254, 0.0
      %v1271 = vsel %vm1018, %v1255, 0.0
      %v1272 = vsel %vm1019, %v1256, 0.0
      %v1273 = vsel %vm1020, %v1265, 0.0
      %1274 = vrot.lane.b32.xlu0 %v819, 96
      %v1275 = vpop.permute.xlu0 %1274
      %1276 = vrot.lane.b32.xlu0 %v820, 96
      %v1277 = vpop.permute.xlu0 %1276
      %1278 = vrot.lane.b32.xlu0 %v821, 96
      %v1279 = vpop.permute.xlu0 %1278
      %1280 = vrot.lane.b32.xlu0 %v822, 96
      %v1281 = vpop.permute.xlu0 %1280
      %1282 = vrot.lane.b32.xlu0 %v823, 96
      %v1283 = vpop.permute.xlu0 %1282
      %1284 = vrot.lane.b32.xlu0 %v824, 96
      %v1285 = vpop.permute.xlu0 %1284
      %1286 = vrot.lane.b32.xlu0 %v825, 96
      %v1287 = vpop.permute.xlu0 %1286
      %1288 = vrot.lane.b32.xlu0 %v826, 96
      %v1289 = vpop.permute.xlu0 %1288
      %vm1290 = vcmask 785408
      %v1291 = vsel %vm1290, %v1275, %v1277
      %v1292 = vsel %vm1290, %v1277, %v1279
      %v1293 = vsel %vm1290, %v1279, %v1281
      %v1294 = vsel %vm1290, %v1281, %v1283
      %v1295 = vsel %vm1290, %v1283, %v1285
      %v1296 = vsel %vm1290, %v1285, %v1287
      %v1297 = vsel %vm1290, %v1287, %v1289
      %v1306 = vsel %vm1290, %v1289, 0.0
      %1307 = vrot.lane.b32.xlu0 %v819, 95
      %v1308 = vpop.permute.xlu0 %1307
      %1309 = vrot.lane.b32.xlu0 %v820, 95
      %v1310 = vpop.permute.xlu0 %1309
      %1311 = vrot.lane.b32.xlu0 %v821, 95
      %v1312 = vpop.permute.xlu0 %1311
      %1313 = vrot.lane.b32.xlu0 %v822, 95
      %v1314 = vpop.permute.xlu0 %1313
      %1315 = vrot.lane.b32.xlu0 %v823, 95
      %v1316 = vpop.permute.xlu0 %1315
      %1317 = vrot.lane.b32.xlu0 %v824, 95
      %v1318 = vpop.permute.xlu0 %1317
      %1319 = vrot.lane.b32.xlu0 %v825, 95
      %v1320 = vpop.permute.xlu0 %1319
      %1321 = vrot.lane.b32.xlu0 %v826, 95
      %v1322 = vpop.permute.xlu0 %1321
      %vm1323 = vcmask 777216
      %v1324 = vsel %vm1323, %v1308, %v1310
      %v1325 = vsel %vm1323, %v1310, %v1312
      %v1326 = vsel %vm1323, %v1312, %v1314
      %v1327 = vsel %vm1323, %v1314, %v1316
      %v1328 = vsel %vm1323, %v1316, %v1318
      %v1329 = vsel %vm1323, %v1318, %v1320
      %v1330 = vsel %vm1323, %v1320, %v1322
      %v1339 = vsel %vm1323, %v1322, 0.0
      %v1340 = vsel %vm1135, %v1324, 0.0
      %v1341 = vsel %vm1136, %v1325, 0.0
      %v1342 = vsel %vm1137, %v1326, 0.0
      %v1343 = vsel %vm1138, %v1327, 0.0
      %v1344 = vsel %vm1139, %v1328, 0.0
      %v1345 = vsel %vm1140, %v1329, 0.0
      %v1346 = vsel %vm1141, %v1330, 0.0
      %v1347 = vsel %vm1142, %v1339, 0.0
      %v1348 = vld [vmem:[%s1] sm:$0xff]
      %vm1349 = vcmask 588800
      %v1351 = vsel %vm1349, %v1348, 0
      %1353 = vmatprep.subr.mxu0 %v1022
      %1354 = vmatpush1.msra.mxu0 %v1021
      %1355 = vmatprep.subr.mxu0 %v1046
      %1356 = vmatpush1.msra.mxu0 %v1061
      %1357 = vmatprep.subr.mxu0 %v1144
      %1358 = vmatpush1.msra.mxu0 %v1143
      %1359 = vmatprep.subr.mxu0 %v1185
      %1360 = vmatpush1.msra.mxu0 %v1184
      %1361 = vmatprep.subr.mxu0 %v820
      %1362 = vmatpush1.msra.mxu0 %v819
      %1363 = vmatprep.subr.mxu0 %v1226
      %1364 = vmatpush1.msra.mxu0 %v1225
      %1365 = vmatprep.subr.mxu0 %v1267
      %1366 = vmatpush1.msra.mxu0 %v1266
      %1367 = vmatprep.subr.mxu0 %v1292
      %1368 = vmatpush1.msra.mxu0 %v1291
      %1369 = vmatprep.subr.mxu0 %v1341
      %1370 = vmatpush1.msra.mxu0 %v1340
      %1371 = vmatprep.subr.mxu0 0.0
      %1372 = vmatpush1.msra.mxu0 0.0
      %1373 = vmatprep.subr.mxu0 0.0
      %1374 = vmatpush1.msra.mxu0 0.0
      %1375 = vmatprep.subr.mxu0 0.0
      %1376 = vmatpush1.msra.mxu0 0.0
      %1377 = vmatprep.subr.mxu0 0.0
      %1378 = vmatpush1.msra.mxu0 0.0
      %1379 = vmatprep.subr.mxu0 0.0
      %1380 = vmatpush1.msra.mxu0 0.0
      %1381 = vmatprep.subr.mxu0 0.0
      %1382 = vmatpush1.msra.mxu0 0.0
      %1383 = vmatprep.subr.mxu0 0.0
      %1384 = vmatpush1.msra.mxu0 0.0
      %1385 = vmatprep.subr.mxu0 0.0
      %1386 = vmatpush1.msra.mxu0 0.0
      %1387 = vmatprep.subr.mxu0 0.0
      %1388 = vmatpush1.msra.mxu0 0.0
      %1389 = vmatprep.subr.mxu0 0.0
      %1390 = vmatpush1.msra.mxu0 0.0
      %1391 = vmatprep.subr.mxu0 0.0
      %1392 = vmatpush1.msra.mxu0 0.0
      %1393 = vmatprep.subr.mxu0 0.0
      %1394 = vmatpush1.msra.mxu0 0.0
      %1395 = vmatprep.subr.mxu0 0.0
      %1396 = vmatpush1.msra.mxu0 0.0
      %1397 = vmatprep.subr.mxu0 0.0
      %1398 = vmatpush1.msra.mxu0 0.0
      %1399 = vmatprep.subr.mxu0 0.0
      %1400 = vmatpush1.msra.mxu0 0.0
      %1401 = vmatprep.subr.mxu0 0.0
      %1402 = vmatpush1.msra.mxu0 0.0
      %1403 = vmatprep.subr.mxu0 0.0
      %1404 = vmatpush1.msra.mxu0 0.0
      %1405 = vmatprep.subr.mxu0 0.0
      %1406 = vmatpush1.msra.mxu0 0.0
      %1407 = vmatprep.subr.mxu0 0.0
      %1408 = vmatpush1.msra.mxu0 0.0
      %1409 = vmatprep.subr.mxu0 0.0
      %1410 = vmatpush1.msra.mxu0 0.0
      %1411 = vmatprep.subr.mxu0 0.0
      %1412 = vmatpush1.msra.mxu0 0.0
      %1413 = vmatprep.subr.mxu0 0.0
      %1414 = vmatpush1.msra.mxu0 0.0
      %1415 = vmatprep.subr.mxu0 0.0
      %1416 = vmatpush1.msra.mxu0 0.0
      %1417 = vmatprep.mubr.f32.mxu0 0.0
      %1418 = vmatmul.mubr.f32.gmra.mrb[0].mxu0 %v1351
      %v1419 = vpop.f32.mrb[0].mxu0
      %v1420 = vadd.f32 0.0, %v1419
      %v1421 = vpop.f32.mrb[0].mxu0
      %v1422 = vadd.f32 0.0, %v1421
      %1423 = vdwg.mxu0
      %1424 = vmatprep.subr.mxu0 %v1024
      %1425 = vmatpush1.msra.mxu0 %v1023
      %1426 = vmatprep.subr.mxu0 %v1048
      %1427 = vmatpush1.msra.mxu0 %v1047
      %1428 = vmatprep.subr.mxu0 %v1146
      %1429 = vmatpush1.msra.mxu0 %v1145
      %1430 = vmatprep.subr.mxu0 %v1187
      %1431 = vmatpush1.msra.mxu0 %v1186
      %1432 = vmatprep.subr.mxu0 %v822
      %1433 = vmatpush1.msra.mxu0 %v821
      %1434 = vmatprep.subr.mxu0 %v1228
      %1435 = vmatpush1.msra.mxu0 %v1227
      %1436 = vmatprep.subr.mxu0 %v1269
      %1437 = vmatpush1.msra.mxu0 %v1268
      %1438 = vmatprep.subr.mxu0 %v1294
      %1439 = vmatpush1.msra.mxu0 %v1293
      %1440 = vmatprep.subr.mxu0 %v1343
      %1441 = vmatpush1.msra.mxu0 %v1342
      %1442 = vmatprep.subr.mxu0 0.0
      %1443 = vmatpush1.msra.mxu0 0.0
      %1444 = vmatprep.subr.mxu0 0.0
      %1445 = vmatpush1.msra.mxu0 0.0
      %1446 = vmatprep.subr.mxu0 0.0
      %1447 = vmatpush1.msra.mxu0 0.0
      %1448 = vmatprep.subr.mxu0 0.0
      %1449 = vmatpush1.msra.mxu0 0.0
      %1450 = vmatprep.subr.mxu0 0.0
      %1451 = vmatpush1.msra.mxu0 0.0
      %1452 = vmatprep.subr.mxu0 0.0
      %1453 = vmatpush1.msra.mxu0 0.0
      %1454 = vmatprep.subr.mxu0 0.0
      %1455 = vmatpush1.msra.mxu0 0.0
      %1456 = vmatprep.subr.mxu0 0.0
      %1457 = vmatpush1.msra.mxu0 0.0
      %1458 = vmatprep.subr.mxu0 0.0
      %1459 = vmatpush1.msra.mxu0 0.0
      %1460 = vmatprep.subr.mxu0 0.0
      %1461 = vmatpush1.msra.mxu0 0.0
      %1462 = vmatprep.subr.mxu0 0.0
      %1463 = vmatpush1.msra.mxu0 0.0
      %1464 = vmatprep.subr.mxu0 0.0
      %1465 = vmatpush1.msra.mxu0 0.0
      %1466 = vmatprep.subr.mxu0 0.0
      %1467 = vmatpush1.msra.mxu0 0.0
      %1468 = vmatprep.subr.mxu0 0.0
      %1469 = vmatpush1.msra.mxu0 0.0
      %1470 = vmatprep.subr.mxu0 0.0
      %1471 = vmatpush1.msra.mxu0 0.0
      %1472 = vmatprep.subr.mxu0 0.0
      %1473 = vmatpush1.msra.mxu0 0.0
      %1474 = vmatprep.subr.mxu0 0.0
      %1475 = vmatpush1.msra.mxu0 0.0
      %1476 = vmatprep.subr.mxu0 0.0
      %1477 = vmatpush1.msra.mxu0 0.0
      %1478 = vmatprep.subr.mxu0 0.0
      %1479 = vmatpush1.msra.mxu0 0.0
      %1480 = vmatprep.subr.mxu0 0.0
      %1481 = vmatpush1.msra.mxu0 0.0
      %1482 = vmatprep.subr.mxu0 0.0
      %1483 = vmatpush1.msra.mxu0 0.0
      %1484 = vmatprep.subr.mxu0 0.0
      %1485 = vmatpush1.msra.mxu0 0.0
      %1486 = vmatprep.subr.mxu0 0.0
      %1487 = vmatpush1.msra.mxu0 0.0
      %1488 = vmatprep.mubr.f32.mxu0 0.0
      %1489 = vmatmul.mubr.f32.gmra.mrb[0].mxu0 %v1351
      %v1490 = vpop.f32.mrb[0].mxu0
      %v1491 = vadd.f32 0.0, %v1490
      %v1492 = vpop.f32.mrb[0].mxu0
      %v1493 = vadd.f32 0.0, %v1492
      %1494 = vdwg.mxu0
      %1495 = vmatprep.subr.mxu0 %v1026
      %1496 = vmatpush1.msra.mxu0 %v1025
      %1497 = vmatprep.subr.mxu0 %v1050
      %1498 = vmatpush1.msra.mxu0 %v1049
      %1499 = vmatprep.subr.mxu0 %v1148
      %1500 = vmatpush1.msra.mxu0 %v1147
      %1501 = vmatprep.subr.mxu0 %v1189
      %1502 = vmatpush1.msra.mxu0 %v1188
      %1503 = vmatprep.subr.mxu0 %v824
      %1504 = vmatpush1.msra.mxu0 %v823
      %1505 = vmatprep.subr.mxu0 %v1230
      %1506 = vmatpush1.msra.mxu0 %v1229
      %1507 = vmatprep.subr.mxu0 %v1271
      %1508 = vmatpush1.msra.mxu0 %v1270
      %1509 = vmatprep.subr.mxu0 %v1296
      %1510 = vmatpush1.msra.mxu0 %v1295
      %1511 = vmatprep.subr.mxu0 %v1345
      %1512 = vmatpush1.msra.mxu0 %v1344
      %1513 = vmatprep.subr.mxu0 0.0
      %1514 = vmatpush1.msra.mxu0 0.0
      %1515 = vmatprep.subr.mxu0 0.0
      %1516 = vmatpush1.msra.mxu0 0.0
      %1517 = vmatprep.subr.mxu0 0.0
      %1518 = vmatpush1.msra.mxu0 0.0
      %1519 = vmatprep.subr.mxu0 0.0
      %1520 = vmatpush1.msra.mxu0 0.0
      %1521 = vmatprep.subr.mxu0 0.0
      %1522 = vmatpush1.msra.mxu0 0.0
      %1523 = vmatprep.subr.mxu0 0.0
      %1524 = vmatpush1.msra.mxu0 0.0
      %1525 = vmatprep.subr.mxu0 0.0
      %1526 = vmatpush1.msra.mxu0 0.0
      %1527 = vmatprep.subr.mxu0 0.0
      %1528 = vmatpush1.msra.mxu0 0.0
      %1529 = vmatprep.subr.mxu0 0.0
      %1530 = vmatpush1.msra.mxu0 0.0
      %1531 = vmatprep.subr.mxu0 0.0
      %1532 = vmatpush1.msra.mxu0 0.0
      %1533 = vmatprep.subr.mxu0 0.0
      %1534 = vmatpush1.msra.mxu0 0.0
      %1535 = vmatprep.subr.mxu0 0.0
      %1536 = vmatpush1.msra.mxu0 0.0
      %1537 = vmatprep.subr.mxu0 0.0
      %1538 = vmatpush1.msra.mxu0 0.0
      %1539 = vmatprep.subr.mxu0 0.0
      %1540 = vmatpush1.msra.mxu0 0.0
      %1541 = vmatprep.subr.mxu0 0.0
      %1542 = vmatpush1.msra.mxu0 0.0
      %1543 = vmatprep.subr.mxu0 0.0
      %1544 = vmatpush1.msra.mxu0 0.0
      %1545 = vmatprep.subr.mxu0 0.0
      %1546 = vmatpush1.msra.mxu0 0.0
      %1547 = vmatprep.subr.mxu0 0.0
      %1548 = vmatpush1.msra.mxu0 0.0
      %1549 = vmatprep.subr.mxu0 0.0
      %1550 = vmatpush1.msra.mxu0 0.0
      %1551 = vmatprep.subr.mxu0 0.0
      %1552 = vmatpush1.msra.mxu0 0.0
      %1553 = vmatprep.subr.mxu0 0.0
      %1554 = vmatpush1.msra.mxu0 0.0
      %1555 = vmatprep.subr.mxu0 0.0
      %1556 = vmatpush1.msra.mxu0 0.0
      %1557 = vmatprep.subr.mxu0 0.0
      %1558 = vmatpush1.msra.mxu0 0.0
      %1559 = vmatprep.mubr.f32.mxu0 0.0
      %1560 = vmatmul.mubr.f32.gmra.mrb[0].mxu0 %v1351
      %v1561 = vpop.f32.mrb[0].mxu0
      %v1562 = vadd.f32 0.0, %v1561
      %v1563 = vpop.f32.mrb[0].mxu0
      %v1564 = vadd.f32 0.0, %v1563
      %1565 = vdwg.mxu0
      %1566 = vmatprep.subr.mxu0 %v1028
      %1567 = vmatpush1.msra.mxu0 %v1027
      %1568 = vmatprep.subr.mxu0 %v1052
      %1569 = vmatpush1.msra.mxu0 %v1051
      %1570 = vmatprep.subr.mxu0 %v1150
      %1571 = vmatpush1.msra.mxu0 %v1149
      %1572 = vmatprep.subr.mxu0 %v1191
      %1573 = vmatpush1.msra.mxu0 %v1190
      %1574 = vmatprep.subr.mxu0 %v826
      %1575 = vmatpush1.msra.mxu0 %v825
      %1576 = vmatprep.subr.mxu0 %v1232
      %1577 = vmatpush1.msra.mxu0 %v1231
      %1578 = vmatprep.subr.mxu0 %v1273
      %1579 = vmatpush1.msra.mxu0 %v1272
      %1580 = vmatprep.subr.mxu0 %v1306
      %1581 = vmatpush1.msra.mxu0 %v1297
      %1582 = vmatprep.subr.mxu0 %v1347
      %1583 = vmatpush1.msra.mxu0 %v1346
      %1584 = vmatprep.subr.mxu0 0.0
      %1585 = vmatpush1.msra.mxu0 0.0
      %1586 = vmatprep.subr.mxu0 0.0
      %1587 = vmatpush1.msra.mxu0 0.0
      %1588 = vmatprep.subr.mxu0 0.0
      %1589 = vmatpush1.msra.mxu0 0.0
      %1590 = vmatprep.subr.mxu0 0.0
      %1591 = vmatpush1.msra.mxu0 0.0
      %1592 = vmatprep.subr.mxu0 0.0
      %1593 = vmatpush1.msra.mxu0 0.0
      %1594 = vmatprep.subr.mxu0 0.0
      %1595 = vmatpush1.msra.mxu0 0.0
      %1596 = vmatprep.subr.mxu0 0.0
      %1597 = vmatpush1.msra.mxu0 0.0
      %1598 = vmatprep.subr.mxu0 0.0
      %1599 = vmatpush1.msra.mxu0 0.0
      %1600 = vmatprep.subr.mxu0 0.0
      %1601 = vmatpush1.msra.mxu0 0.0
      %1602 = vmatprep.subr.mxu0 0.0
      %1603 = vmatpush1.msra.mxu0 0.0
      %1604 = vmatprep.subr.mxu0 0.0
      %1605 = vmatpush1.msra.mxu0 0.0
      %1606 = vmatprep.subr.mxu0 0.0
      %1607 = vmatpush1.msra.mxu0 0.0
      %1608 = vmatprep.subr.mxu0 0.0
      %1609 = vmatpush1.msra.mxu0 0.0
      %1610 = vmatprep.subr.mxu0 0.0
      %1611 = vmatpush1.msra.mxu0 0.0
      %1612 = vmatprep.subr.mxu0 0.0
      %1613 = vmatpush1.msra.mxu0 0.0
      %1614 = vmatprep.subr.mxu0 0.0
      %1615 = vmatpush1.msra.mxu0 0.0
      %1616 = vmatprep.subr.mxu0 0.0
      %1617 = vmatpush1.msra.mxu0 0.0
      %1618 = vmatprep.subr.mxu0 0.0
      %1619 = vmatpush1.msra.mxu0 0.0
      %1620 = vmatprep.subr.mxu0 0.0
      %1621 = vmatpush1.msra.mxu0 0.0
      %1622 = vmatprep.subr.mxu0 0.0
      %1623 = vmatpush1.msra.mxu0 0.0
      %1624 = vmatprep.subr.mxu0 0.0
      %1625 = vmatpush1.msra.mxu0 0.0
      %1626 = vmatprep.subr.mxu0 0.0
      %1627 = vmatpush1.msra.mxu0 0.0
      %1628 = vmatprep.subr.mxu0 0.0
      %1629 = vmatpush1.msra.mxu0 0.0
      %1630 = vmatprep.mubr.f32.mxu0 0.0
      %1631 = vmatmul.mubr.f32.gmra.mrb[0].mxu0 %v1351
      %v1632 = vpop.f32.mrb[0].mxu0
      %v1633 = vadd.f32 0.0, %v1632
      %v1634 = vpop.f32.mrb[0].mxu0
      %v1635 = vadd.f32 0.0, %v1634
      %1636 = vdwg.mxu0
      %v1637 = vld [vmem:[%s2] sm:$0xff]
      %1639 = vset.pattern.permute.xlu0 0
      %1640 = vperm.xlu0 %1639, %v1637
      %v1641 = vpop.permute.xlu0 %1640
      %v1643 = vmul.f32 %v1420, %v1641
      %v1644 = vmul.f32 %v1422, %v1641
      %v1645 = vmul.f32 %v1491, %v1641
      %v1646 = vmul.f32 %v1493, %v1641
      %v1647 = vmul.f32 %v1562, %v1641
      %v1648 = vmul.f32 %v1564, %v1641
      %v1649 = vmul.f32 %v1633, %v1641
      %v1650 = vmul.f32 %v1635, %v1641
      %v1651 = vld [vmem:[%s3] sm:$0xff]
      %1653 = vset.pattern.permute.xlu0 0
      %1654 = vperm.xlu0 %1653, %v1651
      %v1655 = vpop.permute.xlu0 %1654
      %v1657 = vadd.f32 %v1643, %v1655
      %v1658 = vadd.f32 %v1644, %v1655
      %v1659 = vadd.f32 %v1645, %v1655
      %v1660 = vadd.f32 %v1646, %v1655
      %v1661 = vadd.f32 %v1647, %v1655
      %v1662 = vadd.f32 %v1648, %v1655
      %v1663 = vadd.f32 %v1649, %v1655
      %v1664 = vadd.f32 %v1650, %v1655
      %vm1665 = vcmp.ge.f32.partialorder %v1657, 0.0
      %vm1666 = vcmp.ge.f32.partialorder %v1658, 0.0
      %vm1667 = vcmp.ge.f32.partialorder %v1659, 0.0
      %vm1668 = vcmp.ge.f32.partialorder %v1660, 0.0
      %vm1669 = vcmp.ge.f32.partialorder %v1661, 0.0
      %vm1670 = vcmp.ge.f32.partialorder %v1662, 0.0
      %vm1671 = vcmp.ge.f32.partialorder %v1663, 0.0
      %vm1672 = vcmp.ge.f32.partialorder %v1664, 0.0
      %v1673 = vmul.f32 %v1657, 0.01
      %v1674 = vmul.f32 %v1658, 0.01
      %v1675 = vmul.f32 %v1659, 0.01
      %v1676 = vmul.f32 %v1660, 0.01
      %v1677 = vmul.f32 %v1661, 0.01
      %v1678 = vmul.f32 %v1662, 0.01
      %v1679 = vmul.f32 %v1663, 0.01
      %v1680 = vmul.f32 %v1664, 0.01
      %v1681 = vsel %vm1665, %v1657, %v1673
      %v1682 = vsel %vm1666, %v1658, %v1674
      %v1683 = vsel %vm1667, %v1659, %v1675
      %v1684 = vsel %vm1668, %v1660, %v1676
      %v1685 = vsel %vm1669, %v1661, %v1677
      %v1686 = vsel %vm1670, %v1662, %v1678
      %v1687 = vsel %vm1671, %v1663, %v1679
      %v1688 = vsel %vm1672, %v1664, %v1680
      %1697 = vrot.lane.b32.xlu0 %v1681, 33
      %v1698 = vpop.permute.xlu0 %1697
      %1699 = vrot.lane.b32.xlu0 %v1682, 33
      %v1700 = vpop.permute.xlu0 %1699
      %1701 = vrot.lane.b32.xlu0 %v1683, 33
      %v1702 = vpop.permute.xlu0 %1701
      %1703 = vrot.lane.b32.xlu0 %v1684, 33
      %v1704 = vpop.permute.xlu0 %1703
      %1705 = vrot.lane.b32.xlu0 %v1685, 33
      %v1706 = vpop.permute.xlu0 %1705
      %1707 = vrot.lane.b32.xlu0 %v1686, 33
      %v1708 = vpop.permute.xlu0 %1707
      %1709 = vrot.lane.b32.xlu0 %v1687, 33
      %v1710 = vpop.permute.xlu0 %1709
      %1711 = vrot.lane.b32.xlu0 %v1688, 33
      %v1712 = vpop.permute.xlu0 %1711
      %v1713 = vsel %vm956, %v1698, %v1700
      %v1714 = vsel %vm956, %v1700, %v1702
      %v1715 = vsel %vm956, %v1702, %v1704
      %v1716 = vsel %vm956, %v1704, %v1706
      %v1717 = vsel %vm956, %v1706, %v1708
      %v1718 = vsel %vm956, %v1708, %v1710
      %v1719 = vsel %vm956, %v1710, %v1712
      %v1728 = vsel %vm956, 0.0, %v1698
      %v1729 = vsel %vm1013, %v1728, 0.0
      %v1730 = vsel %vm1014, %v1713, 0.0
      %v1731 = vsel %vm1015, %v1714, 0.0
      %v1732 = vsel %vm1016, %v1715, 0.0
      %v1733 = vsel %vm1017, %v1716, 0.0
      %v1734 = vsel %vm1018, %v1717, 0.0
      %v1735 = vsel %vm1019, %v1718, 0.0
      %v1736 = vsel %vm1020, %v1719, 0.0
      %1737 = vrot.lane.b32.xlu0 %v1681, 32
      %v1738 = vpop.permute.xlu0 %1737
      %1739 = vrot.lane.b32.xlu0 %v1682, 32
      %v1740 = vpop.permute.xlu0 %1739
      %1741 = vrot.lane.b32.xlu0 %v1683, 32
      %v1742 = vpop.permute.xlu0 %1741
      %1743 = vrot.lane.b32.xlu0 %v1684, 32
      %v1744 = vpop.permute.xlu0 %1743
      %1745 = vrot.lane.b32.xlu0 %v1685, 32
      %v1746 = vpop.permute.xlu0 %1745
      %1747 = vrot.lane.b32.xlu0 %v1686, 32
      %v1748 = vpop.permute.xlu0 %1747
      %1749 = vrot.lane.b32.xlu0 %v1687, 32
      %v1750 = vpop.permute.xlu0 %1749
      %1751 = vrot.lane.b32.xlu0 %v1688, 32
      %v1752 = vpop.permute.xlu0 %1751
      %v1753 = vsel %vm1045, %v1738, %v1740
      %v1754 = vsel %vm1045, %v1740, %v1742
      %v1755 = vsel %vm1045, %v1742, %v1744
      %v1756 = vsel %vm1045, %v1744, %v1746
      %v1757 = vsel %vm1045, %v1746, %v1748
      %v1758 = vsel %vm1045, %v1748, %v1750
      %v1759 = vsel %vm1045, %v1750, %v1752
      %v1768 = vsel %vm1045, 0.0, %v1738
      %1769 = vrot.lane.b32.xlu0 %v1681, 31
      %v1770 = vpop.permute.xlu0 %1769
      %1771 = vrot.lane.b32.xlu0 %v1682, 31
      %v1772 = vpop.permute.xlu0 %1771
      %1773 = vrot.lane.b32.xlu0 %v1683, 31
      %v1774 = vpop.permute.xlu0 %1773
      %1775 = vrot.lane.b32.xlu0 %v1684, 31
      %v1776 = vpop.permute.xlu0 %1775
      %1777 = vrot.lane.b32.xlu0 %v1685, 31
      %v1778 = vpop.permute.xlu0 %1777
      %1779 = vrot.lane.b32.xlu0 %v1686, 31
      %v1780 = vpop.permute.xlu0 %1779
      %1781 = vrot.lane.b32.xlu0 %v1687, 31
      %v1782 = vpop.permute.xlu0 %1781
      %1783 = vrot.lane.b32.xlu0 %v1688, 31
      %v1784 = vpop.permute.xlu0 %1783
      %v1785 = vsel %vm1078, %v1770, %v1772
      %v1786 = vsel %vm1078, %v1772, %v1774
      %v1787 = vsel %vm1078, %v1774, %v1776
      %v1788 = vsel %vm1078, %v1776, %v1778
      %v1789 = vsel %vm1078, %v1778, %v1780
      %v1790 = vsel %vm1078, %v1780, %v1782
      %v1791 = vsel %vm1078, %v1782, %v1784
      %v1800 = vsel %vm1078, 0.0, %v1770
      %v1801 = vsel %vm1135, %v1800, 0.0
      %v1802 = vsel %vm1136, %v1785, 0.0
      %v1803 = vsel %vm1137, %v1786, 0.0
      %v1804 = vsel %vm1138, %v1787, 0.0
      %v1805 = vsel %vm1139, %v1788, 0.0
      %v1806 = vsel %vm1140, %v1789, 0.0
      %v1807 = vsel %vm1141, %v1790, 0.0
      %v1808 = vsel %vm1142, %v1791, 0.0
      %1809 = vrot.lane.b32.xlu0 %v1681, 1
      %v1810 = vpop.permute.xlu0 %1809
      %1811 = vrot.lane.b32.xlu0 %v1682, 1
      %v1812 = vpop.permute.xlu0 %1811
      %1813 = vrot.lane.b32.xlu0 %v1683, 1
      %v1814 = vpop.permute.xlu0 %1813
      %1815 = vrot.lane.b32.xlu0 %v1684, 1
      %v1816 = vpop.permute.xlu0 %1815
      %1817 = vrot.lane.b32.xlu0 %v1685, 1
      %v1818 = vpop.permute.xlu0 %1817
      %1819 = vrot.lane.b32.xlu0 %v1686, 1
      %v1820 = vpop.permute.xlu0 %1819
      %1821 = vrot.lane.b32.xlu0 %v1687, 1
      %v1822 = vpop.permute.xlu0 %1821
      %1823 = vrot.lane.b32.xlu0 %v1688, 1
      %v1824 = vpop.permute.xlu0 %1823
      %v1825 = vsel %vm1167, %v1810, %v1812
      %v1826 = vsel %vm1167, %v1812, %v1814
      %v1827 = vsel %vm1167, %v1814, %v1816
      %v1828 = vsel %vm1167, %v1816, %v1818
      %v1829 = vsel %vm1167, %v1818, %v1820
      %v1830 = vsel %vm1167, %v1820, %v1822
      %v1831 = vsel %vm1167, %v1822, %v1824
      %v1840 = vsel %vm1167, 0.0, %v1810
      %v1841 = vsel %vm1013, %v1840, 0.0
      %v1842 = vsel %vm1014, %v1825, 0.0
      %v1843 = vsel %vm1015, %v1826, 0.0
      %v1844 = vsel %vm1016, %v1827, 0.0
      %v1845 = vsel %vm1017, %v1828, 0.0
      %v1846 = vsel %vm1018, %v1829, 0.0
      %v1847 = vsel %vm1019, %v1830, 0.0
      %v1848 = vsel %vm1020, %v1831, 0.0
      %1849 = vrot.lane.b32.xlu0 %v1681, 127
      %v1850 = vpop.permute.xlu0 %1849
      %1851 = vrot.lane.b32.xlu0 %v1682, 127
      %v1852 = vpop.permute.xlu0 %1851
      %1853 = vrot.lane.b32.xlu0 %v1683, 127
      %v1854 = vpop.permute.xlu0 %1853
      %1855 = vrot.lane.b32.xlu0 %v1684, 127
      %v1856 = vpop.permute.xlu0 %1855
      %1857 = vrot.lane.b32.xlu0 %v1685, 127
      %v1858 = vpop.permute.xlu0 %1857
      %1859 = vrot.lane.b32.xlu0 %v1686, 127
      %v1860 = vpop.permute.xlu0 %1859
      %1861 = vrot.lane.b32.xlu0 %v1687, 127
      %v1862 = vpop.permute.xlu0 %1861
      %1863 = vrot.lane.b32.xlu0 %v1688, 127
      %v1864 = vpop.permute.xlu0 %1863
      %v1865 = vsel %vm1208, %v1850, %v1852
      %v1866 = vsel %vm1208, %v1852, %v1854
      %v1867 = vsel %vm1208, %v1854, %v1856
      %v1868 = vsel %vm1208, %v1856, %v1858
      %v1869 = vsel %vm1208, %v1858, %v1860
      %v1870 = vsel %vm1208, %v1860, %v1862
      %v1871 = vsel %vm1208, %v1862, %v1864
      %v1880 = vsel %vm1208, %v1864, 0.0
      %v1881 = vsel %vm1135, %v1865, 0.0
      %v1882 = vsel %vm1136, %v1866, 0.0
      %v1883 = vsel %vm1137, %v1867, 0.0
      %v1884 = vsel %vm1138, %v1868, 0.0
      %v1885 = vsel %vm1139, %v1869, 0.0
      %v1886 = vsel %vm1140, %v1870, 0.0
      %v1887 = vsel %vm1141, %v1871, 0.0
      %v1888 = vsel %vm1142, %v1880, 0.0
      %1889 = vrot.lane.b32.xlu0 %v1681, 97
      %v1890 = vpop.permute.xlu0 %1889
      %1891 = vrot.lane.b32.xlu0 %v1682, 97
      %v1892 = vpop.permute.xlu0 %1891
      %1893 = vrot.lane.b32.xlu0 %v1683, 97
      %v1894 = vpop.permute.xlu0 %1893
      %1895 = vrot.lane.b32.xlu0 %v1684, 97
      %v1896 = vpop.permute.xlu0 %1895
      %1897 = vrot.lane.b32.xlu0 %v1685, 97
      %v1898 = vpop.permute.xlu0 %1897
      %1899 = vrot.lane.b32.xlu0 %v1686, 97
      %v1900 = vpop.permute.xlu0 %1899
      %1901 = vrot.lane.b32.xlu0 %v1687, 97
      %v1902 = vpop.permute.xlu0 %1901
      %1903 = vrot.lane.b32.xlu0 %v1688, 97
      %v1904 = vpop.permute.xlu0 %1903
      %v1905 = vsel %vm1249, %v1890, %v1892
      %v1906 = vsel %vm1249, %v1892, %v1894
      %v1907 = vsel %vm1249, %v1894, %v1896
      %v1908 = vsel %vm1249, %v1896, %v1898
      %v1909 = vsel %vm1249, %v1898, %v1900
      %v1910 = vsel %vm1249, %v1900, %v1902
      %v1911 = vsel %vm1249, %v1902, %v1904
      %v1920 = vsel %vm1249, %v1904, 0.0
      %v1921 = vsel %vm1013, %v1905, 0.0
      %v1922 = vsel %vm1014, %v1906, 0.0
      %v1923 = vsel %vm1015, %v1907, 0.0
      %v1924 = vsel %vm1016, %v1908, 0.0
      %v1925 = vsel %vm1017, %v1909, 0.0
      %v1926 = vsel %vm1018, %v1910, 0.0
      %v1927 = vsel %vm1019, %v1911, 0.0
      %v1928 = vsel %vm1020, %v1920, 0.0
      %1929 = vrot.lane.b32.xlu0 %v1681, 96
      %v1930 = vpop.permute.xlu0 %1929
      %1931 = vrot.lane.b32.xlu0 %v1682, 96
      %v1932 = vpop.permute.xlu0 %1931
      %1933 = vrot.lane.b32.xlu0 %v1683, 96
      %v1934 = vpop.permute.xlu0 %1933
      %1935 = vrot.lane.b32.xlu0 %v1684, 96
      %v1936 = vpop.permute.xlu0 %1935
      %1937 = vrot.lane.b32.xlu0 %v1685, 96
      %v1938 = vpop.permute.xlu0 %1937
      %1939 = vrot.lane.b32.xlu0 %v1686, 96
      %v1940 = vpop.permute.xlu0 %1939
      %1941 = vrot.lane.b32.xlu0 %v1687, 96
      %v1942 = vpop.permute.xlu0 %1941
      %1943 = vrot.lane.b32.xlu0 %v1688, 96
      %v1944 = vpop.permute.xlu0 %1943
      %v1945 = vsel %vm1290, %v1930, %v1932
      %v1946 = vsel %vm1290, %v1932, %v1934
      %v1947 = vsel %vm1290, %v1934, %v1936
      %v1948 = vsel %vm1290, %v1936, %v1938
      %v1949 = vsel %vm1290, %v1938, %v1940
      %v1950 = vsel %vm1290, %v1940, %v1942
      %v1951 = vsel %vm1290, %v1942, %v1944
      %v1960 = vsel %vm1290, %v1944, 0.0
      %1961 = vrot.lane.b32.xlu0 %v1681, 95
      %v1962 = vpop.permute.xlu0 %1961
      %1963 = vrot.lane.b32.xlu0 %v1682, 95
      %v1964 = vpop.permute.xlu0 %1963
      %1965 = vrot.lane.b32.xlu0 %v1683, 95
      %v1966 = vpop.permute.xlu0 %1965
      %1967 = vrot.lane.b32.xlu0 %v1684, 95
      %v1968 = vpop.permute.xlu0 %1967
      %1969 = vrot.lane.b32.xlu0 %v1685, 95
      %v1970 = vpop.permute.xlu0 %1969
      %1971 = vrot.lane.b32.xlu0 %v1686, 95
      %v1972 = vpop.permute.xlu0 %1971
      %1973 = vrot.lane.b32.xlu0 %v1687, 95
      %v1974 = vpop.permute.xlu0 %1973
      %1975 = vrot.lane.b32.xlu0 %v1688, 95
      %v1976 = vpop.permute.xlu0 %1975
      %v1977 = vsel %vm1323, %v1962, %v1964
      %v1978 = vsel %vm1323, %v1964, %v1966
      %v1979 = vsel %vm1323, %v1966, %v1968
      %v1980 = vsel %vm1323, %v1968, %v1970
      %v1981 = vsel %vm1323, %v1970, %v1972
      %v1982 = vsel %vm1323, %v1972, %v1974
      %v1983 = vsel %vm1323, %v1974, %v1976
      %v1992 = vsel %vm1323, %v1976, 0.0
      %v1993 = vsel %vm1135, %v1977, 0.0
      %v1994 = vsel %vm1136, %v1978, 0.0
      %v1995 = vsel %vm1137, %v1979, 0.0
      %v1996 = vsel %vm1138, %v1980, 0.0
      %v1997 = vsel %vm1139, %v1981, 0.0
      %v1998 = vsel %vm1140, %v1982, 0.0
      %v1999 = vsel %vm1141, %v1983, 0.0
      %v2000 = vsel %vm1142, %v1992, 0.0
      %v2001 = vld [vmem:[%s4] sm:$0xff]
      %v2003 = vsel %vm1349, %v2001, 0
      %2005 = vmatprep.subr.mxu0 %v1730
      %2006 = vmatpush1.msra.mxu0 %v1729
      %2007 = vmatprep.subr.mxu0 %v1753
      %2008 = vmatpush1.msra.mxu0 %v1768
      %2009 = vmatprep.subr.mxu0 %v1802
      %2010 = vmatpush1.msra.mxu0 %v1801
      %2011 = vmatprep.subr.mxu0 %v1842
      %2012 = vmatpush1.msra.mxu0 %v1841
      %2013 = vmatprep.subr.mxu0 %v1682
      %2014 = vmatpush1.msra.mxu0 %v1681
      %2015 = vmatprep.subr.mxu0 %v1882
      %2016 = vmatpush1.msra.mxu0 %v1881
      %2017 = vmatprep.subr.mxu0 %v1922
      %2018 = vmatpush1.msra.mxu0 %v1921
      %2019 = vmatprep.subr.mxu0 %v1946
      %2020 = vmatpush1.msra.mxu0 %v1945
      %2021 = vmatprep.subr.mxu0 %v1994
      %2022 = vmatpush1.msra.mxu0 %v1993
      %2023 = vmatprep.subr.mxu0 0.0
      %2024 = vmatpush1.msra.mxu0 0.0
      %2025 = vmatprep.subr.mxu0 0.0
      %2026 = vmatpush1.msra.mxu0 0.0
      %2027 = vmatprep.subr.mxu0 0.0
      %2028 = vmatpush1.msra.mxu0 0.0
      %2029 = vmatprep.subr.mxu0 0.0
      %2030 = vmatpush1.msra.mxu0 0.0
      %2031 = vmatprep.subr.mxu0 0.0
      %2032 = vmatpush1.msra.mxu0 0.0
      %2033 = vmatprep.subr.mxu0 0.0
      %2034 = vmatpush1.msra.mxu0 0.0
      %2035 = vmatprep.subr.mxu0 0.0
      %2036 = vmatpush1.msra.mxu0 0.0
      %2037 = vmatprep.subr.mxu0 0.0
      %2038 = vmatpush1.msra.mxu0 0.0
      %2039 = vmatprep.subr.mxu0 0.0
      %2040 = vmatpush1.msra.mxu0 0.0
      %2041 = vmatprep.subr.mxu0 0.0
      %2042 = vmatpush1.msra.mxu0 0.0
      %2043 = vmatprep.subr.mxu0 0.0
      %2044 = vmatpush1.msra.mxu0 0.0
      %2045 = vmatprep.subr.mxu0 0.0
      %2046 = vmatpush1.msra.mxu0 0.0
      %2047 = vmatprep.subr.mxu0 0.0
      %2048 = vmatpush1.msra.mxu0 0.0
      %2049 = vmatprep.subr.mxu0 0.0
      %2050 = vmatpush1.msra.mxu0 0.0
      %2051 = vmatprep.subr.mxu0 0.0
      %2052 = vmatpush1.msra.mxu0 0.0
      %2053 = vmatprep.subr.mxu0 0.0
      %2054 = vmatpush1.msra.mxu0 0.0
      %2055 = vmatprep.subr.mxu0 0.0
      %2056 = vmatpush1.msra.mxu0 0.0
      %2057 = vmatprep.subr.mxu0 0.0
      %2058 = vmatpush1.msra.mxu0 0.0
      %2059 = vmatprep.subr.mxu0 0.0
      %2060 = vmatpush1.msra.mxu0 0.0
      %2061 = vmatprep.subr.mxu0 0.0
      %2062 = vmatpush1.msra.mxu0 0.0
      %2063 = vmatprep.subr.mxu0 0.0
      %2064 = vmatpush1.msra.mxu0 0.0
      %2065 = vmatprep.subr.mxu0 0.0
      %2066 = vmatpush1.msra.mxu0 0.0
      %2067 = vmatprep.subr.mxu0 0.0
      %2068 = vmatpush1.msra.mxu0 0.0
      %2069 = vmatprep.mubr.f32.mxu0 0.0
      %2070 = vmatmul.mubr.f32.gmra.mrb[0].mxu0 %v2003
      %v2071 = vpop.f32.mrb[0].mxu0
      %v2072 = vadd.f32 0.0, %v2071
      %v2073 = vpop.f32.mrb[0].mxu0
      %v2074 = vadd.f32 0.0, %v2073
      %2075 = vdwg.mxu0
      %2076 = vmatprep.subr.mxu0 %v1732
      %2077 = vmatpush1.msra.mxu0 %v1731
      %2078 = vmatprep.subr.mxu0 %v1755
      %2079 = vmatpush1.msra.mxu0 %v1754
      %2080 = vmatprep.subr.mxu0 %v1804
      %2081 = vmatpush1.msra.mxu0 %v1803
      %2082 = vmatprep.subr.mxu0 %v1844
      %2083 = vmatpush1.msra.mxu0 %v1843
      %2084 = vmatprep.subr.mxu0 %v1684
      %2085 = vmatpush1.msra.mxu0 %v1683
      %2086 = vmatprep.subr.mxu0 %v1884
      %2087 = vmatpush1.msra.mxu0 %v1883
      %2088 = vmatprep.subr.mxu0 %v1924
      %2089 = vmatpush1.msra.mxu0 %v1923
      %2090 = vmatprep.subr.mxu0 %v1948
      %2091 = vmatpush1.msra.mxu0 %v1947
      %2092 = vmatprep.subr.mxu0 %v1996
      %2093 = vmatpush1.msra.mxu0 %v1995
      %2094 = vmatprep.subr.mxu0 0.0
      %2095 = vmatpush1.msra.mxu0 0.0
      %2096 = vmatprep.subr.mxu0 0.0
      %2097 = vmatpush1.msra.mxu0 0.0
      %2098 = vmatprep.subr.mxu0 0.0
      %2099 = vmatpush1.msra.mxu0 0.0
      %2100 = vmatprep.subr.mxu0 0.0
      %2101 = vmatpush1.msra.mxu0 0.0
      %2102 = vmatprep.subr.mxu0 0.0
      %2103 = vmatpush1.msra.mxu0 0.0
      %2104 = vmatprep.subr.mxu0 0.0
      %2105 = vmatpush1.msra.mxu0 0.0
      %2106 = vmatprep.subr.mxu0 0.0
      %2107 = vmatpush1.msra.mxu0 0.0
      %2108 = vmatprep.subr.mxu0 0.0
      %2109 = vmatpush1.msra.mxu0 0.0
      %2110 = vmatprep.subr.mxu0 0.0
      %2111 = vmatpush1.msra.mxu0 0.0
      %2112 = vmatprep.subr.mxu0 0.0
      %2113 = vmatpush1.msra.mxu0 0.0
      %2114 = vmatprep.subr.mxu0 0.0
      %2115 = vmatpush1.msra.mxu0 0.0
      %2116 = vmatprep.subr.mxu0 0.0
      %2117 = vmatpush1.msra.mxu0 0.0
      %2118 = vmatprep.subr.mxu0 0.0
      %2119 = vmatpush1.msra.mxu0 0.0
      %2120 = vmatprep.subr.mxu0 0.0
      %2121 = vmatpush1.msra.mxu0 0.0
      %2122 = vmatprep.subr.mxu0 0.0
      %2123 = vmatpush1.msra.mxu0 0.0
      %2124 = vmatprep.subr.mxu0 0.0
      %2125 = vmatpush1.msra.mxu0 0.0
      %2126 = vmatprep.subr.mxu0 0.0
      %2127 = vmatpush1.msra.mxu0 0.0
      %2128 = vmatprep.subr.mxu0 0.0
      %2129 = vmatpush1.msra.mxu0 0.0
      %2130 = vmatprep.subr.mxu0 0.0
      %2131 = vmatpush1.msra.mxu0 0.0
      %2132 = vmatprep.subr.mxu0 0.0
      %2133 = vmatpush1.msra.mxu0 0.0
      %2134 = vmatprep.subr.mxu0 0.0
      %2135 = vmatpush1.msra.mxu0 0.0
      %2136 = vmatprep.subr.mxu0 0.0
      %2137 = vmatpush1.msra.mxu0 0.0
      %2138 = vmatprep.subr.mxu0 0.0
      %2139 = vmatpush1.msra.mxu0 0.0
      %2140 = vmatprep.mubr.f32.mxu0 0.0
      %2141 = vmatmul.mubr.f32.gmra.mrb[0].mxu0 %v2003
      %v2142 = vpop.f32.mrb[0].mxu0
      %v2143 = vadd.f32 0.0, %v2142
      %v2144 = vpop.f32.mrb[0].mxu0
      %v2145 = vadd.f32 0.0, %v2144
      %2146 = vdwg.mxu0
      %2147 = vmatprep.subr.mxu0 %v1734
      %2148 = vmatpush1.msra.mxu0 %v1733
      %2149 = vmatprep.subr.mxu0 %v1757
      %2150 = vmatpush1.msra.mxu0 %v1756
      %2151 = vmatprep.subr.mxu0 %v1806
      %2152 = vmatpush1.msra.mxu0 %v1805
      %2153 = vmatprep.subr.mxu0 %v1846
      %2154 = vmatpush1.msra.mxu0 %v1845
      %2155 = vmatprep.subr.mxu0 %v1686
      %2156 = vmatpush1.msra.mxu0 %v1685
      %2157 = vmatprep.subr.mxu0 %v1886
      %2158 = vmatpush1.msra.mxu0 %v1885
      %2159 = vmatprep.subr.mxu0 %v1926
      %2160 = vmatpush1.msra.mxu0 %v1925
      %2161 = vmatprep.subr.mxu0 %v1950
      %2162 = vmatpush1.msra.mxu0 %v1949
      %2163 = vmatprep.subr.mxu0 %v1998
      %2164 = vmatpush1.msra.mxu0 %v1997
      %2165 = vmatprep.subr.mxu0 0.0
      %2166 = vmatpush1.msra.mxu0 0.0
      %2167 = vmatprep.subr.mxu0 0.0
      %2168 = vmatpush1.msra.mxu0 0.0
      %2169 = vmatprep.subr.mxu0 0.0
      %2170 = vmatpush1.msra.mxu0 0.0
      %2171 = vmatprep.subr.mxu0 0.0
      %2172 = vmatpush1.msra.mxu0 0.0
      %2173 = vmatprep.subr.mxu0 0.0
      %2174 = vmatpush1.msra.mxu0 0.0
      %2175 = vmatprep.subr.mxu0 0.0
      %2176 = vmatpush1.msra.mxu0 0.0
      %2177 = vmatprep.subr.mxu0 0.0
      %2178 = vmatpush1.msra.mxu0 0.0
      %2179 = vmatprep.subr.mxu0 0.0
      %2180 = vmatpush1.msra.mxu0 0.0
      %2181 = vmatprep.subr.mxu0 0.0
      %2182 = vmatpush1.msra.mxu0 0.0
      %2183 = vmatprep.subr.mxu0 0.0
      %2184 = vmatpush1.msra.mxu0 0.0
      %2185 = vmatprep.subr.mxu0 0.0
      %2186 = vmatpush1.msra.mxu0 0.0
      %2187 = vmatprep.subr.mxu0 0.0
      %2188 = vmatpush1.msra.mxu0 0.0
      %2189 = vmatprep.subr.mxu0 0.0
      %2190 = vmatpush1.msra.mxu0 0.0
      %2191 = vmatprep.subr.mxu0 0.0
      %2192 = vmatpush1.msra.mxu0 0.0
      %2193 = vmatprep.subr.mxu0 0.0
      %2194 = vmatpush1.msra.mxu0 0.0
      %2195 = vmatprep.subr.mxu0 0.0
      %2196 = vmatpush1.msra.mxu0 0.0
      %2197 = vmatprep.subr.mxu0 0.0
      %2198 = vmatpush1.msra.mxu0 0.0
      %2199 = vmatprep.subr.mxu0 0.0
      %2200 = vmatpush1.msra.mxu0 0.0
      %2201 = vmatprep.subr.mxu0 0.0
      %2202 = vmatpush1.msra.mxu0 0.0
      %2203 = vmatprep.subr.mxu0 0.0
      %2204 = vmatpush1.msra.mxu0 0.0
      %2205 = vmatprep.subr.mxu0 0.0
      %2206 = vmatpush1.msra.mxu0 0.0
      %2207 = vmatprep.subr.mxu0 0.0
      %2208 = vmatpush1.msra.mxu0 0.0
      %2209 = vmatprep.subr.mxu0 0.0
      %2210 = vmatpush1.msra.mxu0 0.0
      %2211 = vmatprep.mubr.f32.mxu0 0.0
      %2212 = vmatmul.mubr.f32.gmra.mrb[0].mxu0 %v2003
      %v2213 = vpop.f32.mrb[0].mxu0
      %v2214 = vadd.f32 0.0, %v2213
      %v2215 = vpop.f32.mrb[0].mxu0
      %v2216 = vadd.f32 0.0, %v2215
      %2217 = vdwg.mxu0
      %2218 = vmatprep.subr.mxu0 %v1736
      %2219 = vmatpush1.msra.mxu0 %v1735
      %2220 = vmatprep.subr.mxu0 %v1759
      %2221 = vmatpush1.msra.mxu0 %v1758
      %2222 = vmatprep.subr.mxu0 %v1808
      %2223 = vmatpush1.msra.mxu0 %v1807
      %2224 = vmatprep.subr.mxu0 %v1848
      %2225 = vmatpush1.msra.mxu0 %v1847
      %2226 = vmatprep.subr.mxu0 %v1688
      %2227 = vmatpush1.msra.mxu0 %v1687
      %2228 = vmatprep.subr.mxu0 %v1888
      %2229 = vmatpush1.msra.mxu0 %v1887
      %2230 = vmatprep.subr.mxu0 %v1928
      %2231 = vmatpush1.msra.mxu0 %v1927
      %2232 = vmatprep.subr.mxu0 %v1960
      %2233 = vmatpush1.msra.mxu0 %v1951
      %2234 = vmatprep.subr.mxu0 %v2000
      %2235 = vmatpush1.msra.mxu0 %v1999
      %2236 = vmatprep.subr.mxu0 0.0
      %2237 = vmatpush1.msra.mxu0 0.0
      %2238 = vmatprep.subr.mxu0 0.0
      %2239 = vmatpush1.msra.mxu0 0.0
      %2240 = vmatprep.subr.mxu0 0.0
      %2241 = vmatpush1.msra.mxu0 0.0
      %2242 = vmatprep.subr.mxu0 0.0
      %2243 = vmatpush1.msra.mxu0 0.0
      %2244 = vmatprep.subr.mxu0 0.0
      %2245 = vmatpush1.msra.mxu0 0.0
      %2246 = vmatprep.subr.mxu0 0.0
      %2247 = vmatpush1.msra.mxu0 0.0
      %2248 = vmatprep.subr.mxu0 0.0
      %2249 = vmatpush1.msra.mxu0 0.0
      %2250 = vmatprep.subr.mxu0 0.0
      %2251 = vmatpush1.msra.mxu0 0.0
      %2252 = vmatprep.subr.mxu0 0.0
      %2253 = vmatpush1.msra.mxu0 0.0
      %2254 = vmatprep.subr.mxu0 0.0
      %2255 = vmatpush1.msra.mxu0 0.0
      %2256 = vmatprep.subr.mxu0 0.0
      %2257 = vmatpush1.msra.mxu0 0.0
      %2258 = vmatprep.subr.mxu0 0.0
      %2259 = vmatpush1.msra.mxu0 0.0
      %2260 = vmatprep.subr.mxu0 0.0
      %2261 = vmatpush1.msra.mxu0 0.0
      %2262 = vmatprep.subr.mxu0 0.0
      %2263 = vmatpush1.msra.mxu0 0.0
      %2264 = vmatprep.subr.mxu0 0.0
      %2265 = vmatpush1.msra.mxu0 0.0
      %2266 = vmatprep.subr.mxu0 0.0
      %2267 = vmatpush1.msra.mxu0 0.0
      %2268 = vmatprep.subr.mxu0 0.0
      %2269 = vmatpush1.msra.mxu0 0.0
      %2270 = vmatprep.subr.mxu0 0.0
      %2271 = vmatpush1.msra.mxu0 0.0
      %2272 = vmatprep.subr.mxu0 0.0
      %2273 = vmatpush1.msra.mxu0 0.0
      %2274 = vmatprep.subr.mxu0 0.0
      %2275 = vmatpush1.msra.mxu0 0.0
      %2276 = vmatprep.subr.mxu0 0.0
      %2277 = vmatpush1.msra.mxu0 0.0
      %2278 = vmatprep.subr.mxu0 0.0
      %2279 = vmatpush1.msra.mxu0 0.0
      %2280 = vmatprep.subr.mxu0 0.0
      %2281 = vmatpush1.msra.mxu0 0.0
      %2282 = vmatprep.mubr.f32.mxu0 0.0
      %2283 = vmatmul.mubr.f32.gmra.mrb[0].mxu0 %v2003
      %v2284 = vpop.f32.mrb[0].mxu0
      %v2285 = vadd.f32 0.0, %v2284
      %v2286 = vpop.f32.mrb[0].mxu0
      %v2287 = vadd.f32 0.0, %v2286
      %2288 = vdwg.mxu0
      %v2289 = vld [vmem:[%s5] sm:$0xff]
      %2291 = vset.pattern.permute.xlu0 0
      %2292 = vperm.xlu0 %2291, %v2289
      %v2293 = vpop.permute.xlu0 %2292
      %v2295 = vmul.f32 %v2072, %v2293
      %v2296 = vmul.f32 %v2074, %v2293
      %v2297 = vmul.f32 %v2143, %v2293
      %v2298 = vmul.f32 %v2145, %v2293
      %v2299 = vmul.f32 %v2214, %v2293
      %v2300 = vmul.f32 %v2216, %v2293
      %v2301 = vmul.f32 %v2285, %v2293
      %v2302 = vmul.f32 %v2287, %v2293
      %v2303 = vld [vmem:[%s6] sm:$0xff]
      %2305 = vset.pattern.permute.xlu0 0
      %2306 = vperm.xlu0 %2305, %v2303
      %v2307 = vpop.permute.xlu0 %2306
      %v2309 = vadd.f32 %v2295, %v2307
      %v2310 = vadd.f32 %v2296, %v2307
      %v2311 = vadd.f32 %v2297, %v2307
      %v2312 = vadd.f32 %v2298, %v2307
      %v2313 = vadd.f32 %v2299, %v2307
      %v2314 = vadd.f32 %v2300, %v2307
      %v2315 = vadd.f32 %v2301, %v2307
      %v2316 = vadd.f32 %v2302, %v2307
      %vm2317 = vcmp.ge.f32.partialorder %v2309, 0.0
      %vm2318 = vcmp.ge.f32.partialorder %v2310, 0.0
      %vm2319 = vcmp.ge.f32.partialorder %v2311, 0.0
      %vm2320 = vcmp.ge.f32.partialorder %v2312, 0.0
      %vm2321 = vcmp.ge.f32.partialorder %v2313, 0.0
      %vm2322 = vcmp.ge.f32.partialorder %v2314, 0.0
      %vm2323 = vcmp.ge.f32.partialorder %v2315, 0.0
      %vm2324 = vcmp.ge.f32.partialorder %v2316, 0.0
      %v2325 = vmul.f32 %v2309, 0.01
      %v2326 = vmul.f32 %v2310, 0.01
      %v2327 = vmul.f32 %v2311, 0.01
      %v2328 = vmul.f32 %v2312, 0.01
      %v2329 = vmul.f32 %v2313, 0.01
      %v2330 = vmul.f32 %v2314, 0.01
      %v2331 = vmul.f32 %v2315, 0.01
      %v2332 = vmul.f32 %v2316, 0.01
      %v2333 = vsel %vm2317, %v2309, %v2325
      %v2334 = vsel %vm2318, %v2310, %v2326
      %v2335 = vsel %vm2319, %v2311, %v2327
      %v2336 = vsel %vm2320, %v2312, %v2328
      %v2337 = vsel %vm2321, %v2313, %v2329
      %v2338 = vsel %vm2322, %v2314, %v2330
      %v2339 = vsel %vm2323, %v2315, %v2331
      %v2340 = vsel %vm2324, %v2316, %v2332
      %2349 = vrot.lane.b32.xlu0 %v2333, 33
      %v2350 = vpop.permute.xlu0 %2349
      %2351 = vrot.lane.b32.xlu0 %v2334, 33
      %v2352 = vpop.permute.xlu0 %2351
      %2353 = vrot.lane.b32.xlu0 %v2335, 33
      %v2354 = vpop.permute.xlu0 %2353
      %2355 = vrot.lane.b32.xlu0 %v2336, 33
      %v2356 = vpop.permute.xlu0 %2355
      %2357 = vrot.lane.b32.xlu0 %v2337, 33
      %v2358 = vpop.permute.xlu0 %2357
      %2359 = vrot.lane.b32.xlu0 %v2338, 33
      %v2360 = vpop.permute.xlu0 %2359
      %2361 = vrot.lane.b32.xlu0 %v2339, 33
      %v2362 = vpop.permute.xlu0 %2361
      %2363 = vrot.lane.b32.xlu0 %v2340, 33
      %v2364 = vpop.permute.xlu0 %2363
      %v2365 = vsel %vm956, %v2350, %v2352
      %v2366 = vsel %vm956, %v2352, %v2354
      %v2367 = vsel %vm956, %v2354, %v2356
      %v2368 = vsel %vm956, %v2356, %v2358
      %v2369 = vsel %vm956, %v2358, %v2360
      %v2370 = vsel %vm956, %v2360, %v2362
      %v2371 = vsel %vm956, %v2362, %v2364
      %v2380 = vsel %vm956, 0.0, %v2350
      %v2381 = vsel %vm1013, %v2380, 0.0
      %v2382 = vsel %vm1014, %v2365, 0.0
      %v2383 = vsel %vm1015, %v2366, 0.0
      %v2384 = vsel %vm1016, %v2367, 0.0
      %v2385 = vsel %vm1017, %v2368, 0.0
      %v2386 = vsel %vm1018, %v2369, 0.0
      %v2387 = vsel %vm1019, %v2370, 0.0
      %v2388 = vsel %vm1020, %v2371, 0.0
      %2389 = vrot.lane.b32.xlu0 %v2333, 32
      %v2390 = vpop.permute.xlu0 %2389
      %2391 = vrot.lane.b32.xlu0 %v2334, 32
      %v2392 = vpop.permute.xlu0 %2391
      %2393 = vrot.lane.b32.xlu0 %v2335, 32
      %v2394 = vpop.permute.xlu0 %2393
      %2395 = vrot.lane.b32.xlu0 %v2336, 32
      %v2396 = vpop.permute.xlu0 %2395
      %2397 = vrot.lane.b32.xlu0 %v2337, 32
      %v2398 = vpop.permute.xlu0 %2397
      %2399 = vrot.lane.b32.xlu0 %v2338, 32
      %v2400 = vpop.permute.xlu0 %2399
      %2401 = vrot.lane.b32.xlu0 %v2339, 32
      %v2402 = vpop.permute.xlu0 %2401
      %2403 = vrot.lane.b32.xlu0 %v2340, 32
      %v2404 = vpop.permute.xlu0 %2403
      %v2405 = vsel %vm1045, %v2390, %v2392
      %v2406 = vsel %vm1045, %v2392, %v2394
      %v2407 = vsel %vm1045, %v2394, %v2396
      %v2408 = vsel %vm1045, %v2396, %v2398
      %v2409 = vsel %vm1045, %v2398, %v2400
      %v2410 = vsel %vm1045, %v2400, %v2402
      %v2411 = vsel %vm1045, %v2402, %v2404
      %v2420 = vsel %vm1045, 0.0, %v2390
      %2421 = vrot.lane.b32.xlu0 %v2333, 31
      %v2422 = vpop.permute.xlu0 %2421
      %2423 = vrot.lane.b32.xlu0 %v2334, 31
      %v2424 = vpop.permute.xlu0 %2423
      %2425 = vrot.lane.b32.xlu0 %v2335, 31
      %v2426 = vpop.permute.xlu0 %2425
      %2427 = vrot.lane.b32.xlu0 %v2336, 31
      %v2428 = vpop.permute.xlu0 %2427
      %2429 = vrot.lane.b32.xlu0 %v2337, 31
      %v2430 = vpop.permute.xlu0 %2429
      %2431 = vrot.lane.b32.xlu0 %v2338, 31
      %v2432 = vpop.permute.xlu0 %2431
      %2433 = vrot.lane.b32.xlu0 %v2339, 31
      %v2434 = vpop.permute.xlu0 %2433
      %2435 = vrot.lane.b32.xlu0 %v2340, 31
      %v2436 = vpop.permute.xlu0 %2435
      %v2437 = vsel %vm1078, %v2422, %v2424
      %v2438 = vsel %vm1078, %v2424, %v2426
      %v2439 = vsel %vm1078, %v2426, %v2428
      %v2440 = vsel %vm1078, %v2428, %v2430
      %v2441 = vsel %vm1078, %v2430, %v2432
      %v2442 = vsel %vm1078, %v2432, %v2434
      %v2443 = vsel %vm1078, %v2434, %v2436
      %v2452 = vsel %vm1078, 0.0, %v2422
      %v2453 = vsel %vm1135, %v2452, 0.0
      %v2454 = vsel %vm1136, %v2437, 0.0
      %v2455 = vsel %vm1137, %v2438, 0.0
      %v2456 = vsel %vm1138, %v2439, 0.0
      %v2457 = vsel %vm1139, %v2440, 0.0
      %v2458 = vsel %vm1140, %v2441, 0.0
      %v2459 = vsel %vm1141, %v2442, 0.0
      %v2460 = vsel %vm1142, %v2443, 0.0
      %2461 = vrot.lane.b32.xlu0 %v2333, 1
      %v2462 = vpop.permute.xlu0 %2461
      %2463 = vrot.lane.b32.xlu0 %v2334, 1
      %v2464 = vpop.permute.xlu0 %2463
      %2465 = vrot.lane.b32.xlu0 %v2335, 1
      %v2466 = vpop.permute.xlu0 %2465
      %2467 = vrot.lane.b32.xlu0 %v2336, 1
      %v2468 = vpop.permute.xlu0 %2467
      %2469 = vrot.lane.b32.xlu0 %v2337, 1
      %v2470 = vpop.permute.xlu0 %2469
      %2471 = vrot.lane.b32.xlu0 %v2338, 1
      %v2472 = vpop.permute.xlu0 %2471
      %2473 = vrot.lane.b32.xlu0 %v2339, 1
      %v2474 = vpop.permute.xlu0 %2473
      %2475 = vrot.lane.b32.xlu0 %v2340, 1
      %v2476 = vpop.permute.xlu0 %2475
      %v2477 = vsel %vm1167, %v2462, %v2464
      %v2478 = vsel %vm1167, %v2464, %v2466
      %v2479 = vsel %vm1167, %v2466, %v2468
      %v2480 = vsel %vm1167, %v2468, %v2470
      %v2481 = vsel %vm1167, %v2470, %v2472
      %v2482 = vsel %vm1167, %v2472, %v2474
      %v2483 = vsel %vm1167, %v2474, %v2476
      %v2492 = vsel %vm1167, 0.0, %v2462
      %v2493 = vsel %vm1013, %v2492, 0.0
      %v2494 = vsel %vm1014, %v2477, 0.0
      %v2495 = vsel %vm1015, %v2478, 0.0
      %v2496 = vsel %vm1016, %v2479, 0.0
      %v2497 = vsel %vm1017, %v2480, 0.0
      %v2498 = vsel %vm1018, %v2481, 0.0
      %v2499 = vsel %vm1019, %v2482, 0.0
      %v2500 = vsel %vm1020, %v2483, 0.0
      %2501 = vrot.lane.b32.xlu0 %v2333, 127
      %v2502 = vpop.permute.xlu0 %2501
      %2503 = vrot.lane.b32.xlu0 %v2334, 127
      %v2504 = vpop.permute.xlu0 %2503
      %2505 = vrot.lane.b32.xlu0 %v2335, 127
      %v2506 = vpop.permute.xlu0 %2505
      %2507 = vrot.lane.b32.xlu0 %v2336, 127
      %v2508 = vpop.permute.xlu0 %2507
      %2509 = vrot.lane.b32.xlu0 %v2337, 127
      %v2510 = vpop.permute.xlu0 %2509
      %2511 = vrot.lane.b32.xlu0 %v2338, 127
      %v2512 = vpop.permute.xlu0 %2511
      %2513 = vrot.lane.b32.xlu0 %v2339, 127
      %v2514 = vpop.permute.xlu0 %2513
      %2515 = vrot.lane.b32.xlu0 %v2340, 127
      %v2516 = vpop.permute.xlu0 %2515
      %v2517 = vsel %vm1208, %v2502, %v2504
      %v2518 = vsel %vm1208, %v2504, %v2506
      %v2519 = vsel %vm1208, %v2506, %v2508
      %v2520 = vsel %vm1208, %v2508, %v2510
      %v2521 = vsel %vm1208, %v2510, %v2512
      %v2522 = vsel %vm1208, %v2512, %v2514
      %v2523 = vsel %vm1208, %v2514, %v2516
      %v2532 = vsel %vm1208, %v2516, 0.0
      %v2533 = vsel %vm1135, %v2517, 0.0
      %v2534 = vsel %vm1136, %v2518, 0.0
      %v2535 = vsel %vm1137, %v2519, 0.0
      %v2536 = vsel %vm1138, %v2520, 0.0
      %v2537 = vsel %vm1139, %v2521, 0.0
      %v2538 = vsel %vm1140, %v2522, 0.0
      %v2539 = vsel %vm1141, %v2523, 0.0
      %v2540 = vsel %vm1142, %v2532, 0.0
      %2541 = vrot.lane.b32.xlu0 %v2333, 97
      %v2542 = vpop.permute.xlu0 %2541
      %2543 = vrot.lane.b32.xlu0 %v2334, 97
      %v2544 = vpop.permute.xlu0 %2543
      %2545 = vrot.lane.b32.xlu0 %v2335, 97
      %v2546 = vpop.permute.xlu0 %2545
      %2547 = vrot.lane.b32.xlu0 %v2336, 97
      %v2548 = vpop.permute.xlu0 %2547
      %2549 = vrot.lane.b32.xlu0 %v2337, 97
      %v2550 = vpop.permute.xlu0 %2549
      %2551 = vrot.lane.b32.xlu0 %v2338, 97
      %v2552 = vpop.permute.xlu0 %2551
      %2553 = vrot.lane.b32.xlu0 %v2339, 97
      %v2554 = vpop.permute.xlu0 %2553
      %2555 = vrot.lane.b32.xlu0 %v2340, 97
      %v2556 = vpop.permute.xlu0 %2555
      %v2557 = vsel %vm1249, %v2542, %v2544
      %v2558 = vsel %vm1249, %v2544, %v2546
      %v2559 = vsel %vm1249, %v2546, %v2548
      %v2560 = vsel %vm1249, %v2548, %v2550
      %v2561 = vsel %vm1249, %v2550, %v2552
      %v2562 = vsel %vm1249, %v2552, %v2554
      %v2563 = vsel %vm1249, %v2554, %v2556
      %v2572 = vsel %vm1249, %v2556, 0.0
      %v2573 = vsel %vm1013, %v2557, 0.0
      %v2574 = vsel %vm1014, %v2558, 0.0
      %v2575 = vsel %vm1015, %v2559, 0.0
      %v2576 = vsel %vm1016, %v2560, 0.0
      %v2577 = vsel %vm1017, %v2561, 0.0
      %v2578 = vsel %vm1018, %v2562, 0.0
      %v2579 = vsel %vm1019, %v2563, 0.0
      %v2580 = vsel %vm1020, %v2572, 0.0
      %2581 = vrot.lane.b32.xlu0 %v2333, 96
      %v2582 = vpop.permute.xlu0 %2581
      %2583 = vrot.lane.b32.xlu0 %v2334, 96
      %v2584 = vpop.permute.xlu0 %2583
      %2585 = vrot.lane.b32.xlu0 %v2335, 96
      %v2586 = vpop.permute.xlu0 %2585
      %2587 = vrot.lane.b32.xlu0 %v2336, 96
      %v2588 = vpop.permute.xlu0 %2587
      %2589 = vrot.lane.b32.xlu0 %v2337, 96
      %v2590 = vpop.permute.xlu0 %2589
      %2591 = vrot.lane.b32.xlu0 %v2338, 96
      %v2592 = vpop.permute.xlu0 %2591
      %2593 = vrot.lane.b32.xlu0 %v2339, 96
      %v2594 = vpop.permute.xlu0 %2593
      %2595 = vrot.lane.b32.xlu0 %v2340, 96
      %v2596 = vpop.permute.xlu0 %2595
      %v2597 = vsel %vm1290, %v2582, %v2584
      %v2598 = vsel %vm1290, %v2584, %v2586
      %v2599 = vsel %vm1290, %v2586, %v2588
      %v2600 = vsel %vm1290, %v2588, %v2590
      %v2601 = vsel %vm1290, %v2590, %v2592
      %v2602 = vsel %vm1290, %v2592, %v2594
      %v2603 = vsel %vm1290, %v2594, %v2596
      %v2612 = vsel %vm1290, %v2596, 0.0
      %2613 = vrot.lane.b32.xlu0 %v2333, 95
      %v2614 = vpop.permute.xlu0 %2613
      %2615 = vrot.lane.b32.xlu0 %v2334, 95
      %v2616 = vpop.permute.xlu0 %2615
      %2617 = vrot.lane.b32.xlu0 %v2335, 95
      %v2618 = vpop.permute.xlu0 %2617
      %2619 = vrot.lane.b32.xlu0 %v2336, 95
      %v2620 = vpop.permute.xlu0 %2619
      %2621 = vrot.lane.b32.xlu0 %v2337, 95
      %v2622 = vpop.permute.xlu0 %2621
      %2623 = vrot.lane.b32.xlu0 %v2338, 95
      %v2624 = vpop.permute.xlu0 %2623
      %2625 = vrot.lane.b32.xlu0 %v2339, 95
      %v2626 = vpop.permute.xlu0 %2625
      %2627 = vrot.lane.b32.xlu0 %v2340, 95
      %v2628 = vpop.permute.xlu0 %2627
      %v2629 = vsel %vm1323, %v2614, %v2616
      %v2630 = vsel %vm1323, %v2616, %v2618
      %v2631 = vsel %vm1323, %v2618, %v2620
      %v2632 = vsel %vm1323, %v2620, %v2622
      %v2633 = vsel %vm1323, %v2622, %v2624
      %v2634 = vsel %vm1323, %v2624, %v2626
      %v2635 = vsel %vm1323, %v2626, %v2628
      %v2644 = vsel %vm1323, %v2628, 0.0
      %v2645 = vsel %vm1135, %v2629, 0.0
      %v2646 = vsel %vm1136, %v2630, 0.0
      %v2647 = vsel %vm1137, %v2631, 0.0
      %v2648 = vsel %vm1138, %v2632, 0.0
      %v2649 = vsel %vm1139, %v2633, 0.0
      %v2650 = vsel %vm1140, %v2634, 0.0
      %v2651 = vsel %vm1141, %v2635, 0.0
      %v2652 = vsel %vm1142, %v2644, 0.0
      %v2653 = vld [vmem:[%s7] sm:$0xff]
      %v2654 = vld [vmem:[%s7 + $0x8] sm:$0xff]
      %vm2655 = vcmask 130048
      %v2657 = vsel %vm2655, %v2654, 0
      %2659 = vmatprep.subr.mxu0 %v1730
      %2660 = vmatpush1.msra.mxu0 %v1729
      %2661 = vmatprep.subr.mxu0 %v2382
      %2662 = vmatpush1.msra.mxu0 %v2381
      %2663 = vmatprep.subr.mxu0 %v1753
      %2664 = vmatpush1.msra.mxu0 %v1768
      %2665 = vmatprep.subr.mxu0 %v2405
      %2666 = vmatpush1.msra.mxu0 %v2420
      %2667 = vmatprep.subr.mxu0 %v1802
      %2668 = vmatpush1.msra.mxu0 %v1801
      %2669 = vmatprep.subr.mxu0 %v2454
      %2670 = vmatpush1.msra.mxu0 %v2453
      %2671 = vmatprep.subr.mxu0 %v1842
      %2672 = vmatpush1.msra.mxu0 %v1841
      %2673 = vmatprep.subr.mxu0 %v2494
      %2674 = vmatpush1.msra.mxu0 %v2493
      %2675 = vmatprep.subr.mxu0 %v1682
      %2676 = vmatpush1.msra.mxu0 %v1681
      %2677 = vmatprep.subr.mxu0 %v2334
      %2678 = vmatpush1.msra.mxu0 %v2333
      %2679 = vmatprep.subr.mxu0 %v1882
      %2680 = vmatpush1.msra.mxu0 %v1881
      %2681 = vmatprep.subr.mxu0 %v2534
      %2682 = vmatpush1.msra.mxu0 %v2533
      %2683 = vmatprep.subr.mxu0 %v1922
      %2684 = vmatpush1.msra.mxu0 %v1921
      %2685 = vmatprep.subr.mxu0 %v2574
      %2686 = vmatpush1.msra.mxu0 %v2573
      %2687 = vmatprep.subr.mxu0 %v1946
      %2688 = vmatpush1.msra.mxu0 %v1945
      %2689 = vmatprep.subr.mxu0 %v2598
      %2690 = vmatpush1.msra.mxu0 %v2597
      %2691 = vmatprep.subr.mxu0 %v1994
      %2692 = vmatpush1.msra.mxu0 %v1993
      %2693 = vmatprep.subr.mxu0 %v2646
      %2694 = vmatpush1.msra.mxu0 %v2645
      %2695 = vmatprep.subr.mxu0 0.0
      %2696 = vmatpush1.msra.mxu0 0.0
      %2697 = vmatprep.subr.mxu0 0.0
      %2698 = vmatpush1.msra.mxu0 0.0
      %2699 = vmatprep.subr.mxu0 0.0
      %2700 = vmatpush1.msra.mxu0 0.0
      %2701 = vmatprep.subr.mxu0 0.0
      %2702 = vmatpush1.msra.mxu0 0.0
      %2703 = vmatprep.subr.mxu0 0.0
      %2704 = vmatpush1.msra.mxu0 0.0
      %2705 = vmatprep.subr.mxu0 0.0
      %2706 = vmatpush1.msra.mxu0 0.0
      %2707 = vmatprep.subr.mxu0 0.0
      %2708 = vmatpush1.msra.mxu0 0.0
      %2709 = vmatprep.subr.mxu0 0.0
      %2710 = vmatpush1.msra.mxu0 0.0
      %2711 = vmatprep.subr.mxu0 0.0
      %2712 = vmatpush1.msra.mxu0 0.0
      %2713 = vmatprep.subr.mxu0 0.0
      %2714 = vmatpush1.msra.mxu0 0.0
      %2715 = vmatprep.subr.mxu0 0.0
      %2716 = vmatpush1.msra.mxu0 0.0
      %2717 = vmatprep.subr.mxu0 0.0
      %2718 = vmatpush1.msra.mxu0 0.0
      %2719 = vmatprep.subr.mxu0 0.0
      %2720 = vmatpush1.msra.mxu0 0.0
      %2721 = vmatprep.subr.mxu0 0.0
      %2722 = vmatpush1.msra.mxu0 0.0
      %2723 = vmatprep.mubr.f32.mxu0 %v2657
      %2724 = vmatmul.mubr.f32.gmra.mrb[0].mxu0 %v2653
      %v2725 = vpop.f32.mrb[0].mxu0
      %v2726 = vadd.f32 0.0, %v2725
      %v2727 = vpop.f32.mrb[0].mxu0
      %v2728 = vadd.f32 0.0, %v2727
      %2729 = vdwg.mxu0
      %2730 = vmatprep.subr.mxu0 %v1732
      %2731 = vmatpush1.msra.mxu0 %v1731
      %2732 = vmatprep.subr.mxu0 %v2384
      %2733 = vmatpush1.msra.mxu0 %v2383
      %2734 = vmatprep.subr.mxu0 %v1755
      %2735 = vmatpush1.msra.mxu0 %v1754
      %2736 = vmatprep.subr.mxu0 %v2407
      %2737 = vmatpush1.msra.mxu0 %v2406
      %2738 = vmatprep.subr.mxu0 %v1804
      %2739 = vmatpush1.msra.mxu0 %v1803
      %2740 = vmatprep.subr.mxu0 %v2456
      %2741 = vmatpush1.msra.mxu0 %v2455
      %2742 = vmatprep.subr.mxu0 %v1844
      %2743 = vmatpush1.msra.mxu0 %v1843
      %2744 = vmatprep.subr.mxu0 %v2496
      %2745 = vmatpush1.msra.mxu0 %v2495
      %2746 = vmatprep.subr.mxu0 %v1684
      %2747 = vmatpush1.msra.mxu0 %v1683
      %2748 = vmatprep.subr.mxu0 %v2336
      %2749 = vmatpush1.msra.mxu0 %v2335
      %2750 = vmatprep.subr.mxu0 %v1884
      %2751 = vmatpush1.msra.mxu0 %v1883
      %2752 = vmatprep.subr.mxu0 %v2536
      %2753 = vmatpush1.msra.mxu0 %v2535
      %2754 = vmatprep.subr.mxu0 %v1924
      %2755 = vmatpush1.msra.mxu0 %v1923
      %2756 = vmatprep.subr.mxu0 %v2576
      %2757 = vmatpush1.msra.mxu0 %v2575
      %2758 = vmatprep.subr.mxu0 %v1948
      %2759 = vmatpush1.msra.mxu0 %v1947
      %2760 = vmatprep.subr.mxu0 %v2600
      %2761 = vmatpush1.msra.mxu0 %v2599
      %2762 = vmatprep.subr.mxu0 %v1996
      %2763 = vmatpush1.msra.mxu0 %v1995
      %2764 = vmatprep.subr.mxu0 %v2648
      %2765 = vmatpush1.msra.mxu0 %v2647
      %2766 = vmatprep.subr.mxu0 0.0
      %2767 = vmatpush1.msra.mxu0 0.0
      %2768 = vmatprep.subr.mxu0 0.0
      %2769 = vmatpush1.msra.mxu0 0.0
      %2770 = vmatprep.subr.mxu0 0.0
      %2771 = vmatpush1.msra.mxu0 0.0
      %2772 = vmatprep.subr.mxu0 0.0
      %2773 = vmatpush1.msra.mxu0 0.0
      %2774 = vmatprep.subr.mxu0 0.0
      %2775 = vmatpush1.msra.mxu0 0.0
      %2776 = vmatprep.subr.mxu0 0.0
      %2777 = vmatpush1.msra.mxu0 0.0
      %2778 = vmatprep.subr.mxu0 0.0
      %2779 = vmatpush1.msra.mxu0 0.0
      %2780 = vmatprep.subr.mxu0 0.0
      %2781 = vmatpush1.msra.mxu0 0.0
      %2782 = vmatprep.subr.mxu0 0.0
      %2783 = vmatpush1.msra.mxu0 0.0
      %2784 = vmatprep.subr.mxu0 0.0
      %2785 = vmatpush1.msra.mxu0 0.0
      %2786 = vmatprep.subr.mxu0 0.0
      %2787 = vmatpush1.msra.mxu0 0.0
      %2788 = vmatprep.subr.mxu0 0.0
      %2789 = vmatpush1.msra.mxu0 0.0
      %2790 = vmatprep.subr.mxu0 0.0
      %2791 = vmatpush1.msra.mxu0 0.0
      %2792 = vmatprep.subr.mxu0 0.0
      %2793 = vmatpush1.msra.mxu0 0.0
      %2794 = vmatprep.mubr.f32.mxu0 %v2657
      %2795 = vmatmul.mubr.f32.gmra.mrb[0].mxu0 %v2653
      %v2796 = vpop.f32.mrb[0].mxu0
      %v2797 = vadd.f32 0.0, %v2796
      %v2798 = vpop.f32.mrb[0].mxu0
      %v2799 = vadd.f32 0.0, %v2798
      %2800 = vdwg.mxu0
      %2801 = vmatprep.subr.mxu0 %v1734
      %2802 = vmatpush1.msra.mxu0 %v1733
      %2803 = vmatprep.subr.mxu0 %v2386
      %2804 = vmatpush1.msra.mxu0 %v2385
      %2805 = vmatprep.subr.mxu0 %v1757
      %2806 = vmatpush1.msra.mxu0 %v1756
      %2807 = vmatprep.subr.mxu0 %v2409
      %2808 = vmatpush1.msra.mxu0 %v2408
      %2809 = vmatprep.subr.mxu0 %v1806
      %2810 = vmatpush1.msra.mxu0 %v1805
      %2811 = vmatprep.subr.mxu0 %v2458
      %2812 = vmatpush1.msra.mxu0 %v2457
      %2813 = vmatprep.subr.mxu0 %v1846
      %2814 = vmatpush1.msra.mxu0 %v1845
      %2815 = vmatprep.subr.mxu0 %v2498
      %2816 = vmatpush1.msra.mxu0 %v2497
      %2817 = vmatprep.subr.mxu0 %v1686
      %2818 = vmatpush1.msra.mxu0 %v1685
      %2819 = vmatprep.subr.mxu0 %v2338
      %2820 = vmatpush1.msra.mxu0 %v2337
      %2821 = vmatprep.subr.mxu0 %v1886
      %2822 = vmatpush1.msra.mxu0 %v1885
      %2823 = vmatprep.subr.mxu0 %v2538
      %2824 = vmatpush1.msra.mxu0 %v2537
      %2825 = vmatprep.subr.mxu0 %v1926
      %2826 = vmatpush1.msra.mxu0 %v1925
      %2827 = vmatprep.subr.mxu0 %v2578
      %2828 = vmatpush1.msra.mxu0 %v2577
      %2829 = vmatprep.subr.mxu0 %v1950
      %2830 = vmatpush1.msra.mxu0 %v1949
      %2831 = vmatprep.subr.mxu0 %v2602
      %2832 = vmatpush1.msra.mxu0 %v2601
      %2833 = vmatprep.subr.mxu0 %v1998
      %2834 = vmatpush1.msra.mxu0 %v1997
      %2835 = vmatprep.subr.mxu0 %v2650
      %2836 = vmatpush1.msra.mxu0 %v2649
      %2837 = vmatprep.subr.mxu0 0.0
      %2838 = vmatpush1.msra.mxu0 0.0
      %2839 = vmatprep.subr.mxu0 0.0
      %2840 = vmatpush1.msra.mxu0 0.0
      %2841 = vmatprep.subr.mxu0 0.0
      %2842 = vmatpush1.msra.mxu0 0.0
      %2843 = vmatprep.subr.mxu0 0.0
      %2844 = vmatpush1.msra.mxu0 0.0
      %2845 = vmatprep.subr.mxu0 0.0
      %2846 = vmatpush1.msra.mxu0 0.0
      %2847 = vmatprep.subr.mxu0 0.0
      %2848 = vmatpush1.msra.mxu0 0.0
      %2849 = vmatprep.subr.mxu0 0.0
      %2850 = vmatpush1.msra.mxu0 0.0
      %2851 = vmatprep.subr.mxu0 0.0
      %2852 = vmatpush1.msra.mxu0 0.0
      %2853 = vmatprep.subr.mxu0 0.0
      %2854 = vmatpush1.msra.mxu0 0.0
      %2855 = vmatprep.subr.mxu0 0.0
      %2856 = vmatpush1.msra.mxu0 0.0
      %2857 = vmatprep.subr.mxu0 0.0
      %2858 = vmatpush1.msra.mxu0 0.0
      %2859 = vmatprep.subr.mxu0 0.0
      %2860 = vmatpush1.msra.mxu0 0.0
      %2861 = vmatprep.subr.mxu0 0.0
      %2862 = vmatpush1.msra.mxu0 0.0
      %2863 = vmatprep.subr.mxu0 0.0
      %2864 = vmatpush1.msra.mxu0 0.0
      %2865 = vmatprep.mubr.f32.mxu0 %v2657
      %2866 = vmatmul.mubr.f32.gmra.mrb[0].mxu0 %v2653
      %v2867 = vpop.f32.mrb[0].mxu0
      %v2868 = vadd.f32 0.0, %v2867
      %v2869 = vpop.f32.mrb[0].mxu0
      %v2870 = vadd.f32 0.0, %v2869
      %2871 = vdwg.mxu0
      %2872 = vmatprep.subr.mxu0 %v1736
      %2873 = vmatpush1.msra.mxu0 %v1735
      %2874 = vmatprep.subr.mxu0 %v2388
      %2875 = vmatpush1.msra.mxu0 %v2387
      %2876 = vmatprep.subr.mxu0 %v1759
      %2877 = vmatpush1.msra.mxu0 %v1758
      %2878 = vmatprep.subr.mxu0 %v2411
      %2879 = vmatpush1.msra.mxu0 %v2410
      %2880 = vmatprep.subr.mxu0 %v1808
      %2881 = vmatpush1.msra.mxu0 %v1807
      %2882 = vmatprep.subr.mxu0 %v2460
      %2883 = vmatpush1.msra.mxu0 %v2459
      %2884 = vmatprep.subr.mxu0 %v1848
      %2885 = vmatpush1.msra.mxu0 %v1847
      %2886 = vmatprep.subr.mxu0 %v2500
      %2887 = vmatpush1.msra.mxu0 %v2499
      %2888 = vmatprep.subr.mxu0 %v1688
      %2889 = vmatpush1.msra.mxu0 %v1687
      %2890 = vmatprep.subr.mxu0 %v2340
      %2891 = vmatpush1.msra.mxu0 %v2339
      %2892 = vmatprep.subr.mxu0 %v1888
      %2893 = vmatpush1.msra.mxu0 %v1887
      %2894 = vmatprep.subr.mxu0 %v2540
      %2895 = vmatpush1.msra.mxu0 %v2539
      %2896 = vmatprep.subr.mxu0 %v1928
      %2897 = vmatpush1.msra.mxu0 %v1927
      %2898 = vmatprep.subr.mxu0 %v2580
      %2899 = vmatpush1.msra.mxu0 %v2579
      %2900 = vmatprep.subr.mxu0 %v1960
      %2901 = vmatpush1.msra.mxu0 %v1951
      %2902 = vmatprep.subr.mxu0 %v2612
      %2903 = vmatpush1.msra.mxu0 %v2603
      %2904 = vmatprep.subr.mxu0 %v2000
      %2905 = vmatpush1.msra.mxu0 %v1999
      %2906 = vmatprep.subr.mxu0 %v2652
      %2907 = vmatpush1.msra.mxu0 %v2651
      %2908 = vmatprep.subr.mxu0 0.0
      %2909 = vmatpush1.msra.mxu0 0.0
      %2910 = vmatprep.subr.mxu0 0.0
      %2911 = vmatpush1.msra.mxu0 0.0
      %2912 = vmatprep.subr.mxu0 0.0
      %2913 = vmatpush1.msra.mxu0 0.0
      %2914 = vmatprep.subr.mxu0 0.0
      %2915 = vmatpush1.msra.mxu0 0.0
      %2916 = vmatprep.subr.mxu0 0.0
      %2917 = vmatpush1.msra.mxu0 0.0
      %2918 = vmatprep.subr.mxu0 0.0
      %2919 = vmatpush1.msra.mxu0 0.0
      %2920 = vmatprep.subr.mxu0 0.0
      %2921 = vmatpush1.msra.mxu0 0.0
      %2922 = vmatprep.subr.mxu0 0.0
      %2923 = vmatpush1.msra.mxu0 0.0
      %2924 = vmatprep.subr.mxu0 0.0
      %2925 = vmatpush1.msra.mxu0 0.0
      %2926 = vmatprep.subr.mxu0 0.0
      %2927 = vmatpush1.msra.mxu0 0.0
      %2928 = vmatprep.subr.mxu0 0.0
      %2929 = vmatpush1.msra.mxu0 0.0
      %2930 = vmatprep.subr.mxu0 0.0
      %2931 = vmatpush1.msra.mxu0 0.0
      %2932 = vmatprep.subr.mxu0 0.0
      %2933 = vmatpush1.msra.mxu0 0.0
      %2934 = vmatprep.subr.mxu0 0.0
      %2935 = vmatpush1.msra.mxu0 0.0
      %2936 = vmatprep.mubr.f32.mxu0 %v2657
      %2937 = vmatmul.mubr.f32.gmra.mrb[0].mxu0 %v2653
      %v2938 = vpop.f32.mrb[0].mxu0
      %v2939 = vadd.f32 0.0, %v2938
      %v2940 = vpop.f32.mrb[0].mxu0
      %v2941 = vadd.f32 0.0, %v2940
      %2942 = vdwg.mxu0
      %v2943 = vld [vmem:[%s8] sm:$0xff]
      %2945 = vset.pattern.permute.xlu0 0
      %2946 = vperm.xlu0 %2945, %v2943
      %v2947 = vpop.permute.xlu0 %2946
      %v2949 = vmul.f32 %v2726, %v2947
      %v2950 = vmul.f32 %v2728, %v2947
      %v2951 = vmul.f32 %v2797, %v2947
      %v2952 = vmul.f32 %v2799, %v2947
      %v2953 = vmul.f32 %v2868, %v2947
      %v2954 = vmul.f32 %v2870, %v2947
      %v2955 = vmul.f32 %v2939, %v2947
      %v2956 = vmul.f32 %v2941, %v2947
      %v2957 = vld [vmem:[%s9] sm:$0xff]
      %2959 = vset.pattern.permute.xlu0 0
      %2960 = vperm.xlu0 %2959, %v2957
      %v2961 = vpop.permute.xlu0 %2960
      %v2963 = vadd.f32 %v2949, %v2961
      %v2964 = vadd.f32 %v2950, %v2961
      %v2965 = vadd.f32 %v2951, %v2961
      %v2966 = vadd.f32 %v2952, %v2961
      %v2967 = vadd.f32 %v2953, %v2961
      %v2968 = vadd.f32 %v2954, %v2961
      %v2969 = vadd.f32 %v2955, %v2961
      %v2970 = vadd.f32 %v2956, %v2961
      %vm2971 = vcmp.ge.f32.partialorder %v2963, 0.0
      %vm2972 = vcmp.ge.f32.partialorder %v2964, 0.0
      %vm2973 = vcmp.ge.f32.partialorder %v2965, 0.0
      %vm2974 = vcmp.ge.f32.partialorder %v2966, 0.0
      %vm2975 = vcmp.ge.f32.partialorder %v2967, 0.0
      %vm2976 = vcmp.ge.f32.partialorder %v2968, 0.0
      %vm2977 = vcmp.ge.f32.partialorder %v2969, 0.0
      %vm2978 = vcmp.ge.f32.partialorder %v2970, 0.0
      %v2979 = vmul.f32 %v2963, 0.01
      %v2980 = vmul.f32 %v2964, 0.01
      %v2981 = vmul.f32 %v2965, 0.01
      %v2982 = vmul.f32 %v2966, 0.01
      %v2983 = vmul.f32 %v2967, 0.01
      %v2984 = vmul.f32 %v2968, 0.01
      %v2985 = vmul.f32 %v2969, 0.01
      %v2986 = vmul.f32 %v2970, 0.01
      %v2987 = vsel %vm2971, %v2963, %v2979
      %v2988 = vsel %vm2972, %v2964, %v2980
      %v2989 = vsel %vm2973, %v2965, %v2981
      %v2990 = vsel %vm2974, %v2966, %v2982
      %v2991 = vsel %vm2975, %v2967, %v2983
      %v2992 = vsel %vm2976, %v2968, %v2984
      %v2993 = vsel %vm2977, %v2969, %v2985
      %v2994 = vsel %vm2978, %v2970, %v2986
      %v2995 = vld [vmem:[%s25] sm:$0xff]
      %v2996 = vld [vmem:[%s25 + $0x8] sm:$0xff]
      %v2997 = vld [vmem:[%s25 + $0x10] sm:$0xff]
      %v2998 = vld [vmem:[%s25 + $0x18] sm:$0xff]
      %v2999 = vld [vmem:[%s25 + $0x20] sm:$0xff]
      %v3000 = vld [vmem:[%s25 + $0x28] sm:$0xff]
      %v3001 = vld [vmem:[%s25 + $0x30] sm:$0xff]
      %v3002 = vld [vmem:[%s25 + $0x38] sm:$0xff]
      %v3003 = vld [vmem:[%s25 + $0x40] sm:$0xff]
      %v3004 = vld [vmem:[%s25 + $0x48] sm:$0xff]
      %v3005 = vld [vmem:[%s25 + $0x50] sm:$0xff]
      %v3006 = vld [vmem:[%s25 + $0x58] sm:$0xff]
      %v3007 = vld [vmem:[%s25 + $0x60] sm:$0xff]
      %v3008 = vld [vmem:[%s25 + $0x68] sm:$0xff]
      %v3009 = vld [vmem:[%s25 + $0x70] sm:$0xff]
      %v3010 = vld [vmem:[%s25 + $0x78] sm:$0xff]
      %v3011 = vld [vmem:[%s25 + $0x80] sm:$0xff]
      %v3012 = vld [vmem:[%s25 + $0x88] sm:$0xff]
      %v3013 = vld [vmem:[%s25 + $0x90] sm:$0xff]
      %v3014 = vld [vmem:[%s25 + $0x98] sm:$0xff]
      %v3015 = vld [vmem:[%s25 + $0xa0] sm:$0xff]
      %v3016 = vld [vmem:[%s25 + $0xa8] sm:$0xff]
      %v3017 = vld [vmem:[%s25 + $0xb0] sm:$0xff]
      %v3018 = vld [vmem:[%s25 + $0xb8] sm:$0xff]
      %v3019 = vld [vmem:[%s25 + $0xc0] sm:$0xff]
      %v3020 = vld [vmem:[%s25 + $0xc8] sm:$0xff]
      %v3021 = vld [vmem:[%s25 + $0xd0] sm:$0xff]
      %v3022 = vld [vmem:[%s25 + $0xd8] sm:$0xff]
      %v3023 = vld [vmem:[%s25 + $0xe0] sm:$0xff]
      %v3024 = vld [vmem:[%s25 + $0xe8] sm:$0xff]
      %v3025 = vld [vmem:[%s25 + $0xf0] sm:$0xff]
      %v3026 = vld [vmem:[%s25 + $0xf8] sm:$0xff]
      %v3027 = vld [vmem:[%s25 + $0x100] sm:$0xff]
      %v3028 = vld [vmem:[%s25 + $0x108] sm:$0xff]
      %v3029 = vld [vmem:[%s25 + $0x110] sm:$0xff]
      %v3030 = vld [vmem:[%s25 + $0x118] sm:$0xff]
      %v3031 = vld [vmem:[%s25 + $0x120] sm:$0xff]
      %v3032 = vld [vmem:[%s25 + $0x128] sm:$0xff]
      %v3033 = vld [vmem:[%s25 + $0x130] sm:$0xff]
      %v3034 = vld [vmem:[%s25 + $0x138] sm:$0xff]
      %v3035 = vld [vmem:[%s25 + $0x140] sm:$0xff]
      %v3036 = vld [vmem:[%s25 + $0x148] sm:$0xff]
      %v3037 = vld [vmem:[%s25 + $0x150] sm:$0xff]
      %v3038 = vld [vmem:[%s25 + $0x158] sm:$0xff]
      %v3039 = vld [vmem:[%s25 + $0x160] sm:$0xff]
      %v3040 = vld [vmem:[%s25 + $0x168] sm:$0xff]
      %v3041 = vld [vmem:[%s25 + $0x170] sm:$0xff]
      %v3042 = vld [vmem:[%s25 + $0x178] sm:$0xff]
      %v3043 = vld [vmem:[%s25 + $0x180] sm:$0xff]
      %v3044 = vld [vmem:[%s25 + $0x188] sm:$0xff]
      %v3045 = vld [vmem:[%s25 + $0x190] sm:$0xff]
      %v3046 = vld [vmem:[%s25 + $0x198] sm:$0xff]
      %v3047 = vld [vmem:[%s25 + $0x1a0] sm:$0xff]
      %v3048 = vld [vmem:[%s25 + $0x1a8] sm:$0xff]
      %v3049 = vld [vmem:[%s25 + $0x1b0] sm:$0xff]
      %v3050 = vld [vmem:[%s25 + $0x1b8] sm:$0xff]
      %v3051 = vld [vmem:[%s25 + $0x1c0] sm:$0xff]
      %v3052 = vld [vmem:[%s25 + $0x1c8] sm:$0xff]
      %v3053 = vld [vmem:[%s25 + $0x1d0] sm:$0xff]
      %v3054 = vld [vmem:[%s25 + $0x1d8] sm:$0xff]
      %v3055 = vld [vmem:[%s25 + $0x1e0] sm:$0xff]
      %v3056 = vld [vmem:[%s25 + $0x1e8] sm:$0xff]
      %v3057 = vld [vmem:[%s25 + $0x1f0] sm:$0xff]
      %v3058 = vld [vmem:[%s25 + $0x1f8] sm:$0xff]
      %v3059 = vld [vmem:[%s25 + $0x200] sm:$0xff]
      %v3060 = vld [vmem:[%s25 + $0x208] sm:$0xff]
      %v3061 = vld [vmem:[%s25 + $0x210] sm:$0xff]
      %v3062 = vld [vmem:[%s25 + $0x218] sm:$0xff]
      %v3063 = vld [vmem:[%s25 + $0x220] sm:$0xff]
      %v3064 = vld [vmem:[%s25 + $0x228] sm:$0xff]
      %v3065 = vld [vmem:[%s25 + $0x230] sm:$0xff]
      %v3066 = vld [vmem:[%s25 + $0x238] sm:$0xff]
      %v3067 = vld [vmem:[%s25 + $0x240] sm:$0xff]
      %v3068 = vld [vmem:[%s25 + $0x248] sm:$0xff]
      %v3069 = vld [vmem:[%s25 + $0x250] sm:$0xff]
      %v3070 = vld [vmem:[%s25 + $0x258] sm:$0xff]
      %v3071 = vld [vmem:[%s25 + $0x260] sm:$0xff]
      %v3072 = vld [vmem:[%s25 + $0x268] sm:$0xff]
      %v3073 = vld [vmem:[%s25 + $0x270] sm:$0xff]
      %v3074 = vld [vmem:[%s25 + $0x278] sm:$0xff]
      %v3075 = vld [vmem:[%s25 + $0x280] sm:$0xff]
      %v3076 = vld [vmem:[%s25 + $0x288] sm:$0xff]
      %v3077 = vld [vmem:[%s25 + $0x290] sm:$0xff]
      %v3078 = vld [vmem:[%s25 + $0x298] sm:$0xff]
      %v3079 = vld [vmem:[%s25 + $0x2a0] sm:$0xff]
      %v3080 = vld [vmem:[%s25 + $0x2a8] sm:$0xff]
      %v3081 = vld [vmem:[%s25 + $0x2b0] sm:$0xff]
      %v3082 = vld [vmem:[%s25 + $0x2b8] sm:$0xff]
      %v3083 = vld [vmem:[%s25 + $0x2c0] sm:$0xff]
      %v3084 = vld [vmem:[%s25 + $0x2c8] sm:$0xff]
      %v3085 = vld [vmem:[%s25 + $0x2d0] sm:$0xff]
      %v3086 = vld [vmem:[%s25 + $0x2d8] sm:$0xff]
      %v3087 = vld [vmem:[%s25 + $0x2e0] sm:$0xff]
      %v3088 = vld [vmem:[%s25 + $0x2e8] sm:$0xff]
      %v3089 = vld [vmem:[%s25 + $0x2f0] sm:$0xff]
      %v3090 = vld [vmem:[%s25 + $0x2f8] sm:$0xff]
      %v3091 = vld [vmem:[%s25 + $0x300] sm:$0xff]
      %v3092 = vld [vmem:[%s25 + $0x308] sm:$0xff]
      %v3093 = vld [vmem:[%s25 + $0x310] sm:$0xff]
      %v3094 = vld [vmem:[%s25 + $0x318] sm:$0xff]
      %v3095 = vld [vmem:[%s25 + $0x320] sm:$0xff]
      %v3096 = vld [vmem:[%s25 + $0x328] sm:$0xff]
      %v3097 = vld [vmem:[%s25 + $0x330] sm:$0xff]
      %v3098 = vld [vmem:[%s25 + $0x338] sm:$0xff]
      %v3099 = vld [vmem:[%s25 + $0x340] sm:$0xff]
      %v3100 = vld [vmem:[%s25 + $0x348] sm:$0xff]
      %v3101 = vld [vmem:[%s25 + $0x350] sm:$0xff]
      %v3102 = vld [vmem:[%s25 + $0x358] sm:$0xff]
      %v3103 = vld [vmem:[%s25 + $0x360] sm:$0xff]
      %v3104 = vld [vmem:[%s25 + $0x368] sm:$0xff]
      %v3105 = vld [vmem:[%s25 + $0x370] sm:$0xff]
      %v3106 = vld [vmem:[%s25 + $0x378] sm:$0xff]
      %v3107 = vld [vmem:[%s25 + $0x380] sm:$0xff]
      %v3108 = vld [vmem:[%s25 + $0x388] sm:$0xff]
      %v3109 = vld [vmem:[%s25 + $0x390] sm:$0xff]
      %v3110 = vld [vmem:[%s25 + $0x398] sm:$0xff]
      %v3111 = vld [vmem:[%s25 + $0x3a0] sm:$0xff]
      %v3112 = vld [vmem:[%s25 + $0x3a8] sm:$0xff]
      %v3113 = vld [vmem:[%s25 + $0x3b0] sm:$0xff]
      %v3114 = vld [vmem:[%s25 + $0x3b8] sm:$0xff]
      %v3115 = vld [vmem:[%s25 + $0x3c0] sm:$0xff]
      %v3116 = vld [vmem:[%s25 + $0x3c8] sm:$0xff]
      %v3117 = vld [vmem:[%s25 + $0x3d0] sm:$0xff]
      %v3118 = vld [vmem:[%s25 + $0x3d8] sm:$0xff]
      %v3119 = vld [vmem:[%s25 + $0x3e0] sm:$0xff]
      %v3120 = vld [vmem:[%s25 + $0x3e8] sm:$0xff]
      %v3121 = vld [vmem:[%s25 + $0x3f0] sm:$0xff]
      %v3122 = vld [vmem:[%s25 + $0x3f8] sm:$0xff]
      %v3123 = vld [vmem:[%s25 + $0x400] sm:$0xff]
      %v3124 = vld [vmem:[%s25 + $0x408] sm:$0xff]
      %v3125 = vld [vmem:[%s25 + $0x410] sm:$0xff]
      %v3126 = vld [vmem:[%s25 + $0x418] sm:$0xff]
      %v3127 = vld [vmem:[%s25 + $0x420] sm:$0xff]
      %v3128 = vld [vmem:[%s25 + $0x428] sm:$0xff]
      %v3129 = vld [vmem:[%s25 + $0x430] sm:$0xff]
      %v3130 = vld [vmem:[%s25 + $0x438] sm:$0xff]
      %v3131 = vld [vmem:[%s25 + $0x440] sm:$0xff]
      %v3132 = vld [vmem:[%s25 + $0x448] sm:$0xff]
      %v3133 = vld [vmem:[%s25 + $0x450] sm:$0xff]
      %v3134 = vld [vmem:[%s25 + $0x458] sm:$0xff]
      %v3135 = vld [vmem:[%s25 + $0x460] sm:$0xff]
      %v3136 = vld [vmem:[%s25 + $0x468] sm:$0xff]
      %v3137 = vld [vmem:[%s25 + $0x470] sm:$0xff]
      %v3138 = vld [vmem:[%s25 + $0x478] sm:$0xff]
      %v3139 = vld [vmem:[%s25 + $0x480] sm:$0xff]
      %v3140 = vld [vmem:[%s25 + $0x488] sm:$0xff]
      %v3141 = vld [vmem:[%s25 + $0x490] sm:$0xff]
      %v3142 = vld [vmem:[%s25 + $0x498] sm:$0xff]
      %v3143 = vld [vmem:[%s25 + $0x4a0] sm:$0xff]
      %v3144 = vld [vmem:[%s25 + $0x4a8] sm:$0xff]
      %v3145 = vld [vmem:[%s25 + $0x4b0] sm:$0xff]
      %v3146 = vld [vmem:[%s25 + $0x4b8] sm:$0xff]
      %v3147 = vld [vmem:[%s25 + $0x4c0] sm:$0xff]
      %v3148 = vld [vmem:[%s25 + $0x4c8] sm:$0xff]
      %v3149 = vld [vmem:[%s25 + $0x4d0] sm:$0xff]
      %v3150 = vld [vmem:[%s25 + $0x4d8] sm:$0xff]
      %v3151 = vld [vmem:[%s25 + $0x4e0] sm:$0xff]
      %v3152 = vld [vmem:[%s25 + $0x4e8] sm:$0xff]
      %v3153 = vld [vmem:[%s25 + $0x4f0] sm:$0xff]
      %v3154 = vld [vmem:[%s25 + $0x4f8] sm:$0xff]
      %v3155 = vld [vmem:[%s25 + $0x500] sm:$0xff]
      %v3156 = vld [vmem:[%s25 + $0x508] sm:$0xff]
      %v3157 = vld [vmem:[%s25 + $0x510] sm:$0xff]
      %v3158 = vld [vmem:[%s25 + $0x518] sm:$0xff]
      %v3159 = vld [vmem:[%s25 + $0x520] sm:$0xff]
      %v3160 = vld [vmem:[%s25 + $0x528] sm:$0xff]
      %v3161 = vld [vmem:[%s25 + $0x530] sm:$0xff]
      %v3162 = vld [vmem:[%s25 + $0x538] sm:$0xff]
      %v3163 = vld [vmem:[%s25 + $0x540] sm:$0xff]
      %v3164 = vld [vmem:[%s25 + $0x548] sm:$0xff]
      %v3165 = vld [vmem:[%s25 + $0x550] sm:$0xff]
      %v3166 = vld [vmem:[%s25 + $0x558] sm:$0xff]
      %v3167 = vld [vmem:[%s25 + $0x560] sm:$0xff]
      %v3168 = vld [vmem:[%s25 + $0x568] sm:$0xff]
      %v3169 = vld [vmem:[%s25 + $0x570] sm:$0xff]
      %v3170 = vld [vmem:[%s25 + $0x578] sm:$0xff]
      %v3171 = vld [vmem:[%s25 + $0x580] sm:$0xff]
      %v3172 = vld [vmem:[%s25 + $0x588] sm:$0xff]
      %v3173 = vld [vmem:[%s25 + $0x590] sm:$0xff]
      %v3174 = vld [vmem:[%s25 + $0x598] sm:$0xff]
      %v3175 = vld [vmem:[%s25 + $0x5a0] sm:$0xff]
      %v3176 = vld [vmem:[%s25 + $0x5a8] sm:$0xff]
      %v3177 = vld [vmem:[%s25 + $0x5b0] sm:$0xff]
      %v3178 = vld [vmem:[%s25 + $0x5b8] sm:$0xff]
      %v3179 = vld [vmem:[%s25 + $0x5c0] sm:$0xff]
      %v3180 = vld [vmem:[%s25 + $0x5c8] sm:$0xff]
      %v3181 = vld [vmem:[%s25 + $0x5d0] sm:$0xff]
      %v3182 = vld [vmem:[%s25 + $0x5d8] sm:$0xff]
      %v3183 = vld [vmem:[%s25 + $0x5e0] sm:$0xff]
      %v3184 = vld [vmem:[%s25 + $0x5e8] sm:$0xff]
      %v3185 = vld [vmem:[%s25 + $0x5f0] sm:$0xff]
      %v3186 = vld [vmem:[%s25 + $0x5f8] sm:$0xff]
      %v3187 = vld [vmem:[%s25 + $0x600] sm:$0xff]
      %v3188 = vld [vmem:[%s25 + $0x608] sm:$0xff]
      %v3189 = vld [vmem:[%s25 + $0x610] sm:$0xff]
      %v3190 = vld [vmem:[%s25 + $0x618] sm:$0xff]
      %v3191 = vld [vmem:[%s25 + $0x620] sm:$0xff]
      %v3192 = vld [vmem:[%s25 + $0x628] sm:$0xff]
      %v3193 = vld [vmem:[%s25 + $0x630] sm:$0xff]
      %v3194 = vld [vmem:[%s25 + $0x638] sm:$0xff]
      %v3195 = vld [vmem:[%s25 + $0x640] sm:$0xff]
      %v3196 = vld [vmem:[%s25 + $0x648] sm:$0xff]
      %v3197 = vld [vmem:[%s25 + $0x650] sm:$0xff]
      %v3198 = vld [vmem:[%s25 + $0x658] sm:$0xff]
      %v3199 = vld [vmem:[%s25 + $0x660] sm:$0xff]
      %v3200 = vld [vmem:[%s25 + $0x668] sm:$0xff]
      %v3201 = vld [vmem:[%s25 + $0x670] sm:$0xff]
      %v3202 = vld [vmem:[%s25 + $0x678] sm:$0xff]
      %v3203 = vld [vmem:[%s25 + $0x680] sm:$0xff]
      %v3204 = vld [vmem:[%s25 + $0x688] sm:$0xff]
      %v3205 = vld [vmem:[%s25 + $0x690] sm:$0xff]
      %v3206 = vld [vmem:[%s25 + $0x698] sm:$0xff]
      %v3207 = vld [vmem:[%s25 + $0x6a0] sm:$0xff]
      %v3208 = vld [vmem:[%s25 + $0x6a8] sm:$0xff]
      %v3209 = vld [vmem:[%s25 + $0x6b0] sm:$0xff]
      %v3210 = vld [vmem:[%s25 + $0x6b8] sm:$0xff]
      %v3211 = vld [vmem:[%s25 + $0x6c0] sm:$0xff]
      %v3212 = vld [vmem:[%s25 + $0x6c8] sm:$0xff]
      %v3213 = vld [vmem:[%s25 + $0x6d0] sm:$0xff]
      %v3214 = vld [vmem:[%s25 + $0x6d8] sm:$0xff]
      %v3215 = vld [vmem:[%s25 + $0x6e0] sm:$0xff]
      %v3216 = vld [vmem:[%s25 + $0x6e8] sm:$0xff]
      %v3217 = vld [vmem:[%s25 + $0x6f0] sm:$0xff]
      %v3218 = vld [vmem:[%s25 + $0x6f8] sm:$0xff]
      %v3219 = vld [vmem:[%s25 + $0x700] sm:$0xff]
      %v3220 = vld [vmem:[%s25 + $0x708] sm:$0xff]
      %v3221 = vld [vmem:[%s25 + $0x710] sm:$0xff]
      %v3222 = vld [vmem:[%s25 + $0x718] sm:$0xff]
      %v3223 = vld [vmem:[%s25 + $0x720] sm:$0xff]
      %v3224 = vld [vmem:[%s25 + $0x728] sm:$0xff]
      %v3225 = vld [vmem:[%s25 + $0x730] sm:$0xff]
      %v3226 = vld [vmem:[%s25 + $0x738] sm:$0xff]
      %v3227 = vld [vmem:[%s25 + $0x740] sm:$0xff]
      %v3228 = vld [vmem:[%s25 + $0x748] sm:$0xff]
      %v3229 = vld [vmem:[%s25 + $0x750] sm:$0xff]
      %v3230 = vld [vmem:[%s25 + $0x758] sm:$0xff]
      %v3231 = vld [vmem:[%s25 + $0x760] sm:$0xff]
      %v3232 = vld [vmem:[%s25 + $0x768] sm:$0xff]
      %v3233 = vld [vmem:[%s25 + $0x770] sm:$0xff]
      %v3234 = vld [vmem:[%s25 + $0x778] sm:$0xff]
      %v3235 = vld [vmem:[%s25 + $0x780] sm:$0xff]
      %v3236 = vld [vmem:[%s25 + $0x788] sm:$0xff]
      %v3237 = vld [vmem:[%s25 + $0x790] sm:$0xff]
      %v3238 = vld [vmem:[%s25 + $0x798] sm:$0xff]
      %v3239 = vld [vmem:[%s25 + $0x7a0] sm:$0xff]
      %v3240 = vld [vmem:[%s25 + $0x7a8] sm:$0xff]
      %v3241 = vld [vmem:[%s25 + $0x7b0] sm:$0xff]
      %v3242 = vld [vmem:[%s25 + $0x7b8] sm:$0xff]
      %v3243 = vld [vmem:[%s25 + $0x7c0] sm:$0xff]
      %v3244 = vld [vmem:[%s25 + $0x7c8] sm:$0xff]
      %v3245 = vld [vmem:[%s25 + $0x7d0] sm:$0xff]
      %v3246 = vld [vmem:[%s25 + $0x7d8] sm:$0xff]
      %v3247 = vld [vmem:[%s25 + $0x7e0] sm:$0xff]
      %v3248 = vld [vmem:[%s25 + $0x7e8] sm:$0xff]
      %v3249 = vld [vmem:[%s25 + $0x7f0] sm:$0xff]
      %v3250 = vld [vmem:[%s25 + $0x7f8] sm:$0xff]
      %3251 = vmatprep.subr.mxu0 %v2996
      %3252 = vmatpush1.msra.mxu0 %v2995
      %3253 = vmatprep.subr.mxu0 %v2998
      %3254 = vmatpush1.msra.mxu0 %v2997
      %3255 = vmatprep.subr.mxu0 %v3000
      %3256 = vmatpush1.msra.mxu0 %v2999
      %3257 = vmatprep.subr.mxu0 %v3002
      %3258 = vmatpush1.msra.mxu0 %v3001
      %3259 = vmatprep.subr.mxu0 %v3004
      %3260 = vmatpush1.msra.mxu0 %v3003
      %3261 = vmatprep.subr.mxu0 %v3006
      %3262 = vmatpush1.msra.mxu0 %v3005
      %3263 = vmatprep.subr.mxu0 %v3008
      %3264 = vmatpush1.msra.mxu0 %v3007
      %3265 = vmatprep.subr.mxu0 %v3010
      %3266 = vmatpush1.msra.mxu0 %v3009
      %3267 = vmatprep.subr.mxu0 %v3012
      %3268 = vmatpush1.msra.mxu0 %v3011
      %3269 = vmatprep.subr.mxu0 %v3014
      %3270 = vmatpush1.msra.mxu0 %v3013
      %3271 = vmatprep.subr.mxu0 %v3016
      %3272 = vmatpush1.msra.mxu0 %v3015
      %3273 = vmatprep.subr.mxu0 %v3018
      %3274 = vmatpush1.msra.mxu0 %v3017
      %3275 = vmatprep.subr.mxu0 %v3020
      %3276 = vmatpush1.msra.mxu0 %v3019
      %3277 = vmatprep.subr.mxu0 %v3022
      %3278 = vmatpush1.msra.mxu0 %v3021
      %3279 = vmatprep.subr.mxu0 %v3024
      %3280 = vmatpush1.msra.mxu0 %v3023
      %3281 = vmatprep.subr.mxu0 %v3026
      %3282 = vmatpush1.msra.mxu0 %v3025
      %3283 = vmatprep.subr.mxu0 %v3028
      %3284 = vmatpush1.msra.mxu0 %v3027
      %3285 = vmatprep.subr.mxu0 %v3030
      %3286 = vmatpush1.msra.mxu0 %v3029
      %3287 = vmatprep.subr.mxu0 %v3032
      %3288 = vmatpush1.msra.mxu0 %v3031
      %3289 = vmatprep.subr.mxu0 %v3034
      %3290 = vmatpush1.msra.mxu0 %v3033
      %3291 = vmatprep.subr.mxu0 %v3036
      %3292 = vmatpush1.msra.mxu0 %v3035
      %3293 = vmatprep.subr.mxu0 %v3038
      %3294 = vmatpush1.msra.mxu0 %v3037
      %3295 = vmatprep.subr.mxu0 %v3040
      %3296 = vmatpush1.msra.mxu0 %v3039
      %3297 = vmatprep.subr.mxu0 %v3042
      %3298 = vmatpush1.msra.mxu0 %v3041
      %3299 = vmatprep.subr.mxu0 %v3044
      %3300 = vmatpush1.msra.mxu0 %v3043
      %3301 = vmatprep.subr.mxu0 %v3046
      %3302 = vmatpush1.msra.mxu0 %v3045
      %3303 = vmatprep.subr.mxu0 %v3048
      %3304 = vmatpush1.msra.mxu0 %v3047
      %3305 = vmatprep.subr.mxu0 %v3050
      %3306 = vmatpush1.msra.mxu0 %v3049
      %3307 = vmatprep.subr.mxu0 %v3052
      %3308 = vmatpush1.msra.mxu0 %v3051
      %3309 = vmatprep.subr.mxu0 %v3054
      %3310 = vmatpush1.msra.mxu0 %v3053
      %3311 = vmatprep.subr.mxu0 %v3056
      %3312 = vmatpush1.msra.mxu0 %v3055
      %3313 = vmatprep.subr.mxu0 %v3058
      %3314 = vmatpush1.msra.mxu0 %v3057
      %3315 = vmatprep.mubr.f32.mxu0 %v2988
      %3316 = vmatmul.mubr.f32.gmra.mrb[0].mxu0 %v2987
      %v3317 = vpop.f32.mrb[0].mxu0
      %v3318 = vadd.f32 0.0, %v3317
      %v3319 = vpop.f32.mrb[0].mxu0
      %v3320 = vadd.f32 0.0, %v3319
      %3321 = vdwg.mxu0
      %3322 = vmatprep.subr.mxu0 %v3060
      %3323 = vmatpush1.msra.mxu0 %v3059
      %3324 = vmatprep.subr.mxu0 %v3062
      %3325 = vmatpush1.msra.mxu0 %v3061
      %3326 = vmatprep.subr.mxu0 %v3064
      %3327 = vmatpush1.msra.mxu0 %v3063
      %3328 = vmatprep.subr.mxu0 %v3066
      %3329 = vmatpush1.msra.mxu0 %v3065
      %3330 = vmatprep.subr.mxu0 %v3068
      %3331 = vmatpush1.msra.mxu0 %v3067
      %3332 = vmatprep.subr.mxu0 %v3070
      %3333 = vmatpush1.msra.mxu0 %v3069
      %3334 = vmatprep.subr.mxu0 %v3072
      %3335 = vmatpush1.msra.mxu0 %v3071
      %3336 = vmatprep.subr.mxu0 %v3074
      %3337 = vmatpush1.msra.mxu0 %v3073
      %3338 = vmatprep.subr.mxu0 %v3076
      %3339 = vmatpush1.msra.mxu0 %v3075
      %3340 = vmatprep.subr.mxu0 %v3078
      %3341 = vmatpush1.msra.mxu0 %v3077
      %3342 = vmatprep.subr.mxu0 %v3080
      %3343 = vmatpush1.msra.mxu0 %v3079
      %3344 = vmatprep.subr.mxu0 %v3082
      %3345 = vmatpush1.msra.mxu0 %v3081
      %3346 = vmatprep.subr.mxu0 %v3084
      %3347 = vmatpush1.msra.mxu0 %v3083
      %3348 = vmatprep.subr.mxu0 %v3086
      %3349 = vmatpush1.msra.mxu0 %v3085
      %3350 = vmatprep.subr.mxu0 %v3088
      %3351 = vmatpush1.msra.mxu0 %v3087
      %3352 = vmatprep.subr.mxu0 %v3090
      %3353 = vmatpush1.msra.mxu0 %v3089
      %3354 = vmatprep.subr.mxu0 %v3092
      %3355 = vmatpush1.msra.mxu0 %v3091
      %3356 = vmatprep.subr.mxu0 %v3094
      %3357 = vmatpush1.msra.mxu0 %v3093
      %3358 = vmatprep.subr.mxu0 %v3096
      %3359 = vmatpush1.msra.mxu0 %v3095
      %3360 = vmatprep.subr.mxu0 %v3098
      %3361 = vmatpush1.msra.mxu0 %v3097
      %3362 = vmatprep.subr.mxu0 %v3100
      %3363 = vmatpush1.msra.mxu0 %v3099
      %3364 = vmatprep.subr.mxu0 %v3102
      %3365 = vmatpush1.msra.mxu0 %v3101
      %3366 = vmatprep.subr.mxu0 %v3104
      %3367 = vmatpush1.msra.mxu0 %v3103
      %3368 = vmatprep.subr.mxu0 %v3106
      %3369 = vmatpush1.msra.mxu0 %v3105
      %3370 = vmatprep.subr.mxu0 %v3108
      %3371 = vmatpush1.msra.mxu0 %v3107
      %3372 = vmatprep.subr.mxu0 %v3110
      %3373 = vmatpush1.msra.mxu0 %v3109
      %3374 = vmatprep.subr.mxu0 %v3112
      %3375 = vmatpush1.msra.mxu0 %v3111
      %3376 = vmatprep.subr.mxu0 %v3114
      %3377 = vmatpush1.msra.mxu0 %v3113
      %3378 = vmatprep.subr.mxu0 %v3116
      %3379 = vmatpush1.msra.mxu0 %v3115
      %3380 = vmatprep.subr.mxu0 %v3118
      %3381 = vmatpush1.msra.mxu0 %v3117
      %3382 = vmatprep.subr.mxu0 %v3120
      %3383 = vmatpush1.msra.mxu0 %v3119
      %3384 = vmatprep.subr.mxu0 %v3122
      %3385 = vmatpush1.msra.mxu0 %v3121
      %3386 = vmatprep.mubr.f32.mxu0 %v2990
      %3387 = vmatmul.mubr.f32.gmra.mrb[0].mxu0 %v2989
      %v3388 = vpop.f32.mrb[0].mxu0
      %v3389 = vadd.f32 %v3318, %v3388
      %v3390 = vpop.f32.mrb[0].mxu0
      %v3391 = vadd.f32 %v3320, %v3390
      %3392 = vdwg.mxu0
      %3393 = vmatprep.subr.mxu0 %v3124
      %3394 = vmatpush1.msra.mxu0 %v3123
      %3395 = vmatprep.subr.mxu0 %v3126
      %3396 = vmatpush1.msra.mxu0 %v3125
      %3397 = vmatprep.subr.mxu0 %v3128
      %3398 = vmatpush1.msra.mxu0 %v3127
      %3399 = vmatprep.subr.mxu0 %v3130
      %3400 = vmatpush1.msra.mxu0 %v3129
      %3401 = vmatprep.subr.mxu0 %v3132
      %3402 = vmatpush1.msra.mxu0 %v3131
      %3403 = vmatprep.subr.mxu0 %v3134
      %3404 = vmatpush1.msra.mxu0 %v3133
      %3405 = vmatprep.subr.mxu0 %v3136
      %3406 = vmatpush1.msra.mxu0 %v3135
      %3407 = vmatprep.subr.mxu0 %v3138
      %3408 = vmatpush1.msra.mxu0 %v3137
      %3409 = vmatprep.subr.mxu0 %v3140
      %3410 = vmatpush1.msra.mxu0 %v3139
      %3411 = vmatprep.subr.mxu0 %v3142
      %3412 = vmatpush1.msra.mxu0 %v3141
      %3413 = vmatprep.subr.mxu0 %v3144
      %3414 = vmatpush1.msra.mxu0 %v3143
      %3415 = vmatprep.subr.mxu0 %v3146
      %3416 = vmatpush1.msra.mxu0 %v3145
      %3417 = vmatprep.subr.mxu0 %v3148
      %3418 = vmatpush1.msra.mxu0 %v3147
      %3419 = vmatprep.subr.mxu0 %v3150
      %3420 = vmatpush1.msra.mxu0 %v3149
      %3421 = vmatprep.subr.mxu0 %v3152
      %3422 = vmatpush1.msra.mxu0 %v3151
      %3423 = vmatprep.subr.mxu0 %v3154
      %3424 = vmatpush1.msra.mxu0 %v3153
      %3425 = vmatprep.subr.mxu0 %v3156
      %3426 = vmatpush1.msra.mxu0 %v3155
      %3427 = vmatprep.subr.mxu0 %v3158
      %3428 = vmatpush1.msra.mxu0 %v3157
      %3429 = vmatprep.subr.mxu0 %v3160
      %3430 = vmatpush1.msra.mxu0 %v3159
      %3431 = vmatprep.subr.mxu0 %v3162
      %3432 = vmatpush1.msra.mxu0 %v3161
      %3433 = vmatprep.subr.mxu0 %v3164
      %3434 = vmatpush1.msra.mxu0 %v3163
      %3435 = vmatprep.subr.mxu0 %v3166
      %3436 = vmatpush1.msra.mxu0 %v3165
      %3437 = vmatprep.subr.mxu0 %v3168
      %3438 = vmatpush1.msra.mxu0 %v3167
      %3439 = vmatprep.subr.mxu0 %v3170
      %3440 = vmatpush1.msra.mxu0 %v3169
      %3441 = vmatprep.subr.mxu0 %v3172
      %3442 = vmatpush1.msra.mxu0 %v3171
      %3443 = vmatprep.subr.mxu0 %v3174
      %3444 = vmatpush1.msra.mxu0 %v3173
      %3445 = vmatprep.subr.mxu0 %v3176
      %3446 = vmatpush1.msra.mxu0 %v3175
      %3447 = vmatprep.subr.mxu0 %v3178
      %3448 = vmatpush1.msra.mxu0 %v3177
      %3449 = vmatprep.subr.mxu0 %v3180
      %3450 = vmatpush1.msra.mxu0 %v3179
      %3451 = vmatprep.subr.mxu0 %v3182
      %3452 = vmatpush1.msra.mxu0 %v3181
      %3453 = vmatprep.subr.mxu0 %v3184
      %3454 = vmatpush1.msra.mxu0 %v3183
      %3455 = vmatprep.subr.mxu0 %v3186
      %3456 = vmatpush1.msra.mxu0 %v3185
      %3457 = vmatprep.mubr.f32.mxu0 %v2992
      %3458 = vmatmul.mubr.f32.gmra.mrb[0].mxu0 %v2991
      %v3459 = vpop.f32.mrb[0].mxu0
      %v3460 = vadd.f32 %v3389, %v3459
      %v3461 = vpop.f32.mrb[0].mxu0
      %v3462 = vadd.f32 %v3391, %v3461
      %3463 = vdwg.mxu0
      %3464 = vmatprep.subr.mxu0 %v3188
      %3465 = vmatpush1.msra.mxu0 %v3187
      %3466 = vmatprep.subr.mxu0 %v3190
      %3467 = vmatpush1.msra.mxu0 %v3189
      %3468 = vmatprep.subr.mxu0 %v3192
      %3469 = vmatpush1.msra.mxu0 %v3191
      %3470 = vmatprep.subr.mxu0 %v3194
      %3471 = vmatpush1.msra.mxu0 %v3193
      %3472 = vmatprep.subr.mxu0 %v3196
      %3473 = vmatpush1.msra.mxu0 %v3195
      %3474 = vmatprep.subr.mxu0 %v3198
      %3475 = vmatpush1.msra.mxu0 %v3197
      %3476 = vmatprep.subr.mxu0 %v3200
      %3477 = vmatpush1.msra.mxu0 %v3199
      %3478 = vmatprep.subr.mxu0 %v3202
      %3479 = vmatpush1.msra.mxu0 %v3201
      %3480 = vmatprep.subr.mxu0 %v3204
      %3481 = vmatpush1.msra.mxu0 %v3203
      %3482 = vmatprep.subr.mxu0 %v3206
      %3483 = vmatpush1.msra.mxu0 %v3205
      %3484 = vmatprep.subr.mxu0 %v3208
      %3485 = vmatpush1.msra.mxu0 %v3207
      %3486 = vmatprep.subr.mxu0 %v3210
      %3487 = vmatpush1.msra.mxu0 %v3209
      %3488 = vmatprep.subr.mxu0 %v3212
      %3489 = vmatpush1.msra.mxu0 %v3211
      %3490 = vmatprep.subr.mxu0 %v3214
      %3491 = vmatpush1.msra.mxu0 %v3213
      %3492 = vmatprep.subr.mxu0 %v3216
      %3493 = vmatpush1.msra.mxu0 %v3215
      %3494 = vmatprep.subr.mxu0 %v3218
      %3495 = vmatpush1.msra.mxu0 %v3217
      %3496 = vmatprep.subr.mxu0 %v3220
      %3497 = vmatpush1.msra.mxu0 %v3219
      %3498 = vmatprep.subr.mxu0 %v3222
      %3499 = vmatpush1.msra.mxu0 %v3221
      %3500 = vmatprep.subr.mxu0 %v3224
      %3501 = vmatpush1.msra.mxu0 %v3223
      %3502 = vmatprep.subr.mxu0 %v3226
      %3503 = vmatpush1.msra.mxu0 %v3225
      %3504 = vmatprep.subr.mxu0 %v3228
      %3505 = vmatpush1.msra.mxu0 %v3227
      %3506 = vmatprep.subr.mxu0 %v3230
      %3507 = vmatpush1.msra.mxu0 %v3229
      %3508 = vmatprep.subr.mxu0 %v3232
      %3509 = vmatpush1.msra.mxu0 %v3231
      %3510 = vmatprep.subr.mxu0 %v3234
      %3511 = vmatpush1.msra.mxu0 %v3233
      %3512 = vmatprep.subr.mxu0 %v3236
      %3513 = vmatpush1.msra.mxu0 %v3235
      %3514 = vmatprep.subr.mxu0 %v3238
      %3515 = vmatpush1.msra.mxu0 %v3237
      %3516 = vmatprep.subr.mxu0 %v3240
      %3517 = vmatpush1.msra.mxu0 %v3239
      %3518 = vmatprep.subr.mxu0 %v3242
      %3519 = vmatpush1.msra.mxu0 %v3241
      %3520 = vmatprep.subr.mxu0 %v3244
      %3521 = vmatpush1.msra.mxu0 %v3243
      %3522 = vmatprep.subr.mxu0 %v3246
      %3523 = vmatpush1.msra.mxu0 %v3245
      %3524 = vmatprep.subr.mxu0 %v3248
      %3525 = vmatpush1.msra.mxu0 %v3247
      %3526 = vmatprep.subr.mxu0 %v3250
      %3527 = vmatpush1.msra.mxu0 %v3249
      %3528 = vmatprep.mubr.f32.mxu0 %v2994
      %3529 = vmatmul.mubr.f32.gmra.mrb[0].mxu0 %v2993
      %v3530 = vpop.f32.mrb[0].mxu0
      %v3531 = vadd.f32 %v3460, %v3530
      %v3532 = vpop.f32.mrb[0].mxu0
      %v3533 = vadd.f32 %v3462, %v3532
      %3534 = vdwg.mxu0
      %vm3535 = vcmp.lt.s32.totalorder %v828, 0
      %v3536 = vsub.s32 0, %v828
      %v3537 = vsel %vm3535, %v3536, %v828
      %v3538 = vshrl.u32 %v3537, 4
      %v3539 = vand.u32 %v3537, 15
      %v3540 = vsub.s32 0, %v3539
      %v3541 = vsel %vm3535, %v3540, %v3539
      %vm3542 = vcmp.lt.s32.totalorder %v829, 0
      %v3543 = vsub.s32 0, %v829
      %v3544 = vsel %vm3542, %v3543, %v829
      %v3545 = vshrl.u32 %v3544, 4
      %v3546 = vand.u32 %v3544, 15
      %v3547 = vsub.s32 0, %v3546
      %v3548 = vsel %vm3542, %v3547, %v3546
      %vm3549 = vcmp.ne.s32.totalorder %v3541, 0
      %vm3550 = vcmp.ne.s32.totalorder %v3548, 0
      %vm3551 = vcmp.lt.s32.totalorder %v3541, 0
      %vm3552 = vcmp.lt.s32.totalorder %v3548, 0
      %vm3553 = vmand %vm3551, %vm3549
      %vm3554 = vmand %vm3552, %vm3550
      %v3555 = vadd.s32 %v3541, 16
      %v3556 = vadd.s32 %v3548, 16
      %v3557 = vsel %vm3553, %v3555, %v3541
      %v3558 = vsel %vm3554, %v3556, %v3548
      %3561 = vrot.lane.b32.xlu0 %v3531, 17
      %v3562 = vpop.permute.xlu0 %3561
      %3563 = vrot.lane.b32.xlu0 %v3533, 17
      %v3564 = vpop.permute.xlu0 %3563
      %vm3565 = vcmask 138240
      %v3566 = vsel %vm3565, %v3562, %v3564
      %v3569 = vsel %vm3565, 0.0, %v3562
      %v3570 = vadd.s32 %v3557, 4294967295
      %v3571 = vadd.s32 %v3558, 4294967295
      %vm3572 = vcmp.ge.s32.totalorder %v3570, 0
      %vm3573 = vcmp.ge.s32.totalorder %v3571, 0
      %vm3574 = vcmp.lt.s32.totalorder %v3570, 16
      %vm3575 = vcmp.lt.s32.totalorder %v3571, 16
      %vm3576 = vmand %vm3572, %vm3574
      %vm3577 = vmand %vm3573, %vm3575
      %v3578 = vsel %vm3576, 1, 0
      %v3579 = vsel %vm3577, 1, 0
      %vm3580 = vcmp.eq.s32.totalorder %v3578, 1
      %vm3581 = vcmp.eq.s32.totalorder %v3579, 1
      %v3582 = vsel %vm3580, %v3569, 0.0
      %v3583 = vsel %vm3581, %v3566, 0.0
      %3584 = vrot.lane.b32.xlu0 %v3531, 16
      %v3585 = vpop.permute.xlu0 %3584
      %3586 = vrot.lane.b32.xlu0 %v3533, 16
      %v3587 = vpop.permute.xlu0 %3586
      %v3588 = vsel %vm2655, %v3585, %v3587
      %v3591 = vsel %vm2655, 0.0, %v3585
      %3592 = vrot.lane.b32.xlu0 %v3531, 15
      %v3593 = vpop.permute.xlu0 %3592
      %3594 = vrot.lane.b32.xlu0 %v3533, 15
      %v3595 = vpop.permute.xlu0 %3594
      %vm3596 = vcmask 121856
      %v3597 = vsel %vm3596, %v3593, %v3595
      %v3600 = vsel %vm3596, 0.0, %v3593
      %v3601 = vadd.s32 %v3557, 1
      %v3602 = vadd.s32 %v3558, 1
      %vm3603 = vcmp.ge.s32.totalorder %v3601, 0
      %vm3604 = vcmp.ge.s32.totalorder %v3602, 0
      %vm3605 = vcmp.lt.s32.totalorder %v3601, 16
      %vm3606 = vcmp.lt.s32.totalorder %v3602, 16
      %vm3607 = vmand %vm3603, %vm3605
      %vm3608 = vmand %vm3604, %vm3606
      %v3609 = vsel %vm3607, 1, 0
      %v3610 = vsel %vm3608, 1, 0
      %vm3611 = vcmp.eq.s32.totalorder %v3609, 1
      %vm3612 = vcmp.eq.s32.totalorder %v3610, 1
      %v3613 = vsel %vm3611, %v3600, 0.0
      %v3614 = vsel %vm3612, %v3597, 0.0
      %3615 = vrot.lane.b32.xlu0 %v3531, 1
      %v3616 = vpop.permute.xlu0 %3615
      %3617 = vrot.lane.b32.xlu0 %v3533, 1
      %v3618 = vpop.permute.xlu0 %3617
      %v3619 = vsel %vm1167, %v3616, %v3618
      %v3622 = vsel %vm1167, 0.0, %v3616
      %v3623 = vsel %vm3580, %v3622, 0.0
      %v3624 = vsel %vm3581, %v3619, 0.0
      %3625 = vrot.lane.b32.xlu0 %v3531, 127
      %v3626 = vpop.permute.xlu0 %3625
      %3627 = vrot.lane.b32.xlu0 %v3533, 127
      %v3628 = vpop.permute.xlu0 %3627
      %v3629 = vsel %vm1208, %v3626, %v3628
      %v3632 = vsel %vm1208, %v3628, 0.0
      %v3633 = vsel %vm3611, %v3629, 0.0
      %v3634 = vsel %vm3612, %v3632, 0.0
      %3635 = vrot.lane.b32.xlu0 %v3531, 113
      %v3636 = vpop.permute.xlu0 %3635
      %3637 = vrot.lane.b32.xlu0 %v3533, 113
      %v3638 = vpop.permute.xlu0 %3637
      %vm3639 = vcmask 924672
      %v3640 = vsel %vm3639, %v3636, %v3638
      %v3643 = vsel %vm3639, %v3638, 0.0
      %v3644 = vsel %vm3580, %v3640, 0.0
      %v3645 = vsel %vm3581, %v3643, 0.0
      %3646 = vrot.lane.b32.xlu0 %v3531, 112
      %v3647 = vpop.permute.xlu0 %3646
      %3648 = vrot.lane.b32.xlu0 %v3533, 112
      %v3649 = vpop.permute.xlu0 %3648
      %vm3650 = vcmask 916480
      %v3651 = vsel %vm3650, %v3647, %v3649
      %v3654 = vsel %vm3650, %v3649, 0.0
      %3655 = vrot.lane.b32.xlu0 %v3531, 111
      %v3656 = vpop.permute.xlu0 %3655
      %3657 = vrot.lane.b32.xlu0 %v3533, 111
      %v3658 = vpop.permute.xlu0 %3657
      %vm3659 = vcmask 908288
      %v3660 = vsel %vm3659, %v3656, %v3658
      %v3663 = vsel %vm3659, %v3658, 0.0
      %v3664 = vsel %vm3611, %v3660, 0.0
      %v3665 = vsel %vm3612, %v3663, 0.0
      %v3666 = vld [vmem:[%s10] sm:$0xff]
      %v3668 = vsel %vm1349, %v3666, 0
      %3670 = vmatprep.subr.mxu0 %v3583
      %3671 = vmatpush1.msra.mxu0 %v3582
      %3672 = vmatprep.subr.mxu0 %v3588
      %3673 = vmatpush1.msra.mxu0 %v3591
      %3674 = vmatprep.subr.mxu0 %v3614
      %3675 = vmatpush1.msra.mxu0 %v3613
      %3676 = vmatprep.subr.mxu0 %v3624
      %3677 = vmatpush1.msra.mxu0 %v3623
      %3678 = vmatprep.subr.mxu0 %v3533
      %3679 = vmatpush1.msra.mxu0 %v3531
      %3680 = vmatprep.subr.mxu0 %v3634
      %3681 = vmatpush1.msra.mxu0 %v3633
      %3682 = vmatprep.subr.mxu0 %v3645
      %3683 = vmatpush1.msra.mxu0 %v3644
      %3684 = vmatprep.subr.mxu0 %v3654
      %3685 = vmatpush1.msra.mxu0 %v3651
      %3686 = vmatprep.subr.mxu0 %v3665
      %3687 = vmatpush1.msra.mxu0 %v3664
      %3688 = vmatprep.subr.mxu0 0.0
      %3689 = vmatpush1.msra.mxu0 0.0
      %3690 = vmatprep.subr.mxu0 0.0
      %3691 = vmatpush1.msra.mxu0 0.0
      %3692 = vmatprep.subr.mxu0 0.0
      %3693 = vmatpush1.msra.mxu0 0.0
      %3694 = vmatprep.subr.mxu0 0.0
      %3695 = vmatpush1.msra.mxu0 0.0
      %3696 = vmatprep.subr.mxu0 0.0
      %3697 = vmatpush1.msra.mxu0 0.0
      %3698 = vmatprep.subr.mxu0 0.0
      %3699 = vmatpush1.msra.mxu0 0.0
      %3700 = vmatprep.subr.mxu0 0.0
      %3701 = vmatpush1.msra.mxu0 0.0
      %3702 = vmatprep.subr.mxu0 0.0
      %3703 = vmatpush1.msra.mxu0 0.0
      %3704 = vmatprep.subr.mxu0 0.0
      %3705 = vmatpush1.msra.mxu0 0.0
      %3706 = vmatprep.subr.mxu0 0.0
      %3707 = vmatpush1.msra.mxu0 0.0
      %3708 = vmatprep.subr.mxu0 0.0
      %3709 = vmatpush1.msra.mxu0 0.0
      %3710 = vmatprep.subr.mxu0 0.0
      %3711 = vmatpush1.msra.mxu0 0.0
      %3712 = vmatprep.subr.mxu0 0.0
      %3713 = vmatpush1.msra.mxu0 0.0
      %3714 = vmatprep.subr.mxu0 0.0
      %3715 = vmatpush1.msra.mxu0 0.0
      %3716 = vmatprep.subr.mxu0 0.0
      %3717 = vmatpush1.msra.mxu0 0.0
      %3718 = vmatprep.subr.mxu0 0.0
      %3719 = vmatpush1.msra.mxu0 0.0
      %3720 = vmatprep.subr.mxu0 0.0
      %3721 = vmatpush1.msra.mxu0 0.0
      %3722 = vmatprep.subr.mxu0 0.0
      %3723 = vmatpush1.msra.mxu0 0.0
      %3724 = vmatprep.subr.mxu0 0.0
      %3725 = vmatpush1.msra.mxu0 0.0
      %3726 = vmatprep.subr.mxu0 0.0
      %3727 = vmatpush1.msra.mxu0 0.0
      %3728 = vmatprep.subr.mxu0 0.0
      %3729 = vmatpush1.msra.mxu0 0.0
      %3730 = vmatprep.subr.mxu0 0.0
      %3731 = vmatpush1.msra.mxu0 0.0
      %3732 = vmatprep.subr.mxu0 0.0
      %3733 = vmatpush1.msra.mxu0 0.0
      %3734 = vmatprep.mubr.f32.mxu0 0.0
      %3735 = vmatmul.mubr.f32.gmra.mrb[0].mxu0 %v3668
      %v3736 = vpop.f32.mrb[0].mxu0
      %v3737 = vadd.f32 0.0, %v3736
      %v3738 = vpop.f32.mrb[0].mxu0
      %v3739 = vadd.f32 0.0, %v3738
      %3740 = vdwg.mxu0
      %v3741 = vld [vmem:[%s11] sm:$0xff]
      %3743 = vset.pattern.permute.xlu0 0
      %3744 = vperm.xlu0 %3743, %v3741
      %v3745 = vpop.permute.xlu0 %3744
      %v3747 = vmul.f32 %v3737, %v3745
      %v3748 = vmul.f32 %v3739, %v3745
      %v3749 = vld [vmem:[%s12] sm:$0xff]
      %3751 = vset.pattern.permute.xlu0 0
      %3752 = vperm.xlu0 %3751, %v3749
      %v3753 = vpop.permute.xlu0 %3752
      %v3755 = vadd.f32 %v3747, %v3753
      %v3756 = vadd.f32 %v3748, %v3753
      %vm3757 = vcmp.ge.f32.partialorder %v3755, 0.0
      %vm3758 = vcmp.ge.f32.partialorder %v3756, 0.0
      %v3759 = vmul.f32 %v3755, 0.01
      %v3760 = vmul.f32 %v3756, 0.01
      %v3761 = vsel %vm3757, %v3755, %v3759
      %v3762 = vsel %vm3758, %v3756, %v3760
      %3765 = vrot.lane.b32.xlu0 %v3761, 17
      %v3766 = vpop.permute.xlu0 %3765
      %3767 = vrot.lane.b32.xlu0 %v3762, 17
      %v3768 = vpop.permute.xlu0 %3767
      %v3769 = vsel %vm3565, %v3766, %v3768
      %v3772 = vsel %vm3565, 0.0, %v3766
      %v3773 = vsel %vm3580, %v3772, 0.0
      %v3774 = vsel %vm3581, %v3769, 0.0
      %3775 = vrot.lane.b32.xlu0 %v3761, 16
      %v3776 = vpop.permute.xlu0 %3775
      %3777 = vrot.lane.b32.xlu0 %v3762, 16
      %v3778 = vpop.permute.xlu0 %3777
      %v3779 = vsel %vm2655, %v3776, %v3778
      %v3782 = vsel %vm2655, 0.0, %v3776
      %3783 = vrot.lane.b32.xlu0 %v3761, 15
      %v3784 = vpop.permute.xlu0 %3783
      %3785 = vrot.lane.b32.xlu0 %v3762, 15
      %v3786 = vpop.permute.xlu0 %3785
      %v3787 = vsel %vm3596, %v3784, %v3786
      %v3790 = vsel %vm3596, 0.0, %v3784
      %v3791 = vsel %vm3611, %v3790, 0.0
      %v3792 = vsel %vm3612, %v3787, 0.0
      %3793 = vrot.lane.b32.xlu0 %v3761, 1
      %v3794 = vpop.permute.xlu0 %3793
      %3795 = vrot.lane.b32.xlu0 %v3762, 1
      %v3796 = vpop.permute.xlu0 %3795
      %v3797 = vsel %vm1167, %v3794, %v3796
      %v3800 = vsel %vm1167, 0.0, %v3794
      %v3801 = vsel %vm3580, %v3800, 0.0
      %v3802 = vsel %vm3581, %v3797, 0.0
      %3803 = vrot.lane.b32.xlu0 %v3761, 127
      %v3804 = vpop.permute.xlu0 %3803
      %3805 = vrot.lane.b32.xlu0 %v3762, 127
      %v3806 = vpop.permute.xlu0 %3805
      %v3807 = vsel %vm1208, %v3804, %v3806
      %v3810 = vsel %vm1208, %v3806, 0.0
      %v3811 = vsel %vm3611, %v3807, 0.0
      %v3812 = vsel %vm3612, %v3810, 0.0
      %3813 = vrot.lane.b32.xlu0 %v3761, 113
      %v3814 = vpop.permute.xlu0 %3813
      %3815 = vrot.lane.b32.xlu0 %v3762, 113
      %v3816 = vpop.permute.xlu0 %3815
      %v3817 = vsel %vm3639, %v3814, %v3816
      %v3820 = vsel %vm3639, %v3816, 0.0
      %v3821 = vsel %vm3580, %v3817, 0.0
      %v3822 = vsel %vm3581, %v3820, 0.0
      %3823 = vrot.lane.b32.xlu0 %v3761, 112
      %v3824 = vpop.permute.xlu0 %3823
      %3825 = vrot.lane.b32.xlu0 %v3762, 112
      %v3826 = vpop.permute.xlu0 %3825
      %v3827 = vsel %vm3650, %v3824, %v3826
      %v3830 = vsel %vm3650, %v3826, 0.0
      %3831 = vrot.lane.b32.xlu0 %v3761, 111
      %v3832 = vpop.permute.xlu0 %3831
      %3833 = vrot.lane.b32.xlu0 %v3762, 111
      %v3834 = vpop.permute.xlu0 %3833
      %v3835 = vsel %vm3659, %v3832, %v3834
      %v3838 = vsel %vm3659, %v3834, 0.0
      %v3839 = vsel %vm3611, %v3835, 0.0
      %v3840 = vsel %vm3612, %v3838, 0.0
      %v3841 = vld [vmem:[%s13] sm:$0xff]
      %v3842 = vld [vmem:[%s13 + $0x8] sm:$0xff]
      %v3844 = vsel %vm2655, %v3842, 0
      %3846 = vmatprep.subr.mxu0 %v3583
      %3847 = vmatpush1.msra.mxu0 %v3582
      %3848 = vmatprep.subr.mxu0 %v3774
      %3849 = vmatpush1.msra.mxu0 %v3773
      %3850 = vmatprep.subr.mxu0 %v3588
      %3851 = vmatpush1.msra.mxu0 %v3591
      %3852 = vmatprep.subr.mxu0 %v3779
      %3853 = vmatpush1.msra.mxu0 %v3782
      %3854 = vmatprep.subr.mxu0 %v3614
      %3855 = vmatpush1.msra.mxu0 %v3613
      %3856 = vmatprep.subr.mxu0 %v3792
      %3857 = vmatpush1.msra.mxu0 %v3791
      %3858 = vmatprep.subr.mxu0 %v3624
      %3859 = vmatpush1.msra.mxu0 %v3623
      %3860 = vmatprep.subr.mxu0 %v3802
      %3861 = vmatpush1.msra.mxu0 %v3801
      %3862 = vmatprep.subr.mxu0 %v3533
      %3863 = vmatpush1.msra.mxu0 %v3531
      %3864 = vmatprep.subr.mxu0 %v3762
      %3865 = vmatpush1.msra.mxu0 %v3761
      %3866 = vmatprep.subr.mxu0 %v3634
      %3867 = vmatpush1.msra.mxu0 %v3633
      %3868 = vmatprep.subr.mxu0 %v3812
      %3869 = vmatpush1.msra.mxu0 %v3811
      %3870 = vmatprep.subr.mxu0 %v3645
      %3871 = vmatpush1.msra.mxu0 %v3644
      %3872 = vmatprep.subr.mxu0 %v3822
      %3873 = vmatpush1.msra.mxu0 %v3821
      %3874 = vmatprep.subr.mxu0 %v3654
      %3875 = vmatpush1.msra.mxu0 %v3651
      %3876 = vmatprep.subr.mxu0 %v3830
      %3877 = vmatpush1.msra.mxu0 %v3827
      %3878 = vmatprep.subr.mxu0 %v3665
      %3879 = vmatpush1.msra.mxu0 %v3664
      %3880 = vmatprep.subr.mxu0 %v3840
      %3881 = vmatpush1.msra.mxu0 %v3839
      %3882 = vmatprep.subr.mxu0 0.0
      %3883 = vmatpush1.msra.mxu0 0.0
      %3884 = vmatprep.subr.mxu0 0.0
      %3885 = vmatpush1.msra.mxu0 0.0
      %3886 = vmatprep.subr.mxu0 0.0
      %3887 = vmatpush1.msra.mxu0 0.0
      %3888 = vmatprep.subr.mxu0 0.0
      %3889 = vmatpush1.msra.mxu0 0.0
      %3890 = vmatprep.subr.mxu0 0.0
      %3891 = vmatpush1.msra.mxu0 0.0
      %3892 = vmatprep.subr.mxu0 0.0
      %3893 = vmatpush1.msra.mxu0 0.0
      %3894 = vmatprep.subr.mxu0 0.0
      %3895 = vmatpush1.msra.mxu0 0.0
      %3896 = vmatprep.subr.mxu0 0.0
      %3897 = vmatpush1.msra.mxu0 0.0
      %3898 = vmatprep.subr.mxu0 0.0
      %3899 = vmatpush1.msra.mxu0 0.0
      %3900 = vmatprep.subr.mxu0 0.0
      %3901 = vmatpush1.msra.mxu0 0.0
      %3902 = vmatprep.subr.mxu0 0.0
      %3903 = vmatpush1.msra.mxu0 0.0
      %3904 = vmatprep.subr.mxu0 0.0
      %3905 = vmatpush1.msra.mxu0 0.0
      %3906 = vmatprep.subr.mxu0 0.0
      %3907 = vmatpush1.msra.mxu0 0.0
      %3908 = vmatprep.subr.mxu0 0.0
      %3909 = vmatpush1.msra.mxu0 0.0
      %3910 = vmatprep.mubr.f32.mxu0 %v3844
      %3911 = vmatmul.mubr.f32.gmra.mrb[0].mxu0 %v3841
      %v3912 = vpop.f32.mrb[0].mxu0
      %v3913 = vadd.f32 0.0, %v3912
      %v3914 = vpop.f32.mrb[0].mxu0
      %v3915 = vadd.f32 0.0, %v3914
      %3916 = vdwg.mxu0
      %v3917 = vld [vmem:[%s14] sm:$0xff]
      %3919 = vset.pattern.permute.xlu0 0
      %3920 = vperm.xlu0 %3919, %v3917
      %v3921 = vpop.permute.xlu0 %3920
      %v3923 = vmul.f32 %v3913, %v3921
      %v3924 = vmul.f32 %v3915, %v3921
      %v3925 = vld [vmem:[%s15] sm:$0xff]
      %3927 = vset.pattern.permute.xlu0 0
      %3928 = vperm.xlu0 %3927, %v3925
      %v3929 = vpop.permute.xlu0 %3928
      %v3931 = vadd.f32 %v3923, %v3929
      %v3932 = vadd.f32 %v3924, %v3929
      %vm3933 = vcmp.ge.f32.partialorder %v3931, 0.0
      %vm3934 = vcmp.ge.f32.partialorder %v3932, 0.0
      %v3935 = vmul.f32 %v3931, 0.01
      %v3936 = vmul.f32 %v3932, 0.01
      %v3937 = vsel %vm3933, %v3931, %v3935
      %v3938 = vsel %vm3934, %v3932, %v3936
      %v3939 = vld [vmem:[%s26] sm:$0xff]
      %v3940 = vld [vmem:[%s26 + $0x8] sm:$0xff]
      %v3941 = vld [vmem:[%s26 + $0x10] sm:$0xff]
      %v3942 = vld [vmem:[%s26 + $0x18] sm:$0xff]
      %v3943 = vld [vmem:[%s26 + $0x20] sm:$0xff]
      %v3944 = vld [vmem:[%s26 + $0x28] sm:$0xff]
      %v3945 = vld [vmem:[%s26 + $0x30] sm:$0xff]
      %v3946 = vld [vmem:[%s26 + $0x38] sm:$0xff]
      %v3947 = vld [vmem:[%s26 + $0x40] sm:$0xff]
      %v3948 = vld [vmem:[%s26 + $0x48] sm:$0xff]
      %v3949 = vld [vmem:[%s26 + $0x50] sm:$0xff]
      %v3950 = vld [vmem:[%s26 + $0x58] sm:$0xff]
      %v3951 = vld [vmem:[%s26 + $0x60] sm:$0xff]
      %v3952 = vld [vmem:[%s26 + $0x68] sm:$0xff]
      %v3953 = vld [vmem:[%s26 + $0x70] sm:$0xff]
      %v3954 = vld [vmem:[%s26 + $0x78] sm:$0xff]
      %v3955 = vld [vmem:[%s26 + $0x80] sm:$0xff]
      %v3956 = vld [vmem:[%s26 + $0x88] sm:$0xff]
      %v3957 = vld [vmem:[%s26 + $0x90] sm:$0xff]
      %v3958 = vld [vmem:[%s26 + $0x98] sm:$0xff]
      %v3959 = vld [vmem:[%s26 + $0xa0] sm:$0xff]
      %v3960 = vld [vmem:[%s26 + $0xa8] sm:$0xff]
      %v3961 = vld [vmem:[%s26 + $0xb0] sm:$0xff]
      %v3962 = vld [vmem:[%s26 + $0xb8] sm:$0xff]
      %v3963 = vld [vmem:[%s26 + $0xc0] sm:$0xff]
      %v3964 = vld [vmem:[%s26 + $0xc8] sm:$0xff]
      %v3965 = vld [vmem:[%s26 + $0xd0] sm:$0xff]
      %v3966 = vld [vmem:[%s26 + $0xd8] sm:$0xff]
      %v3967 = vld [vmem:[%s26 + $0xe0] sm:$0xff]
      %v3968 = vld [vmem:[%s26 + $0xe8] sm:$0xff]
      %v3969 = vld [vmem:[%s26 + $0xf0] sm:$0xff]
      %v3970 = vld [vmem:[%s26 + $0xf8] sm:$0xff]
      %3971 = vmatprep.subr.mxu0 0.0
      %3972 = vmatpush1.msra.mxu0 %v3939
      %3973 = vmatprep.subr.mxu0 0.0
      %3974 = vmatpush1.msra.mxu0 %v3940
      %3975 = vmatprep.subr.mxu0 0.0
      %3976 = vmatpush1.msra.mxu0 %v3941
      %3977 = vmatprep.subr.mxu0 0.0
      %3978 = vmatpush1.msra.mxu0 %v3942
      %3979 = vmatprep.subr.mxu0 0.0
      %3980 = vmatpush1.msra.mxu0 %v3943
      %3981 = vmatprep.subr.mxu0 0.0
      %3982 = vmatpush1.msra.mxu0 %v3944
      %3983 = vmatprep.subr.mxu0 0.0
      %3984 = vmatpush1.msra.mxu0 %v3945
      %3985 = vmatprep.subr.mxu0 0.0
      %3986 = vmatpush1.msra.mxu0 %v3946
      %3987 = vmatprep.subr.mxu0 0.0
      %3988 = vmatpush1.msra.mxu0 %v3947
      %3989 = vmatprep.subr.mxu0 0.0
      %3990 = vmatpush1.msra.mxu0 %v3948
      %3991 = vmatprep.subr.mxu0 0.0
      %3992 = vmatpush1.msra.mxu0 %v3949
      %3993 = vmatprep.subr.mxu0 0.0
      %3994 = vmatpush1.msra.mxu0 %v3950
      %3995 = vmatprep.subr.mxu0 0.0
      %3996 = vmatpush1.msra.mxu0 %v3951
      %3997 = vmatprep.subr.mxu0 0.0
      %3998 = vmatpush1.msra.mxu0 %v3952
      %3999 = vmatprep.subr.mxu0 0.0
      %4000 = vmatpush1.msra.mxu0 %v3953
      %4001 = vmatprep.subr.mxu0 0.0
      %4002 = vmatpush1.msra.mxu0 %v3954
      %4003 = vmatprep.subr.mxu0 0.0
      %4004 = vmatpush1.msra.mxu0 %v3955
      %4005 = vmatprep.subr.mxu0 0.0
      %4006 = vmatpush1.msra.mxu0 %v3956
      %4007 = vmatprep.subr.mxu0 0.0
      %4008 = vmatpush1.msra.mxu0 %v3957
      %4009 = vmatprep.subr.mxu0 0.0
      %4010 = vmatpush1.msra.mxu0 %v3958
      %4011 = vmatprep.subr.mxu0 0.0
      %4012 = vmatpush1.msra.mxu0 %v3959
      %4013 = vmatprep.subr.mxu0 0.0
      %4014 = vmatpush1.msra.mxu0 %v3960
      %4015 = vmatprep.subr.mxu0 0.0
      %4016 = vmatpush1.msra.mxu0 %v3961
      %4017 = vmatprep.subr.mxu0 0.0
      %4018 = vmatpush1.msra.mxu0 %v3962
      %4019 = vmatprep.subr.mxu0 0.0
      %4020 = vmatpush1.msra.mxu0 %v3963
      %4021 = vmatprep.subr.mxu0 0.0
      %4022 = vmatpush1.msra.mxu0 %v3964
      %4023 = vmatprep.subr.mxu0 0.0
      %4024 = vmatpush1.msra.mxu0 %v3965
      %4025 = vmatprep.subr.mxu0 0.0
      %4026 = vmatpush1.msra.mxu0 %v3966
      %4027 = vmatprep.subr.mxu0 0.0
      %4028 = vmatpush1.msra.mxu0 %v3967
      %4029 = vmatprep.subr.mxu0 0.0
      %4030 = vmatpush1.msra.mxu0 %v3968
      %4031 = vmatprep.subr.mxu0 0.0
      %4032 = vmatpush1.msra.mxu0 %v3969
      %4033 = vmatprep.subr.mxu0 0.0
      %4034 = vmatpush1.msra.mxu0 %v3970
      %4035 = vmatprep.mubr.f32.mxu0 %v3938
      %4036 = vmatmul.mubr.f32.gmra.mrb[0].mxu0 %v3937
      %v4037 = vpop.f32.mrb[0].mxu0
      %v4038 = vadd.f32 0.0, %v4037
      %v4039 = vpop.f32.mrb[0].mxu0
      %4040 = vdwg.mxu0
      %vm4041 = vcmp.lt.s32.totalorder %v828, 0
      %v4042 = vsub.s32 0, %v828
      %v4043 = vsel %vm4041, %v4042, %v828
      %v4044 = vshrl.u32 %v4043, 3
      %v4045 = vand.u32 %v4043, 7
      %v4046 = vsub.s32 0, %v4045
      %v4047 = vsel %vm4041, %v4046, %v4045
      %vm4048 = vcmp.ne.s32.totalorder %v4047, 0
      %vm4049 = vcmp.lt.s32.totalorder %v4047, 0
      %vm4050 = vmand %vm4049, %vm4048
      %v4051 = vadd.s32 %v4047, 8
      %v4052 = vsel %vm4050, %v4051, %v4047
      %4054 = vrot.lane.b32.xlu0 %v4038, 9
      %v4055 = vpop.permute.xlu0 %4054
      %vm4057 = vcmask 72704
      %v4058 = vsel %vm4057, 0.0, %v4055
      %v4059 = vadd.s32 %v4052, 4294967295
      %vm4060 = vcmp.ge.s32.totalorder %v4059, 0
      %vm4061 = vcmp.lt.s32.totalorder %v4059, 8
      %vm4062 = vmand %vm4060, %vm4061
      %v4063 = vsel %vm4062, 1, 0
      %vm4064 = vcmp.eq.s32.totalorder %v4063, 1
      %v4065 = vsel %vm4064, %v4058, 0.0
      %4066 = vrot.lane.b32.xlu0 %v4038, 8
      %v4067 = vpop.permute.xlu0 %4066
      %vm4069 = vcmask 64512
      %v4070 = vsel %vm4069, 0.0, %v4067
      %4071 = vrot.lane.b32.xlu0 %v4038, 7
      %v4072 = vpop.permute.xlu0 %4071
      %vm4074 = vcmask 56320
      %v4075 = vsel %vm4074, 0.0, %v4072
      %v4076 = vadd.s32 %v4052, 1
      %vm4077 = vcmp.ge.s32.totalorder %v4076, 0
      %vm4078 = vcmp.lt.s32.totalorder %v4076, 8
      %vm4079 = vmand %vm4077, %vm4078
      %v4080 = vsel %vm4079, 1, 0
      %vm4081 = vcmp.eq.s32.totalorder %v4080, 1
      %v4082 = vsel %vm4081, %v4075, 0.0
      %4083 = vrot.lane.b32.xlu0 %v4038, 1
      %v4084 = vpop.permute.xlu0 %4083
      %v4086 = vsel %vm1167, 0.0, %v4084
      %v4087 = vsel %vm4064, %v4086, 0.0
      %4088 = vrot.lane.b32.xlu0 %v4038, 127
      %v4089 = vpop.permute.xlu0 %4088
      %vm4091 = vcmask 515072
      %v4092 = vsel %vm4091, %v4089, 0.0
      %v4093 = vsel %vm4081, %v4092, 0.0
      %4094 = vrot.lane.b32.xlu0 %v4038, 121
      %v4095 = vpop.permute.xlu0 %4094
      %vm4097 = vcmask 465920
      %v4098 = vsel %vm4097, %v4095, 0.0
      %v4099 = vsel %vm4064, %v4098, 0.0
      %4100 = vrot.lane.b32.xlu0 %v4038, 120
      %v4101 = vpop.permute.xlu0 %4100
      %vm4103 = vcmask 457728
      %v4104 = vsel %vm4103, %v4101, 0.0
      %4105 = vrot.lane.b32.xlu0 %v4038, 119
      %v4106 = vpop.permute.xlu0 %4105
      %vm4108 = vcmask 449536
      %v4109 = vsel %vm4108, %v4106, 0.0
      %v4110 = vsel %vm4081, %v4109, 0.0
      %v4111 = vld [vmem:[%s16] sm:$0xff]
      %v4113 = vsel %vm1349, %v4111, 0
      %4115 = vmatprep.subr.mxu0 0.0
      %4116 = vmatpush1.msra.mxu0 %v4065
      %4117 = vmatprep.subr.mxu0 0.0
      %4118 = vmatpush1.msra.mxu0 %v4070
      %4119 = vmatprep.subr.mxu0 0.0
      %4120 = vmatpush1.msra.mxu0 %v4082
      %4121 = vmatprep.subr.mxu0 0.0
      %4122 = vmatpush1.msra.mxu0 %v4087
      %4123 = vmatprep.subr.mxu0 0.0
      %4124 = vmatpush1.msra.mxu0 %v4038
      %4125 = vmatprep.subr.mxu0 0.0
      %4126 = vmatpush1.msra.mxu0 %v4093
      %4127 = vmatprep.subr.mxu0 0.0
      %4128 = vmatpush1.msra.mxu0 %v4099
      %4129 = vmatprep.subr.mxu0 0.0
      %4130 = vmatpush1.msra.mxu0 %v4104
      %4131 = vmatprep.subr.mxu0 0.0
      %4132 = vmatpush1.msra.mxu0 %v4110
      %4133 = vmatprep.subr.mxu0 0.0
      %4134 = vmatpush1.msra.mxu0 0.0
      %4135 = vmatprep.subr.mxu0 0.0
      %4136 = vmatpush1.msra.mxu0 0.0
      %4137 = vmatprep.subr.mxu0 0.0
      %4138 = vmatpush1.msra.mxu0 0.0
      %4139 = vmatprep.subr.mxu0 0.0
      %4140 = vmatpush1.msra.mxu0 0.0
      %4141 = vmatprep.subr.mxu0 0.0
      %4142 = vmatpush1.msra.mxu0 0.0
      %4143 = vmatprep.subr.mxu0 0.0
      %4144 = vmatpush1.msra.mxu0 0.0
      %4145 = vmatprep.subr.mxu0 0.0
      %4146 = vmatpush1.msra.mxu0 0.0
      %4147 = vmatprep.subr.mxu0 0.0
      %4148 = vmatpush1.msra.mxu0 0.0
      %4149 = vmatprep.subr.mxu0 0.0
      %4150 = vmatpush1.msra.mxu0 0.0
      %4151 = vmatprep.subr.mxu0 0.0
      %4152 = vmatpush1.msra.mxu0 0.0
      %4153 = vmatprep.subr.mxu0 0.0
      %4154 = vmatpush1.msra.mxu0 0.0
      %4155 = vmatprep.subr.mxu0 0.0
      %4156 = vmatpush1.msra.mxu0 0.0
      %4157 = vmatprep.subr.mxu0 0.0
      %4158 = vmatpush1.msra.mxu0 0.0
      %4159 = vmatprep.subr.mxu0 0.0
      %4160 = vmatpush1.msra.mxu0 0.0
      %4161 = vmatprep.subr.mxu0 0.0
      %4162 = vmatpush1.msra.mxu0 0.0
      %4163 = vmatprep.subr.mxu0 0.0
      %4164 = vmatpush1.msra.mxu0 0.0
      %4165 = vmatprep.subr.mxu0 0.0
      %4166 = vmatpush1.msra.mxu0 0.0
      %4167 = vmatprep.subr.mxu0 0.0
      %4168 = vmatpush1.msra.mxu0 0.0
      %4169 = vmatprep.subr.mxu0 0.0
      %4170 = vmatpush1.msra.mxu0 0.0
      %4171 = vmatprep.subr.mxu0 0.0
      %4172 = vmatpush1.msra.mxu0 0.0
      %4173 = vmatprep.subr.mxu0 0.0
      %4174 = vmatpush1.msra.mxu0 0.0
      %4175 = vmatprep.subr.mxu0 0.0
      %4176 = vmatpush1.msra.mxu0 0.0
      %4177 = vmatprep.subr.mxu0 0.0
      %4178 = vmatpush1.msra.mxu0 0.0
      %4179 = vmatprep.mubr.f32.mxu0 0.0
      %4180 = vmatmul.mubr.f32.gmra.mrb[0].mxu0 %v4113
      %v4181 = vpop.f32.mrb[0].mxu0
      %v4182 = vadd.f32 0.0, %v4181
      %v4183 = vpop.f32.mrb[0].mxu0
      %4184 = vdwg.mxu0
      %v4185 = vld [vmem:[%s17] sm:$0xff]
      %4187 = vset.pattern.permute.xlu0 0
      %4188 = vperm.xlu0 %4187, %v4185
      %v4189 = vpop.permute.xlu0 %4188
      %v4191 = vmul.f32 %v4182, %v4189
      %v4192 = vld [vmem:[%s18] sm:$0xff]
      %4194 = vset.pattern.permute.xlu0 0
      %4195 = vperm.xlu0 %4194, %v4192
      %v4196 = vpop.permute.xlu0 %4195
      %v4198 = vadd.f32 %v4191, %v4196
      %vm4199 = vcmp.ge.f32.partialorder %v4198, 0.0
      %v4200 = vmul.f32 %v4198, 0.01
      %v4201 = vsel %vm4199, %v4198, %v4200
      %4203 = vrot.lane.b32.xlu0 %v4201, 9
      %v4204 = vpop.permute.xlu0 %4203
      %v4206 = vsel %vm4057, 0.0, %v4204
      %v4207 = vsel %vm4064, %v4206, 0.0
      %4208 = vrot.lane.b32.xlu0 %v4201, 8
      %v4209 = vpop.permute.xlu0 %4208
      %v4211 = vsel %vm4069, 0.0, %v4209
      %4212 = vrot.lane.b32.xlu0 %v4201, 7
      %v4213 = vpop.permute.xlu0 %4212
      %v4215 = vsel %vm4074, 0.0, %v4213
      %v4216 = vsel %vm4081, %v4215, 0.0
      %4217 = vrot.lane.b32.xlu0 %v4201, 1
      %v4218 = vpop.permute.xlu0 %4217
      %v4220 = vsel %vm1167, 0.0, %v4218
      %v4221 = vsel %vm4064, %v4220, 0.0
      %4222 = vrot.lane.b32.xlu0 %v4201, 127
      %v4223 = vpop.permute.xlu0 %4222
      %v4225 = vsel %vm4091, %v4223, 0.0
      %v4226 = vsel %vm4081, %v4225, 0.0
      %4227 = vrot.lane.b32.xlu0 %v4201, 121
      %v4228 = vpop.permute.xlu0 %4227
      %v4230 = vsel %vm4097, %v4228, 0.0
      %v4231 = vsel %vm4064, %v4230, 0.0
      %4232 = vrot.lane.b32.xlu0 %v4201, 120
      %v4233 = vpop.permute.xlu0 %4232
      %v4235 = vsel %vm4103, %v4233, 0.0
      %4236 = vrot.lane.b32.xlu0 %v4201, 119
      %v4237 = vpop.permute.xlu0 %4236
      %v4239 = vsel %vm4108, %v4237, 0.0
      %v4240 = vsel %vm4081, %v4239, 0.0
      %v4241 = vld [vmem:[%s19] sm:$0xff]
      %v4242 = vld [vmem:[%s19 + $0x8] sm:$0xff]
      %v4244 = vsel %vm2655, %v4242, 0
      %4246 = vmatprep.subr.mxu0 0.0
      %4247 = vmatpush1.msra.mxu0 %v4065
      %4248 = vmatprep.subr.mxu0 0.0
      %4249 = vmatpush1.msra.mxu0 %v4207
      %4250 = vmatprep.subr.mxu0 0.0
      %4251 = vmatpush1.msra.mxu0 %v4070
      %4252 = vmatprep.subr.mxu0 0.0
      %4253 = vmatpush1.msra.mxu0 %v4211
      %4254 = vmatprep.subr.mxu0 0.0
      %4255 = vmatpush1.msra.mxu0 %v4082
      %4256 = vmatprep.subr.mxu0 0.0
      %4257 = vmatpush1.msra.mxu0 %v4216
      %4258 = vmatprep.subr.mxu0 0.0
      %4259 = vmatpush1.msra.mxu0 %v4087
      %4260 = vmatprep.subr.mxu0 0.0
      %4261 = vmatpush1.msra.mxu0 %v4221
      %4262 = vmatprep.subr.mxu0 0.0
      %4263 = vmatpush1.msra.mxu0 %v4038
      %4264 = vmatprep.subr.mxu0 0.0
      %4265 = vmatpush1.msra.mxu0 %v4201
      %4266 = vmatprep.subr.mxu0 0.0
      %4267 = vmatpush1.msra.mxu0 %v4093
      %4268 = vmatprep.subr.mxu0 0.0
      %4269 = vmatpush1.msra.mxu0 %v4226
      %4270 = vmatprep.subr.mxu0 0.0
      %4271 = vmatpush1.msra.mxu0 %v4099
      %4272 = vmatprep.subr.mxu0 0.0
      %4273 = vmatpush1.msra.mxu0 %v4231
      %4274 = vmatprep.subr.mxu0 0.0
      %4275 = vmatpush1.msra.mxu0 %v4104
      %4276 = vmatprep.subr.mxu0 0.0
      %4277 = vmatpush1.msra.mxu0 %v4235
      %4278 = vmatprep.subr.mxu0 0.0
      %4279 = vmatpush1.msra.mxu0 %v4110
      %4280 = vmatprep.subr.mxu0 0.0
      %4281 = vmatpush1.msra.mxu0 %v4240
      %4282 = vmatprep.subr.mxu0 0.0
      %4283 = vmatpush1.msra.mxu0 0.0
      %4284 = vmatprep.subr.mxu0 0.0
      %4285 = vmatpush1.msra.mxu0 0.0
      %4286 = vmatprep.subr.mxu0 0.0
      %4287 = vmatpush1.msra.mxu0 0.0
      %4288 = vmatprep.subr.mxu0 0.0
      %4289 = vmatpush1.msra.mxu0 0.0
      %4290 = vmatprep.subr.mxu0 0.0
      %4291 = vmatpush1.msra.mxu0 0.0
      %4292 = vmatprep.subr.mxu0 0.0
      %4293 = vmatpush1.msra.mxu0 0.0
      %4294 = vmatprep.subr.mxu0 0.0
      %4295 = vmatpush1.msra.mxu0 0.0
      %4296 = vmatprep.subr.mxu0 0.0
      %4297 = vmatpush1.msra.mxu0 0.0
      %4298 = vmatprep.subr.mxu0 0.0
      %4299 = vmatpush1.msra.mxu0 0.0
      %4300 = vmatprep.subr.mxu0 0.0
      %4301 = vmatpush1.msra.mxu0 0.0
      %4302 = vmatprep.subr.mxu0 0.0
      %4303 = vmatpush1.msra.mxu0 0.0
      %4304 = vmatprep.subr.mxu0 0.0
      %4305 = vmatpush1.msra.mxu0 0.0
      %4306 = vmatprep.subr.mxu0 0.0
      %4307 = vmatpush1.msra.mxu0 0.0
      %4308 = vmatprep.subr.mxu0 0.0
      %4309 = vmatpush1.msra.mxu0 0.0
      %4310 = vmatprep.mubr.f32.mxu0 %v4244
      %4311 = vmatmul.mubr.f32.gmra.mrb[0].mxu0 %v4241
      %v4312 = vpop.f32.mrb[0].mxu0
      %v4313 = vadd.f32 0.0, %v4312
      %v4314 = vpop.f32.mrb[0].mxu0
      %4315 = vdwg.mxu0
      %v4316 = vld [vmem:[%s20] sm:$0xff]
      %4318 = vset.pattern.permute.xlu0 0
      %4319 = vperm.xlu0 %4318, %v4316
      %v4320 = vpop.permute.xlu0 %4319
      %v4322 = vmul.f32 %v4313, %v4320
      %v4323 = vld [vmem:[%s21] sm:$0xff]
      %4325 = vset.pattern.permute.xlu0 0
      %4326 = vperm.xlu0 %4325, %v4323
      %v4327 = vpop.permute.xlu0 %4326
      %v4329 = vadd.f32 %v4322, %v4327
      %vm4330 = vcmp.ge.f32.partialorder %v4329, 0.0
      %v4331 = vmul.f32 %v4329, 0.01
      %v4332 = vsel %vm4330, %v4329, %v4331
      %4334 = vrot.lane.b32.xlu0 %v4332, 9
      %v4335 = vpop.permute.xlu0 %4334
      %v4337 = vsel %vm4057, 0.0, %v4335
      %v4338 = vsel %vm4064, %v4337, 0.0
      %4339 = vrot.lane.b32.xlu0 %v4332, 8
      %v4340 = vpop.permute.xlu0 %4339
      %v4342 = vsel %vm4069, 0.0, %v4340
      %4343 = vrot.lane.b32.xlu0 %v4332, 7
      %v4344 = vpop.permute.xlu0 %4343
      %v4346 = vsel %vm4074, 0.0, %v4344
      %v4347 = vsel %vm4081, %v4346, 0.0
      %4348 = vrot.lane.b32.xlu0 %v4332, 1
      %v4349 = vpop.permute.xlu0 %4348
      %v4351 = vsel %vm1167, 0.0, %v4349
      %v4352 = vsel %vm4064, %v4351, 0.0
      %4353 = vrot.lane.b32.xlu0 %v4332, 127
      %v4354 = vpop.permute.xlu0 %4353
      %v4356 = vsel %vm4091, %v4354, 0.0
      %v4357 = vsel %vm4081, %v4356, 0.0
      %4358 = vrot.lane.b32.xlu0 %v4332, 121
      %v4359 = vpop.permute.xlu0 %4358
      %v4361 = vsel %vm4097, %v4359, 0.0
      %v4362 = vsel %vm4064, %v4361, 0.0
      %4363 = vrot.lane.b32.xlu0 %v4332, 120
      %v4364 = vpop.permute.xlu0 %4363
      %v4366 = vsel %vm4103, %v4364, 0.0
      %4367 = vrot.lane.b32.xlu0 %v4332, 119
      %v4368 = vpop.permute.xlu0 %4367
      %v4370 = vsel %vm4108, %v4368, 0.0
      %v4371 = vsel %vm4081, %v4370, 0.0
      %v4372 = vld [vmem:[%s22] sm:$0xff]
      %v4373 = vld [vmem:[%s22 + $0x8] sm:$0xff]
      %v4375 = vsel %vm1349, %v4372, 0
      %v4378 = vsel %vm1349, %v4373, 0
      %4380 = vmatprep.subr.mxu0 0.0
      %4381 = vmatpush1.msra.mxu0 %v4338
      %4382 = vmatprep.subr.mxu0 0.0
      %4383 = vmatpush1.msra.mxu0 %v4342
      %4384 = vmatprep.subr.mxu0 0.0
      %4385 = vmatpush1.msra.mxu0 %v4347
      %4386 = vmatprep.subr.mxu0 0.0
      %4387 = vmatpush1.msra.mxu0 %v4352
      %4388 = vmatprep.subr.mxu0 0.0
      %4389 = vmatpush1.msra.mxu0 %v4332
      %4390 = vmatprep.subr.mxu0 0.0
      %4391 = vmatpush1.msra.mxu0 %v4357
      %4392 = vmatprep.subr.mxu0 0.0
      %4393 = vmatpush1.msra.mxu0 %v4362
      %4394 = vmatprep.subr.mxu0 0.0
      %4395 = vmatpush1.msra.mxu0 %v4366
      %4396 = vmatprep.subr.mxu0 0.0
      %4397 = vmatpush1.msra.mxu0 %v4371
      %4398 = vmatprep.subr.mxu0 0.0
      %4399 = vmatpush1.msra.mxu0 0.0
      %4400 = vmatprep.subr.mxu0 0.0
      %4401 = vmatpush1.msra.mxu0 0.0
      %4402 = vmatprep.subr.mxu0 0.0
      %4403 = vmatpush1.msra.mxu0 0.0
      %4404 = vmatprep.subr.mxu0 0.0
      %4405 = vmatpush1.msra.mxu0 0.0
      %4406 = vmatprep.subr.mxu0 0.0
      %4407 = vmatpush1.msra.mxu0 0.0
      %4408 = vmatprep.subr.mxu0 0.0
      %4409 = vmatpush1.msra.mxu0 0.0
      %4410 = vmatprep.subr.mxu0 0.0
      %4411 = vmatpush1.msra.mxu0 0.0
      %4412 = vmatprep.subr.mxu0 0.0
      %4413 = vmatpush1.msra.mxu0 0.0
      %4414 = vmatprep.subr.mxu0 0.0
      %4415 = vmatpush1.msra.mxu0 0.0
      %4416 = vmatprep.subr.mxu0 0.0
      %4417 = vmatpush1.msra.mxu0 0.0
      %4418 = vmatprep.subr.mxu0 0.0
      %4419 = vmatpush1.msra.mxu0 0.0
      %4420 = vmatprep.subr.mxu0 0.0
      %4421 = vmatpush1.msra.mxu0 0.0
      %4422 = vmatprep.subr.mxu0 0.0
      %4423 = vmatpush1.msra.mxu0 0.0
      %4424 = vmatprep.subr.mxu0 0.0
      %4425 = vmatpush1.msra.mxu0 0.0
      %4426 = vmatprep.subr.mxu0 0.0
      %4427 = vmatpush1.msra.mxu0 0.0
      %4428 = vmatprep.subr.mxu0 0.0
      %4429 = vmatpush1.msra.mxu0 0.0
      %4430 = vmatprep.subr.mxu0 0.0
      %4431 = vmatpush1.msra.mxu0 0.0
      %4432 = vmatprep.subr.mxu0 0.0
      %4433 = vmatpush1.msra.mxu0 0.0
      %4434 = vmatprep.subr.mxu0 0.0
      %4435 = vmatpush1.msra.mxu0 0.0
      %4436 = vmatprep.subr.mxu0 0.0
      %4437 = vmatpush1.msra.mxu0 0.0
      %4438 = vmatprep.subr.mxu0 0.0
      %4439 = vmatpush1.msra.mxu0 0.0
      %4440 = vmatprep.subr.mxu0 0.0
      %4441 = vmatpush1.msra.mxu0 0.0
      %4442 = vmatprep.subr.mxu0 0.0
      %4443 = vmatpush1.msra.mxu0 0.0
      %4444 = vmatprep.mubr.f32.mxu0 0.0
      %4445 = vmatmul.mubr.f32.gmra.mrb[0].mxu0 %v4375
      %v4446 = vpop.f32.mrb[0].mxu0
      %v4447 = vadd.f32 0.0, %v4446
      %v4448 = vpop.f32.mrb[0].mxu0
      %4449 = vmatprep.mubr.f32.mxu0 0.0
      %4450 = vmatmul.mubr.f32.gmra.mrb[0].mxu0 %v4378
      %v4451 = vpop.f32.mrb[0].mxu0
      %v4452 = vadd.f32 0.0, %v4451
      %v4453 = vpop.f32.mrb[0].mxu0
      %4454 = vdwg.mxu0
      %v4455 = vld [vmem:[%s23] sm:$0xff]
      %v4456 = vld [vmem:[%s23 + $0x8] sm:$0xff]
      %4458 = vset.pattern.permute.xlu0 0
      %4459 = vperm.xlu0 %4458, %v4455
      %v4460 = vpop.permute.xlu0 %4459
      %4463 = vset.pattern.permute.xlu0 0
      %4464 = vperm.xlu0 %4463, %v4456
      %v4465 = vpop.permute.xlu0 %4464
      %v4467 = vmul.f32 %v4447, %v4460
      %v4468 = vmul.f32 %v4452, %v4465
      %v4469 = vld [vmem:[%s24] sm:$0xff]
      %v4470 = vld [vmem:[%s24 + $0x8] sm:$0xff]
      %4472 = vset.pattern.permute.xlu0 0
      %4473 = vperm.xlu0 %4472, %v4469
      %v4474 = vpop.permute.xlu0 %4473
      %4477 = vset.pattern.permute.xlu0 0
      %4478 = vperm.xlu0 %4477, %v4470
      %v4479 = vpop.permute.xlu0 %4478
      %v4481 = vadd.f32 %v4467, %v4474
      %v4482 = vadd.f32 %v4468, %v4479
      %vm4483 = vcmp.ge.f32.partialorder %v4481, 0.0
      %vm4484 = vcmp.ge.f32.partialorder %v4482, 0.0
      %v4485 = vmul.f32 %v4481, 0.01
      %v4486 = vmul.f32 %v4482, 0.01
      %v4487 = vsel %vm4483, %v4481, %v4485
      %v4488 = vsel %vm4484, %v4482, %v4486
      %vm4489 = vcmask 523264
      %v4490 = vsel %vm4489, %v4487, 0.0
      %4491 = vadd.xlane.f32.xlu0 %v4490
      %v4492 = vpop.xlane.xlu0 %4491
      %v4493 = vsel %vm4489, %v4488, 0.0
      %4494 = vadd.xlane.f32.xlu0 %v4493
      %v4495 = vpop.xlane.xlu0 %4494
      %v4496 = vmul.f32 %v4492, 0.015625
      %v4497 = vmul.f32 %v4495, 0.015625
      %4498 = vst.msk [vmem:[%s818] sm:$0xff] %vm1167, %v4496
      %4499 = vst.msk [vmem:[%s818 + $0x8] sm:$0xff] %vm1167, %v4497
      %p4500 = scmp.lt.s32.totalorder %s38, 1
      %s4501 = scalar_select %p4500, %s38, 1
      %s4502 = smul.addr %s4501, 2
      %s4503 = smul.addr %s4502, 8
      %s4504 = scalar_lea.vmem %s27, %s4503
      // Predicated region
      $region129: #{extractor_forward.1} parent=127 // pred_check
        %p4505 = pneg %p628
      $region130: #{extractor_forward.1} parent=127 // pred_check_branch
        %4507 = sbr.rel (%p4505) target = $region132
      $region131: #{extractor_forward.1} parent=127 // pred_region
        _
      $region132: #{extractor_forward.1} parent=127 // pred_fallthru
        _
    $region128: #{extractor_forward.1} parent=5 // pred_fallthru
      _
    %p4508 = scmp.le.s32.totalorder 2, %s33
    // Predicated region
    $region133: #{extractor_forward.1} parent=5 // pred_check
      %p4509 = pneg %p4508
    $region134: #{extractor_forward.1} parent=5 // pred_check_branch
      %4511 = sbr.rel (%p4509) target = $region136
    $region135: #{extractor_forward.1} parent=5 // pred_region
      %s4512 = ssub.s32 %s33, 2
      // Predicated region
      $region137: #{extractor_forward.1} parent=135 // pred_check
        %p4513 = pneg %p634
      $region138: #{extractor_forward.1} parent=135 // pred_check_branch
        %4515 = sbr.rel (%p4513) target = $region140
      $region139: #{extractor_forward.1} parent=135 // pred_region
        %p4516 = scmp.lt.s32.totalorder %s39, 1
        %s4517 = scalar_select %p4516, %s39, 1
        %s4518 = smul.addr %s4517, 2
        %s4519 = smul.addr %s4518, 8
        %s4520 = scalar_lea.vmem %s27, %s4519
      $region140: #{extractor_forward.1} parent=135 // pred_fallthru
        _
    $region136: #{extractor_forward.1} parent=5 // pred_fallthru
      _
  $region6: #{extractor_forward.1} parent=0 // loop_footer
    %s37 = sadd.s32 1, %s33
  $region7: #{extractor_forward.1} parent=0 // loop_footer_branch
    %32 = sbr.rel target = $region3
  $region8: #{extractor_forward.1} parent=0 // loop_exit
    _

</llo_original>
